<compile_context>
chip_gen: v5e
topology: v5e:2x2
jax: 0.10.0
libtpu: 0.0.40
codegen_flags: <defaults>
</compile_context>

<pallas_src>
import functools

import numpy as np

import jax
import jax.numpy as jnp
from jax.experimental import pallas as pl
from jax.experimental.pallas import tpu as pltpu

_HALO = 128  # lane halo around each flattened (C, N*H*W) map held in VMEM scratch


# ----------------------------------------------------------------------------
# Host-side (numpy) constant builders.  These encode pure index structure
# (tap validity masks, pooling matrices, transposed-conv gather / phase
# matrices) and are baked into the executable as XLA constants.
# ----------------------------------------------------------------------------
def _conv_shifts_masks(N, H, W, KH, KW, ph, pw):
    """Flat lane shifts + 0/1 validity masks for a stride-1 'same' conv."""
    R = N * H * W
    r = np.arange(R)
    h = (r // W) % H
    w = r % W
    shifts, masks = [], []
    for i in range(KH):
        for j in range(KW):
            di, dj = i - ph, j - pw
            shifts.append(di * W + dj)
            ok = (h + di >= 0) & (h + di < H) & (w + dj >= 0) & (w + dj < W)
            masks.append(ok.astype(np.float32))
    return tuple(shifts), np.stack(masks)                     # (T,), (T, R)


def _pool_matrix(N, H, W):
    """(N*H*W, N*(H//2)*(W//2)) matrix so that  pooled = x @ P  (2x2 mean)."""
    Ho, Wo = H // 2, W // 2
    P = np.zeros((N * H * W, N * Ho * Wo), np.float32)
    for n in range(N):
        for h in range(H):
            for w in range(W):
                P[n * H * W + h * W + w,
                  n * Ho * Wo + (h // 2) * Wo + (w // 2)] = 0.25
    return P


def _upsample_mats(N, Hin, Win, s, pad):
    """Matrices for depthwise ConvTranspose2d with kernel K = 2*s, stride s.

    Returns
      G : (2, 2, N*Hin*Win, N*Hout*Wout) 0/1 gather matrices, one per
          contribution slot (a, b); out-of-range taps become zero columns.
      PM: (s*s, N*Hout*Wout) one-hot phase selector, PM[ph_h*s + ph_w, ro] = 1.
    """
    Hout, Wout = Hin * s, Win * s
    Rin, Rout = N * Hin * Win, N * Hout * Wout
    G = np.zeros((2, 2, Rin, Rout), np.float32)
    PM = np.zeros((s * s, Rout), np.float32)
    for n in range(N):
        for ho in range(Hout):
            for wo in range(Wout):
                ro = n * Hout * Wout + ho * Wout + wo
                ph_h, ph_w = (ho + pad) % s, (wo + pad) % s
                PM[ph_h * s + ph_w, ro] = 1.0
                for a in range(2):
                    hi = (ho + pad) // s - a
                    if not 0 <= hi < Hin:
                        continue
                    for b in range(2):
                        wi = (wo + pad) // s - b
                        if not 0 <= wi < Win:
                            continue
                        G[a, b, n * Hin * Win + hi * Win + wi, ro] = 1.0
    return G, PM


@functools.lru_cache(maxsize=None)
def _constants(N, H, W):
    H2, W2, H3, W3 = H // 2, W // 2, H // 4, W // 4
    sh1, m1 = _conv_shifts_masks(N, H, W, 3, 7, 1, 3)       # conv1
    sh2, m2 = _conv_shifts_masks(N, H2, W2, 3, 5, 1, 2)     # conv2
    sh3, m3 = _conv_shifts_masks(N, H3, W3, 3, 3, 1, 1)     # conv3
    sh4, m4 = _conv_shifts_masks(N, H, W, 3, 3, 1, 1)       # conv4
    g2, pm2 = _upsample_mats(N, H2, W2, 2, 1)               # Upsample2: K4 s2 p1
    g3, pm3 = _upsample_mats(N, H3, W3, 4, 2)               # Upsample3: K8 s4 p2
    return dict(sh1=sh1, m1=m1, sh2=sh2, m2=m2, sh3=sh3, m3=m3, sh4=sh4, m4=m4,
                pool1=_pool_matrix(N, H, W), pool2=_pool_matrix(N, H2, W2),
                g2=g2, pm2=pm2, g3=g3, pm3=pm3)


# ----------------------------------------------------------------------------
# In-kernel building blocks (traced inline; all operands live in VMEM).
# ----------------------------------------------------------------------------
def _store_padded(pad_ref, val, R):
    """Write a (C, R) map into the centre of a zeroed (C, R + 2*_HALO) scratch."""
    pad_ref[...] = jnp.zeros(pad_ref.shape, pad_ref.dtype)
    pad_ref[:, _HALO:_HALO + R] = val


def _conv_taps(pad_ref, w_ref, m_ref, shifts, R, mode):
    """Stride-1 'same' conv as a sum of masked shifted-window taps.

    pad_ref: (Cin, R + 2*_HALO) halo-padded input, valid data at [_HALO, _HALO+R)
    w_ref  : 'cin1' -> (T, Cout, 1); 'dot' -> (T, Cout, Cin); 'cout1' -> (T, Cin, 1)
    m_ref  : (T, R) 0/1 validity masks (zero taps that cross a row/image edge)
    """
    acc = None
    for t, sh in enumerate(shifts):
        win = pad_ref[:, _HALO + sh:_HALO + sh + R]          # (Cin, R)
        msk = m_ref[t:t + 1, :]                              # (1, R)
        wt = w_ref[t]
        if mode == "cin1":                                   # outer product on VPU
            term = wt * (msk * win)
        elif mode == "cout1":                                # per-tap sublane reduce
            term = msk * jnp.sum(win * wt, axis=0, keepdims=True)
        else:                                                # MXU GEMM tap
            term = jnp.dot(wt, msk * win, preferred_element_type=jnp.float32)
        acc = term if acc is None else acc + term
    return acc


def _upsample(x, g_ref, wq_ref, pm_ref):
    """Depthwise ConvTranspose2d (K = 2*stride) as 4 slot-gathers x phase weights."""
    pm = pm_ref[...]
    acc = None
    for a in range(2):
        for b in range(2):
            gathered = jnp.dot(x, g_ref[a, b],
                               preferred_element_type=jnp.float32)      # (C, Rout)
            wsel = jnp.dot(wq_ref[a, b], pm,
                           preferred_element_type=jnp.float32)          # (C, Rout)
            term = gathered * wsel
            acc = term if acc is None else acc + term
    return acc


def _featnet_kernel(sh1, sh2, sh3, sh4, R1, R2, R3,
                    x_ref, w1_ref, m1_ref, pool1_ref,
                    w2_ref, m2_ref, w2q_ref, pm2_ref, g2_ref, b2_ref,
                    pool2_ref, w3_ref, m3_ref, w3q_ref, pm3_ref, g3_ref,
                    w4a_ref, w4b_ref, w4c_ref, m4_ref,
                    out_ref,
                    x1p, p1p, p2p, s1p, s2p, s3p):
    # conv1 + tanh: 1 -> 16 channels at full resolution.
    _store_padded(x1p, x_ref[...], R1)
    s1 = jnp.tanh(_conv_taps(x1p, w1_ref, m1_ref, sh1, R1, "cin1"))       # (16, R1)
    _store_padded(s1p, s1, R1)

    # Pool1 (2x2 mean as matmul) + conv2 + tanh: 16 -> 32 channels at H/2.
    p1 = jnp.dot(s1, pool1_ref[...], preferred_element_type=jnp.float32)  # (16, R2)
    _store_padded(p1p, p1, R2)
    c2 = jnp.tanh(_conv_taps(p1p, w2_ref, m2_ref, sh2, R2, "dot"))        # (32, R2)

    # Upsample2: depthwise ConvTranspose2d(k=4, s=2, p=1) + bias, back to H.
    s2 = _upsample(c2, g2_ref, w2q_ref, pm2_ref) + b2_ref[...]            # (32, R1)
    _store_padded(s2p, s2, R1)

    # Pool2 + conv3 + tanh: 32 -> 64 channels at H/4.
    p2 = jnp.dot(c2, pool2_ref[...], preferred_element_type=jnp.float32)  # (32, R3)
    _store_padded(p2p, p2, R3)
    c3 = jnp.tanh(_conv_taps(p2p, w3_ref, m3_ref, sh3, R3, "dot"))        # (64, R3)

    # Upsample3: depthwise ConvTranspose2d(k=8, s=4, p=2), back to H.
    s3 = _upsample(c3, g3_ref, w3q_ref, pm3_ref)                          # (64, R1)
    _store_padded(s3p, s3, R1)

    # conv4 on concat([s1, s2, s3]) == sum of three group convs (no concat).
    out = (_conv_taps(s1p, w4a_ref, m4_ref, sh4, R1, "cout1")
           + _conv_taps(s2p, w4b_ref, m4_ref, sh4, R1, "cout1")
           + _conv_taps(s3p, w4c_ref, m4_ref, sh4, R1, "cout1"))          # (1, R1)
    out_ref[...] = out


# ----------------------------------------------------------------------------
# Public wrapper: NCHW in / NCHW out, one pallas_call for the whole network.
# ----------------------------------------------------------------------------
def featnet_forward(x_nchw, params):
    N, Cin, H, W = x_nchw.shape
    assert Cin == 1 and H % 4 == 0 and W % 4 == 0
    R1 = N * H * W
    R2 = N * (H // 2) * (W // 2)
    R3 = N * (H // 4) * (W // 4)
    const = _constants(N, H, W)
    f32 = jnp.float32

    def prep_conv(w):                      # (Cout, Cin, KH, KW) -> (T, Cout, Cin)
        co, ci, kh, kw = w.shape
        return jnp.transpose(w, (2, 3, 0, 1)).reshape(kh * kw, co, ci).astype(f32)

    def prep_conv_cout1(w):                # (1, Cin, KH, KW) -> (T, Cin, 1)
        _, ci, kh, kw = w.shape
        return jnp.transpose(w, (2, 3, 1, 0)).reshape(kh * kw, ci, 1).astype(f32)

    def prep_up(w, s):                     # (C, 1, 2s, 2s) -> (2, 2, C, s*s)
        c = w.shape[0]
        wq = w[:, 0].reshape(c, 2, s, 2, s)                 # [c, a, ph_h, b, ph_w]
        return jnp.transpose(wq, (1, 3, 0, 2, 4)).reshape(2, 2, c, s * s).astype(f32)

    w1 = prep_conv(params["conv1"])                         # (21, 16, 1)
    w2 = prep_conv(params["conv2"])                         # (15, 32, 16)
    w3 = prep_conv(params["conv3"])                         # (9, 64, 32)
    w4 = params["conv4"]
    w4a = prep_conv_cout1(w4[:, 0:16])                      # (9, 16, 1)
    w4b = prep_conv_cout1(w4[:, 16:48])                     # (9, 32, 1)
    w4c = prep_conv_cout1(w4[:, 48:112])                    # (9, 64, 1)
    w2q = prep_up(params["up2_w"], 2)                       # (2, 2, 32, 4)
    w3q = prep_up(params["up3_w"], 4)                       # (2, 2, 64, 16)
    b2 = params["up2_b"].reshape(-1, 1).astype(f32)         # (32, 1)

    x_flat = x_nchw.reshape(1, R1).astype(f32)              # (1, N*H*W)

    operands = [x_flat,
                w1, const["m1"], const["pool1"],
                w2, const["m2"], w2q, const["pm2"], const["g2"], b2,
                const["pool2"], w3, const["m3"], w3q, const["pm3"], const["g3"],
                w4a, w4b, w4c, const["m4"]]

    def _zero_map(nd):
        return lambda i: (0,) * nd

    in_specs = [pl.BlockSpec(tuple(op.shape), _zero_map(op.ndim)) for op in operands]

    scratch_shapes = [
        pltpu.VMEM((1, R1 + 2 * _HALO), f32),    # x1p : padded network input
        pltpu.VMEM((16, R2 + 2 * _HALO), f32),   # p1p : padded Pool1 output
        pltpu.VMEM((32, R3 + 2 * _HALO), f32),   # p2p : padded Pool2 output
        pltpu.VMEM((16, R1 + 2 * _HALO), f32),   # s1p : padded stack1
        pltpu.VMEM((32, R1 + 2 * _HALO), f32),   # s2p : padded stack2
        pltpu.VMEM((64, R1 + 2 * _HALO), f32),   # s3p : padded stack3
    ]

    kernel = functools.partial(_featnet_kernel,
                               const["sh1"], const["sh2"], const["sh3"],
                               const["sh4"], R1, R2, R3)

    out_flat = pl.pallas_call(
        kernel,
        out_shape=jax.ShapeDtypeStruct((1, R1), f32),
        grid=(1,),
        in_specs=in_specs,
        out_specs=pl.BlockSpec((1, R1), lambda i: (0, 0)),
        scratch_shapes=scratch_shapes,
        compiler_params=pltpu.CompilerParams(
            dimension_semantics=("arbitrary",),
            vmem_limit_bytes=32 * 1024 * 1024),
        cost_estimate=pl.CostEstimate(
            flops=40_000_000, transcendentals=16_384, bytes_accessed=2_200_000),
    )(*operands)

    return out_flat.reshape(N, 1, H, W)


# ----------------------------------------------------------------------------
# Pure-JAX reference of the PyTorch module (for self-validation only).
# ----------------------------------------------------------------------------
def _featnet_reference(x, params):
    dn = ("NCHW", "OIHW", "NCHW")

    def conv(v, w, ph, pw):
        return jax.lax.conv_general_dilated(
            v, w, window_strides=(1, 1), padding=[(ph, ph), (pw, pw)],
            dimension_numbers=dn)

    def convt_dw(v, w, k, s, p):
        wf = w[:, :, ::-1, ::-1]
        return jax.lax.conv_general_dilated(
            v, wf, window_strides=(1, 1),
            padding=[(k - 1 - p, k - 1 - p)] * 2, lhs_dilation=(s, s),
            dimension_numbers=dn, feature_group_count=v.shape[1])

    def pool(v):
        n, c, h, w = v.shape
        return v.reshape(n, c, h // 2, 2, w // 2, 2).mean(axis=(3, 5))

    s1 = jnp.tanh(conv(x, params["conv1"], 1, 3))
    p1 = pool(s1)
    c2 = jnp.tanh(conv(p1, params["conv2"], 1, 2))
    s2 = convt_dw(c2, params["up2_w"], 4, 2, 1) + params["up2_b"].reshape(1, -1, 1, 1)
    p2 = pool(c2)
    c3 = jnp.tanh(conv(p2, params["conv3"], 1, 1))
    s3 = convt_dw(c3, params["up3_w"], 8, 4, 2)
    cat = jnp.concatenate([s1, s2, s3], axis=1)
    return conv(cat, params["conv4"], 1, 1)


if __name__ == "__main__":
    key = jax.random.PRNGKey(0)
    kx, k1, k2, k3, k4, k5, k6, k7 = jax.random.split(key, 8)

    x = jax.random.normal(kx, (2, 1, 16, 16), jnp.float32)
    params = {
        "conv1": 0.1 * jax.random.normal(k1, (16, 1, 3, 7), jnp.float32),
        "conv2": 0.1 * jax.random.normal(k2, (32, 16, 3, 5), jnp.float32),
        "up2_w": 0.1 * jax.random.normal(k3, (32, 1, 4, 4), jnp.float32),
        "up2_b": 0.1 * jax.random.normal(k4, (32,), jnp.float32),
        "conv3": 0.1 * jax.random.normal(k5, (64, 32, 3, 3), jnp.float32),
        "up3_w": 0.1 * jax.random.normal(k6, (64, 1, 8, 8), jnp.float32),
        "conv4": 0.1 * jax.random.normal(k7, (1, 112, 3, 3), jnp.float32),
    }

    out = jax.jit(featnet_forward)(x, params)
    out = jax.block_until_ready(out)
    assert out.shape == (2, 1, 16, 16) and out.dtype == jnp.float32

    # Self-check against a pure-JAX/XLA reference of the PyTorch module.
    ref = jax.jit(_featnet_reference)(x, params)
    err = float(jnp.max(jnp.abs(out - ref)))
    assert err < 3e-3, f"mismatch vs reference: max abs err = {err}"

    print("KERNEL_OK")
</pallas_src>

<mosaic_0001>
module attributes {stable_mosaic.version = 11 : i64} {
  func.func @_featnet_kernel(%arg0: i32, %arg1: memref<1x512xf32, #tpu.memory_space<vmem>>, %arg2: memref<21x16x1xf32, #tpu.memory_space<vmem>>, %arg3: memref<21x512xf32, #tpu.memory_space<vmem>>, %arg4: memref<512x128xf32, #tpu.memory_space<vmem>>, %arg5: memref<15x32x16xf32, #tpu.memory_space<vmem>>, %arg6: memref<15x128xf32, #tpu.memory_space<vmem>>, %arg7: memref<2x2x32x4xf32, #tpu.memory_space<vmem>>, %arg8: memref<4x512xf32, #tpu.memory_space<vmem>>, %arg9: memref<2x2x128x512xf32, #tpu.memory_space<vmem>>, %arg10: memref<32x1xf32, #tpu.memory_space<vmem>>, %arg11: memref<128x32xf32, #tpu.memory_space<vmem>>, %arg12: memref<9x64x32xf32, #tpu.memory_space<vmem>>, %arg13: memref<9x32xf32, #tpu.memory_space<vmem>>, %arg14: memref<2x2x64x16xf32, #tpu.memory_space<vmem>>, %arg15: memref<16x512xf32, #tpu.memory_space<vmem>>, %arg16: memref<2x2x32x512xf32, #tpu.memory_space<vmem>>, %arg17: memref<9x16x1xf32, #tpu.memory_space<vmem>>, %arg18: memref<9x32x1xf32, #tpu.memory_space<vmem>>, %arg19: memref<9x64x1xf32, #tpu.memory_space<vmem>>, %arg20: memref<9x512xf32, #tpu.memory_space<vmem>>, %arg21: memref<1x512xf32, #tpu.memory_space<vmem>>, %arg22: memref<1x768xf32, #tpu.memory_space<vmem>>, %arg23: memref<16x384xf32, #tpu.memory_space<vmem>>, %arg24: memref<32x288xf32, #tpu.memory_space<vmem>>, %arg25: memref<16x768xf32, #tpu.memory_space<vmem>>, %arg26: memref<32x768xf32, #tpu.memory_space<vmem>>, %arg27: memref<64x768xf32, #tpu.memory_space<vmem>>) attributes {dimension_semantics = [#tpu.dimension_semantics<arbitrary>], iteration_bounds = array<i64: 1>, scalar_prefetch = 0 : i64, scratch_operands = 6 : i64, tpu.core_type = #tpu.core_type<tc>, window_params = [{pipeline_mode = #tpu.pipeline_mode<synchronous>, transform_indices = @transform_0, window_bounds = array<i64: 1, 512>}, {pipeline_mode = #tpu.pipeline_mode<synchronous>, transform_indices = @transform_1, window_bounds = array<i64: 21, 16, 1>}, {pipeline_mode = #tpu.pipeline_mode<synchronous>, transform_indices = @transform_2, window_bounds = array<i64: 21, 512>}, {pipeline_mode = #tpu.pipeline_mode<synchronous>, transform_indices = @transform_3, window_bounds = array<i64: 512, 128>}, {pipeline_mode = #tpu.pipeline_mode<synchronous>, transform_indices = @transform_4, window_bounds = array<i64: 15, 32, 16>}, {pipeline_mode = #tpu.pipeline_mode<synchronous>, transform_indices = @transform_5, window_bounds = array<i64: 15, 128>}, {pipeline_mode = #tpu.pipeline_mode<synchronous>, transform_indices = @transform_6, window_bounds = array<i64: 2, 2, 32, 4>}, {pipeline_mode = #tpu.pipeline_mode<synchronous>, transform_indices = @transform_7, window_bounds = array<i64: 4, 512>}, {pipeline_mode = #tpu.pipeline_mode<synchronous>, transform_indices = @transform_8, window_bounds = array<i64: 2, 2, 128, 512>}, {pipeline_mode = #tpu.pipeline_mode<synchronous>, transform_indices = @transform_9, window_bounds = array<i64: 32, 1>}, {pipeline_mode = #tpu.pipeline_mode<synchronous>, transform_indices = @transform_10, window_bounds = array<i64: 128, 32>}, {pipeline_mode = #tpu.pipeline_mode<synchronous>, transform_indices = @transform_11, window_bounds = array<i64: 9, 64, 32>}, {pipeline_mode = #tpu.pipeline_mode<synchronous>, transform_indices = @transform_12, window_bounds = array<i64: 9, 32>}, {pipeline_mode = #tpu.pipeline_mode<synchronous>, transform_indices = @transform_13, window_bounds = array<i64: 2, 2, 64, 16>}, {pipeline_mode = #tpu.pipeline_mode<synchronous>, transform_indices = @transform_14, window_bounds = array<i64: 16, 512>}, {pipeline_mode = #tpu.pipeline_mode<synchronous>, transform_indices = @transform_15, window_bounds = array<i64: 2, 2, 32, 512>}, {pipeline_mode = #tpu.pipeline_mode<synchronous>, transform_indices = @transform_16, window_bounds = array<i64: 9, 16, 1>}, {pipeline_mode = #tpu.pipeline_mode<synchronous>, transform_indices = @transform_17, window_bounds = array<i64: 9, 32, 1>}, {pipeline_mode = #tpu.pipeline_mode<synchronous>, transform_indices = @transform_18, window_bounds = array<i64: 9, 64, 1>}, {pipeline_mode = #tpu.pipeline_mode<synchronous>, transform_indices = @transform_19, window_bounds = array<i64: 9, 512>}, {pipeline_mode = #tpu.pipeline_mode<synchronous>, transform_indices = @transform_20, window_bounds = array<i64: 1, 512>}]} {
    %c0 = arith.constant 0 : index
    %c0_0 = arith.constant 0 : index
    %0 = vector.load %arg1[%c0, %c0_0] : memref<1x512xf32, #tpu.memory_space<vmem>>, vector<1x512xf32>
    %cst = arith.constant 0.000000e+00 : f32
    %1 = vector.broadcast %cst : f32 to vector<1x768xf32>
    %c0_1 = arith.constant 0 : index
    %c0_2 = arith.constant 0 : index
    %2 = vector.load %arg22[%c0_1, %c0_2] : memref<1x768xf32, #tpu.memory_space<vmem>>, vector<1x768xf32>
    tpu.vector_store %arg22[%c0_1, %c0_2], %1 {strides = array<i32>} : memref<1x768xf32, #tpu.memory_space<vmem>>, vector<1x768xf32>,
    %c0_3 = arith.constant 0 : index
    %c128 = arith.constant 128 : index
    %3 = vector.load %arg22[%c0_3, %c128] : memref<1x768xf32, #tpu.memory_space<vmem>>, vector<1x512xf32>
    tpu.vector_store %arg22[%c0_3, %c128], %0 {strides = array<i32>} : memref<1x768xf32, #tpu.memory_space<vmem>>, vector<1x512xf32>,
    %c0_4 = arith.constant 0 : index
    %c109 = arith.constant 109 : index
    %4 = vector.load %arg22[%c0_4, %c109] : memref<1x768xf32, #tpu.memory_space<vmem>>, vector<1x512xf32>
    %c0_5 = arith.constant 0 : index
    %c0_6 = arith.constant 0 : index
    %5 = vector.load %arg3[%c0_5, %c0_6] : memref<21x512xf32, #tpu.memory_space<vmem>>, vector<1x512xf32>
    %c0_7 = arith.constant 0 : index
    %c0_8 = arith.constant 0 : index
    %c0_9 = arith.constant 0 : index
    %6 = vector.load %arg2[%c0_7, %c0_8, %c0_9] : memref<21x16x1xf32, #tpu.memory_space<vmem>>, vector<1x16x1xf32>
    %7 = vector.shape_cast %6 : vector<1x16x1xf32> to vector<16x1xf32>
    %8 = arith.mulf %5, %4 : vector<1x512xf32>
    %9 = vector.broadcast %7 : vector<16x1xf32> to vector<16x512xf32>
    %10 = vector.broadcast %8 : vector<1x512xf32> to vector<16x512xf32>
    %11 = arith.mulf %9, %10 : vector<16x512xf32>
    %c0_10 = arith.constant 0 : index
    %c110 = arith.constant 110 : index
    %12 = vector.load %arg22[%c0_10, %c110] : memref<1x768xf32, #tpu.memory_space<vmem>>, vector<1x512xf32>
    %c1 = arith.constant 1 : index
    %c0_11 = arith.constant 0 : index
    %13 = vector.load %arg3[%c1, %c0_11] : memref<21x512xf32, #tpu.memory_space<vmem>>, vector<1x512xf32>
    %c1_12 = arith.constant 1 : index
    %c0_13 = arith.constant 0 : index
    %c0_14 = arith.constant 0 : index
    %14 = vector.load %arg2[%c1_12, %c0_13, %c0_14] : memref<21x16x1xf32, #tpu.memory_space<vmem>>, vector<1x16x1xf32>
    %15 = vector.shape_cast %14 : vector<1x16x1xf32> to vector<16x1xf32>
    %16 = arith.mulf %13, %12 : vector<1x512xf32>
    %17 = vector.broadcast %15 : vector<16x1xf32> to vector<16x512xf32>
    %18 = vector.broadcast %16 : vector<1x512xf32> to vector<16x512xf32>
    %19 = arith.mulf %17, %18 : vector<16x512xf32>
    %20 = arith.addf %11, %19 : vector<16x512xf32>
    %c0_15 = arith.constant 0 : index
    %c111 = arith.constant 111 : index
    %21 = vector.load %arg22[%c0_15, %c111] : memref<1x768xf32, #tpu.memory_space<vmem>>, vector<1x512xf32>
    %c2 = arith.constant 2 : index
    %c0_16 = arith.constant 0 : index
    %22 = vector.load %arg3[%c2, %c0_16] : memref<21x512xf32, #tpu.memory_space<vmem>>, vector<1x512xf32>
    %c2_17 = arith.constant 2 : index
    %c0_18 = arith.constant 0 : index
    %c0_19 = arith.constant 0 : index
    %23 = vector.load %arg2[%c2_17, %c0_18, %c0_19] : memref<21x16x1xf32, #tpu.memory_space<vmem>>, vector<1x16x1xf32>
    %24 = vector.shape_cast %23 : vector<1x16x1xf32> to vector<16x1xf32>
    %25 = arith.mulf %22, %21 : vector<1x512xf32>
    %26 = vector.broadcast %24 : vector<16x1xf32> to vector<16x512xf32>
    %27 = vector.broadcast %25 : vector<1x512xf32> to vector<16x512xf32>
    %28 = arith.mulf %26, %27 : vector<16x512xf32>
    %29 = arith.addf %20, %28 : vector<16x512xf32>
    %c0_20 = arith.constant 0 : index
    %c112 = arith.constant 112 : index
    %30 = vector.load %arg22[%c0_20, %c112] : memref<1x768xf32, #tpu.memory_space<vmem>>, vector<1x512xf32>
    %c3 = arith.constant 3 : index
    %c0_21 = arith.constant 0 : index
    %31 = vector.load %arg3[%c3, %c0_21] : memref<21x512xf32, #tpu.memory_space<vmem>>, vector<1x512xf32>
    %c3_22 = arith.constant 3 : index
    %c0_23 = arith.constant 0 : index
    %c0_24 = arith.constant 0 : index
    %32 = vector.load %arg2[%c3_22, %c0_23, %c0_24] : memref<21x16x1xf32, #tpu.memory_space<vmem>>, vector<1x16x1xf32>
    %33 = vector.shape_cast %32 : vector<1x16x1xf32> to vector<16x1xf32>
    %34 = arith.mulf %31, %30 : vector<1x512xf32>
    %35 = vector.broadcast %33 : vector<16x1xf32> to vector<16x512xf32>
    %36 = vector.broadcast %34 : vector<1x512xf32> to vector<16x512xf32>
    %37 = arith.mulf %35, %36 : vector<16x512xf32>
    %38 = arith.addf %29, %37 : vector<16x512xf32>
    %c0_25 = arith.constant 0 : index
    %c113 = arith.constant 113 : index
    %39 = vector.load %arg22[%c0_25, %c113] : memref<1x768xf32, #tpu.memory_space<vmem>>, vector<1x512xf32>
    %c4 = arith.constant 4 : index
    %c0_26 = arith.constant 0 : index
    %40 = vector.load %arg3[%c4, %c0_26] : memref<21x512xf32, #tpu.memory_space<vmem>>, vector<1x512xf32>
    %c4_27 = arith.constant 4 : index
    %c0_28 = arith.constant 0 : index
    %c0_29 = arith.constant 0 : index
    %41 = vector.load %arg2[%c4_27, %c0_28, %c0_29] : memref<21x16x1xf32, #tpu.memory_space<vmem>>, vector<1x16x1xf32>
    %42 = vector.shape_cast %41 : vector<1x16x1xf32> to vector<16x1xf32>
    %43 = arith.mulf %40, %39 : vector<1x512xf32>
    %44 = vector.broadcast %42 : vector<16x1xf32> to vector<16x512xf32>
    %45 = vector.broadcast %43 : vector<1x512xf32> to vector<16x512xf32>
    %46 = arith.mulf %44, %45 : vector<16x512xf32>
    %47 = arith.addf %38, %46 : vector<16x512xf32>
    %c0_30 = arith.constant 0 : index
    %c114 = arith.constant 114 : index
    %48 = vector.load %arg22[%c0_30, %c114] : memref<1x768xf32, #tpu.memory_space<vmem>>, vector<1x512xf32>
    %c5 = arith.constant 5 : index
    %c0_31 = arith.constant 0 : index
    %49 = vector.load %arg3[%c5, %c0_31] : memref<21x512xf32, #tpu.memory_space<vmem>>, vector<1x512xf32>
    %c5_32 = arith.constant 5 : index
    %c0_33 = arith.constant 0 : index
    %c0_34 = arith.constant 0 : index
    %50 = vector.load %arg2[%c5_32, %c0_33, %c0_34] : memref<21x16x1xf32, #tpu.memory_space<vmem>>, vector<1x16x1xf32>
    %51 = vector.shape_cast %50 : vector<1x16x1xf32> to vector<16x1xf32>
    %52 = arith.mulf %49, %48 : vector<1x512xf32>
    %53 = vector.broadcast %51 : vector<16x1xf32> to vector<16x512xf32>
    %54 = vector.broadcast %52 : vector<1x512xf32> to vector<16x512xf32>
    %55 = arith.mulf %53, %54 : vector<16x512xf32>
    %56 = arith.addf %47, %55 : vector<16x512xf32>
    %c0_35 = arith.constant 0 : index
    %c115 = arith.constant 115 : index
    %57 = vector.load %arg22[%c0_35, %c115] : memref<1x768xf32, #tpu.memory_space<vmem>>, vector<1x512xf32>
    %c6 = arith.constant 6 : index
    %c0_36 = arith.constant 0 : index
    %58 = vector.load %arg3[%c6, %c0_36] : memref<21x512xf32, #tpu.memory_space<vmem>>, vector<1x512xf32>
    %c6_37 = arith.constant 6 : index
    %c0_38 = arith.constant 0 : index
    %c0_39 = arith.constant 0 : index
    %59 = vector.load %arg2[%c6_37, %c0_38, %c0_39] : memref<21x16x1xf32, #tpu.memory_space<vmem>>, vector<1x16x1xf32>
    %60 = vector.shape_cast %59 : vector<1x16x1xf32> to vector<16x1xf32>
    %61 = arith.mulf %58, %57 : vector<1x512xf32>
    %62 = vector.broadcast %60 : vector<16x1xf32> to vector<16x512xf32>
    %63 = vector.broadcast %61 : vector<1x512xf32> to vector<16x512xf32>
    %64 = arith.mulf %62, %63 : vector<16x512xf32>
    %65 = arith.addf %56, %64 : vector<16x512xf32>
    %c0_40 = arith.constant 0 : index
    %c125 = arith.constant 125 : index
    %66 = vector.load %arg22[%c0_40, %c125] : memref<1x768xf32, #tpu.memory_space<vmem>>, vector<1x512xf32>
    %c7 = arith.constant 7 : index
    %c0_41 = arith.constant 0 : index
    %67 = vector.load %arg3[%c7, %c0_41] : memref<21x512xf32, #tpu.memory_space<vmem>>, vector<1x512xf32>
    %c7_42 = arith.constant 7 : index
    %c0_43 = arith.constant 0 : index
    %c0_44 = arith.constant 0 : index
    %68 = vector.load %arg2[%c7_42, %c0_43, %c0_44] : memref<21x16x1xf32, #tpu.memory_space<vmem>>, vector<1x16x1xf32>
    %69 = vector.shape_cast %68 : vector<1x16x1xf32> to vector<16x1xf32>
    %70 = arith.mulf %67, %66 : vector<1x512xf32>
    %71 = vector.broadcast %69 : vector<16x1xf32> to vector<16x512xf32>
    %72 = vector.broadcast %70 : vector<1x512xf32> to vector<16x512xf32>
    %73 = arith.mulf %71, %72 : vector<16x512xf32>
    %74 = arith.addf %65, %73 : vector<16x512xf32>
    %c0_45 = arith.constant 0 : index
    %c126 = arith.constant 126 : index
    %75 = vector.load %arg22[%c0_45, %c126] : memref<1x768xf32, #tpu.memory_space<vmem>>, vector<1x512xf32>
    %c8 = arith.constant 8 : index
    %c0_46 = arith.constant 0 : index
    %76 = vector.load %arg3[%c8, %c0_46] : memref<21x512xf32, #tpu.memory_space<vmem>>, vector<1x512xf32>
    %c8_47 = arith.constant 8 : index
    %c0_48 = arith.constant 0 : index
    %c0_49 = arith.constant 0 : index
    %77 = vector.load %arg2[%c8_47, %c0_48, %c0_49] : memref<21x16x1xf32, #tpu.memory_space<vmem>>, vector<1x16x1xf32>
    %78 = vector.shape_cast %77 : vector<1x16x1xf32> to vector<16x1xf32>
    %79 = arith.mulf %76, %75 : vector<1x512xf32>
    %80 = vector.broadcast %78 : vector<16x1xf32> to vector<16x512xf32>
    %81 = vector.broadcast %79 : vector<1x512xf32> to vector<16x512xf32>
    %82 = arith.mulf %80, %81 : vector<16x512xf32>
    %83 = arith.addf %74, %82 : vector<16x512xf32>
    %c0_50 = arith.constant 0 : index
    %c127 = arith.constant 127 : index
    %84 = vector.load %arg22[%c0_50, %c127] : memref<1x768xf32, #tpu.memory_space<vmem>>, vector<1x512xf32>
    %c9 = arith.constant 9 : index
    %c0_51 = arith.constant 0 : index
    %85 = vector.load %arg3[%c9, %c0_51] : memref<21x512xf32, #tpu.memory_space<vmem>>, vector<1x512xf32>
    %c9_52 = arith.constant 9 : index
    %c0_53 = arith.constant 0 : index
    %c0_54 = arith.constant 0 : index
    %86 = vector.load %arg2[%c9_52, %c0_53, %c0_54] : memref<21x16x1xf32, #tpu.memory_space<vmem>>, vector<1x16x1xf32>
    %87 = vector.shape_cast %86 : vector<1x16x1xf32> to vector<16x1xf32>
    %88 = arith.mulf %85, %84 : vector<1x512xf32>
    %89 = vector.broadcast %87 : vector<16x1xf32> to vector<16x512xf32>
    %90 = vector.broadcast %88 : vector<1x512xf32> to vector<16x512xf32>
    %91 = arith.mulf %89, %90 : vector<16x512xf32>
    %92 = arith.addf %83, %91 : vector<16x512xf32>
    %c0_55 = arith.constant 0 : index
    %c128_56 = arith.constant 128 : index
    %93 = vector.load %arg22[%c0_55, %c128_56] : memref<1x768xf32, #tpu.memory_space<vmem>>, vector<1x512xf32>
    %c10 = arith.constant 10 : index
    %c0_57 = arith.constant 0 : index
    %94 = vector.load %arg3[%c10, %c0_57] : memref<21x512xf32, #tpu.memory_space<vmem>>, vector<1x512xf32>
    %c10_58 = arith.constant 10 : index
    %c0_59 = arith.constant 0 : index
    %c0_60 = arith.constant 0 : index
    %95 = vector.load %arg2[%c10_58, %c0_59, %c0_60] : memref<21x16x1xf32, #tpu.memory_space<vmem>>, vector<1x16x1xf32>
    %96 = vector.shape_cast %95 : vector<1x16x1xf32> to vector<16x1xf32>
    %97 = arith.mulf %94, %93 : vector<1x512xf32>
    %98 = vector.broadcast %96 : vector<16x1xf32> to vector<16x512xf32>
    %99 = vector.broadcast %97 : vector<1x512xf32> to vector<16x512xf32>
    %100 = arith.mulf %98, %99 : vector<16x512xf32>
    %101 = arith.addf %92, %100 : vector<16x512xf32>
    %c0_61 = arith.constant 0 : index
    %c129 = arith.constant 129 : index
    %102 = vector.load %arg22[%c0_61, %c129] : memref<1x768xf32, #tpu.memory_space<vmem>>, vector<1x512xf32>
    %c11 = arith.constant 11 : index
    %c0_62 = arith.constant 0 : index
    %103 = vector.load %arg3[%c11, %c0_62] : memref<21x512xf32, #tpu.memory_space<vmem>>, vector<1x512xf32>
    %c11_63 = arith.constant 11 : index
    %c0_64 = arith.constant 0 : index
    %c0_65 = arith.constant 0 : index
    %104 = vector.load %arg2[%c11_63, %c0_64, %c0_65] : memref<21x16x1xf32, #tpu.memory_space<vmem>>, vector<1x16x1xf32>
    %105 = vector.shape_cast %104 : vector<1x16x1xf32> to vector<16x1xf32>
    %106 = arith.mulf %103, %102 : vector<1x512xf32>
    %107 = vector.broadcast %105 : vector<16x1xf32> to vector<16x512xf32>
    %108 = vector.broadcast %106 : vector<1x512xf32> to vector<16x512xf32>
    %109 = arith.mulf %107, %108 : vector<16x512xf32>
    %110 = arith.addf %101, %109 : vector<16x512xf32>
    %c0_66 = arith.constant 0 : index
    %c130 = arith.constant 130 : index
    %111 = vector.load %arg22[%c0_66, %c130] : memref<1x768xf32, #tpu.memory_space<vmem>>, vector<1x512xf32>
    %c12 = arith.constant 12 : index
    %c0_67 = arith.constant 0 : index
    %112 = vector.load %arg3[%c12, %c0_67] : memref<21x512xf32, #tpu.memory_space<vmem>>, vector<1x512xf32>
    %c12_68 = arith.constant 12 : index
    %c0_69 = arith.constant 0 : index
    %c0_70 = arith.constant 0 : index
    %113 = vector.load %arg2[%c12_68, %c0_69, %c0_70] : memref<21x16x1xf32, #tpu.memory_space<vmem>>, vector<1x16x1xf32>
    %114 = vector.shape_cast %113 : vector<1x16x1xf32> to vector<16x1xf32>
    %115 = arith.mulf %112, %111 : vector<1x512xf32>
    %116 = vector.broadcast %114 : vector<16x1xf32> to vector<16x512xf32>
    %117 = vector.broadcast %115 : vector<1x512xf32> to vector<16x512xf32>
    %118 = arith.mulf %116, %117 : vector<16x512xf32>
    %119 = arith.addf %110, %118 : vector<16x512xf32>
    %c0_71 = arith.constant 0 : index
    %c131 = arith.constant 131 : index
    %120 = vector.load %arg22[%c0_71, %c131] : memref<1x768xf32, #tpu.memory_space<vmem>>, vector<1x512xf32>
    %c13 = arith.constant 13 : index
    %c0_72 = arith.constant 0 : index
    %121 = vector.load %arg3[%c13, %c0_72] : memref<21x512xf32, #tpu.memory_space<vmem>>, vector<1x512xf32>
    %c13_73 = arith.constant 13 : index
    %c0_74 = arith.constant 0 : index
    %c0_75 = arith.constant 0 : index
    %122 = vector.load %arg2[%c13_73, %c0_74, %c0_75] : memref<21x16x1xf32, #tpu.memory_space<vmem>>, vector<1x16x1xf32>
    %123 = vector.shape_cast %122 : vector<1x16x1xf32> to vector<16x1xf32>
    %124 = arith.mulf %121, %120 : vector<1x512xf32>
    %125 = vector.broadcast %123 : vector<16x1xf32> to vector<16x512xf32>
    %126 = vector.broadcast %124 : vector<1x512xf32> to vector<16x512xf32>
    %127 = arith.mulf %125, %126 : vector<16x512xf32>
    %128 = arith.addf %119, %127 : vector<16x512xf32>
    %c0_76 = arith.constant 0 : index
    %c141 = arith.constant 141 : index
    %129 = vector.load %arg22[%c0_76, %c141] : memref<1x768xf32, #tpu.memory_space<vmem>>, vector<1x512xf32>
    %c14 = arith.constant 14 : index
    %c0_77 = arith.constant 0 : index
    %130 = vector.load %arg3[%c14, %c0_77] : memref<21x512xf32, #tpu.memory_space<vmem>>, vector<1x512xf32>
    %c14_78 = arith.constant 14 : index
    %c0_79 = arith.constant 0 : index
    %c0_80 = arith.constant 0 : index
    %131 = vector.load %arg2[%c14_78, %c0_79, %c0_80] : memref<21x16x1xf32, #tpu.memory_space<vmem>>, vector<1x16x1xf32>
    %132 = vector.shape_cast %131 : vector<1x16x1xf32> to vector<16x1xf32>
    %133 = arith.mulf %130, %129 : vector<1x512xf32>
    %134 = vector.broadcast %132 : vector<16x1xf32> to vector<16x512xf32>
    %135 = vector.broadcast %133 : vector<1x512xf32> to vector<16x512xf32>
    %136 = arith.mulf %134, %135 : vector<16x512xf32>
    %137 = arith.addf %128, %136 : vector<16x512xf32>
    %c0_81 = arith.constant 0 : index
    %c142 = arith.constant 142 : index
    %138 = vector.load %arg22[%c0_81, %c142] : memref<1x768xf32, #tpu.memory_space<vmem>>, vector<1x512xf32>
    %c15 = arith.constant 15 : index
    %c0_82 = arith.constant 0 : index
    %139 = vector.load %arg3[%c15, %c0_82] : memref<21x512xf32, #tpu.memory_space<vmem>>, vector<1x512xf32>
    %c15_83 = arith.constant 15 : index
    %c0_84 = arith.constant 0 : index
    %c0_85 = arith.constant 0 : index
    %140 = vector.load %arg2[%c15_83, %c0_84, %c0_85] : memref<21x16x1xf32, #tpu.memory_space<vmem>>, vector<1x16x1xf32>
    %141 = vector.shape_cast %140 : vector<1x16x1xf32> to vector<16x1xf32>
    %142 = arith.mulf %139, %138 : vector<1x512xf32>
    %143 = vector.broadcast %141 : vector<16x1xf32> to vector<16x512xf32>
    %144 = vector.broadcast %142 : vector<1x512xf32> to vector<16x512xf32>
    %145 = arith.mulf %143, %144 : vector<16x512xf32>
    %146 = arith.addf %137, %145 : vector<16x512xf32>
    %c0_86 = arith.constant 0 : index
    %c143 = arith.constant 143 : index
    %147 = vector.load %arg22[%c0_86, %c143] : memref<1x768xf32, #tpu.memory_space<vmem>>, vector<1x512xf32>
    %c16 = arith.constant 16 : index
    %c0_87 = arith.constant 0 : index
    %148 = vector.load %arg3[%c16, %c0_87] : memref<21x512xf32, #tpu.memory_space<vmem>>, vector<1x512xf32>
    %c16_88 = arith.constant 16 : index
    %c0_89 = arith.constant 0 : index
    %c0_90 = arith.constant 0 : index
    %149 = vector.load %arg2[%c16_88, %c0_89, %c0_90] : memref<21x16x1xf32, #tpu.memory_space<vmem>>, vector<1x16x1xf32>
    %150 = vector.shape_cast %149 : vector<1x16x1xf32> to vector<16x1xf32>
    %151 = arith.mulf %148, %147 : vector<1x512xf32>
    %152 = vector.broadcast %150 : vector<16x1xf32> to vector<16x512xf32>
    %153 = vector.broadcast %151 : vector<1x512xf32> to vector<16x512xf32>
    %154 = arith.mulf %152, %153 : vector<16x512xf32>
    %155 = arith.addf %146, %154 : vector<16x512xf32>
    %c0_91 = arith.constant 0 : index
    %c144 = arith.constant 144 : index
    %156 = vector.load %arg22[%c0_91, %c144] : memref<1x768xf32, #tpu.memory_space<vmem>>, vector<1x512xf32>
    %c17 = arith.constant 17 : index
    %c0_92 = arith.constant 0 : index
    %157 = vector.load %arg3[%c17, %c0_92] : memref<21x512xf32, #tpu.memory_space<vmem>>, vector<1x512xf32>
    %c17_93 = arith.constant 17 : index
    %c0_94 = arith.constant 0 : index
    %c0_95 = arith.constant 0 : index
    %158 = vector.load %arg2[%c17_93, %c0_94, %c0_95] : memref<21x16x1xf32, #tpu.memory_space<vmem>>, vector<1x16x1xf32>
    %159 = vector.shape_cast %158 : vector<1x16x1xf32> to vector<16x1xf32>
    %160 = arith.mulf %157, %156 : vector<1x512xf32>
    %161 = vector.broadcast %159 : vector<16x1xf32> to vector<16x512xf32>
    %162 = vector.broadcast %160 : vector<1x512xf32> to vector<16x512xf32>
    %163 = arith.mulf %161, %162 : vector<16x512xf32>
    %164 = arith.addf %155, %163 : vector<16x512xf32>
    %c0_96 = arith.constant 0 : index
    %c145 = arith.constant 145 : index
    %165 = vector.load %arg22[%c0_96, %c145] : memref<1x768xf32, #tpu.memory_space<vmem>>, vector<1x512xf32>
    %c18 = arith.constant 18 : index
    %c0_97 = arith.constant 0 : index
    %166 = vector.load %arg3[%c18, %c0_97] : memref<21x512xf32, #tpu.memory_space<vmem>>, vector<1x512xf32>
    %c18_98 = arith.constant 18 : index
    %c0_99 = arith.constant 0 : index
    %c0_100 = arith.constant 0 : index
    %167 = vector.load %arg2[%c18_98, %c0_99, %c0_100] : memref<21x16x1xf32, #tpu.memory_space<vmem>>, vector<1x16x1xf32>
    %168 = vector.shape_cast %167 : vector<1x16x1xf32> to vector<16x1xf32>
    %169 = arith.mulf %166, %165 : vector<1x512xf32>
    %170 = vector.broadcast %168 : vector<16x1xf32> to vector<16x512xf32>
    %171 = vector.broadcast %169 : vector<1x512xf32> to vector<16x512xf32>
    %172 = arith.mulf %170, %171 : vector<16x512xf32>
    %173 = arith.addf %164, %172 : vector<16x512xf32>
    %c0_101 = arith.constant 0 : index
    %c146 = arith.constant 146 : index
    %174 = vector.load %arg22[%c0_101, %c146] : memref<1x768xf32, #tpu.memory_space<vmem>>, vector<1x512xf32>
    %c19 = arith.constant 19 : index
    %c0_102 = arith.constant 0 : index
    %175 = vector.load %arg3[%c19, %c0_102] : memref<21x512xf32, #tpu.memory_space<vmem>>, vector<1x512xf32>
    %c19_103 = arith.constant 19 : index
    %c0_104 = arith.constant 0 : index
    %c0_105 = arith.constant 0 : index
    %176 = vector.load %arg2[%c19_103, %c0_104, %c0_105] : memref<21x16x1xf32, #tpu.memory_space<vmem>>, vector<1x16x1xf32>
    %177 = vector.shape_cast %176 : vector<1x16x1xf32> to vector<16x1xf32>
    %178 = arith.mulf %175, %174 : vector<1x512xf32>
    %179 = vector.broadcast %177 : vector<16x1xf32> to vector<16x512xf32>
    %180 = vector.broadcast %178 : vector<1x512xf32> to vector<16x512xf32>
    %181 = arith.mulf %179, %180 : vector<16x512xf32>
    %182 = arith.addf %173, %181 : vector<16x512xf32>
    %c0_106 = arith.constant 0 : index
    %c147 = arith.constant 147 : index
    %183 = vector.load %arg22[%c0_106, %c147] : memref<1x768xf32, #tpu.memory_space<vmem>>, vector<1x512xf32>
    %c20 = arith.constant 20 : index
    %c0_107 = arith.constant 0 : index
    %184 = vector.load %arg3[%c20, %c0_107] : memref<21x512xf32, #tpu.memory_space<vmem>>, vector<1x512xf32>
    %c20_108 = arith.constant 20 : index
    %c0_109 = arith.constant 0 : index
    %c0_110 = arith.constant 0 : index
    %185 = vector.load %arg2[%c20_108, %c0_109, %c0_110] : memref<21x16x1xf32, #tpu.memory_space<vmem>>, vector<1x16x1xf32>
    %186 = vector.shape_cast %185 : vector<1x16x1xf32> to vector<16x1xf32>
    %187 = arith.mulf %184, %183 : vector<1x512xf32>
    %188 = vector.broadcast %186 : vector<16x1xf32> to vector<16x512xf32>
    %189 = vector.broadcast %187 : vector<1x512xf32> to vector<16x512xf32>
    %190 = arith.mulf %188, %189 : vector<16x512xf32>
    %191 = arith.addf %182, %190 : vector<16x512xf32>
    %192 = math.tanh %191 : vector<16x512xf32>
    %cst_111 = arith.constant 0.000000e+00 : f32
    %193 = vector.broadcast %cst_111 : f32 to vector<16x768xf32>
    %c0_112 = arith.constant 0 : index
    %c0_113 = arith.constant 0 : index
    %194 = vector.load %arg25[%c0_112, %c0_113] : memref<16x768xf32, #tpu.memory_space<vmem>>, vector<16x768xf32>
    tpu.vector_store %arg25[%c0_112, %c0_113], %193 {strides = array<i32>} : memref<16x768xf32, #tpu.memory_space<vmem>>, vector<16x768xf32>,
    %c0_114 = arith.constant 0 : index
    %c128_115 = arith.constant 128 : index
    %195 = vector.load %arg25[%c0_114, %c128_115] : memref<16x768xf32, #tpu.memory_space<vmem>>, vector<16x512xf32>
    tpu.vector_store %arg25[%c0_114, %c128_115], %192 {strides = array<i32>} : memref<16x768xf32, #tpu.memory_space<vmem>>, vector<16x512xf32>,
    %c0_116 = arith.constant 0 : index
    %c0_117 = arith.constant 0 : index
    %196 = vector.load %arg4[%c0_116, %c0_117] : memref<512x128xf32, #tpu.memory_space<vmem>>, vector<512x128xf32>
    %cst_118 = arith.constant dense<0.000000e+00> : vector<16x128xf32>
    %197 = tpu.matmul %192, %196, %cst_118 {dimension_numbers = #tpu.dot_dimension_numbers<[1], [0], [0], [1], [0, 0, 1, 1], [], []>} : vector<16x512xf32>, vector<512x128xf32>, vector<16x128xf32> -> vector<16x128xf32>
    %cst_119 = arith.constant 0.000000e+00 : f32
    %198 = vector.broadcast %cst_119 : f32 to vector<16x384xf32>
    %c0_120 = arith.constant 0 : index
    %c0_121 = arith.constant 0 : index
    %199 = vector.load %arg23[%c0_120, %c0_121] : memref<16x384xf32, #tpu.memory_space<vmem>>, vector<16x384xf32>
    tpu.vector_store %arg23[%c0_120, %c0_121], %198 {strides = array<i32>} : memref<16x384xf32, #tpu.memory_space<vmem>>, vector<16x384xf32>,
    %c0_122 = arith.constant 0 : index
    %c128_123 = arith.constant 128 : index
    %200 = vector.load %arg23[%c0_122, %c128_123] : memref<16x384xf32, #tpu.memory_space<vmem>>, vector<16x128xf32>
    tpu.vector_store %arg23[%c0_122, %c128_123], %197 {strides = array<i32>} : memref<16x384xf32, #tpu.memory_space<vmem>>, vector<16x128xf32>,
    %c0_124 = arith.constant 0 : index
    %c118 = arith.constant 118 : index
    %201 = vector.load %arg23[%c0_124, %c118] : memref<16x384xf32, #tpu.memory_space<vmem>>, vector<16x128xf32>
    %c0_125 = arith.constant 0 : index
    %c0_126 = arith.constant 0 : index
    %202 = vector.load %arg6[%c0_125, %c0_126] : memref<15x128xf32, #tpu.memory_space<vmem>>, vector<1x128xf32>
    %c0_127 = arith.constant 0 : index
    %c0_128 = arith.constant 0 : index
    %c0_129 = arith.constant 0 : index
    %203 = vector.load %arg5[%c0_127, %c0_128, %c0_129] : memref<15x32x16xf32, #tpu.memory_space<vmem>>, vector<1x32x16xf32>
    %204 = vector.shape_cast %203 : vector<1x32x16xf32> to vector<32x16xf32>
    %205 = vector.broadcast %202 : vector<1x128xf32> to vector<16x128xf32>
    %206 = arith.mulf %205, %201 : vector<16x128xf32>
    %cst_130 = arith.constant dense<0.000000e+00> : vector<32x128xf32>
    %207 = tpu.matmul %204, %206, %cst_130 {dimension_numbers = #tpu.dot_dimension_numbers<[1], [0], [0], [1], [0, 0, 1, 1], [], []>} : vector<32x16xf32>, vector<16x128xf32>, vector<32x128xf32> -> vector<32x128xf32>
    %c0_131 = arith.constant 0 : index
    %c119 = arith.constant 119 : index
    %208 = vector.load %arg23[%c0_131, %c119] : memref<16x384xf32, #tpu.memory_space<vmem>>, vector<16x128xf32>
    %c1_132 = arith.constant 1 : index
    %c0_133 = arith.constant 0 : index
    %209 = vector.load %arg6[%c1_132, %c0_133] : memref<15x128xf32, #tpu.memory_space<vmem>>, vector<1x128xf32>
    %c1_134 = arith.constant 1 : index
    %c0_135 = arith.constant 0 : index
    %c0_136 = arith.constant 0 : index
    %210 = vector.load %arg5[%c1_134, %c0_135, %c0_136] : memref<15x32x16xf32, #tpu.memory_space<vmem>>, vector<1x32x16xf32>
    %211 = vector.shape_cast %210 : vector<1x32x16xf32> to vector<32x16xf32>
    %212 = vector.broadcast %209 : vector<1x128xf32> to vector<16x128xf32>
    %213 = arith.mulf %212, %208 : vector<16x128xf32>
    %cst_137 = arith.constant dense<0.000000e+00> : vector<32x128xf32>
    %214 = tpu.matmul %211, %213, %cst_137 {dimension_numbers = #tpu.dot_dimension_numbers<[1], [0], [0], [1], [0, 0, 1, 1], [], []>} : vector<32x16xf32>, vector<16x128xf32>, vector<32x128xf32> -> vector<32x128xf32>
    %215 = arith.addf %207, %214 : vector<32x128xf32>
    %c0_138 = arith.constant 0 : index
    %c120 = arith.constant 120 : index
    %216 = vector.load %arg23[%c0_138, %c120] : memref<16x384xf32, #tpu.memory_space<vmem>>, vector<16x128xf32>
    %c2_139 = arith.constant 2 : index
    %c0_140 = arith.constant 0 : index
    %217 = vector.load %arg6[%c2_139, %c0_140] : memref<15x128xf32, #tpu.memory_space<vmem>>, vector<1x128xf32>
    %c2_141 = arith.constant 2 : index
    %c0_142 = arith.constant 0 : index
    %c0_143 = arith.constant 0 : index
    %218 = vector.load %arg5[%c2_141, %c0_142, %c0_143] : memref<15x32x16xf32, #tpu.memory_space<vmem>>, vector<1x32x16xf32>
    %219 = vector.shape_cast %218 : vector<1x32x16xf32> to vector<32x16xf32>
    %220 = vector.broadcast %217 : vector<1x128xf32> to vector<16x128xf32>
    %221 = arith.mulf %220, %216 : vector<16x128xf32>
    %cst_144 = arith.constant dense<0.000000e+00> : vector<32x128xf32>
    %222 = tpu.matmul %219, %221, %cst_144 {dimension_numbers = #tpu.dot_dimension_numbers<[1], [0], [0], [1], [0, 0, 1, 1], [], []>} : vector<32x16xf32>, vector<16x128xf32>, vector<32x128xf32> -> vector<32x128xf32>
    %223 = arith.addf %215, %222 : vector<32x128xf32>
    %c0_145 = arith.constant 0 : index
    %c121 = arith.constant 121 : index
    %224 = vector.load %arg23[%c0_145, %c121] : memref<16x384xf32, #tpu.memory_space<vmem>>, vector<16x128xf32>
    %c3_146 = arith.constant 3 : index
    %c0_147 = arith.constant 0 : index
    %225 = vector.load %arg6[%c3_146, %c0_147] : memref<15x128xf32, #tpu.memory_space<vmem>>, vector<1x128xf32>
    %c3_148 = arith.constant 3 : index
    %c0_149 = arith.constant 0 : index
    %c0_150 = arith.constant 0 : index
    %226 = vector.load %arg5[%c3_148, %c0_149, %c0_150] : memref<15x32x16xf32, #tpu.memory_space<vmem>>, vector<1x32x16xf32>
    %227 = vector.shape_cast %226 : vector<1x32x16xf32> to vector<32x16xf32>
    %228 = vector.broadcast %225 : vector<1x128xf32> to vector<16x128xf32>
    %229 = arith.mulf %228, %224 : vector<16x128xf32>
    %cst_151 = arith.constant dense<0.000000e+00> : vector<32x128xf32>
    %230 = tpu.matmul %227, %229, %cst_151 {dimension_numbers = #tpu.dot_dimension_numbers<[1], [0], [0], [1], [0, 0, 1, 1], [], []>} : vector<32x16xf32>, vector<16x128xf32>, vector<32x128xf32> -> vector<32x128xf32>
    %231 = arith.addf %223, %230 : vector<32x128xf32>
    %c0_152 = arith.constant 0 : index
    %c122 = arith.constant 122 : index
    %232 = vector.load %arg23[%c0_152, %c122] : memref<16x384xf32, #tpu.memory_space<vmem>>, vector<16x128xf32>
    %c4_153 = arith.constant 4 : index
    %c0_154 = arith.constant 0 : index
    %233 = vector.load %arg6[%c4_153, %c0_154] : memref<15x128xf32, #tpu.memory_space<vmem>>, vector<1x128xf32>
    %c4_155 = arith.constant 4 : index
    %c0_156 = arith.constant 0 : index
    %c0_157 = arith.constant 0 : index
    %234 = vector.load %arg5[%c4_155, %c0_156, %c0_157] : memref<15x32x16xf32, #tpu.memory_space<vmem>>, vector<1x32x16xf32>
    %235 = vector.shape_cast %234 : vector<1x32x16xf32> to vector<32x16xf32>
    %236 = vector.broadcast %233 : vector<1x128xf32> to vector<16x128xf32>
    %237 = arith.mulf %236, %232 : vector<16x128xf32>
    %cst_158 = arith.constant dense<0.000000e+00> : vector<32x128xf32>
    %238 = tpu.matmul %235, %237, %cst_158 {dimension_numbers = #tpu.dot_dimension_numbers<[1], [0], [0], [1], [0, 0, 1, 1], [], []>} : vector<32x16xf32>, vector<16x128xf32>, vector<32x128xf32> -> vector<32x128xf32>
    %239 = arith.addf %231, %238 : vector<32x128xf32>
    %c0_159 = arith.constant 0 : index
    %c126_160 = arith.constant 126 : index
    %240 = vector.load %arg23[%c0_159, %c126_160] : memref<16x384xf32, #tpu.memory_space<vmem>>, vector<16x128xf32>
    %c5_161 = arith.constant 5 : index
    %c0_162 = arith.constant 0 : index
    %241 = vector.load %arg6[%c5_161, %c0_162] : memref<15x128xf32, #tpu.memory_space<vmem>>, vector<1x128xf32>
    %c5_163 = arith.constant 5 : index
    %c0_164 = arith.constant 0 : index
    %c0_165 = arith.constant 0 : index
    %242 = vector.load %arg5[%c5_163, %c0_164, %c0_165] : memref<15x32x16xf32, #tpu.memory_space<vmem>>, vector<1x32x16xf32>
    %243 = vector.shape_cast %242 : vector<1x32x16xf32> to vector<32x16xf32>
    %244 = vector.broadcast %241 : vector<1x128xf32> to vector<16x128xf32>
    %245 = arith.mulf %244, %240 : vector<16x128xf32>
    %cst_166 = arith.constant dense<0.000000e+00> : vector<32x128xf32>
    %246 = tpu.matmul %243, %245, %cst_166 {dimension_numbers = #tpu.dot_dimension_numbers<[1], [0], [0], [1], [0, 0, 1, 1], [], []>} : vector<32x16xf32>, vector<16x128xf32>, vector<32x128xf32> -> vector<32x128xf32>
    %247 = arith.addf %239, %246 : vector<32x128xf32>
    %c0_167 = arith.constant 0 : index
    %c127_168 = arith.constant 127 : index
    %248 = vector.load %arg23[%c0_167, %c127_168] : memref<16x384xf32, #tpu.memory_space<vmem>>, vector<16x128xf32>
    %c6_169 = arith.constant 6 : index
    %c0_170 = arith.constant 0 : index
    %249 = vector.load %arg6[%c6_169, %c0_170] : memref<15x128xf32, #tpu.memory_space<vmem>>, vector<1x128xf32>
    %c6_171 = arith.constant 6 : index
    %c0_172 = arith.constant 0 : index
    %c0_173 = arith.constant 0 : index
    %250 = vector.load %arg5[%c6_171, %c0_172, %c0_173] : memref<15x32x16xf32, #tpu.memory_space<vmem>>, vector<1x32x16xf32>
    %251 = vector.shape_cast %250 : vector<1x32x16xf32> to vector<32x16xf32>
    %252 = vector.broadcast %249 : vector<1x128xf32> to vector<16x128xf32>
    %253 = arith.mulf %252, %248 : vector<16x128xf32>
    %cst_174 = arith.constant dense<0.000000e+00> : vector<32x128xf32>
    %254 = tpu.matmul %251, %253, %cst_174 {dimension_numbers = #tpu.dot_dimension_numbers<[1], [0], [0], [1], [0, 0, 1, 1], [], []>} : vector<32x16xf32>, vector<16x128xf32>, vector<32x128xf32> -> vector<32x128xf32>
    %255 = arith.addf %247, %254 : vector<32x128xf32>
    %c0_175 = arith.constant 0 : index
    %c128_176 = arith.constant 128 : index
    %256 = vector.load %arg23[%c0_175, %c128_176] : memref<16x384xf32, #tpu.memory_space<vmem>>, vector<16x128xf32>
    %c7_177 = arith.constant 7 : index
    %c0_178 = arith.constant 0 : index
    %257 = vector.load %arg6[%c7_177, %c0_178] : memref<15x128xf32, #tpu.memory_space<vmem>>, vector<1x128xf32>
    %c7_179 = arith.constant 7 : index
    %c0_180 = arith.constant 0 : index
    %c0_181 = arith.constant 0 : index
    %258 = vector.load %arg5[%c7_179, %c0_180, %c0_181] : memref<15x32x16xf32, #tpu.memory_space<vmem>>, vector<1x32x16xf32>
    %259 = vector.shape_cast %258 : vector<1x32x16xf32> to vector<32x16xf32>
    %260 = vector.broadcast %257 : vector<1x128xf32> to vector<16x128xf32>
    %261 = arith.mulf %260, %256 : vector<16x128xf32>
    %cst_182 = arith.constant dense<0.000000e+00> : vector<32x128xf32>
    %262 = tpu.matmul %259, %261, %cst_182 {dimension_numbers = #tpu.dot_dimension_numbers<[1], [0], [0], [1], [0, 0, 1, 1], [], []>} : vector<32x16xf32>, vector<16x128xf32>, vector<32x128xf32> -> vector<32x128xf32>
    %263 = arith.addf %255, %262 : vector<32x128xf32>
    %c0_183 = arith.constant 0 : index
    %c129_184 = arith.constant 129 : index
    %264 = vector.load %arg23[%c0_183, %c129_184] : memref<16x384xf32, #tpu.memory_space<vmem>>, vector<16x128xf32>
    %c8_185 = arith.constant 8 : index
    %c0_186 = arith.constant 0 : index
    %265 = vector.load %arg6[%c8_185, %c0_186] : memref<15x128xf32, #tpu.memory_space<vmem>>, vector<1x128xf32>
    %c8_187 = arith.constant 8 : index
    %c0_188 = arith.constant 0 : index
    %c0_189 = arith.constant 0 : index
    %266 = vector.load %arg5[%c8_187, %c0_188, %c0_189] : memref<15x32x16xf32, #tpu.memory_space<vmem>>, vector<1x32x16xf32>
    %267 = vector.shape_cast %266 : vector<1x32x16xf32> to vector<32x16xf32>
    %268 = vector.broadcast %265 : vector<1x128xf32> to vector<16x128xf32>
    %269 = arith.mulf %268, %264 : vector<16x128xf32>
    %cst_190 = arith.constant dense<0.000000e+00> : vector<32x128xf32>
    %270 = tpu.matmul %267, %269, %cst_190 {dimension_numbers = #tpu.dot_dimension_numbers<[1], [0], [0], [1], [0, 0, 1, 1], [], []>} : vector<32x16xf32>, vector<16x128xf32>, vector<32x128xf32> -> vector<32x128xf32>
    %271 = arith.addf %263, %270 : vector<32x128xf32>
    %c0_191 = arith.constant 0 : index
    %c130_192 = arith.constant 130 : index
    %272 = vector.load %arg23[%c0_191, %c130_192] : memref<16x384xf32, #tpu.memory_space<vmem>>, vector<16x128xf32>
    %c9_193 = arith.constant 9 : index
    %c0_194 = arith.constant 0 : index
    %273 = vector.load %arg6[%c9_193, %c0_194] : memref<15x128xf32, #tpu.memory_space<vmem>>, vector<1x128xf32>
    %c9_195 = arith.constant 9 : index
    %c0_196 = arith.constant 0 : index
    %c0_197 = arith.constant 0 : index
    %274 = vector.load %arg5[%c9_195, %c0_196, %c0_197] : memref<15x32x16xf32, #tpu.memory_space<vmem>>, vector<1x32x16xf32>
    %275 = vector.shape_cast %274 : vector<1x32x16xf32> to vector<32x16xf32>
    %276 = vector.broadcast %273 : vector<1x128xf32> to vector<16x128xf32>
    %277 = arith.mulf %276, %272 : vector<16x128xf32>
    %cst_198 = arith.constant dense<0.000000e+00> : vector<32x128xf32>
    %278 = tpu.matmul %275, %277, %cst_198 {dimension_numbers = #tpu.dot_dimension_numbers<[1], [0], [0], [1], [0, 0, 1, 1], [], []>} : vector<32x16xf32>, vector<16x128xf32>, vector<32x128xf32> -> vector<32x128xf32>
    %279 = arith.addf %271, %278 : vector<32x128xf32>
    %c0_199 = arith.constant 0 : index
    %c134 = arith.constant 134 : index
    %280 = vector.load %arg23[%c0_199, %c134] : memref<16x384xf32, #tpu.memory_space<vmem>>, vector<16x128xf32>
    %c10_200 = arith.constant 10 : index
    %c0_201 = arith.constant 0 : index
    %281 = vector.load %arg6[%c10_200, %c0_201] : memref<15x128xf32, #tpu.memory_space<vmem>>, vector<1x128xf32>
    %c10_202 = arith.constant 10 : index
    %c0_203 = arith.constant 0 : index
    %c0_204 = arith.constant 0 : index
    %282 = vector.load %arg5[%c10_202, %c0_203, %c0_204] : memref<15x32x16xf32, #tpu.memory_space<vmem>>, vector<1x32x16xf32>
    %283 = vector.shape_cast %282 : vector<1x32x16xf32> to vector<32x16xf32>
    %284 = vector.broadcast %281 : vector<1x128xf32> to vector<16x128xf32>
    %285 = arith.mulf %284, %280 : vector<16x128xf32>
    %cst_205 = arith.constant dense<0.000000e+00> : vector<32x128xf32>
    %286 = tpu.matmul %283, %285, %cst_205 {dimension_numbers = #tpu.dot_dimension_numbers<[1], [0], [0], [1], [0, 0, 1, 1], [], []>} : vector<32x16xf32>, vector<16x128xf32>, vector<32x128xf32> -> vector<32x128xf32>
    %287 = arith.addf %279, %286 : vector<32x128xf32>
    %c0_206 = arith.constant 0 : index
    %c135 = arith.constant 135 : index
    %288 = vector.load %arg23[%c0_206, %c135] : memref<16x384xf32, #tpu.memory_space<vmem>>, vector<16x128xf32>
    %c11_207 = arith.constant 11 : index
    %c0_208 = arith.constant 0 : index
    %289 = vector.load %arg6[%c11_207, %c0_208] : memref<15x128xf32, #tpu.memory_space<vmem>>, vector<1x128xf32>
    %c11_209 = arith.constant 11 : index
    %c0_210 = arith.constant 0 : index
    %c0_211 = arith.constant 0 : index
    %290 = vector.load %arg5[%c11_209, %c0_210, %c0_211] : memref<15x32x16xf32, #tpu.memory_space<vmem>>, vector<1x32x16xf32>
    %291 = vector.shape_cast %290 : vector<1x32x16xf32> to vector<32x16xf32>
    %292 = vector.broadcast %289 : vector<1x128xf32> to vector<16x128xf32>
    %293 = arith.mulf %292, %288 : vector<16x128xf32>
    %cst_212 = arith.constant dense<0.000000e+00> : vector<32x128xf32>
    %294 = tpu.matmul %291, %293, %cst_212 {dimension_numbers = #tpu.dot_dimension_numbers<[1], [0], [0], [1], [0, 0, 1, 1], [], []>} : vector<32x16xf32>, vector<16x128xf32>, vector<32x128xf32> -> vector<32x128xf32>
    %295 = arith.addf %287, %294 : vector<32x128xf32>
    %c0_213 = arith.constant 0 : index
    %c136 = arith.constant 136 : index
    %296 = vector.load %arg23[%c0_213, %c136] : memref<16x384xf32, #tpu.memory_space<vmem>>, vector<16x128xf32>
    %c12_214 = arith.constant 12 : index
    %c0_215 = arith.constant 0 : index
    %297 = vector.load %arg6[%c12_214, %c0_215] : memref<15x128xf32, #tpu.memory_space<vmem>>, vector<1x128xf32>
    %c12_216 = arith.constant 12 : index
    %c0_217 = arith.constant 0 : index
    %c0_218 = arith.constant 0 : index
    %298 = vector.load %arg5[%c12_216, %c0_217, %c0_218] : memref<15x32x16xf32, #tpu.memory_space<vmem>>, vector<1x32x16xf32>
    %299 = vector.shape_cast %298 : vector<1x32x16xf32> to vector<32x16xf32>
    %300 = vector.broadcast %297 : vector<1x128xf32> to vector<16x128xf32>
    %301 = arith.mulf %300, %296 : vector<16x128xf32>
    %cst_219 = arith.constant dense<0.000000e+00> : vector<32x128xf32>
    %302 = tpu.matmul %299, %301, %cst_219 {dimension_numbers = #tpu.dot_dimension_numbers<[1], [0], [0], [1], [0, 0, 1, 1], [], []>} : vector<32x16xf32>, vector<16x128xf32>, vector<32x128xf32> -> vector<32x128xf32>
    %303 = arith.addf %295, %302 : vector<32x128xf32>
    %c0_220 = arith.constant 0 : index
    %c137 = arith.constant 137 : index
    %304 = vector.load %arg23[%c0_220, %c137] : memref<16x384xf32, #tpu.memory_space<vmem>>, vector<16x128xf32>
    %c13_221 = arith.constant 13 : index
    %c0_222 = arith.constant 0 : index
    %305 = vector.load %arg6[%c13_221, %c0_222] : memref<15x128xf32, #tpu.memory_space<vmem>>, vector<1x128xf32>
    %c13_223 = arith.constant 13 : index
    %c0_224 = arith.constant 0 : index
    %c0_225 = arith.constant 0 : index
    %306 = vector.load %arg5[%c13_223, %c0_224, %c0_225] : memref<15x32x16xf32, #tpu.memory_space<vmem>>, vector<1x32x16xf32>
    %307 = vector.shape_cast %306 : vector<1x32x16xf32> to vector<32x16xf32>
    %308 = vector.broadcast %305 : vector<1x128xf32> to vector<16x128xf32>
    %309 = arith.mulf %308, %304 : vector<16x128xf32>
    %cst_226 = arith.constant dense<0.000000e+00> : vector<32x128xf32>
    %310 = tpu.matmul %307, %309, %cst_226 {dimension_numbers = #tpu.dot_dimension_numbers<[1], [0], [0], [1], [0, 0, 1, 1], [], []>} : vector<32x16xf32>, vector<16x128xf32>, vector<32x128xf32> -> vector<32x128xf32>
    %311 = arith.addf %303, %310 : vector<32x128xf32>
    %c0_227 = arith.constant 0 : index
    %c138 = arith.constant 138 : index
    %312 = vector.load %arg23[%c0_227, %c138] : memref<16x384xf32, #tpu.memory_space<vmem>>, vector<16x128xf32>
    %c14_228 = arith.constant 14 : index
    %c0_229 = arith.constant 0 : index
    %313 = vector.load %arg6[%c14_228, %c0_229] : memref<15x128xf32, #tpu.memory_space<vmem>>, vector<1x128xf32>
    %c14_230 = arith.constant 14 : index
    %c0_231 = arith.constant 0 : index
    %c0_232 = arith.constant 0 : index
    %314 = vector.load %arg5[%c14_230, %c0_231, %c0_232] : memref<15x32x16xf32, #tpu.memory_space<vmem>>, vector<1x32x16xf32>
    %315 = vector.shape_cast %314 : vector<1x32x16xf32> to vector<32x16xf32>
    %316 = vector.broadcast %313 : vector<1x128xf32> to vector<16x128xf32>
    %317 = arith.mulf %316, %312 : vector<16x128xf32>
    %cst_233 = arith.constant dense<0.000000e+00> : vector<32x128xf32>
    %318 = tpu.matmul %315, %317, %cst_233 {dimension_numbers = #tpu.dot_dimension_numbers<[1], [0], [0], [1], [0, 0, 1, 1], [], []>} : vector<32x16xf32>, vector<16x128xf32>, vector<32x128xf32> -> vector<32x128xf32>
    %319 = arith.addf %311, %318 : vector<32x128xf32>
    %320 = math.tanh %319 : vector<32x128xf32>
    %c0_234 = arith.constant 0 : index
    %c0_235 = arith.constant 0 : index
    %321 = vector.load %arg8[%c0_234, %c0_235] : memref<4x512xf32, #tpu.memory_space<vmem>>, vector<4x512xf32>
    %c0_236 = arith.constant 0 : index
    %c0_237 = arith.constant 0 : index
    %c0_238 = arith.constant 0 : index
    %c0_239 = arith.constant 0 : index
    %322 = vector.load %arg9[%c0_236, %c0_237, %c0_238, %c0_239] : memref<2x2x128x512xf32, #tpu.memory_space<vmem>>, vector<1x1x128x512xf32>
    %323 = vector.shape_cast %322 : vector<1x1x128x512xf32> to vector<128x512xf32>
    %cst_240 = arith.constant dense<0.000000e+00> : vector<32x512xf32>
    %324 = tpu.matmul %320, %323, %cst_240 {dimension_numbers = #tpu.dot_dimension_numbers<[1], [0], [0], [1], [0, 0, 1, 1], [], []>} : vector<32x128xf32>, vector<128x512xf32>, vector<32x512xf32> -> vector<32x512xf32>
    %c0_241 = arith.constant 0 : index
    %c0_242 = arith.constant 0 : index
    %c0_243 = arith.constant 0 : index
    %c0_244 = arith.constant 0 : index
    %325 = vector.load %arg7[%c0_241, %c0_242, %c0_243, %c0_244] : memref<2x2x32x4xf32, #tpu.memory_space<vmem>>, vector<1x1x32x4xf32>
    %326 = vector.shape_cast %325 : vector<1x1x32x4xf32> to vector<32x4xf32>
    %cst_245 = arith.constant dense<0.000000e+00> : vector<32x512xf32>
    %327 = tpu.matmul %326, %321, %cst_245 {dimension_numbers = #tpu.dot_dimension_numbers<[1], [0], [0], [1], [0, 0, 1, 1], [], []>} : vector<32x4xf32>, vector<4x512xf32>, vector<32x512xf32> -> vector<32x512xf32>
    %328 = arith.mulf %324, %327 : vector<32x512xf32>
    %c0_246 = arith.constant 0 : index
    %c1_247 = arith.constant 1 : index
    %c0_248 = arith.constant 0 : index
    %c0_249 = arith.constant 0 : index
    %329 = vector.load %arg9[%c0_246, %c1_247, %c0_248, %c0_249] : memref<2x2x128x512xf32, #tpu.memory_space<vmem>>, vector<1x1x128x512xf32>
    %330 = vector.shape_cast %329 : vector<1x1x128x512xf32> to vector<128x512xf32>
    %cst_250 = arith.constant dense<0.000000e+00> : vector<32x512xf32>
    %331 = tpu.matmul %320, %330, %cst_250 {dimension_numbers = #tpu.dot_dimension_numbers<[1], [0], [0], [1], [0, 0, 1, 1], [], []>} : vector<32x128xf32>, vector<128x512xf32>, vector<32x512xf32> -> vector<32x512xf32>
    %c0_251 = arith.constant 0 : index
    %c1_252 = arith.constant 1 : index
    %c0_253 = arith.constant 0 : index
    %c0_254 = arith.constant 0 : index
    %332 = vector.load %arg7[%c0_251, %c1_252, %c0_253, %c0_254] : memref<2x2x32x4xf32, #tpu.memory_space<vmem>>, vector<1x1x32x4xf32>
    %333 = vector.shape_cast %332 : vector<1x1x32x4xf32> to vector<32x4xf32>
    %cst_255 = arith.constant dense<0.000000e+00> : vector<32x512xf32>
    %334 = tpu.matmul %333, %321, %cst_255 {dimension_numbers = #tpu.dot_dimension_numbers<[1], [0], [0], [1], [0, 0, 1, 1], [], []>} : vector<32x4xf32>, vector<4x512xf32>, vector<32x512xf32> -> vector<32x512xf32>
    %335 = arith.mulf %331, %334 : vector<32x512xf32>
    %336 = arith.addf %328, %335 : vector<32x512xf32>
    %c1_256 = arith.constant 1 : index
    %c0_257 = arith.constant 0 : index
    %c0_258 = arith.constant 0 : index
    %c0_259 = arith.constant 0 : index
    %337 = vector.load %arg9[%c1_256, %c0_257, %c0_258, %c0_259] : memref<2x2x128x512xf32, #tpu.memory_space<vmem>>, vector<1x1x128x512xf32>
    %338 = vector.shape_cast %337 : vector<1x1x128x512xf32> to vector<128x512xf32>
    %cst_260 = arith.constant dense<0.000000e+00> : vector<32x512xf32>
    %339 = tpu.matmul %320, %338, %cst_260 {dimension_numbers = #tpu.dot_dimension_numbers<[1], [0], [0], [1], [0, 0, 1, 1], [], []>} : vector<32x128xf32>, vector<128x512xf32>, vector<32x512xf32> -> vector<32x512xf32>
    %c1_261 = arith.constant 1 : index
    %c0_262 = arith.constant 0 : index
    %c0_263 = arith.constant 0 : index
    %c0_264 = arith.constant 0 : index
    %340 = vector.load %arg7[%c1_261, %c0_262, %c0_263, %c0_264] : memref<2x2x32x4xf32, #tpu.memory_space<vmem>>, vector<1x1x32x4xf32>
    %341 = vector.shape_cast %340 : vector<1x1x32x4xf32> to vector<32x4xf32>
    %cst_265 = arith.constant dense<0.000000e+00> : vector<32x512xf32>
    %342 = tpu.matmul %341, %321, %cst_265 {dimension_numbers = #tpu.dot_dimension_numbers<[1], [0], [0], [1], [0, 0, 1, 1], [], []>} : vector<32x4xf32>, vector<4x512xf32>, vector<32x512xf32> -> vector<32x512xf32>
    %343 = arith.mulf %339, %342 : vector<32x512xf32>
    %344 = arith.addf %336, %343 : vector<32x512xf32>
    %c1_266 = arith.constant 1 : index
    %c1_267 = arith.constant 1 : index
    %c0_268 = arith.constant 0 : index
    %c0_269 = arith.constant 0 : index
    %345 = vector.load %arg9[%c1_266, %c1_267, %c0_268, %c0_269] : memref<2x2x128x512xf32, #tpu.memory_space<vmem>>, vector<1x1x128x512xf32>
    %346 = vector.shape_cast %345 : vector<1x1x128x512xf32> to vector<128x512xf32>
    %cst_270 = arith.constant dense<0.000000e+00> : vector<32x512xf32>
    %347 = tpu.matmul %320, %346, %cst_270 {dimension_numbers = #tpu.dot_dimension_numbers<[1], [0], [0], [1], [0, 0, 1, 1], [], []>} : vector<32x128xf32>, vector<128x512xf32>, vector<32x512xf32> -> vector<32x512xf32>
    %c1_271 = arith.constant 1 : index
    %c1_272 = arith.constant 1 : index
    %c0_273 = arith.constant 0 : index
    %c0_274 = arith.constant 0 : index
    %348 = vector.load %arg7[%c1_271, %c1_272, %c0_273, %c0_274] : memref<2x2x32x4xf32, #tpu.memory_space<vmem>>, vector<1x1x32x4xf32>
    %349 = vector.shape_cast %348 : vector<1x1x32x4xf32> to vector<32x4xf32>
    %cst_275 = arith.constant dense<0.000000e+00> : vector<32x512xf32>
    %350 = tpu.matmul %349, %321, %cst_275 {dimension_numbers = #tpu.dot_dimension_numbers<[1], [0], [0], [1], [0, 0, 1, 1], [], []>} : vector<32x4xf32>, vector<4x512xf32>, vector<32x512xf32> -> vector<32x512xf32>
    %351 = arith.mulf %347, %350 : vector<32x512xf32>
    %352 = arith.addf %344, %351 : vector<32x512xf32>
    %c0_276 = arith.constant 0 : index
    %c0_277 = arith.constant 0 : index
    %353 = vector.load %arg10[%c0_276, %c0_277] : memref<32x1xf32, #tpu.memory_space<vmem>>, vector<32x1xf32>
    %354 = vector.broadcast %353 : vector<32x1xf32> to vector<32x512xf32>
    %355 = arith.addf %352, %354 : vector<32x512xf32>
    %cst_278 = arith.constant 0.000000e+00 : f32
    %356 = vector.broadcast %cst_278 : f32 to vector<32x768xf32>
    %c0_279 = arith.constant 0 : index
    %c0_280 = arith.constant 0 : index
    %357 = vector.load %arg26[%c0_279, %c0_280] : memref<32x768xf32, #tpu.memory_space<vmem>>, vector<32x768xf32>
    tpu.vector_store %arg26[%c0_279, %c0_280], %356 {strides = array<i32>} : memref<32x768xf32, #tpu.memory_space<vmem>>, vector<32x768xf32>,
    %c0_281 = arith.constant 0 : index
    %c128_282 = arith.constant 128 : index
    %358 = vector.load %arg26[%c0_281, %c128_282] : memref<32x768xf32, #tpu.memory_space<vmem>>, vector<32x512xf32>
    tpu.vector_store %arg26[%c0_281, %c128_282], %355 {strides = array<i32>} : memref<32x768xf32, #tpu.memory_space<vmem>>, vector<32x512xf32>,
    %c0_283 = arith.constant 0 : index
    %c0_284 = arith.constant 0 : index
    %359 = vector.load %arg11[%c0_283, %c0_284] : memref<128x32xf32, #tpu.memory_space<vmem>>, vector<128x32xf32>
    %cst_285 = arith.constant dense<0.000000e+00> : vector<32x32xf32>
    %360 = tpu.matmul %320, %359, %cst_285 {dimension_numbers = #tpu.dot_dimension_numbers<[1], [0], [0], [1], [0, 0, 1, 1], [], []>} : vector<32x128xf32>, vector<128x32xf32>, vector<32x32xf32> -> vector<32x32xf32>
    %cst_286 = arith.constant 0.000000e+00 : f32
    %361 = vector.broadcast %cst_286 : f32 to vector<32x288xf32>
    %c0_287 = arith.constant 0 : index
    %c0_288 = arith.constant 0 : index
    %362 = vector.load %arg24[%c0_287, %c0_288] : memref<32x288xf32, #tpu.memory_space<vmem>>, vector<32x288xf32>
    tpu.vector_store %arg24[%c0_287, %c0_288], %361 {strides = array<i32>} : memref<32x288xf32, #tpu.memory_space<vmem>>, vector<32x288xf32>,
    %c0_289 = arith.constant 0 : index
    %c128_290 = arith.constant 128 : index
    %363 = vector.load %arg24[%c0_289, %c128_290] : memref<32x288xf32, #tpu.memory_space<vmem>>, vector<32x32xf32>
    tpu.vector_store %arg24[%c0_289, %c128_290], %360 {strides = array<i32>} : memref<32x288xf32, #tpu.memory_space<vmem>>, vector<32x32xf32>,
    %c0_291 = arith.constant 0 : index
    %c123 = arith.constant 123 : index
    %364 = vector.load %arg24[%c0_291, %c123] : memref<32x288xf32, #tpu.memory_space<vmem>>, vector<32x32xf32>
    %c0_292 = arith.constant 0 : index
    %c0_293 = arith.constant 0 : index
    %365 = vector.load %arg13[%c0_292, %c0_293] : memref<9x32xf32, #tpu.memory_space<vmem>>, vector<1x32xf32>
    %c0_294 = arith.constant 0 : index
    %c0_295 = arith.constant 0 : index
    %c0_296 = arith.constant 0 : index
    %366 = vector.load %arg12[%c0_294, %c0_295, %c0_296] : memref<9x64x32xf32, #tpu.memory_space<vmem>>, vector<1x64x32xf32>
    %367 = vector.shape_cast %366 : vector<1x64x32xf32> to vector<64x32xf32>
    %368 = vector.broadcast %365 : vector<1x32xf32> to vector<32x32xf32>
    %369 = arith.mulf %368, %364 : vector<32x32xf32>
    %cst_297 = arith.constant dense<0.000000e+00> : vector<64x32xf32>
    %370 = tpu.matmul %367, %369, %cst_297 {dimension_numbers = #tpu.dot_dimension_numbers<[1], [0], [0], [1], [0, 0, 1, 1], [], []>} : vector<64x32xf32>, vector<32x32xf32>, vector<64x32xf32> -> vector<64x32xf32>
    %c0_298 = arith.constant 0 : index
    %c124 = arith.constant 124 : index
    %371 = vector.load %arg24[%c0_298, %c124] : memref<32x288xf32, #tpu.memory_space<vmem>>, vector<32x32xf32>
    %c1_299 = arith.constant 1 : index
    %c0_300 = arith.constant 0 : index
    %372 = vector.load %arg13[%c1_299, %c0_300] : memref<9x32xf32, #tpu.memory_space<vmem>>, vector<1x32xf32>
    %c1_301 = arith.constant 1 : index
    %c0_302 = arith.constant 0 : index
    %c0_303 = arith.constant 0 : index
    %373 = vector.load %arg12[%c1_301, %c0_302, %c0_303] : memref<9x64x32xf32, #tpu.memory_space<vmem>>, vector<1x64x32xf32>
    %374 = vector.shape_cast %373 : vector<1x64x32xf32> to vector<64x32xf32>
    %375 = vector.broadcast %372 : vector<1x32xf32> to vector<32x32xf32>
    %376 = arith.mulf %375, %371 : vector<32x32xf32>
    %cst_304 = arith.constant dense<0.000000e+00> : vector<64x32xf32>
    %377 = tpu.matmul %374, %376, %cst_304 {dimension_numbers = #tpu.dot_dimension_numbers<[1], [0], [0], [1], [0, 0, 1, 1], [], []>} : vector<64x32xf32>, vector<32x32xf32>, vector<64x32xf32> -> vector<64x32xf32>
    %378 = arith.addf %370, %377 : vector<64x32xf32>
    %c0_305 = arith.constant 0 : index
    %c125_306 = arith.constant 125 : index
    %379 = vector.load %arg24[%c0_305, %c125_306] : memref<32x288xf32, #tpu.memory_space<vmem>>, vector<32x32xf32>
    %c2_307 = arith.constant 2 : index
    %c0_308 = arith.constant 0 : index
    %380 = vector.load %arg13[%c2_307, %c0_308] : memref<9x32xf32, #tpu.memory_space<vmem>>, vector<1x32xf32>
    %c2_309 = arith.constant 2 : index
    %c0_310 = arith.constant 0 : index
    %c0_311 = arith.constant 0 : index
    %381 = vector.load %arg12[%c2_309, %c0_310, %c0_311] : memref<9x64x32xf32, #tpu.memory_space<vmem>>, vector<1x64x32xf32>
    %382 = vector.shape_cast %381 : vector<1x64x32xf32> to vector<64x32xf32>
    %383 = vector.broadcast %380 : vector<1x32xf32> to vector<32x32xf32>
    %384 = arith.mulf %383, %379 : vector<32x32xf32>
    %cst_312 = arith.constant dense<0.000000e+00> : vector<64x32xf32>
    %385 = tpu.matmul %382, %384, %cst_312 {dimension_numbers = #tpu.dot_dimension_numbers<[1], [0], [0], [1], [0, 0, 1, 1], [], []>} : vector<64x32xf32>, vector<32x32xf32>, vector<64x32xf32> -> vector<64x32xf32>
    %386 = arith.addf %378, %385 : vector<64x32xf32>
    %c0_313 = arith.constant 0 : index
    %c127_314 = arith.constant 127 : index
    %387 = vector.load %arg24[%c0_313, %c127_314] : memref<32x288xf32, #tpu.memory_space<vmem>>, vector<32x32xf32>
    %c3_315 = arith.constant 3 : index
    %c0_316 = arith.constant 0 : index
    %388 = vector.load %arg13[%c3_315, %c0_316] : memref<9x32xf32, #tpu.memory_space<vmem>>, vector<1x32xf32>
    %c3_317 = arith.constant 3 : index
    %c0_318 = arith.constant 0 : index
    %c0_319 = arith.constant 0 : index
    %389 = vector.load %arg12[%c3_317, %c0_318, %c0_319] : memref<9x64x32xf32, #tpu.memory_space<vmem>>, vector<1x64x32xf32>
    %390 = vector.shape_cast %389 : vector<1x64x32xf32> to vector<64x32xf32>
    %391 = vector.broadcast %388 : vector<1x32xf32> to vector<32x32xf32>
    %392 = arith.mulf %391, %387 : vector<32x32xf32>
    %cst_320 = arith.constant dense<0.000000e+00> : vector<64x32xf32>
    %393 = tpu.matmul %390, %392, %cst_320 {dimension_numbers = #tpu.dot_dimension_numbers<[1], [0], [0], [1], [0, 0, 1, 1], [], []>} : vector<64x32xf32>, vector<32x32xf32>, vector<64x32xf32> -> vector<64x32xf32>
    %394 = arith.addf %386, %393 : vector<64x32xf32>
    %c0_321 = arith.constant 0 : index
    %c128_322 = arith.constant 128 : index
    %395 = vector.load %arg24[%c0_321, %c128_322] : memref<32x288xf32, #tpu.memory_space<vmem>>, vector<32x32xf32>
    %c4_323 = arith.constant 4 : index
    %c0_324 = arith.constant 0 : index
    %396 = vector.load %arg13[%c4_323, %c0_324] : memref<9x32xf32, #tpu.memory_space<vmem>>, vector<1x32xf32>
    %c4_325 = arith.constant 4 : index
    %c0_326 = arith.constant 0 : index
    %c0_327 = arith.constant 0 : index
    %397 = vector.load %arg12[%c4_325, %c0_326, %c0_327] : memref<9x64x32xf32, #tpu.memory_space<vmem>>, vector<1x64x32xf32>
    %398 = vector.shape_cast %397 : vector<1x64x32xf32> to vector<64x32xf32>
    %399 = vector.broadcast %396 : vector<1x32xf32> to vector<32x32xf32>
    %400 = arith.mulf %399, %395 : vector<32x32xf32>
    %cst_328 = arith.constant dense<0.000000e+00> : vector<64x32xf32>
    %401 = tpu.matmul %398, %400, %cst_328 {dimension_numbers = #tpu.dot_dimension_numbers<[1], [0], [0], [1], [0, 0, 1, 1], [], []>} : vector<64x32xf32>, vector<32x32xf32>, vector<64x32xf32> -> vector<64x32xf32>
    %402 = arith.addf %394, %401 : vector<64x32xf32>
    %c0_329 = arith.constant 0 : index
    %c129_330 = arith.constant 129 : index
    %403 = vector.load %arg24[%c0_329, %c129_330] : memref<32x288xf32, #tpu.memory_space<vmem>>, vector<32x32xf32>
    %c5_331 = arith.constant 5 : index
    %c0_332 = arith.constant 0 : index
    %404 = vector.load %arg13[%c5_331, %c0_332] : memref<9x32xf32, #tpu.memory_space<vmem>>, vector<1x32xf32>
    %c5_333 = arith.constant 5 : index
    %c0_334 = arith.constant 0 : index
    %c0_335 = arith.constant 0 : index
    %405 = vector.load %arg12[%c5_333, %c0_334, %c0_335] : memref<9x64x32xf32, #tpu.memory_space<vmem>>, vector<1x64x32xf32>
    %406 = vector.shape_cast %405 : vector<1x64x32xf32> to vector<64x32xf32>
    %407 = vector.broadcast %404 : vector<1x32xf32> to vector<32x32xf32>
    %408 = arith.mulf %407, %403 : vector<32x32xf32>
    %cst_336 = arith.constant dense<0.000000e+00> : vector<64x32xf32>
    %409 = tpu.matmul %406, %408, %cst_336 {dimension_numbers = #tpu.dot_dimension_numbers<[1], [0], [0], [1], [0, 0, 1, 1], [], []>} : vector<64x32xf32>, vector<32x32xf32>, vector<64x32xf32> -> vector<64x32xf32>
    %410 = arith.addf %402, %409 : vector<64x32xf32>
    %c0_337 = arith.constant 0 : index
    %c131_338 = arith.constant 131 : index
    %411 = vector.load %arg24[%c0_337, %c131_338] : memref<32x288xf32, #tpu.memory_space<vmem>>, vector<32x32xf32>
    %c6_339 = arith.constant 6 : index
    %c0_340 = arith.constant 0 : index
    %412 = vector.load %arg13[%c6_339, %c0_340] : memref<9x32xf32, #tpu.memory_space<vmem>>, vector<1x32xf32>
    %c6_341 = arith.constant 6 : index
    %c0_342 = arith.constant 0 : index
    %c0_343 = arith.constant 0 : index
    %413 = vector.load %arg12[%c6_341, %c0_342, %c0_343] : memref<9x64x32xf32, #tpu.memory_space<vmem>>, vector<1x64x32xf32>
    %414 = vector.shape_cast %413 : vector<1x64x32xf32> to vector<64x32xf32>
    %415 = vector.broadcast %412 : vector<1x32xf32> to vector<32x32xf32>
    %416 = arith.mulf %415, %411 : vector<32x32xf32>
    %cst_344 = arith.constant dense<0.000000e+00> : vector<64x32xf32>
    %417 = tpu.matmul %414, %416, %cst_344 {dimension_numbers = #tpu.dot_dimension_numbers<[1], [0], [0], [1], [0, 0, 1, 1], [], []>} : vector<64x32xf32>, vector<32x32xf32>, vector<64x32xf32> -> vector<64x32xf32>
    %418 = arith.addf %410, %417 : vector<64x32xf32>
    %c0_345 = arith.constant 0 : index
    %c132 = arith.constant 132 : index
    %419 = vector.load %arg24[%c0_345, %c132] : memref<32x288xf32, #tpu.memory_space<vmem>>, vector<32x32xf32>
    %c7_346 = arith.constant 7 : index
    %c0_347 = arith.constant 0 : index
    %420 = vector.load %arg13[%c7_346, %c0_347] : memref<9x32xf32, #tpu.memory_space<vmem>>, vector<1x32xf32>
    %c7_348 = arith.constant 7 : index
    %c0_349 = arith.constant 0 : index
    %c0_350 = arith.constant 0 : index
    %421 = vector.load %arg12[%c7_348, %c0_349, %c0_350] : memref<9x64x32xf32, #tpu.memory_space<vmem>>, vector<1x64x32xf32>
    %422 = vector.shape_cast %421 : vector<1x64x32xf32> to vector<64x32xf32>
    %423 = vector.broadcast %420 : vector<1x32xf32> to vector<32x32xf32>
    %424 = arith.mulf %423, %419 : vector<32x32xf32>
    %cst_351 = arith.constant dense<0.000000e+00> : vector<64x32xf32>
    %425 = tpu.matmul %422, %424, %cst_351 {dimension_numbers = #tpu.dot_dimension_numbers<[1], [0], [0], [1], [0, 0, 1, 1], [], []>} : vector<64x32xf32>, vector<32x32xf32>, vector<64x32xf32> -> vector<64x32xf32>
    %426 = arith.addf %418, %425 : vector<64x32xf32>
    %c0_352 = arith.constant 0 : index
    %c133 = arith.constant 133 : index
    %427 = vector.load %arg24[%c0_352, %c133] : memref<32x288xf32, #tpu.memory_space<vmem>>, vector<32x32xf32>
    %c8_353 = arith.constant 8 : index
    %c0_354 = arith.constant 0 : index
    %428 = vector.load %arg13[%c8_353, %c0_354] : memref<9x32xf32, #tpu.memory_space<vmem>>, vector<1x32xf32>
    %c8_355 = arith.constant 8 : index
    %c0_356 = arith.constant 0 : index
    %c0_357 = arith.constant 0 : index
    %429 = vector.load %arg12[%c8_355, %c0_356, %c0_357] : memref<9x64x32xf32, #tpu.memory_space<vmem>>, vector<1x64x32xf32>
    %430 = vector.shape_cast %429 : vector<1x64x32xf32> to vector<64x32xf32>
    %431 = vector.broadcast %428 : vector<1x32xf32> to vector<32x32xf32>
    %432 = arith.mulf %431, %427 : vector<32x32xf32>
    %cst_358 = arith.constant dense<0.000000e+00> : vector<64x32xf32>
    %433 = tpu.matmul %430, %432, %cst_358 {dimension_numbers = #tpu.dot_dimension_numbers<[1], [0], [0], [1], [0, 0, 1, 1], [], []>} : vector<64x32xf32>, vector<32x32xf32>, vector<64x32xf32> -> vector<64x32xf32>
    %434 = arith.addf %426, %433 : vector<64x32xf32>
    %435 = math.tanh %434 : vector<64x32xf32>
    %c0_359 = arith.constant 0 : index
    %c0_360 = arith.constant 0 : index
    %436 = vector.load %arg15[%c0_359, %c0_360] : memref<16x512xf32, #tpu.memory_space<vmem>>, vector<16x512xf32>
    %c0_361 = arith.constant 0 : index
    %c0_362 = arith.constant 0 : index
    %c0_363 = arith.constant 0 : index
    %c0_364 = arith.constant 0 : index
    %437 = vector.load %arg16[%c0_361, %c0_362, %c0_363, %c0_364] : memref<2x2x32x512xf32, #tpu.memory_space<vmem>>, vector<1x1x32x512xf32>
    %438 = vector.shape_cast %437 : vector<1x1x32x512xf32> to vector<32x512xf32>
    %cst_365 = arith.constant dense<0.000000e+00> : vector<64x512xf32>
    %439 = tpu.matmul %435, %438, %cst_365 {dimension_numbers = #tpu.dot_dimension_numbers<[1], [0], [0], [1], [0, 0, 1, 1], [], []>} : vector<64x32xf32>, vector<32x512xf32>, vector<64x512xf32> -> vector<64x512xf32>
    %c0_366 = arith.constant 0 : index
    %c0_367 = arith.constant 0 : index
    %c0_368 = arith.constant 0 : index
    %c0_369 = arith.constant 0 : index
    %440 = vector.load %arg14[%c0_366, %c0_367, %c0_368, %c0_369] : memref<2x2x64x16xf32, #tpu.memory_space<vmem>>, vector<1x1x64x16xf32>
    %441 = vector.shape_cast %440 : vector<1x1x64x16xf32> to vector<64x16xf32>
    %cst_370 = arith.constant dense<0.000000e+00> : vector<64x512xf32>
    %442 = tpu.matmul %441, %436, %cst_370 {dimension_numbers = #tpu.dot_dimension_numbers<[1], [0], [0], [1], [0, 0, 1, 1], [], []>} : vector<64x16xf32>, vector<16x512xf32>, vector<64x512xf32> -> vector<64x512xf32>
    %443 = arith.mulf %439, %442 : vector<64x512xf32>
    %c0_371 = arith.constant 0 : index
    %c1_372 = arith.constant 1 : index
    %c0_373 = arith.constant 0 : index
    %c0_374 = arith.constant 0 : index
    %444 = vector.load %arg16[%c0_371, %c1_372, %c0_373, %c0_374] : memref<2x2x32x512xf32, #tpu.memory_space<vmem>>, vector<1x1x32x512xf32>
    %445 = vector.shape_cast %444 : vector<1x1x32x512xf32> to vector<32x512xf32>
    %cst_375 = arith.constant dense<0.000000e+00> : vector<64x512xf32>
    %446 = tpu.matmul %435, %445, %cst_375 {dimension_numbers = #tpu.dot_dimension_numbers<[1], [0], [0], [1], [0, 0, 1, 1], [], []>} : vector<64x32xf32>, vector<32x512xf32>, vector<64x512xf32> -> vector<64x512xf32>
    %c0_376 = arith.constant 0 : index
    %c1_377 = arith.constant 1 : index
    %c0_378 = arith.constant 0 : index
    %c0_379 = arith.constant 0 : index
    %447 = vector.load %arg14[%c0_376, %c1_377, %c0_378, %c0_379] : memref<2x2x64x16xf32, #tpu.memory_space<vmem>>, vector<1x1x64x16xf32>
    %448 = vector.shape_cast %447 : vector<1x1x64x16xf32> to vector<64x16xf32>
    %cst_380 = arith.constant dense<0.000000e+00> : vector<64x512xf32>
    %449 = tpu.matmul %448, %436, %cst_380 {dimension_numbers = #tpu.dot_dimension_numbers<[1], [0], [0], [1], [0, 0, 1, 1], [], []>} : vector<64x16xf32>, vector<16x512xf32>, vector<64x512xf32> -> vector<64x512xf32>
    %450 = arith.mulf %446, %449 : vector<64x512xf32>
    %451 = arith.addf %443, %450 : vector<64x512xf32>
    %c1_381 = arith.constant 1 : index
    %c0_382 = arith.constant 0 : index
    %c0_383 = arith.constant 0 : index
    %c0_384 = arith.constant 0 : index
    %452 = vector.load %arg16[%c1_381, %c0_382, %c0_383, %c0_384] : memref<2x2x32x512xf32, #tpu.memory_space<vmem>>, vector<1x1x32x512xf32>
    %453 = vector.shape_cast %452 : vector<1x1x32x512xf32> to vector<32x512xf32>
    %cst_385 = arith.constant dense<0.000000e+00> : vector<64x512xf32>
    %454 = tpu.matmul %435, %453, %cst_385 {dimension_numbers = #tpu.dot_dimension_numbers<[1], [0], [0], [1], [0, 0, 1, 1], [], []>} : vector<64x32xf32>, vector<32x512xf32>, vector<64x512xf32> -> vector<64x512xf32>
    %c1_386 = arith.constant 1 : index
    %c0_387 = arith.constant 0 : index
    %c0_388 = arith.constant 0 : index
    %c0_389 = arith.constant 0 : index
    %455 = vector.load %arg14[%c1_386, %c0_387, %c0_388, %c0_389] : memref<2x2x64x16xf32, #tpu.memory_space<vmem>>, vector<1x1x64x16xf32>
    %456 = vector.shape_cast %455 : vector<1x1x64x16xf32> to vector<64x16xf32>
    %cst_390 = arith.constant dense<0.000000e+00> : vector<64x512xf32>
    %457 = tpu.matmul %456, %436, %cst_390 {dimension_numbers = #tpu.dot_dimension_numbers<[1], [0], [0], [1], [0, 0, 1, 1], [], []>} : vector<64x16xf32>, vector<16x512xf32>, vector<64x512xf32> -> vector<64x512xf32>
    %458 = arith.mulf %454, %457 : vector<64x512xf32>
    %459 = arith.addf %451, %458 : vector<64x512xf32>
    %c1_391 = arith.constant 1 : index
    %c1_392 = arith.constant 1 : index
    %c0_393 = arith.constant 0 : index
    %c0_394 = arith.constant 0 : index
    %460 = vector.load %arg16[%c1_391, %c1_392, %c0_393, %c0_394] : memref<2x2x32x512xf32, #tpu.memory_space<vmem>>, vector<1x1x32x512xf32>
    %461 = vector.shape_cast %460 : vector<1x1x32x512xf32> to vector<32x512xf32>
    %cst_395 = arith.constant dense<0.000000e+00> : vector<64x512xf32>
    %462 = tpu.matmul %435, %461, %cst_395 {dimension_numbers = #tpu.dot_dimension_numbers<[1], [0], [0], [1], [0, 0, 1, 1], [], []>} : vector<64x32xf32>, vector<32x512xf32>, vector<64x512xf32> -> vector<64x512xf32>
    %c1_396 = arith.constant 1 : index
    %c1_397 = arith.constant 1 : index
    %c0_398 = arith.constant 0 : index
    %c0_399 = arith.constant 0 : index
    %463 = vector.load %arg14[%c1_396, %c1_397, %c0_398, %c0_399] : memref<2x2x64x16xf32, #tpu.memory_space<vmem>>, vector<1x1x64x16xf32>
    %464 = vector.shape_cast %463 : vector<1x1x64x16xf32> to vector<64x16xf32>
    %cst_400 = arith.constant dense<0.000000e+00> : vector<64x512xf32>
    %465 = tpu.matmul %464, %436, %cst_400 {dimension_numbers = #tpu.dot_dimension_numbers<[1], [0], [0], [1], [0, 0, 1, 1], [], []>} : vector<64x16xf32>, vector<16x512xf32>, vector<64x512xf32> -> vector<64x512xf32>
    %466 = arith.mulf %462, %465 : vector<64x512xf32>
    %467 = arith.addf %459, %466 : vector<64x512xf32>
    %cst_401 = arith.constant 0.000000e+00 : f32
    %468 = vector.broadcast %cst_401 : f32 to vector<64x768xf32>
    %c0_402 = arith.constant 0 : index
    %c0_403 = arith.constant 0 : index
    %469 = vector.load %arg27[%c0_402, %c0_403] : memref<64x768xf32, #tpu.memory_space<vmem>>, vector<64x768xf32>
    tpu.vector_store %arg27[%c0_402, %c0_403], %468 {strides = array<i32>} : memref<64x768xf32, #tpu.memory_space<vmem>>, vector<64x768xf32>,
    %c0_404 = arith.constant 0 : index
    %c128_405 = arith.constant 128 : index
    %470 = vector.load %arg27[%c0_404, %c128_405] : memref<64x768xf32, #tpu.memory_space<vmem>>, vector<64x512xf32>
    tpu.vector_store %arg27[%c0_404, %c128_405], %467 {strides = array<i32>} : memref<64x768xf32, #tpu.memory_space<vmem>>, vector<64x512xf32>,
    %c0_406 = arith.constant 0 : index
    %c111_407 = arith.constant 111 : index
    %471 = vector.load %arg25[%c0_406, %c111_407] : memref<16x768xf32, #tpu.memory_space<vmem>>, vector<16x512xf32>
    %c0_408 = arith.constant 0 : index
    %c0_409 = arith.constant 0 : index
    %472 = vector.load %arg20[%c0_408, %c0_409] : memref<9x512xf32, #tpu.memory_space<vmem>>, vector<1x512xf32>
    %c0_410 = arith.constant 0 : index
    %c0_411 = arith.constant 0 : index
    %c0_412 = arith.constant 0 : index
    %473 = vector.load %arg17[%c0_410, %c0_411, %c0_412] : memref<9x16x1xf32, #tpu.memory_space<vmem>>, vector<1x16x1xf32>
    %474 = vector.shape_cast %473 : vector<1x16x1xf32> to vector<16x1xf32>
    %475 = vector.broadcast %474 : vector<16x1xf32> to vector<16x512xf32>
    %476 = arith.mulf %471, %475 : vector<16x512xf32>
    %cst_413 = arith.constant dense<0.000000e+00> : vector<512xf32>
    %477 = vector.multi_reduction <add>, %476, %cst_413 [0] : vector<16x512xf32> to vector<512xf32>
    %478 = vector.shape_cast %477 : vector<512xf32> to vector<1x512xf32>
    %479 = arith.mulf %472, %478 : vector<1x512xf32>
    %c0_414 = arith.constant 0 : index
    %c112_415 = arith.constant 112 : index
    %480 = vector.load %arg25[%c0_414, %c112_415] : memref<16x768xf32, #tpu.memory_space<vmem>>, vector<16x512xf32>
    %c1_416 = arith.constant 1 : index
    %c0_417 = arith.constant 0 : index
    %481 = vector.load %arg20[%c1_416, %c0_417] : memref<9x512xf32, #tpu.memory_space<vmem>>, vector<1x512xf32>
    %c1_418 = arith.constant 1 : index
    %c0_419 = arith.constant 0 : index
    %c0_420 = arith.constant 0 : index
    %482 = vector.load %arg17[%c1_418, %c0_419, %c0_420] : memref<9x16x1xf32, #tpu.memory_space<vmem>>, vector<1x16x1xf32>
    %483 = vector.shape_cast %482 : vector<1x16x1xf32> to vector<16x1xf32>
    %484 = vector.broadcast %483 : vector<16x1xf32> to vector<16x512xf32>
    %485 = arith.mulf %480, %484 : vector<16x512xf32>
    %cst_421 = arith.constant dense<0.000000e+00> : vector<512xf32>
    %486 = vector.multi_reduction <add>, %485, %cst_421 [0] : vector<16x512xf32> to vector<512xf32>
    %487 = vector.shape_cast %486 : vector<512xf32> to vector<1x512xf32>
    %488 = arith.mulf %481, %487 : vector<1x512xf32>
    %489 = arith.addf %479, %488 : vector<1x512xf32>
    %c0_422 = arith.constant 0 : index
    %c113_423 = arith.constant 113 : index
    %490 = vector.load %arg25[%c0_422, %c113_423] : memref<16x768xf32, #tpu.memory_space<vmem>>, vector<16x512xf32>
    %c2_424 = arith.constant 2 : index
    %c0_425 = arith.constant 0 : index
    %491 = vector.load %arg20[%c2_424, %c0_425] : memref<9x512xf32, #tpu.memory_space<vmem>>, vector<1x512xf32>
    %c2_426 = arith.constant 2 : index
    %c0_427 = arith.constant 0 : index
    %c0_428 = arith.constant 0 : index
    %492 = vector.load %arg17[%c2_426, %c0_427, %c0_428] : memref<9x16x1xf32, #tpu.memory_space<vmem>>, vector<1x16x1xf32>
    %493 = vector.shape_cast %492 : vector<1x16x1xf32> to vector<16x1xf32>
    %494 = vector.broadcast %493 : vector<16x1xf32> to vector<16x512xf32>
    %495 = arith.mulf %490, %494 : vector<16x512xf32>
    %cst_429 = arith.constant dense<0.000000e+00> : vector<512xf32>
    %496 = vector.multi_reduction <add>, %495, %cst_429 [0] : vector<16x512xf32> to vector<512xf32>
    %497 = vector.shape_cast %496 : vector<512xf32> to vector<1x512xf32>
    %498 = arith.mulf %491, %497 : vector<1x512xf32>
    %499 = arith.addf %489, %498 : vector<1x512xf32>
    %c0_430 = arith.constant 0 : index
    %c127_431 = arith.constant 127 : index
    %500 = vector.load %arg25[%c0_430, %c127_431] : memref<16x768xf32, #tpu.memory_space<vmem>>, vector<16x512xf32>
    %c3_432 = arith.constant 3 : index
    %c0_433 = arith.constant 0 : index
    %501 = vector.load %arg20[%c3_432, %c0_433] : memref<9x512xf32, #tpu.memory_space<vmem>>, vector<1x512xf32>
    %c3_434 = arith.constant 3 : index
    %c0_435 = arith.constant 0 : index
    %c0_436 = arith.constant 0 : index
    %502 = vector.load %arg17[%c3_434, %c0_435, %c0_436] : memref<9x16x1xf32, #tpu.memory_space<vmem>>, vector<1x16x1xf32>
    %503 = vector.shape_cast %502 : vector<1x16x1xf32> to vector<16x1xf32>
    %504 = vector.broadcast %503 : vector<16x1xf32> to vector<16x512xf32>
    %505 = arith.mulf %500, %504 : vector<16x512xf32>
    %cst_437 = arith.constant dense<0.000000e+00> : vector<512xf32>
    %506 = vector.multi_reduction <add>, %505, %cst_437 [0] : vector<16x512xf32> to vector<512xf32>
    %507 = vector.shape_cast %506 : vector<512xf32> to vector<1x512xf32>
    %508 = arith.mulf %501, %507 : vector<1x512xf32>
    %509 = arith.addf %499, %508 : vector<1x512xf32>
    %c0_438 = arith.constant 0 : index
    %c128_439 = arith.constant 128 : index
    %510 = vector.load %arg25[%c0_438, %c128_439] : memref<16x768xf32, #tpu.memory_space<vmem>>, vector<16x512xf32>
    %c4_440 = arith.constant 4 : index
    %c0_441 = arith.constant 0 : index
    %511 = vector.load %arg20[%c4_440, %c0_441] : memref<9x512xf32, #tpu.memory_space<vmem>>, vector<1x512xf32>
    %c4_442 = arith.constant 4 : index
    %c0_443 = arith.constant 0 : index
    %c0_444 = arith.constant 0 : index
    %512 = vector.load %arg17[%c4_442, %c0_443, %c0_444] : memref<9x16x1xf32, #tpu.memory_space<vmem>>, vector<1x16x1xf32>
    %513 = vector.shape_cast %512 : vector<1x16x1xf32> to vector<16x1xf32>
    %514 = vector.broadcast %513 : vector<16x1xf32> to vector<16x512xf32>
    %515 = arith.mulf %510, %514 : vector<16x512xf32>
    %cst_445 = arith.constant dense<0.000000e+00> : vector<512xf32>
    %516 = vector.multi_reduction <add>, %515, %cst_445 [0] : vector<16x512xf32> to vector<512xf32>
    %517 = vector.shape_cast %516 : vector<512xf32> to vector<1x512xf32>
    %518 = arith.mulf %511, %517 : vector<1x512xf32>
    %519 = arith.addf %509, %518 : vector<1x512xf32>
    %c0_446 = arith.constant 0 : index
    %c129_447 = arith.constant 129 : index
    %520 = vector.load %arg25[%c0_446, %c129_447] : memref<16x768xf32, #tpu.memory_space<vmem>>, vector<16x512xf32>
    %c5_448 = arith.constant 5 : index
    %c0_449 = arith.constant 0 : index
    %521 = vector.load %arg20[%c5_448, %c0_449] : memref<9x512xf32, #tpu.memory_space<vmem>>, vector<1x512xf32>
    %c5_450 = arith.constant 5 : index
    %c0_451 = arith.constant 0 : index
    %c0_452 = arith.constant 0 : index
    %522 = vector.load %arg17[%c5_450, %c0_451, %c0_452] : memref<9x16x1xf32, #tpu.memory_space<vmem>>, vector<1x16x1xf32>
    %523 = vector.shape_cast %522 : vector<1x16x1xf32> to vector<16x1xf32>
    %524 = vector.broadcast %523 : vector<16x1xf32> to vector<16x512xf32>
    %525 = arith.mulf %520, %524 : vector<16x512xf32>
    %cst_453 = arith.constant dense<0.000000e+00> : vector<512xf32>
    %526 = vector.multi_reduction <add>, %525, %cst_453 [0] : vector<16x512xf32> to vector<512xf32>
    %527 = vector.shape_cast %526 : vector<512xf32> to vector<1x512xf32>
    %528 = arith.mulf %521, %527 : vector<1x512xf32>
    %529 = arith.addf %519, %528 : vector<1x512xf32>
    %c0_454 = arith.constant 0 : index
    %c143_455 = arith.constant 143 : index
    %530 = vector.load %arg25[%c0_454, %c143_455] : memref<16x768xf32, #tpu.memory_space<vmem>>, vector<16x512xf32>
    %c6_456 = arith.constant 6 : index
    %c0_457 = arith.constant 0 : index
    %531 = vector.load %arg20[%c6_456, %c0_457] : memref<9x512xf32, #tpu.memory_space<vmem>>, vector<1x512xf32>
    %c6_458 = arith.constant 6 : index
    %c0_459 = arith.constant 0 : index
    %c0_460 = arith.constant 0 : index
    %532 = vector.load %arg17[%c6_458, %c0_459, %c0_460] : memref<9x16x1xf32, #tpu.memory_space<vmem>>, vector<1x16x1xf32>
    %533 = vector.shape_cast %532 : vector<1x16x1xf32> to vector<16x1xf32>
    %534 = vector.broadcast %533 : vector<16x1xf32> to vector<16x512xf32>
    %535 = arith.mulf %530, %534 : vector<16x512xf32>
    %cst_461 = arith.constant dense<0.000000e+00> : vector<512xf32>
    %536 = vector.multi_reduction <add>, %535, %cst_461 [0] : vector<16x512xf32> to vector<512xf32>
    %537 = vector.shape_cast %536 : vector<512xf32> to vector<1x512xf32>
    %538 = arith.mulf %531, %537 : vector<1x512xf32>
    %539 = arith.addf %529, %538 : vector<1x512xf32>
    %c0_462 = arith.constant 0 : index
    %c144_463 = arith.constant 144 : index
    %540 = vector.load %arg25[%c0_462, %c144_463] : memref<16x768xf32, #tpu.memory_space<vmem>>, vector<16x512xf32>
    %c7_464 = arith.constant 7 : index
    %c0_465 = arith.constant 0 : index
    %541 = vector.load %arg20[%c7_464, %c0_465] : memref<9x512xf32, #tpu.memory_space<vmem>>, vector<1x512xf32>
    %c7_466 = arith.constant 7 : index
    %c0_467 = arith.constant 0 : index
    %c0_468 = arith.constant 0 : index
    %542 = vector.load %arg17[%c7_466, %c0_467, %c0_468] : memref<9x16x1xf32, #tpu.memory_space<vmem>>, vector<1x16x1xf32>
    %543 = vector.shape_cast %542 : vector<1x16x1xf32> to vector<16x1xf32>
    %544 = vector.broadcast %543 : vector<16x1xf32> to vector<16x512xf32>
    %545 = arith.mulf %540, %544 : vector<16x512xf32>
    %cst_469 = arith.constant dense<0.000000e+00> : vector<512xf32>
    %546 = vector.multi_reduction <add>, %545, %cst_469 [0] : vector<16x512xf32> to vector<512xf32>
    %547 = vector.shape_cast %546 : vector<512xf32> to vector<1x512xf32>
    %548 = arith.mulf %541, %547 : vector<1x512xf32>
    %549 = arith.addf %539, %548 : vector<1x512xf32>
    %c0_470 = arith.constant 0 : index
    %c145_471 = arith.constant 145 : index
    %550 = vector.load %arg25[%c0_470, %c145_471] : memref<16x768xf32, #tpu.memory_space<vmem>>, vector<16x512xf32>
    %c8_472 = arith.constant 8 : index
    %c0_473 = arith.constant 0 : index
    %551 = vector.load %arg20[%c8_472, %c0_473] : memref<9x512xf32, #tpu.memory_space<vmem>>, vector<1x512xf32>
    %c8_474 = arith.constant 8 : index
    %c0_475 = arith.constant 0 : index
    %c0_476 = arith.constant 0 : index
    %552 = vector.load %arg17[%c8_474, %c0_475, %c0_476] : memref<9x16x1xf32, #tpu.memory_space<vmem>>, vector<1x16x1xf32>
    %553 = vector.shape_cast %552 : vector<1x16x1xf32> to vector<16x1xf32>
    %554 = vector.broadcast %553 : vector<16x1xf32> to vector<16x512xf32>
    %555 = arith.mulf %550, %554 : vector<16x512xf32>
    %cst_477 = arith.constant dense<0.000000e+00> : vector<512xf32>
    %556 = vector.multi_reduction <add>, %555, %cst_477 [0] : vector<16x512xf32> to vector<512xf32>
    %557 = vector.shape_cast %556 : vector<512xf32> to vector<1x512xf32>
    %558 = arith.mulf %551, %557 : vector<1x512xf32>
    %559 = arith.addf %549, %558 : vector<1x512xf32>
    %c0_478 = arith.constant 0 : index
    %c111_479 = arith.constant 111 : index
    %560 = vector.load %arg26[%c0_478, %c111_479] : memref<32x768xf32, #tpu.memory_space<vmem>>, vector<32x512xf32>
    %c0_480 = arith.constant 0 : index
    %c0_481 = arith.constant 0 : index
    %561 = vector.load %arg20[%c0_480, %c0_481] : memref<9x512xf32, #tpu.memory_space<vmem>>, vector<1x512xf32>
    %c0_482 = arith.constant 0 : index
    %c0_483 = arith.constant 0 : index
    %c0_484 = arith.constant 0 : index
    %562 = vector.load %arg18[%c0_482, %c0_483, %c0_484] : memref<9x32x1xf32, #tpu.memory_space<vmem>>, vector<1x32x1xf32>
    %563 = vector.shape_cast %562 : vector<1x32x1xf32> to vector<32x1xf32>
    %564 = vector.broadcast %563 : vector<32x1xf32> to vector<32x512xf32>
    %565 = arith.mulf %560, %564 : vector<32x512xf32>
    %cst_485 = arith.constant dense<0.000000e+00> : vector<512xf32>
    %566 = vector.multi_reduction <add>, %565, %cst_485 [0] : vector<32x512xf32> to vector<512xf32>
    %567 = vector.shape_cast %566 : vector<512xf32> to vector<1x512xf32>
    %568 = arith.mulf %561, %567 : vector<1x512xf32>
    %c0_486 = arith.constant 0 : index
    %c112_487 = arith.constant 112 : index
    %569 = vector.load %arg26[%c0_486, %c112_487] : memref<32x768xf32, #tpu.memory_space<vmem>>, vector<32x512xf32>
    %c1_488 = arith.constant 1 : index
    %c0_489 = arith.constant 0 : index
    %570 = vector.load %arg20[%c1_488, %c0_489] : memref<9x512xf32, #tpu.memory_space<vmem>>, vector<1x512xf32>
    %c1_490 = arith.constant 1 : index
    %c0_491 = arith.constant 0 : index
    %c0_492 = arith.constant 0 : index
    %571 = vector.load %arg18[%c1_490, %c0_491, %c0_492] : memref<9x32x1xf32, #tpu.memory_space<vmem>>, vector<1x32x1xf32>
    %572 = vector.shape_cast %571 : vector<1x32x1xf32> to vector<32x1xf32>
    %573 = vector.broadcast %572 : vector<32x1xf32> to vector<32x512xf32>
    %574 = arith.mulf %569, %573 : vector<32x512xf32>
    %cst_493 = arith.constant dense<0.000000e+00> : vector<512xf32>
    %575 = vector.multi_reduction <add>, %574, %cst_493 [0] : vector<32x512xf32> to vector<512xf32>
    %576 = vector.shape_cast %575 : vector<512xf32> to vector<1x512xf32>
    %577 = arith.mulf %570, %576 : vector<1x512xf32>
    %578 = arith.addf %568, %577 : vector<1x512xf32>
    %c0_494 = arith.constant 0 : index
    %c113_495 = arith.constant 113 : index
    %579 = vector.load %arg26[%c0_494, %c113_495] : memref<32x768xf32, #tpu.memory_space<vmem>>, vector<32x512xf32>
    %c2_496 = arith.constant 2 : index
    %c0_497 = arith.constant 0 : index
    %580 = vector.load %arg20[%c2_496, %c0_497] : memref<9x512xf32, #tpu.memory_space<vmem>>, vector<1x512xf32>
    %c2_498 = arith.constant 2 : index
    %c0_499 = arith.constant 0 : index
    %c0_500 = arith.constant 0 : index
    %581 = vector.load %arg18[%c2_498, %c0_499, %c0_500] : memref<9x32x1xf32, #tpu.memory_space<vmem>>, vector<1x32x1xf32>
    %582 = vector.shape_cast %581 : vector<1x32x1xf32> to vector<32x1xf32>
    %583 = vector.broadcast %582 : vector<32x1xf32> to vector<32x512xf32>
    %584 = arith.mulf %579, %583 : vector<32x512xf32>
    %cst_501 = arith.constant dense<0.000000e+00> : vector<512xf32>
    %585 = vector.multi_reduction <add>, %584, %cst_501 [0] : vector<32x512xf32> to vector<512xf32>
    %586 = vector.shape_cast %585 : vector<512xf32> to vector<1x512xf32>
    %587 = arith.mulf %580, %586 : vector<1x512xf32>
    %588 = arith.addf %578, %587 : vector<1x512xf32>
    %c0_502 = arith.constant 0 : index
    %c127_503 = arith.constant 127 : index
    %589 = vector.load %arg26[%c0_502, %c127_503] : memref<32x768xf32, #tpu.memory_space<vmem>>, vector<32x512xf32>
    %c3_504 = arith.constant 3 : index
    %c0_505 = arith.constant 0 : index
    %590 = vector.load %arg20[%c3_504, %c0_505] : memref<9x512xf32, #tpu.memory_space<vmem>>, vector<1x512xf32>
    %c3_506 = arith.constant 3 : index
    %c0_507 = arith.constant 0 : index
    %c0_508 = arith.constant 0 : index
    %591 = vector.load %arg18[%c3_506, %c0_507, %c0_508] : memref<9x32x1xf32, #tpu.memory_space<vmem>>, vector<1x32x1xf32>
    %592 = vector.shape_cast %591 : vector<1x32x1xf32> to vector<32x1xf32>
    %593 = vector.broadcast %592 : vector<32x1xf32> to vector<32x512xf32>
    %594 = arith.mulf %589, %593 : vector<32x512xf32>
    %cst_509 = arith.constant dense<0.000000e+00> : vector<512xf32>
    %595 = vector.multi_reduction <add>, %594, %cst_509 [0] : vector<32x512xf32> to vector<512xf32>
    %596 = vector.shape_cast %595 : vector<512xf32> to vector<1x512xf32>
    %597 = arith.mulf %590, %596 : vector<1x512xf32>
    %598 = arith.addf %588, %597 : vector<1x512xf32>
    %c0_510 = arith.constant 0 : index
    %c128_511 = arith.constant 128 : index
    %599 = vector.load %arg26[%c0_510, %c128_511] : memref<32x768xf32, #tpu.memory_space<vmem>>, vector<32x512xf32>
    %c4_512 = arith.constant 4 : index
    %c0_513 = arith.constant 0 : index
    %600 = vector.load %arg20[%c4_512, %c0_513] : memref<9x512xf32, #tpu.memory_space<vmem>>, vector<1x512xf32>
    %c4_514 = arith.constant 4 : index
    %c0_515 = arith.constant 0 : index
    %c0_516 = arith.constant 0 : index
    %601 = vector.load %arg18[%c4_514, %c0_515, %c0_516] : memref<9x32x1xf32, #tpu.memory_space<vmem>>, vector<1x32x1xf32>
    %602 = vector.shape_cast %601 : vector<1x32x1xf32> to vector<32x1xf32>
    %603 = vector.broadcast %602 : vector<32x1xf32> to vector<32x512xf32>
    %604 = arith.mulf %599, %603 : vector<32x512xf32>
    %cst_517 = arith.constant dense<0.000000e+00> : vector<512xf32>
    %605 = vector.multi_reduction <add>, %604, %cst_517 [0] : vector<32x512xf32> to vector<512xf32>
    %606 = vector.shape_cast %605 : vector<512xf32> to vector<1x512xf32>
    %607 = arith.mulf %600, %606 : vector<1x512xf32>
    %608 = arith.addf %598, %607 : vector<1x512xf32>
    %c0_518 = arith.constant 0 : index
    %c129_519 = arith.constant 129 : index
    %609 = vector.load %arg26[%c0_518, %c129_519] : memref<32x768xf32, #tpu.memory_space<vmem>>, vector<32x512xf32>
    %c5_520 = arith.constant 5 : index
    %c0_521 = arith.constant 0 : index
    %610 = vector.load %arg20[%c5_520, %c0_521] : memref<9x512xf32, #tpu.memory_space<vmem>>, vector<1x512xf32>
    %c5_522 = arith.constant 5 : index
    %c0_523 = arith.constant 0 : index
    %c0_524 = arith.constant 0 : index
    %611 = vector.load %arg18[%c5_522, %c0_523, %c0_524] : memref<9x32x1xf32, #tpu.memory_space<vmem>>, vector<1x32x1xf32>
    %612 = vector.shape_cast %611 : vector<1x32x1xf32> to vector<32x1xf32>
    %613 = vector.broadcast %612 : vector<32x1xf32> to vector<32x512xf32>
    %614 = arith.mulf %609, %613 : vector<32x512xf32>
    %cst_525 = arith.constant dense<0.000000e+00> : vector<512xf32>
    %615 = vector.multi_reduction <add>, %614, %cst_525 [0] : vector<32x512xf32> to vector<512xf32>
    %616 = vector.shape_cast %615 : vector<512xf32> to vector<1x512xf32>
    %617 = arith.mulf %610, %616 : vector<1x512xf32>
    %618 = arith.addf %608, %617 : vector<1x512xf32>
    %c0_526 = arith.constant 0 : index
    %c143_527 = arith.constant 143 : index
    %619 = vector.load %arg26[%c0_526, %c143_527] : memref<32x768xf32, #tpu.memory_space<vmem>>, vector<32x512xf32>
    %c6_528 = arith.constant 6 : index
    %c0_529 = arith.constant 0 : index
    %620 = vector.load %arg20[%c6_528, %c0_529] : memref<9x512xf32, #tpu.memory_space<vmem>>, vector<1x512xf32>
    %c6_530 = arith.constant 6 : index
    %c0_531 = arith.constant 0 : index
    %c0_532 = arith.constant 0 : index
    %621 = vector.load %arg18[%c6_530, %c0_531, %c0_532] : memref<9x32x1xf32, #tpu.memory_space<vmem>>, vector<1x32x1xf32>
    %622 = vector.shape_cast %621 : vector<1x32x1xf32> to vector<32x1xf32>
    %623 = vector.broadcast %622 : vector<32x1xf32> to vector<32x512xf32>
    %624 = arith.mulf %619, %623 : vector<32x512xf32>
    %cst_533 = arith.constant dense<0.000000e+00> : vector<512xf32>
    %625 = vector.multi_reduction <add>, %624, %cst_533 [0] : vector<32x512xf32> to vector<512xf32>
    %626 = vector.shape_cast %625 : vector<512xf32> to vector<1x512xf32>
    %627 = arith.mulf %620, %626 : vector<1x512xf32>
    %628 = arith.addf %618, %627 : vector<1x512xf32>
    %c0_534 = arith.constant 0 : index
    %c144_535 = arith.constant 144 : index
    %629 = vector.load %arg26[%c0_534, %c144_535] : memref<32x768xf32, #tpu.memory_space<vmem>>, vector<32x512xf32>
    %c7_536 = arith.constant 7 : index
    %c0_537 = arith.constant 0 : index
    %630 = vector.load %arg20[%c7_536, %c0_537] : memref<9x512xf32, #tpu.memory_space<vmem>>, vector<1x512xf32>
    %c7_538 = arith.constant 7 : index
    %c0_539 = arith.constant 0 : index
    %c0_540 = arith.constant 0 : index
    %631 = vector.load %arg18[%c7_538, %c0_539, %c0_540] : memref<9x32x1xf32, #tpu.memory_space<vmem>>, vector<1x32x1xf32>
    %632 = vector.shape_cast %631 : vector<1x32x1xf32> to vector<32x1xf32>
    %633 = vector.broadcast %632 : vector<32x1xf32> to vector<32x512xf32>
    %634 = arith.mulf %629, %633 : vector<32x512xf32>
    %cst_541 = arith.constant dense<0.000000e+00> : vector<512xf32>
    %635 = vector.multi_reduction <add>, %634, %cst_541 [0] : vector<32x512xf32> to vector<512xf32>
    %636 = vector.shape_cast %635 : vector<512xf32> to vector<1x512xf32>
    %637 = arith.mulf %630, %636 : vector<1x512xf32>
    %638 = arith.addf %628, %637 : vector<1x512xf32>
    %c0_542 = arith.constant 0 : index
    %c145_543 = arith.constant 145 : index
    %639 = vector.load %arg26[%c0_542, %c145_543] : memref<32x768xf32, #tpu.memory_space<vmem>>, vector<32x512xf32>
    %c8_544 = arith.constant 8 : index
    %c0_545 = arith.constant 0 : index
    %640 = vector.load %arg20[%c8_544, %c0_545] : memref<9x512xf32, #tpu.memory_space<vmem>>, vector<1x512xf32>
    %c8_546 = arith.constant 8 : index
    %c0_547 = arith.constant 0 : index
    %c0_548 = arith.constant 0 : index
    %641 = vector.load %arg18[%c8_546, %c0_547, %c0_548] : memref<9x32x1xf32, #tpu.memory_space<vmem>>, vector<1x32x1xf32>
    %642 = vector.shape_cast %641 : vector<1x32x1xf32> to vector<32x1xf32>
    %643 = vector.broadcast %642 : vector<32x1xf32> to vector<32x512xf32>
    %644 = arith.mulf %639, %643 : vector<32x512xf32>
    %cst_549 = arith.constant dense<0.000000e+00> : vector<512xf32>
    %645 = vector.multi_reduction <add>, %644, %cst_549 [0] : vector<32x512xf32> to vector<512xf32>
    %646 = vector.shape_cast %645 : vector<512xf32> to vector<1x512xf32>
    %647 = arith.mulf %640, %646 : vector<1x512xf32>
    %648 = arith.addf %638, %647 : vector<1x512xf32>
    %649 = arith.addf %559, %648 : vector<1x512xf32>
    %c0_550 = arith.constant 0 : index
    %c111_551 = arith.constant 111 : index
    %650 = vector.load %arg27[%c0_550, %c111_551] : memref<64x768xf32, #tpu.memory_space<vmem>>, vector<64x512xf32>
    %c0_552 = arith.constant 0 : index
    %c0_553 = arith.constant 0 : index
    %651 = vector.load %arg20[%c0_552, %c0_553] : memref<9x512xf32, #tpu.memory_space<vmem>>, vector<1x512xf32>
    %c0_554 = arith.constant 0 : index
    %c0_555 = arith.constant 0 : index
    %c0_556 = arith.constant 0 : index
    %652 = vector.load %arg19[%c0_554, %c0_555, %c0_556] : memref<9x64x1xf32, #tpu.memory_space<vmem>>, vector<1x64x1xf32>
    %653 = vector.shape_cast %652 : vector<1x64x1xf32> to vector<64x1xf32>
    %654 = vector.broadcast %653 : vector<64x1xf32> to vector<64x512xf32>
    %655 = arith.mulf %650, %654 : vector<64x512xf32>
    %cst_557 = arith.constant dense<0.000000e+00> : vector<512xf32>
    %656 = vector.multi_reduction <add>, %655, %cst_557 [0] : vector<64x512xf32> to vector<512xf32>
    %657 = vector.shape_cast %656 : vector<512xf32> to vector<1x512xf32>
    %658 = arith.mulf %651, %657 : vector<1x512xf32>
    %c0_558 = arith.constant 0 : index
    %c112_559 = arith.constant 112 : index
    %659 = vector.load %arg27[%c0_558, %c112_559] : memref<64x768xf32, #tpu.memory_space<vmem>>, vector<64x512xf32>
    %c1_560 = arith.constant 1 : index
    %c0_561 = arith.constant 0 : index
    %660 = vector.load %arg20[%c1_560, %c0_561] : memref<9x512xf32, #tpu.memory_space<vmem>>, vector<1x512xf32>
    %c1_562 = arith.constant 1 : index
    %c0_563 = arith.constant 0 : index
    %c0_564 = arith.constant 0 : index
    %661 = vector.load %arg19[%c1_562, %c0_563, %c0_564] : memref<9x64x1xf32, #tpu.memory_space<vmem>>, vector<1x64x1xf32>
    %662 = vector.shape_cast %661 : vector<1x64x1xf32> to vector<64x1xf32>
    %663 = vector.broadcast %662 : vector<64x1xf32> to vector<64x512xf32>
    %664 = arith.mulf %659, %663 : vector<64x512xf32>
    %cst_565 = arith.constant dense<0.000000e+00> : vector<512xf32>
    %665 = vector.multi_reduction <add>, %664, %cst_565 [0] : vector<64x512xf32> to vector<512xf32>
    %666 = vector.shape_cast %665 : vector<512xf32> to vector<1x512xf32>
    %667 = arith.mulf %660, %666 : vector<1x512xf32>
    %668 = arith.addf %658, %667 : vector<1x512xf32>
    %c0_566 = arith.constant 0 : index
    %c113_567 = arith.constant 113 : index
    %669 = vector.load %arg27[%c0_566, %c113_567] : memref<64x768xf32, #tpu.memory_space<vmem>>, vector<64x512xf32>
    %c2_568 = arith.constant 2 : index
    %c0_569 = arith.constant 0 : index
    %670 = vector.load %arg20[%c2_568, %c0_569] : memref<9x512xf32, #tpu.memory_space<vmem>>, vector<1x512xf32>
    %c2_570 = arith.constant 2 : index
    %c0_571 = arith.constant 0 : index
    %c0_572 = arith.constant 0 : index
    %671 = vector.load %arg19[%c2_570, %c0_571, %c0_572] : memref<9x64x1xf32, #tpu.memory_space<vmem>>, vector<1x64x1xf32>
    %672 = vector.shape_cast %671 : vector<1x64x1xf32> to vector<64x1xf32>
    %673 = vector.broadcast %672 : vector<64x1xf32> to vector<64x512xf32>
    %674 = arith.mulf %669, %673 : vector<64x512xf32>
    %cst_573 = arith.constant dense<0.000000e+00> : vector<512xf32>
    %675 = vector.multi_reduction <add>, %674, %cst_573 [0] : vector<64x512xf32> to vector<512xf32>
    %676 = vector.shape_cast %675 : vector<512xf32> to vector<1x512xf32>
    %677 = arith.mulf %670, %676 : vector<1x512xf32>
    %678 = arith.addf %668, %677 : vector<1x512xf32>
    %c0_574 = arith.constant 0 : index
    %c127_575 = arith.constant 127 : index
    %679 = vector.load %arg27[%c0_574, %c127_575] : memref<64x768xf32, #tpu.memory_space<vmem>>, vector<64x512xf32>
    %c3_576 = arith.constant 3 : index
    %c0_577 = arith.constant 0 : index
    %680 = vector.load %arg20[%c3_576, %c0_577] : memref<9x512xf32, #tpu.memory_space<vmem>>, vector<1x512xf32>
    %c3_578 = arith.constant 3 : index
    %c0_579 = arith.constant 0 : index
    %c0_580 = arith.constant 0 : index
    %681 = vector.load %arg19[%c3_578, %c0_579, %c0_580] : memref<9x64x1xf32, #tpu.memory_space<vmem>>, vector<1x64x1xf32>
    %682 = vector.shape_cast %681 : vector<1x64x1xf32> to vector<64x1xf32>
    %683 = vector.broadcast %682 : vector<64x1xf32> to vector<64x512xf32>
    %684 = arith.mulf %679, %683 : vector<64x512xf32>
    %cst_581 = arith.constant dense<0.000000e+00> : vector<512xf32>
    %685 = vector.multi_reduction <add>, %684, %cst_581 [0] : vector<64x512xf32> to vector<512xf32>
    %686 = vector.shape_cast %685 : vector<512xf32> to vector<1x512xf32>
    %687 = arith.mulf %680, %686 : vector<1x512xf32>
    %688 = arith.addf %678, %687 : vector<1x512xf32>
    %c0_582 = arith.constant 0 : index
    %c128_583 = arith.constant 128 : index
    %689 = vector.load %arg27[%c0_582, %c128_583] : memref<64x768xf32, #tpu.memory_space<vmem>>, vector<64x512xf32>
    %c4_584 = arith.constant 4 : index
    %c0_585 = arith.constant 0 : index
    %690 = vector.load %arg20[%c4_584, %c0_585] : memref<9x512xf32, #tpu.memory_space<vmem>>, vector<1x512xf32>
    %c4_586 = arith.constant 4 : index
    %c0_587 = arith.constant 0 : index
    %c0_588 = arith.constant 0 : index
    %691 = vector.load %arg19[%c4_586, %c0_587, %c0_588] : memref<9x64x1xf32, #tpu.memory_space<vmem>>, vector<1x64x1xf32>
    %692 = vector.shape_cast %691 : vector<1x64x1xf32> to vector<64x1xf32>
    %693 = vector.broadcast %692 : vector<64x1xf32> to vector<64x512xf32>
    %694 = arith.mulf %689, %693 : vector<64x512xf32>
    %cst_589 = arith.constant dense<0.000000e+00> : vector<512xf32>
    %695 = vector.multi_reduction <add>, %694, %cst_589 [0] : vector<64x512xf32> to vector<512xf32>
    %696 = vector.shape_cast %695 : vector<512xf32> to vector<1x512xf32>
    %697 = arith.mulf %690, %696 : vector<1x512xf32>
    %698 = arith.addf %688, %697 : vector<1x512xf32>
    %c0_590 = arith.constant 0 : index
    %c129_591 = arith.constant 129 : index
    %699 = vector.load %arg27[%c0_590, %c129_591] : memref<64x768xf32, #tpu.memory_space<vmem>>, vector<64x512xf32>
    %c5_592 = arith.constant 5 : index
    %c0_593 = arith.constant 0 : index
    %700 = vector.load %arg20[%c5_592, %c0_593] : memref<9x512xf32, #tpu.memory_space<vmem>>, vector<1x512xf32>
    %c5_594 = arith.constant 5 : index
    %c0_595 = arith.constant 0 : index
    %c0_596 = arith.constant 0 : index
    %701 = vector.load %arg19[%c5_594, %c0_595, %c0_596] : memref<9x64x1xf32, #tpu.memory_space<vmem>>, vector<1x64x1xf32>
    %702 = vector.shape_cast %701 : vector<1x64x1xf32> to vector<64x1xf32>
    %703 = vector.broadcast %702 : vector<64x1xf32> to vector<64x512xf32>
    %704 = arith.mulf %699, %703 : vector<64x512xf32>
    %cst_597 = arith.constant dense<0.000000e+00> : vector<512xf32>
    %705 = vector.multi_reduction <add>, %704, %cst_597 [0] : vector<64x512xf32> to vector<512xf32>
    %706 = vector.shape_cast %705 : vector<512xf32> to vector<1x512xf32>
    %707 = arith.mulf %700, %706 : vector<1x512xf32>
    %708 = arith.addf %698, %707 : vector<1x512xf32>
    %c0_598 = arith.constant 0 : index
    %c143_599 = arith.constant 143 : index
    %709 = vector.load %arg27[%c0_598, %c143_599] : memref<64x768xf32, #tpu.memory_space<vmem>>, vector<64x512xf32>
    %c6_600 = arith.constant 6 : index
    %c0_601 = arith.constant 0 : index
    %710 = vector.load %arg20[%c6_600, %c0_601] : memref<9x512xf32, #tpu.memory_space<vmem>>, vector<1x512xf32>
    %c6_602 = arith.constant 6 : index
    %c0_603 = arith.constant 0 : index
    %c0_604 = arith.constant 0 : index
    %711 = vector.load %arg19[%c6_602, %c0_603, %c0_604] : memref<9x64x1xf32, #tpu.memory_space<vmem>>, vector<1x64x1xf32>
    %712 = vector.shape_cast %711 : vector<1x64x1xf32> to vector<64x1xf32>
    %713 = vector.broadcast %712 : vector<64x1xf32> to vector<64x512xf32>
    %714 = arith.mulf %709, %713 : vector<64x512xf32>
    %cst_605 = arith.constant dense<0.000000e+00> : vector<512xf32>
    %715 = vector.multi_reduction <add>, %714, %cst_605 [0] : vector<64x512xf32> to vector<512xf32>
    %716 = vector.shape_cast %715 : vector<512xf32> to vector<1x512xf32>
    %717 = arith.mulf %710, %716 : vector<1x512xf32>
    %718 = arith.addf %708, %717 : vector<1x512xf32>
    %c0_606 = arith.constant 0 : index
    %c144_607 = arith.constant 144 : index
    %719 = vector.load %arg27[%c0_606, %c144_607] : memref<64x768xf32, #tpu.memory_space<vmem>>, vector<64x512xf32>
    %c7_608 = arith.constant 7 : index
    %c0_609 = arith.constant 0 : index
    %720 = vector.load %arg20[%c7_608, %c0_609] : memref<9x512xf32, #tpu.memory_space<vmem>>, vector<1x512xf32>
    %c7_610 = arith.constant 7 : index
    %c0_611 = arith.constant 0 : index
    %c0_612 = arith.constant 0 : index
    %721 = vector.load %arg19[%c7_610, %c0_611, %c0_612] : memref<9x64x1xf32, #tpu.memory_space<vmem>>, vector<1x64x1xf32>
    %722 = vector.shape_cast %721 : vector<1x64x1xf32> to vector<64x1xf32>
    %723 = vector.broadcast %722 : vector<64x1xf32> to vector<64x512xf32>
    %724 = arith.mulf %719, %723 : vector<64x512xf32>
    %cst_613 = arith.constant dense<0.000000e+00> : vector<512xf32>
    %725 = vector.multi_reduction <add>, %724, %cst_613 [0] : vector<64x512xf32> to vector<512xf32>
    %726 = vector.shape_cast %725 : vector<512xf32> to vector<1x512xf32>
    %727 = arith.mulf %720, %726 : vector<1x512xf32>
    %728 = arith.addf %718, %727 : vector<1x512xf32>
    %c0_614 = arith.constant 0 : index
    %c145_615 = arith.constant 145 : index
    %729 = vector.load %arg27[%c0_614, %c145_615] : memref<64x768xf32, #tpu.memory_space<vmem>>, vector<64x512xf32>
    %c8_616 = arith.constant 8 : index
    %c0_617 = arith.constant 0 : index
    %730 = vector.load %arg20[%c8_616, %c0_617] : memref<9x512xf32, #tpu.memory_space<vmem>>, vector<1x512xf32>
    %c8_618 = arith.constant 8 : index
    %c0_619 = arith.constant 0 : index
    %c0_620 = arith.constant 0 : index
    %731 = vector.load %arg19[%c8_618, %c0_619, %c0_620] : memref<9x64x1xf32, #tpu.memory_space<vmem>>, vector<1x64x1xf32>
    %732 = vector.shape_cast %731 : vector<1x64x1xf32> to vector<64x1xf32>
    %733 = vector.broadcast %732 : vector<64x1xf32> to vector<64x512xf32>
    %734 = arith.mulf %729, %733 : vector<64x512xf32>
    %cst_621 = arith.constant dense<0.000000e+00> : vector<512xf32>
    %735 = vector.multi_reduction <add>, %734, %cst_621 [0] : vector<64x512xf32> to vector<512xf32>
    %736 = vector.shape_cast %735 : vector<512xf32> to vector<1x512xf32>
    %737 = arith.mulf %730, %736 : vector<1x512xf32>
    %738 = arith.addf %728, %737 : vector<1x512xf32>
    %739 = arith.addf %649, %738 : vector<1x512xf32>
    %c0_622 = arith.constant 0 : index
    %c0_623 = arith.constant 0 : index
    %740 = vector.load %arg21[%c0_622, %c0_623] : memref<1x512xf32, #tpu.memory_space<vmem>>, vector<1x512xf32>
    tpu.vector_store %arg21[%c0_622, %c0_623], %739 {strides = array<i32>} : memref<1x512xf32, #tpu.memory_space<vmem>>, vector<1x512xf32>,
    return
  }
  func.func @transform_0(%arg0: i32) -> (i32, i32) {
    %c0_i32 = arith.constant 0 : i32
    %c0_i32_0 = arith.constant 0 : i32
    %c0_i32_1 = arith.constant 0 : i32
    return %c0_i32, %c0_i32_0 : i32, i32
  }
  func.func @transform_1(%arg0: i32) -> (i32, i32, i32) {
    %c0_i32 = arith.constant 0 : i32
    %c0_i32_0 = arith.constant 0 : i32
    %c0_i32_1 = arith.constant 0 : i32
    %c0_i32_2 = arith.constant 0 : i32
    return %c0_i32, %c0_i32_0, %c0_i32_1 : i32, i32, i32
  }
  func.func @transform_2(%arg0: i32) -> (i32, i32) {
    %c0_i32 = arith.constant 0 : i32
    %c0_i32_0 = arith.constant 0 : i32
    %c0_i32_1 = arith.constant 0 : i32
    return %c0_i32, %c0_i32_0 : i32, i32
  }
  func.func @transform_3(%arg0: i32) -> (i32, i32) {
    %c0_i32 = arith.constant 0 : i32
    %c0_i32_0 = arith.constant 0 : i32
    %c0_i32_1 = arith.constant 0 : i32
    return %c0_i32, %c0_i32_0 : i32, i32
  }
  func.func @transform_4(%arg0: i32) -> (i32, i32, i32) {
    %c0_i32 = arith.constant 0 : i32
    %c0_i32_0 = arith.constant 0 : i32
    %c0_i32_1 = arith.constant 0 : i32
    %c0_i32_2 = arith.constant 0 : i32
    return %c0_i32, %c0_i32_0, %c0_i32_1 : i32, i32, i32
  }
  func.func @transform_5(%arg0: i32) -> (i32, i32) {
    %c0_i32 = arith.constant 0 : i32
    %c0_i32_0 = arith.constant 0 : i32
    %c0_i32_1 = arith.constant 0 : i32
    return %c0_i32, %c0_i32_0 : i32, i32
  }
  func.func @transform_6(%arg0: i32) -> (i32, i32, i32, i32) {
    %c0_i32 = arith.constant 0 : i32
    %c0_i32_0 = arith.constant 0 : i32
    %c0_i32_1 = arith.constant 0 : i32
    %c0_i32_2 = arith.constant 0 : i32
    %c0_i32_3 = arith.constant 0 : i32
    return %c0_i32, %c0_i32_0, %c0_i32_1, %c0_i32_2 : i32, i32, i32, i32
  }
  func.func @transform_7(%arg0: i32) -> (i32, i32) {
    %c0_i32 = arith.constant 0 : i32
    %c0_i32_0 = arith.constant 0 : i32
    %c0_i32_1 = arith.constant 0 : i32
    return %c0_i32, %c0_i32_0 : i32, i32
  }
  func.func @transform_8(%arg0: i32) -> (i32, i32, i32, i32) {
    %c0_i32 = arith.constant 0 : i32
    %c0_i32_0 = arith.constant 0 : i32
    %c0_i32_1 = arith.constant 0 : i32
    %c0_i32_2 = arith.constant 0 : i32
    %c0_i32_3 = arith.constant 0 : i32
    return %c0_i32, %c0_i32_0, %c0_i32_1, %c0_i32_2 : i32, i32, i32, i32
  }
  func.func @transform_9(%arg0: i32) -> (i32, i32) {
    %c0_i32 = arith.constant 0 : i32
    %c0_i32_0 = arith.constant 0 : i32
    %c0_i32_1 = arith.constant 0 : i32
    return %c0_i32, %c0_i32_0 : i32, i32
  }
  func.func @transform_10(%arg0: i32) -> (i32, i32) {
    %c0_i32 = arith.constant 0 : i32
    %c0_i32_0 = arith.constant 0 : i32
    %c0_i32_1 = arith.constant 0 : i32
    return %c0_i32, %c0_i32_0 : i32, i32
  }
  func.func @transform_11(%arg0: i32) -> (i32, i32, i32) {
    %c0_i32 = arith.constant 0 : i32
    %c0_i32_0 = arith.constant 0 : i32
    %c0_i32_1 = arith.constant 0 : i32
    %c0_i32_2 = arith.constant 0 : i32
    return %c0_i32, %c0_i32_0, %c0_i32_1 : i32, i32, i32
  }
  func.func @transform_12(%arg0: i32) -> (i32, i32) {
    %c0_i32 = arith.constant 0 : i32
    %c0_i32_0 = arith.constant 0 : i32
    %c0_i32_1 = arith.constant 0 : i32
    return %c0_i32, %c0_i32_0 : i32, i32
  }
  func.func @transform_13(%arg0: i32) -> (i32, i32, i32, i32) {
    %c0_i32 = arith.constant 0 : i32
    %c0_i32_0 = arith.constant 0 : i32
    %c0_i32_1 = arith.constant 0 : i32
    %c0_i32_2 = arith.constant 0 : i32
    %c0_i32_3 = arith.constant 0 : i32
    return %c0_i32, %c0_i32_0, %c0_i32_1, %c0_i32_2 : i32, i32, i32, i32
  }
  func.func @transform_14(%arg0: i32) -> (i32, i32) {
    %c0_i32 = arith.constant 0 : i32
    %c0_i32_0 = arith.constant 0 : i32
    %c0_i32_1 = arith.constant 0 : i32
    return %c0_i32, %c0_i32_0 : i32, i32
  }
  func.func @transform_15(%arg0: i32) -> (i32, i32, i32, i32) {
    %c0_i32 = arith.constant 0 : i32
    %c0_i32_0 = arith.constant 0 : i32
    %c0_i32_1 = arith.constant 0 : i32
    %c0_i32_2 = arith.constant 0 : i32
    %c0_i32_3 = arith.constant 0 : i32
    return %c0_i32, %c0_i32_0, %c0_i32_1, %c0_i32_2 : i32, i32, i32, i32
  }
  func.func @transform_16(%arg0: i32) -> (i32, i32, i32) {
    %c0_i32 = arith.constant 0 : i32
    %c0_i32_0 = arith.constant 0 : i32
    %c0_i32_1 = arith.constant 0 : i32
    %c0_i32_2 = arith.constant 0 : i32
    return %c0_i32, %c0_i32_0, %c0_i32_1 : i32, i32, i32
  }
  func.func @transform_17(%arg0: i32) -> (i32, i32, i32) {
    %c0_i32 = arith.constant 0 : i32
    %c0_i32_0 = arith.constant 0 : i32
    %c0_i32_1 = arith.constant 0 : i32
    %c0_i32_2 = arith.constant 0 : i32
    return %c0_i32, %c0_i32_0, %c0_i32_1 : i32, i32, i32
  }
  func.func @transform_18(%arg0: i32) -> (i32, i32, i32) {
    %c0_i32 = arith.constant 0 : i32
    %c0_i32_0 = arith.constant 0 : i32
    %c0_i32_1 = arith.constant 0 : i32
    %c0_i32_2 = arith.constant 0 : i32
    return %c0_i32, %c0_i32_0, %c0_i32_1 : i32, i32, i32
  }
  func.func @transform_19(%arg0: i32) -> (i32, i32) {
    %c0_i32 = arith.constant 0 : i32
    %c0_i32_0 = arith.constant 0 : i32
    %c0_i32_1 = arith.constant 0 : i32
    return %c0_i32, %c0_i32_0 : i32, i32
  }
  func.func @transform_20(%arg0: i32) -> (i32, i32) {
    %c0_i32 = arith.constant 0 : i32
    %c0_i32_0 = arith.constant 0 : i32
    %c0_i32_1 = arith.constant 0 : i32
    return %c0_i32, %c0_i32_0 : i32, i32
  }
}

</mosaic_0001>

<llo_original>
// kernel: featnet_forward.1
$region0: #{featnet_forward.1}
  #allocation0 [shape = 'u32[]', space=smem, size = 0x4, offset = 0x4, fixed_abs, tag = 'smem constant byte address 0x4 - core index']
  #allocation1 [shape = 'u32[72,128]{1,0:T(1,128)}', space=vmem, size = 0x9000, scoped, tag = 'internal scratch']
  #allocation2 [shape = 'f32[1,768]{1,0:T(1,128)}', space=vmem, size = 0xc00, scoped, tag = 'scratch operand']
  #allocation3 [shape = 'f32[16,384]{1,0:T(8,128)}', space=vmem, size = 0x6000, scoped, tag = 'scratch operand']
  #allocation4 [shape = 'f32[32,288]{1,0:T(8,128)}', space=vmem, size = 0xc000, scoped, tag = 'scratch operand']
  #allocation5 [shape = 'f32[16,768]{1,0:T(8,128)}', space=vmem, size = 0xc000, scoped, tag = 'scratch operand']
  #allocation6 [shape = 'f32[32,768]{1,0:T(8,128)}', space=vmem, size = 0x18000, scoped, tag = 'scratch operand']
  #allocation7 [shape = 'f32[64,768]{1,0:T(8,128)}', space=vmem, size = 0x30000, scoped, tag = 'scratch operand']
  %s0 = inlined_call_operand.vmem [shape: f32[1,512], index: 0, kind: input, shape index: {}]
  %s1 = inlined_call_operand.vmem [shape: f32[21,16,1], index: 1, kind: input, shape index: {}]
  %s2 = inlined_call_operand.vmem [shape: f32[21,512], index: 2, kind: input, shape index: {}]
  %s3 = inlined_call_operand.vmem [shape: f32[512,128], index: 3, kind: input, shape index: {}]
  %s4 = inlined_call_operand.vmem [shape: f32[15,32,16], index: 4, kind: input, shape index: {}]
  %s5 = inlined_call_operand.hbm [shape: f32[15,128], index: 5, kind: input, shape index: {}]
  %s6 = inlined_call_operand.vmem [shape: f32[2,2,32,4], index: 6, kind: input, shape index: {}]
  %s7 = inlined_call_operand.hbm [shape: f32[4,512], index: 7, kind: input, shape index: {}]
  %s8 = inlined_call_operand.vmem [shape: f32[2,2,128,512], index: 8, kind: input, shape index: {}]
  %s9 = inlined_call_operand.vmem [shape: f32[32,1], index: 9, kind: input, shape index: {}]
  %s10 = inlined_call_operand.vmem [shape: f32[128,32], index: 10, kind: input, shape index: {}]
  %s11 = inlined_call_operand.vmem [shape: f32[9,64,32], index: 11, kind: input, shape index: {}]
  %s12 = inlined_call_operand.hbm [shape: f32[9,32], index: 12, kind: input, shape index: {}]
  %s13 = inlined_call_operand.vmem [shape: f32[2,2,64,16], index: 13, kind: input, shape index: {}]
  %s14 = inlined_call_operand.vmem [shape: f32[16,512], index: 14, kind: input, shape index: {}]
  %s15 = inlined_call_operand.vmem [shape: f32[2,2,32,512], index: 15, kind: input, shape index: {}]
  %s16 = inlined_call_operand.vmem [shape: f32[9,16,1], index: 16, kind: input, shape index: {}]
  %s17 = inlined_call_operand.vmem [shape: f32[9,32,1], index: 17, kind: input, shape index: {}]
  %s18 = inlined_call_operand.vmem [shape: f32[9,64,1], index: 18, kind: input, shape index: {}]
  %s19 = inlined_call_operand.hbm [shape: f32[9,512], index: 19, kind: input, shape index: {}]
  %s20 = inlined_call_operand.vmem [shape: f32[1,512], index: 20, kind: output, shape index: {}]
  %s21 = sld [smem:[#allocation0]]
  $region106: #{featnet_forward.1} parent=0
    _
  %s23 = ssub.s32 1, %s21
  %s24 = scalar_select 0, %s23, %s21
  $region1: #{featnet_forward.1} parent=0
    #allocation8 [shape = 'u8[8192]{0}', space=vmem, size = 0x2000, scoped, tag = 'input window, operand 5, single buffered']
    #allocation9 [shape = 's32[1]{0}', space=sflag, size = 0x4, scoped, tag = 'scoped memory for featnet_forward.1']
    #allocation10 [shape = 'u8[8192]{0}', space=vmem, size = 0x2000, scoped, tag = 'input window, operand 7, single buffered']
    #allocation11 [shape = 's32[1]{0}', space=sflag, size = 0x4, scoped, tag = 'scoped memory for featnet_forward.1']
    #allocation12 [shape = 'u8[8192]{0}', space=vmem, size = 0x2000, scoped, tag = 'input window, operand 12, single buffered']
    #allocation13 [shape = 'u8[32768]{0}', space=vmem, size = 0x8000, scoped, tag = 'input window, operand 19, single buffered']
    #allocation14 [shape = 's32[1]{0}', space=sflag, size = 0x4, scoped, tag = 'scoped memory for featnet_forward.1']
    %25 = vsyncpa [#allocation9], 0
    %26 = vsyncpa [#allocation11], 0
    %27 = vsyncpa [#allocation14], 0
    // Predicated region
    $region2: #{featnet_forward.1} parent=1 // pred_check
      _
    $region3: #{featnet_forward.1} parent=1 // pred_check_branch
      %29 = sbr.rel (0) target = $region5
    $region4: #{featnet_forward.1} parent=1 // pred_region
      _
    $region5: #{featnet_forward.1} parent=1 // pred_fallthru
      _
    // Predicated region
    $region6: #{featnet_forward.1} parent=1 // pred_check
      _
    $region7: #{featnet_forward.1} parent=1 // pred_check_branch
      %31 = sbr.rel (0) target = $region9
    $region8: #{featnet_forward.1} parent=1 // pred_region
      _
    $region9: #{featnet_forward.1} parent=1 // pred_fallthru
      _
    // Predicated region
    $region10: #{featnet_forward.1} parent=1 // pred_check
      _
    $region11: #{featnet_forward.1} parent=1 // pred_check_branch
      %33 = sbr.rel (0) target = $region13
    $region12: #{featnet_forward.1} parent=1 // pred_region
      _
    $region13: #{featnet_forward.1} parent=1 // pred_fallthru
      _
    // Predicated region
    $region14: #{featnet_forward.1} parent=1 // pred_check
      _
    $region15: #{featnet_forward.1} parent=1 // pred_check_branch
      %35 = sbr.rel (0) target = $region17
    $region16: #{featnet_forward.1} parent=1 // pred_region
      _
    $region17: #{featnet_forward.1} parent=1 // pred_fallthru
      _
    // Predicated region
    $region18: #{featnet_forward.1} parent=1 // pred_check
      _
    $region19: #{featnet_forward.1} parent=1 // pred_check_branch
      %37 = sbr.rel (0) target = $region21
    $region20: #{featnet_forward.1} parent=1 // pred_region
      _
    $region21: #{featnet_forward.1} parent=1 // pred_fallthru
      _
    // Predicated region
    $region22: #{featnet_forward.1} parent=1 // pred_check
      _
    $region23: #{featnet_forward.1} parent=1 // pred_check_branch
      %39 = sbr.rel (0) target = $region25
    $region24: #{featnet_forward.1} parent=1 // pred_region
      %41 = vsyncadd [#allocation9], 0
      %s42 = sshll.u32 %s5, 4
      %s43 = int_to_ptr.hbm [resolvable:$true] %s42
      %s44 = sshll.u32 [#allocation8], 4
      %s45 = int_to_ptr.vmem [resolvable:$true] %s44
      %50 = dma.hbm_to_vmem [thread:$0]  %s43, 256, %s45, [#allocation9], 128, 128, 8
    $region25: #{featnet_forward.1} parent=1 // pred_fallthru
      _
    // Predicated region
    $region26: #{featnet_forward.1} parent=1 // pred_check
      _
    $region27: #{featnet_forward.1} parent=1 // pred_check_branch
      %52 = sbr.rel (0) target = $region29
    $region28: #{featnet_forward.1} parent=1 // pred_region
      _
    $region29: #{featnet_forward.1} parent=1 // pred_fallthru
      _
    // Predicated region
    $region30: #{featnet_forward.1} parent=1 // pred_check
      _
    $region31: #{featnet_forward.1} parent=1 // pred_check_branch
      %54 = sbr.rel (0) target = $region33
    $region32: #{featnet_forward.1} parent=1 // pred_region
      %56 = vsyncadd [#allocation11], 0
      %s58 = sshll.u32 %s7, 4
      %s59 = int_to_ptr.hbm [resolvable:$true] %s58
      %s60 = sshll.u32 [#allocation10], 4
      %s61 = int_to_ptr.vmem [resolvable:$true] %s60
      %63 = dma.hbm_to_vmem [thread:$0]  %s59, 256, %s61, [#allocation11]
    $region33: #{featnet_forward.1} parent=1 // pred_fallthru
      _
    // Predicated region
    $region34: #{featnet_forward.1} parent=1 // pred_check
      _
    $region35: #{featnet_forward.1} parent=1 // pred_check_branch
      %65 = sbr.rel (0) target = $region37
    $region36: #{featnet_forward.1} parent=1 // pred_region
      _
    $region37: #{featnet_forward.1} parent=1 // pred_fallthru
      _
    // Predicated region
    $region38: #{featnet_forward.1} parent=1 // pred_check
      _
    $region39: #{featnet_forward.1} parent=1 // pred_check_branch
      %67 = sbr.rel (0) target = $region41
    $region40: #{featnet_forward.1} parent=1 // pred_region
      _
    $region41: #{featnet_forward.1} parent=1 // pred_fallthru
      _
    // Predicated region
    $region42: #{featnet_forward.1} parent=1 // pred_check
      _
    $region43: #{featnet_forward.1} parent=1 // pred_check_branch
      %69 = sbr.rel (0) target = $region45
    $region44: #{featnet_forward.1} parent=1 // pred_region
      _
    $region45: #{featnet_forward.1} parent=1 // pred_fallthru
      _
    // Predicated region
    $region46: #{featnet_forward.1} parent=1 // pred_check
      _
    $region47: #{featnet_forward.1} parent=1 // pred_check_branch
      %71 = sbr.rel (0) target = $region49
    $region48: #{featnet_forward.1} parent=1 // pred_region
      _
    $region49: #{featnet_forward.1} parent=1 // pred_fallthru
      _
    // Predicated region
    $region50: #{featnet_forward.1} parent=1 // pred_check
      _
    $region51: #{featnet_forward.1} parent=1 // pred_check_branch
      %73 = sbr.rel (0) target = $region53
    $region52: #{featnet_forward.1} parent=1 // pred_region
      %75 = vsyncadd [#allocation11], 0
      %s76 = sshll.u32 %s12, 4
      %s77 = int_to_ptr.hbm [resolvable:$true] %s76
      %s78 = sshll.u32 [#allocation12], 4
      %s79 = int_to_ptr.vmem [resolvable:$true] %s78
      %84 = dma.hbm_to_vmem [thread:$0]  %s77, 256, %s79, [#allocation11], 128, 128, 8
    $region53: #{featnet_forward.1} parent=1 // pred_fallthru
      _
    // Predicated region
    $region54: #{featnet_forward.1} parent=1 // pred_check
      _
    $region55: #{featnet_forward.1} parent=1 // pred_check_branch
      %86 = sbr.rel (0) target = $region57
    $region56: #{featnet_forward.1} parent=1 // pred_region
      _
    $region57: #{featnet_forward.1} parent=1 // pred_fallthru
      _
    // Predicated region
    $region58: #{featnet_forward.1} parent=1 // pred_check
      _
    $region59: #{featnet_forward.1} parent=1 // pred_check_branch
      %88 = sbr.rel (0) target = $region61
    $region60: #{featnet_forward.1} parent=1 // pred_region
      _
    $region61: #{featnet_forward.1} parent=1 // pred_fallthru
      _
    // Predicated region
    $region62: #{featnet_forward.1} parent=1 // pred_check
      _
    $region63: #{featnet_forward.1} parent=1 // pred_check_branch
      %90 = sbr.rel (0) target = $region65
    $region64: #{featnet_forward.1} parent=1 // pred_region
      _
    $region65: #{featnet_forward.1} parent=1 // pred_fallthru
      _
    // Predicated region
    $region66: #{featnet_forward.1} parent=1 // pred_check
      _
    $region67: #{featnet_forward.1} parent=1 // pred_check_branch
      %92 = sbr.rel (0) target = $region69
    $region68: #{featnet_forward.1} parent=1 // pred_region
      _
    $region69: #{featnet_forward.1} parent=1 // pred_fallthru
      _
    // Predicated region
    $region70: #{featnet_forward.1} parent=1 // pred_check
      _
    $region71: #{featnet_forward.1} parent=1 // pred_check_branch
      %94 = sbr.rel (0) target = $region73
    $region72: #{featnet_forward.1} parent=1 // pred_region
      _
    $region73: #{featnet_forward.1} parent=1 // pred_fallthru
      _
    // Predicated region
    $region74: #{featnet_forward.1} parent=1 // pred_check
      _
    $region75: #{featnet_forward.1} parent=1 // pred_check_branch
      %96 = sbr.rel (0) target = $region77
    $region76: #{featnet_forward.1} parent=1 // pred_region
      _
    $region77: #{featnet_forward.1} parent=1 // pred_fallthru
      _
    // Predicated region
    $region78: #{featnet_forward.1} parent=1 // pred_check
      _
    $region79: #{featnet_forward.1} parent=1 // pred_check_branch
      %98 = sbr.rel (0) target = $region81
    $region80: #{featnet_forward.1} parent=1 // pred_region
      %100 = vsyncadd [#allocation14], 0
      %s101 = sshll.u32 %s19, 4
      %s102 = int_to_ptr.hbm [resolvable:$true] %s101
      %s103 = sshll.u32 [#allocation13], 4
      %s104 = int_to_ptr.vmem [resolvable:$true] %s103
      %109 = dma.hbm_to_vmem [thread:$0]  %s102, 1024, %s104, [#allocation14], 512, 512, 32
    $region81: #{featnet_forward.1} parent=1 // pred_fallthru
      _
    // Predicated region
    $region82: #{featnet_forward.1} parent=1 // pred_check
      _
    $region83: #{featnet_forward.1} parent=1 // pred_check_branch
      %111 = sbr.rel (0) target = $region85
    $region84: #{featnet_forward.1} parent=1 // pred_region
      %113 = dma.done [#allocation9], 256
    $region85: #{featnet_forward.1} parent=1 // pred_fallthru
      _
    // Predicated region
    $region86: #{featnet_forward.1} parent=1 // pred_check
      _
    $region87: #{featnet_forward.1} parent=1 // pred_check_branch
      %115 = sbr.rel (0) target = $region89
    $region88: #{featnet_forward.1} parent=1 // pred_region
      %117 = dma.done [#allocation11], 256
    $region89: #{featnet_forward.1} parent=1 // pred_fallthru
      _
    // Predicated region
    $region90: #{featnet_forward.1} parent=1 // pred_check
      _
    $region91: #{featnet_forward.1} parent=1 // pred_check_branch
      %119 = sbr.rel (0) target = $region93
    $region92: #{featnet_forward.1} parent=1 // pred_region
      %121 = dma.done [#allocation11], 256
    $region93: #{featnet_forward.1} parent=1 // pred_fallthru
      _
    // Predicated region
    $region94: #{featnet_forward.1} parent=1 // pred_check
      _
    $region95: #{featnet_forward.1} parent=1 // pred_check_branch
      %123 = sbr.rel (0) target = $region97
    $region96: #{featnet_forward.1} parent=1 // pred_region
      %125 = dma.done [#allocation14], 1024
    $region97: #{featnet_forward.1} parent=1 // pred_fallthru
      _
    %v126 = vld [vmem:[%s0] sm:$0xf]
    %v127 = vlaneseq
    %vm128 = vcmp.ge.s32.totalorder %v127, 0
    %vm129 = vcmp.lt.s32.totalorder %v127, 768
    %vm130 = vmand %vm128, %vm129
    %131 = vst.msk [vmem:[#allocation2] sm:$0x3f] %vm130, 0.0
    %vm132 = vcmp.lt.s32.totalorder %v127, 512
    %vm133 = vmand %vm128, %vm132
    %134 = vst.msk [vmem:[#allocation2 + $0x1] sm:$0xf] %vm133, %v126
    %v135 = vld [vmem:[#allocation2] sm:$0x1f]
    %v136 = vld [vmem:[%s2] ss:$8 sm:$0xf]
    %v137 = vld [vmem:[%s1] sm:$0xff]
    %v138 = vld [vmem:[%s1 + $0x8] sm:$0xff]
    %140 = vrot.lane.b32.xlu0 %v135, 19
    %v141 = vpop.permute.xlu0 %140
    %v142 = vrot.slane %v141, 1
    %vm143 = vcmask 154624
    %v144 = vsel %vm143, %v141, %v142
    %v146 = vmul.f32 %v136, %v144
    %148 = vset.pattern.permute.xlu0 0
    %149 = vperm.xlu0 %148, %v137
    %v150 = vpop.permute.xlu0 %149
    %153 = vset.pattern.permute.xlu0 0
    %154 = vperm.xlu0 %153, %v138
    %v155 = vpop.permute.xlu0 %154
    %v158 = vperm.slane %v146, 0
    %v159 = vperm.slane %v146, 1
    %v160 = vperm.slane %v146, 2
    %v161 = vperm.slane %v146, 3
    %v166 = vmul.f32 %v150, %v158
    %v167 = vmul.f32 %v150, %v159
    %v168 = vmul.f32 %v150, %v160
    %v169 = vmul.f32 %v150, %v161
    %v170 = vmul.f32 %v155, %v158
    %v171 = vmul.f32 %v155, %v159
    %v172 = vmul.f32 %v155, %v160
    %v173 = vmul.f32 %v155, %v161
    %s174 = scalar_lea.vmem %s2, 1
    %v175 = vld [vmem:[%s174] ss:$8 sm:$0xf]
    %s176 = scalar_lea.vmem %s1, 16
    %v177 = vld [vmem:[%s176] sm:$0xff]
    %v178 = vld [vmem:[%s176 + $0x8] sm:$0xff]
    %179 = vrot.lane.b32.xlu0 %v135, 18
    %v180 = vpop.permute.xlu0 %179
    %v181 = vrot.slane %v180, 1
    %vm182 = vcmask 146432
    %v183 = vsel %vm182, %v180, %v181
    %v185 = vmul.f32 %v175, %v183
    %187 = vset.pattern.permute.xlu0 0
    %188 = vperm.xlu0 %187, %v177
    %v189 = vpop.permute.xlu0 %188
    %192 = vset.pattern.permute.xlu0 0
    %193 = vperm.xlu0 %192, %v178
    %v194 = vpop.permute.xlu0 %193
    %v197 = vperm.slane %v185, 0
    %v198 = vperm.slane %v185, 1
    %v199 = vperm.slane %v185, 2
    %v200 = vperm.slane %v185, 3
    %v205 = vmul.f32 %v189, %v197
    %v206 = vmul.f32 %v189, %v198
    %v207 = vmul.f32 %v189, %v199
    %v208 = vmul.f32 %v189, %v200
    %v209 = vmul.f32 %v194, %v197
    %v210 = vmul.f32 %v194, %v198
    %v211 = vmul.f32 %v194, %v199
    %v212 = vmul.f32 %v194, %v200
    %v213 = vadd.f32 %v166, %v205
    %v214 = vadd.f32 %v167, %v206
    %v215 = vadd.f32 %v168, %v207
    %v216 = vadd.f32 %v169, %v208
    %v217 = vadd.f32 %v170, %v209
    %v218 = vadd.f32 %v171, %v210
    %v219 = vadd.f32 %v172, %v211
    %v220 = vadd.f32 %v173, %v212
    %s221 = scalar_lea.vmem %s2, 2
    %v222 = vld [vmem:[%s221] ss:$8 sm:$0xf]
    %s223 = scalar_lea.vmem %s1, 32
    %v224 = vld [vmem:[%s223] sm:$0xff]
    %v225 = vld [vmem:[%s223 + $0x8] sm:$0xff]
    %226 = vrot.lane.b32.xlu0 %v135, 17
    %v227 = vpop.permute.xlu0 %226
    %v228 = vrot.slane %v227, 1
    %vm229 = vcmask 138240
    %v230 = vsel %vm229, %v227, %v228
    %v232 = vmul.f32 %v222, %v230
    %234 = vset.pattern.permute.xlu0 0
    %235 = vperm.xlu0 %234, %v224
    %v236 = vpop.permute.xlu0 %235
    %239 = vset.pattern.permute.xlu0 0
    %240 = vperm.xlu0 %239, %v225
    %v241 = vpop.permute.xlu0 %240
    %v244 = vperm.slane %v232, 0
    %v245 = vperm.slane %v232, 1
    %v246 = vperm.slane %v232, 2
    %v247 = vperm.slane %v232, 3
    %v252 = vmul.f32 %v236, %v244
    %v253 = vmul.f32 %v236, %v245
    %v254 = vmul.f32 %v236, %v246
    %v255 = vmul.f32 %v236, %v247
    %v256 = vmul.f32 %v241, %v244
    %v257 = vmul.f32 %v241, %v245
    %v258 = vmul.f32 %v241, %v246
    %v259 = vmul.f32 %v241, %v247
    %v260 = vadd.f32 %v213, %v252
    %v261 = vadd.f32 %v214, %v253
    %v262 = vadd.f32 %v215, %v254
    %v263 = vadd.f32 %v216, %v255
    %v264 = vadd.f32 %v217, %v256
    %v265 = vadd.f32 %v218, %v257
    %v266 = vadd.f32 %v219, %v258
    %v267 = vadd.f32 %v220, %v259
    %s268 = scalar_lea.vmem %s2, 3
    %v269 = vld [vmem:[%s268] ss:$8 sm:$0xf]
    %s270 = scalar_lea.vmem %s1, 48
    %v271 = vld [vmem:[%s270] sm:$0xff]
    %v272 = vld [vmem:[%s270 + $0x8] sm:$0xff]
    %273 = vrot.lane.b32.xlu0 %v135, 16
    %v274 = vpop.permute.xlu0 %273
    %v275 = vrot.slane %v274, 1
    %vm276 = vcmask 130048
    %v277 = vsel %vm276, %v274, %v275
    %v279 = vmul.f32 %v269, %v277
    %281 = vset.pattern.permute.xlu0 0
    %282 = vperm.xlu0 %281, %v271
    %v283 = vpop.permute.xlu0 %282
    %286 = vset.pattern.permute.xlu0 0
    %287 = vperm.xlu0 %286, %v272
    %v288 = vpop.permute.xlu0 %287
    %v291 = vperm.slane %v279, 0
    %v292 = vperm.slane %v279, 1
    %v293 = vperm.slane %v279, 2
    %v294 = vperm.slane %v279, 3
    %v299 = vmul.f32 %v283, %v291
    %v300 = vmul.f32 %v283, %v292
    %v301 = vmul.f32 %v283, %v293
    %v302 = vmul.f32 %v283, %v294
    %v303 = vmul.f32 %v288, %v291
    %v304 = vmul.f32 %v288, %v292
    %v305 = vmul.f32 %v288, %v293
    %v306 = vmul.f32 %v288, %v294
    %v307 = vadd.f32 %v260, %v299
    %v308 = vadd.f32 %v261, %v300
    %v309 = vadd.f32 %v262, %v301
    %v310 = vadd.f32 %v263, %v302
    %v311 = vadd.f32 %v264, %v303
    %v312 = vadd.f32 %v265, %v304
    %v313 = vadd.f32 %v266, %v305
    %v314 = vadd.f32 %v267, %v306
    %s315 = scalar_lea.vmem %s2, 4
    %v316 = vld [vmem:[%s315] ss:$8 sm:$0xf]
    %s317 = scalar_lea.vmem %s1, 64
    %v318 = vld [vmem:[%s317] sm:$0xff]
    %v319 = vld [vmem:[%s317 + $0x8] sm:$0xff]
    %320 = vrot.lane.b32.xlu0 %v135, 15
    %v321 = vpop.permute.xlu0 %320
    %v322 = vrot.slane %v321, 1
    %vm323 = vcmask 121856
    %v324 = vsel %vm323, %v321, %v322
    %v326 = vmul.f32 %v316, %v324
    %328 = vset.pattern.permute.xlu0 0
    %329 = vperm.xlu0 %328, %v318
    %v330 = vpop.permute.xlu0 %329
    %333 = vset.pattern.permute.xlu0 0
    %334 = vperm.xlu0 %333, %v319
    %v335 = vpop.permute.xlu0 %334
    %v338 = vperm.slane %v326, 0
    %v339 = vperm.slane %v326, 1
    %v340 = vperm.slane %v326, 2
    %v341 = vperm.slane %v326, 3
    %v346 = vmul.f32 %v330, %v338
    %v347 = vmul.f32 %v330, %v339
    %v348 = vmul.f32 %v330, %v340
    %v349 = vmul.f32 %v330, %v341
    %v350 = vmul.f32 %v335, %v338
    %v351 = vmul.f32 %v335, %v339
    %v352 = vmul.f32 %v335, %v340
    %v353 = vmul.f32 %v335, %v341
    %v354 = vadd.f32 %v307, %v346
    %v355 = vadd.f32 %v308, %v347
    %v356 = vadd.f32 %v309, %v348
    %v357 = vadd.f32 %v310, %v349
    %v358 = vadd.f32 %v311, %v350
    %v359 = vadd.f32 %v312, %v351
    %v360 = vadd.f32 %v313, %v352
    %v361 = vadd.f32 %v314, %v353
    %s362 = scalar_lea.vmem %s2, 5
    %v363 = vld [vmem:[%s362] ss:$8 sm:$0xf]
    %s364 = scalar_lea.vmem %s1, 80
    %v365 = vld [vmem:[%s364] sm:$0xff]
    %v366 = vld [vmem:[%s364 + $0x8] sm:$0xff]
    %367 = vrot.lane.b32.xlu0 %v135, 14
    %v368 = vpop.permute.xlu0 %367
    %v369 = vrot.slane %v368, 1
    %vm370 = vcmask 113664
    %v371 = vsel %vm370, %v368, %v369
    %v373 = vmul.f32 %v363, %v371
    %375 = vset.pattern.permute.xlu0 0
    %376 = vperm.xlu0 %375, %v365
    %v377 = vpop.permute.xlu0 %376
    %380 = vset.pattern.permute.xlu0 0
    %381 = vperm.xlu0 %380, %v366
    %v382 = vpop.permute.xlu0 %381
    %v385 = vperm.slane %v373, 0
    %v386 = vperm.slane %v373, 1
    %v387 = vperm.slane %v373, 2
    %v388 = vperm.slane %v373, 3
    %v393 = vmul.f32 %v377, %v385
    %v394 = vmul.f32 %v377, %v386
    %v395 = vmul.f32 %v377, %v387
    %v396 = vmul.f32 %v377, %v388
    %v397 = vmul.f32 %v382, %v385
    %v398 = vmul.f32 %v382, %v386
    %v399 = vmul.f32 %v382, %v387
    %v400 = vmul.f32 %v382, %v388
    %v401 = vadd.f32 %v354, %v393
    %v402 = vadd.f32 %v355, %v394
    %v403 = vadd.f32 %v356, %v395
    %v404 = vadd.f32 %v357, %v396
    %v405 = vadd.f32 %v358, %v397
    %v406 = vadd.f32 %v359, %v398
    %v407 = vadd.f32 %v360, %v399
    %v408 = vadd.f32 %v361, %v400
    %s409 = scalar_lea.vmem %s2, 6
    %v410 = vld [vmem:[%s409] ss:$8 sm:$0xf]
    %s411 = scalar_lea.vmem %s1, 96
    %v412 = vld [vmem:[%s411] sm:$0xff]
    %v413 = vld [vmem:[%s411 + $0x8] sm:$0xff]
    %414 = vrot.lane.b32.xlu0 %v135, 13
    %v415 = vpop.permute.xlu0 %414
    %v416 = vrot.slane %v415, 1
    %vm417 = vcmask 105472
    %v418 = vsel %vm417, %v415, %v416
    %v420 = vmul.f32 %v410, %v418
    %422 = vset.pattern.permute.xlu0 0
    %423 = vperm.xlu0 %422, %v412
    %v424 = vpop.permute.xlu0 %423
    %427 = vset.pattern.permute.xlu0 0
    %428 = vperm.xlu0 %427, %v413
    %v429 = vpop.permute.xlu0 %428
    %v432 = vperm.slane %v420, 0
    %v433 = vperm.slane %v420, 1
    %v434 = vperm.slane %v420, 2
    %v435 = vperm.slane %v420, 3
    %v440 = vmul.f32 %v424, %v432
    %v441 = vmul.f32 %v424, %v433
    %v442 = vmul.f32 %v424, %v434
    %v443 = vmul.f32 %v424, %v435
    %v444 = vmul.f32 %v429, %v432
    %v445 = vmul.f32 %v429, %v433
    %v446 = vmul.f32 %v429, %v434
    %v447 = vmul.f32 %v429, %v435
    %v448 = vadd.f32 %v401, %v440
    %v449 = vadd.f32 %v402, %v441
    %v450 = vadd.f32 %v403, %v442
    %v451 = vadd.f32 %v404, %v443
    %v452 = vadd.f32 %v405, %v444
    %v453 = vadd.f32 %v406, %v445
    %v454 = vadd.f32 %v407, %v446
    %v455 = vadd.f32 %v408, %v447
    %s456 = scalar_lea.vmem %s2, 7
    %v457 = vld [vmem:[%s456] ss:$8 sm:$0xf]
    %s458 = scalar_lea.vmem %s1, 112
    %v459 = vld [vmem:[%s458] sm:$0xff]
    %v460 = vld [vmem:[%s458 + $0x8] sm:$0xff]
    %461 = vrot.lane.b32.xlu0 %v135, 3
    %v462 = vpop.permute.xlu0 %461
    %v463 = vrot.slane %v462, 1
    %vm464 = vcmask 23552
    %v465 = vsel %vm464, %v462, %v463
    %v467 = vmul.f32 %v457, %v465
    %469 = vset.pattern.permute.xlu0 0
    %470 = vperm.xlu0 %469, %v459
    %v471 = vpop.permute.xlu0 %470
    %474 = vset.pattern.permute.xlu0 0
    %475 = vperm.xlu0 %474, %v460
    %v476 = vpop.permute.xlu0 %475
    %v479 = vperm.slane %v467, 0
    %v480 = vperm.slane %v467, 1
    %v481 = vperm.slane %v467, 2
    %v482 = vperm.slane %v467, 3
    %v487 = vmul.f32 %v471, %v479
    %v488 = vmul.f32 %v471, %v480
    %v489 = vmul.f32 %v471, %v481
    %v490 = vmul.f32 %v471, %v482
    %v491 = vmul.f32 %v476, %v479
    %v492 = vmul.f32 %v476, %v480
    %v493 = vmul.f32 %v476, %v481
    %v494 = vmul.f32 %v476, %v482
    %v495 = vadd.f32 %v448, %v487
    %v496 = vadd.f32 %v449, %v488
    %v497 = vadd.f32 %v450, %v489
    %v498 = vadd.f32 %v451, %v490
    %v499 = vadd.f32 %v452, %v491
    %v500 = vadd.f32 %v453, %v492
    %v501 = vadd.f32 %v454, %v493
    %v502 = vadd.f32 %v455, %v494
    %s503 = scalar_lea.vmem %s2, 32
    %v504 = vld [vmem:[%s503] ss:$8 sm:$0xf]
    %s505 = scalar_lea.vmem %s1, 128
    %v506 = vld [vmem:[%s505] sm:$0xff]
    %v507 = vld [vmem:[%s505 + $0x8] sm:$0xff]
    %508 = vrot.lane.b32.xlu0 %v135, 2
    %v509 = vpop.permute.xlu0 %508
    %v510 = vrot.slane %v509, 1
    %vm511 = vcmask 15360
    %v512 = vsel %vm511, %v509, %v510
    %v514 = vmul.f32 %v504, %v512
    %516 = vset.pattern.permute.xlu0 0
    %517 = vperm.xlu0 %516, %v506
    %v518 = vpop.permute.xlu0 %517
    %521 = vset.pattern.permute.xlu0 0
    %522 = vperm.xlu0 %521, %v507
    %v523 = vpop.permute.xlu0 %522
    %v526 = vperm.slane %v514, 0
    %v527 = vperm.slane %v514, 1
    %v528 = vperm.slane %v514, 2
    %v529 = vperm.slane %v514, 3
    %v534 = vmul.f32 %v518, %v526
    %v535 = vmul.f32 %v518, %v527
    %v536 = vmul.f32 %v518, %v528
    %v537 = vmul.f32 %v518, %v529
    %v538 = vmul.f32 %v523, %v526
    %v539 = vmul.f32 %v523, %v527
    %v540 = vmul.f32 %v523, %v528
    %v541 = vmul.f32 %v523, %v529
    %v542 = vadd.f32 %v495, %v534
    %v543 = vadd.f32 %v496, %v535
    %v544 = vadd.f32 %v497, %v536
    %v545 = vadd.f32 %v498, %v537
    %v546 = vadd.f32 %v499, %v538
    %v547 = vadd.f32 %v500, %v539
    %v548 = vadd.f32 %v501, %v540
    %v549 = vadd.f32 %v502, %v541
    %s550 = scalar_lea.vmem %s2, 33
    %v551 = vld [vmem:[%s550] ss:$8 sm:$0xf]
    %s552 = scalar_lea.vmem %s1, 144
    %v553 = vld [vmem:[%s552] sm:$0xff]
    %v554 = vld [vmem:[%s552 + $0x8] sm:$0xff]
    %555 = vrot.lane.b32.xlu0 %v135, 1
    %v556 = vpop.permute.xlu0 %555
    %v557 = vrot.slane %v556, 1
    %vm558 = vcmask 7168
    %v559 = vsel %vm558, %v556, %v557
    %v561 = vmul.f32 %v551, %v559
    %563 = vset.pattern.permute.xlu0 0
    %564 = vperm.xlu0 %563, %v553
    %v565 = vpop.permute.xlu0 %564
    %568 = vset.pattern.permute.xlu0 0
    %569 = vperm.xlu0 %568, %v554
    %v570 = vpop.permute.xlu0 %569
    %v573 = vperm.slane %v561, 0
    %v574 = vperm.slane %v561, 1
    %v575 = vperm.slane %v561, 2
    %v576 = vperm.slane %v561, 3
    %v581 = vmul.f32 %v565, %v573
    %v582 = vmul.f32 %v565, %v574
    %v583 = vmul.f32 %v565, %v575
    %v584 = vmul.f32 %v565, %v576
    %v585 = vmul.f32 %v570, %v573
    %v586 = vmul.f32 %v570, %v574
    %v587 = vmul.f32 %v570, %v575
    %v588 = vmul.f32 %v570, %v576
    %v589 = vadd.f32 %v542, %v581
    %v590 = vadd.f32 %v543, %v582
    %v591 = vadd.f32 %v544, %v583
    %v592 = vadd.f32 %v545, %v584
    %v593 = vadd.f32 %v546, %v585
    %v594 = vadd.f32 %v547, %v586
    %v595 = vadd.f32 %v548, %v587
    %v596 = vadd.f32 %v549, %v588
    %v597 = vld [vmem:[#allocation2 + $0x1] sm:$0xf]
    %s598 = scalar_lea.vmem %s2, 34
    %v599 = vld [vmem:[%s598] ss:$8 sm:$0xf]
    %s600 = scalar_lea.vmem %s1, 160
    %v601 = vld [vmem:[%s600] sm:$0xff]
    %v602 = vld [vmem:[%s600 + $0x8] sm:$0xff]
    %v603 = vmul.f32 %v599, %v597
    %605 = vset.pattern.permute.xlu0 0
    %606 = vperm.xlu0 %605, %v601
    %v607 = vpop.permute.xlu0 %606
    %610 = vset.pattern.permute.xlu0 0
    %611 = vperm.xlu0 %610, %v602
    %v612 = vpop.permute.xlu0 %611
    %v615 = vperm.slane %v603, 0
    %v616 = vperm.slane %v603, 1
    %v617 = vperm.slane %v603, 2
    %v618 = vperm.slane %v603, 3
    %v623 = vmul.f32 %v607, %v615
    %v624 = vmul.f32 %v607, %v616
    %v625 = vmul.f32 %v607, %v617
    %v626 = vmul.f32 %v607, %v618
    %v627 = vmul.f32 %v612, %v615
    %v628 = vmul.f32 %v612, %v616
    %v629 = vmul.f32 %v612, %v617
    %v630 = vmul.f32 %v612, %v618
    %v631 = vadd.f32 %v589, %v623
    %v632 = vadd.f32 %v590, %v624
    %v633 = vadd.f32 %v591, %v625
    %v634 = vadd.f32 %v592, %v626
    %v635 = vadd.f32 %v593, %v627
    %v636 = vadd.f32 %v594, %v628
    %v637 = vadd.f32 %v595, %v629
    %v638 = vadd.f32 %v596, %v630
    %v639 = vld [vmem:[#allocation2 + $0x1] sm:$0x1f]
    %s640 = scalar_lea.vmem %s2, 35
    %v641 = vld [vmem:[%s640] ss:$8 sm:$0xf]
    %s642 = scalar_lea.vmem %s1, 176
    %v643 = vld [vmem:[%s642] sm:$0xff]
    %v644 = vld [vmem:[%s642 + $0x8] sm:$0xff]
    %646 = vrot.lane.b32.xlu0 %v639, 127
    %v647 = vpop.permute.xlu0 %646
    %v648 = vrot.slane %v647, 1
    %vm649 = vcmask 1039360
    %v650 = vsel %vm649, %v647, %v648
    %v652 = vmul.f32 %v641, %v650
    %654 = vset.pattern.permute.xlu0 0
    %655 = vperm.xlu0 %654, %v643
    %v656 = vpop.permute.xlu0 %655
    %659 = vset.pattern.permute.xlu0 0
    %660 = vperm.xlu0 %659, %v644
    %v661 = vpop.permute.xlu0 %660
    %v664 = vperm.slane %v652, 0
    %v665 = vperm.slane %v652, 1
    %v666 = vperm.slane %v652, 2
    %v667 = vperm.slane %v652, 3
    %v672 = vmul.f32 %v656, %v664
    %v673 = vmul.f32 %v656, %v665
    %v674 = vmul.f32 %v656, %v666
    %v675 = vmul.f32 %v656, %v667
    %v676 = vmul.f32 %v661, %v664
    %v677 = vmul.f32 %v661, %v665
    %v678 = vmul.f32 %v661, %v666
    %v679 = vmul.f32 %v661, %v667
    %v680 = vadd.f32 %v631, %v672
    %v681 = vadd.f32 %v632, %v673
    %v682 = vadd.f32 %v633, %v674
    %v683 = vadd.f32 %v634, %v675
    %v684 = vadd.f32 %v635, %v676
    %v685 = vadd.f32 %v636, %v677
    %v686 = vadd.f32 %v637, %v678
    %v687 = vadd.f32 %v638, %v679
    %s688 = scalar_lea.vmem %s2, 36
    %v689 = vld [vmem:[%s688] ss:$8 sm:$0xf]
    %s690 = scalar_lea.vmem %s1, 192
    %v691 = vld [vmem:[%s690] sm:$0xff]
    %v692 = vld [vmem:[%s690 + $0x8] sm:$0xff]
    %693 = vrot.lane.b32.xlu0 %v639, 126
    %v694 = vpop.permute.xlu0 %693
    %v695 = vrot.slane %v694, 1
    %vm696 = vcmask 1031168
    %v697 = vsel %vm696, %v694, %v695
    %v699 = vmul.f32 %v689, %v697
    %701 = vset.pattern.permute.xlu0 0
    %702 = vperm.xlu0 %701, %v691
    %v703 = vpop.permute.xlu0 %702
    %706 = vset.pattern.permute.xlu0 0
    %707 = vperm.xlu0 %706, %v692
    %v708 = vpop.permute.xlu0 %707
    %v711 = vperm.slane %v699, 0
    %v712 = vperm.slane %v699, 1
    %v713 = vperm.slane %v699, 2
    %v714 = vperm.slane %v699, 3
    %v719 = vmul.f32 %v703, %v711
    %v720 = vmul.f32 %v703, %v712
    %v721 = vmul.f32 %v703, %v713
    %v722 = vmul.f32 %v703, %v714
    %v723 = vmul.f32 %v708, %v711
    %v724 = vmul.f32 %v708, %v712
    %v725 = vmul.f32 %v708, %v713
    %v726 = vmul.f32 %v708, %v714
    %v727 = vadd.f32 %v680, %v719
    %v728 = vadd.f32 %v681, %v720
    %v729 = vadd.f32 %v682, %v721
    %v730 = vadd.f32 %v683, %v722
    %v731 = vadd.f32 %v684, %v723
    %v732 = vadd.f32 %v685, %v724
    %v733 = vadd.f32 %v686, %v725
    %v734 = vadd.f32 %v687, %v726
    %s735 = scalar_lea.vmem %s2, 37
    %v736 = vld [vmem:[%s735] ss:$8 sm:$0xf]
    %s737 = scalar_lea.vmem %s1, 208
    %v738 = vld [vmem:[%s737] sm:$0xff]
    %v739 = vld [vmem:[%s737 + $0x8] sm:$0xff]
    %740 = vrot.lane.b32.xlu0 %v639, 125
    %v741 = vpop.permute.xlu0 %740
    %v742 = vrot.slane %v741, 1
    %vm743 = vcmask 1022976
    %v744 = vsel %vm743, %v741, %v742
    %v746 = vmul.f32 %v736, %v744
    %748 = vset.pattern.permute.xlu0 0
    %749 = vperm.xlu0 %748, %v738
    %v750 = vpop.permute.xlu0 %749
    %753 = vset.pattern.permute.xlu0 0
    %754 = vperm.xlu0 %753, %v739
    %v755 = vpop.permute.xlu0 %754
    %v758 = vperm.slane %v746, 0
    %v759 = vperm.slane %v746, 1
    %v760 = vperm.slane %v746, 2
    %v761 = vperm.slane %v746, 3
    %v766 = vmul.f32 %v750, %v758
    %v767 = vmul.f32 %v750, %v759
    %v768 = vmul.f32 %v750, %v760
    %v769 = vmul.f32 %v750, %v761
    %v770 = vmul.f32 %v755, %v758
    %v771 = vmul.f32 %v755, %v759
    %v772 = vmul.f32 %v755, %v760
    %v773 = vmul.f32 %v755, %v761
    %v774 = vadd.f32 %v727, %v766
    %v775 = vadd.f32 %v728, %v767
    %v776 = vadd.f32 %v729, %v768
    %v777 = vadd.f32 %v730, %v769
    %v778 = vadd.f32 %v731, %v770
    %v779 = vadd.f32 %v732, %v771
    %v780 = vadd.f32 %v733, %v772
    %v781 = vadd.f32 %v734, %v773
    %s782 = scalar_lea.vmem %s2, 38
    %v783 = vld [vmem:[%s782] ss:$8 sm:$0xf]
    %s784 = scalar_lea.vmem %s1, 224
    %v785 = vld [vmem:[%s784] sm:$0xff]
    %v786 = vld [vmem:[%s784 + $0x8] sm:$0xff]
    %787 = vrot.lane.b32.xlu0 %v639, 115
    %v788 = vpop.permute.xlu0 %787
    %v789 = vrot.slane %v788, 1
    %vm790 = vcmask 941056
    %v791 = vsel %vm790, %v788, %v789
    %v793 = vmul.f32 %v783, %v791
    %795 = vset.pattern.permute.xlu0 0
    %796 = vperm.xlu0 %795, %v785
    %v797 = vpop.permute.xlu0 %796
    %800 = vset.pattern.permute.xlu0 0
    %801 = vperm.xlu0 %800, %v786
    %v802 = vpop.permute.xlu0 %801
    %v805 = vperm.slane %v793, 0
    %v806 = vperm.slane %v793, 1
    %v807 = vperm.slane %v793, 2
    %v808 = vperm.slane %v793, 3
    %v813 = vmul.f32 %v797, %v805
    %v814 = vmul.f32 %v797, %v806
    %v815 = vmul.f32 %v797, %v807
    %v816 = vmul.f32 %v797, %v808
    %v817 = vmul.f32 %v802, %v805
    %v818 = vmul.f32 %v802, %v806
    %v819 = vmul.f32 %v802, %v807
    %v820 = vmul.f32 %v802, %v808
    %v821 = vadd.f32 %v774, %v813
    %v822 = vadd.f32 %v775, %v814
    %v823 = vadd.f32 %v776, %v815
    %v824 = vadd.f32 %v777, %v816
    %v825 = vadd.f32 %v778, %v817
    %v826 = vadd.f32 %v779, %v818
    %v827 = vadd.f32 %v780, %v819
    %v828 = vadd.f32 %v781, %v820
    %s829 = scalar_lea.vmem %s2, 39
    %v830 = vld [vmem:[%s829] ss:$8 sm:$0xf]
    %s831 = scalar_lea.vmem %s1, 240
    %v832 = vld [vmem:[%s831] sm:$0xff]
    %v833 = vld [vmem:[%s831 + $0x8] sm:$0xff]
    %834 = vrot.lane.b32.xlu0 %v639, 114
    %v835 = vpop.permute.xlu0 %834
    %v836 = vrot.slane %v835, 1
    %vm837 = vcmask 932864
    %v838 = vsel %vm837, %v835, %v836
    %v840 = vmul.f32 %v830, %v838
    %842 = vset.pattern.permute.xlu0 0
    %843 = vperm.xlu0 %842, %v832
    %v844 = vpop.permute.xlu0 %843
    %847 = vset.pattern.permute.xlu0 0
    %848 = vperm.xlu0 %847, %v833
    %v849 = vpop.permute.xlu0 %848
    %v852 = vperm.slane %v840, 0
    %v853 = vperm.slane %v840, 1
    %v854 = vperm.slane %v840, 2
    %v855 = vperm.slane %v840, 3
    %v860 = vmul.f32 %v844, %v852
    %v861 = vmul.f32 %v844, %v853
    %v862 = vmul.f32 %v844, %v854
    %v863 = vmul.f32 %v844, %v855
    %v864 = vmul.f32 %v849, %v852
    %v865 = vmul.f32 %v849, %v853
    %v866 = vmul.f32 %v849, %v854
    %v867 = vmul.f32 %v849, %v855
    %v868 = vadd.f32 %v821, %v860
    %v869 = vadd.f32 %v822, %v861
    %v870 = vadd.f32 %v823, %v862
    %v871 = vadd.f32 %v824, %v863
    %v872 = vadd.f32 %v825, %v864
    %v873 = vadd.f32 %v826, %v865
    %v874 = vadd.f32 %v827, %v866
    %v875 = vadd.f32 %v828, %v867
    %s876 = scalar_lea.vmem %s2, 64
    %v877 = vld [vmem:[%s876] ss:$8 sm:$0xf]
    %s878 = scalar_lea.vmem %s1, 256
    %v879 = vld [vmem:[%s878] sm:$0xff]
    %v880 = vld [vmem:[%s878 + $0x8] sm:$0xff]
    %881 = vrot.lane.b32.xlu0 %v639, 113
    %v882 = vpop.permute.xlu0 %881
    %v883 = vrot.slane %v882, 1
    %vm884 = vcmask 924672
    %v885 = vsel %vm884, %v882, %v883
    %v887 = vmul.f32 %v877, %v885
    %889 = vset.pattern.permute.xlu0 0
    %890 = vperm.xlu0 %889, %v879
    %v891 = vpop.permute.xlu0 %890
    %894 = vset.pattern.permute.xlu0 0
    %895 = vperm.xlu0 %894, %v880
    %v896 = vpop.permute.xlu0 %895
    %v899 = vperm.slane %v887, 0
    %v900 = vperm.slane %v887, 1
    %v901 = vperm.slane %v887, 2
    %v902 = vperm.slane %v887, 3
    %v907 = vmul.f32 %v891, %v899
    %v908 = vmul.f32 %v891, %v900
    %v909 = vmul.f32 %v891, %v901
    %v910 = vmul.f32 %v891, %v902
    %v911 = vmul.f32 %v896, %v899
    %v912 = vmul.f32 %v896, %v900
    %v913 = vmul.f32 %v896, %v901
    %v914 = vmul.f32 %v896, %v902
    %v915 = vadd.f32 %v868, %v907
    %v916 = vadd.f32 %v869, %v908
    %v917 = vadd.f32 %v870, %v909
    %v918 = vadd.f32 %v871, %v910
    %v919 = vadd.f32 %v872, %v911
    %v920 = vadd.f32 %v873, %v912
    %v921 = vadd.f32 %v874, %v913
    %v922 = vadd.f32 %v875, %v914
    %s923 = scalar_lea.vmem %s2, 65
    %v924 = vld [vmem:[%s923] ss:$8 sm:$0xf]
    %s925 = scalar_lea.vmem %s1, 272
    %v926 = vld [vmem:[%s925] sm:$0xff]
    %v927 = vld [vmem:[%s925 + $0x8] sm:$0xff]
    %928 = vrot.lane.b32.xlu0 %v639, 112
    %v929 = vpop.permute.xlu0 %928
    %v930 = vrot.slane %v929, 1
    %vm931 = vcmask 916480
    %v932 = vsel %vm931, %v929, %v930
    %v934 = vmul.f32 %v924, %v932
    %936 = vset.pattern.permute.xlu0 0
    %937 = vperm.xlu0 %936, %v926
    %v938 = vpop.permute.xlu0 %937
    %941 = vset.pattern.permute.xlu0 0
    %942 = vperm.xlu0 %941, %v927
    %v943 = vpop.permute.xlu0 %942
    %v946 = vperm.slane %v934, 0
    %v947 = vperm.slane %v934, 1
    %v948 = vperm.slane %v934, 2
    %v949 = vperm.slane %v934, 3
    %v954 = vmul.f32 %v938, %v946
    %v955 = vmul.f32 %v938, %v947
    %v956 = vmul.f32 %v938, %v948
    %v957 = vmul.f32 %v938, %v949
    %v958 = vmul.f32 %v943, %v946
    %v959 = vmul.f32 %v943, %v947
    %v960 = vmul.f32 %v943, %v948
    %v961 = vmul.f32 %v943, %v949
    %v962 = vadd.f32 %v915, %v954
    %v963 = vadd.f32 %v916, %v955
    %v964 = vadd.f32 %v917, %v956
    %v965 = vadd.f32 %v918, %v957
    %v966 = vadd.f32 %v919, %v958
    %v967 = vadd.f32 %v920, %v959
    %v968 = vadd.f32 %v921, %v960
    %v969 = vadd.f32 %v922, %v961
    %s970 = scalar_lea.vmem %s2, 66
    %v971 = vld [vmem:[%s970] ss:$8 sm:$0xf]
    %s972 = scalar_lea.vmem %s1, 288
    %v973 = vld [vmem:[%s972] sm:$0xff]
    %v974 = vld [vmem:[%s972 + $0x8] sm:$0xff]
    %975 = vrot.lane.b32.xlu0 %v639, 111
    %v976 = vpop.permute.xlu0 %975
    %v977 = vrot.slane %v976, 1
    %vm978 = vcmask 908288
    %v979 = vsel %vm978, %v976, %v977
    %v981 = vmul.f32 %v971, %v979
    %983 = vset.pattern.permute.xlu0 0
    %984 = vperm.xlu0 %983, %v973
    %v985 = vpop.permute.xlu0 %984
    %988 = vset.pattern.permute.xlu0 0
    %989 = vperm.xlu0 %988, %v974
    %v990 = vpop.permute.xlu0 %989
    %v993 = vperm.slane %v981, 0
    %v994 = vperm.slane %v981, 1
    %v995 = vperm.slane %v981, 2
    %v996 = vperm.slane %v981, 3
    %v1001 = vmul.f32 %v985, %v993
    %v1002 = vmul.f32 %v985, %v994
    %v1003 = vmul.f32 %v985, %v995
    %v1004 = vmul.f32 %v985, %v996
    %v1005 = vmul.f32 %v990, %v993
    %v1006 = vmul.f32 %v990, %v994
    %v1007 = vmul.f32 %v990, %v995
    %v1008 = vmul.f32 %v990, %v996
    %v1009 = vadd.f32 %v962, %v1001
    %v1010 = vadd.f32 %v963, %v1002
    %v1011 = vadd.f32 %v964, %v1003
    %v1012 = vadd.f32 %v965, %v1004
    %v1013 = vadd.f32 %v966, %v1005
    %v1014 = vadd.f32 %v967, %v1006
    %v1015 = vadd.f32 %v968, %v1007
    %v1016 = vadd.f32 %v969, %v1008
    %s1017 = scalar_lea.vmem %s2, 67
    %v1018 = vld [vmem:[%s1017] ss:$8 sm:$0xf]
    %s1019 = scalar_lea.vmem %s1, 304
    %v1020 = vld [vmem:[%s1019] sm:$0xff]
    %v1021 = vld [vmem:[%s1019 + $0x8] sm:$0xff]
    %1022 = vrot.lane.b32.xlu0 %v639, 110
    %v1023 = vpop.permute.xlu0 %1022
    %v1024 = vrot.slane %v1023, 1
    %vm1025 = vcmask 900096
    %v1026 = vsel %vm1025, %v1023, %v1024
    %v1028 = vmul.f32 %v1018, %v1026
    %1030 = vset.pattern.permute.xlu0 0
    %1031 = vperm.xlu0 %1030, %v1020
    %v1032 = vpop.permute.xlu0 %1031
    %1035 = vset.pattern.permute.xlu0 0
    %1036 = vperm.xlu0 %1035, %v1021
    %v1037 = vpop.permute.xlu0 %1036
    %v1040 = vperm.slane %v1028, 0
    %v1041 = vperm.slane %v1028, 1
    %v1042 = vperm.slane %v1028, 2
    %v1043 = vperm.slane %v1028, 3
    %v1048 = vmul.f32 %v1032, %v1040
    %v1049 = vmul.f32 %v1032, %v1041
    %v1050 = vmul.f32 %v1032, %v1042
    %v1051 = vmul.f32 %v1032, %v1043
    %v1052 = vmul.f32 %v1037, %v1040
    %v1053 = vmul.f32 %v1037, %v1041
    %v1054 = vmul.f32 %v1037, %v1042
    %v1055 = vmul.f32 %v1037, %v1043
    %v1056 = vadd.f32 %v1009, %v1048
    %v1057 = vadd.f32 %v1010, %v1049
    %v1058 = vadd.f32 %v1011, %v1050
    %v1059 = vadd.f32 %v1012, %v1051
    %v1060 = vadd.f32 %v1013, %v1052
    %v1061 = vadd.f32 %v1014, %v1053
    %v1062 = vadd.f32 %v1015, %v1054
    %v1063 = vadd.f32 %v1016, %v1055
    %s1064 = scalar_lea.vmem %s2, 68
    %v1065 = vld [vmem:[%s1064] ss:$8 sm:$0xf]
    %s1066 = scalar_lea.vmem %s1, 320
    %v1067 = vld [vmem:[%s1066] sm:$0xff]
    %v1068 = vld [vmem:[%s1066 + $0x8] sm:$0xff]
    %1069 = vrot.lane.b32.xlu0 %v639, 109
    %v1070 = vpop.permute.xlu0 %1069
    %v1071 = vrot.slane %v1070, 1
    %vm1072 = vcmask 891904
    %v1073 = vsel %vm1072, %v1070, %v1071
    %v1075 = vmul.f32 %v1065, %v1073
    %1077 = vset.pattern.permute.xlu0 0
    %1078 = vperm.xlu0 %1077, %v1067
    %v1079 = vpop.permute.xlu0 %1078
    %1082 = vset.pattern.permute.xlu0 0
    %1083 = vperm.xlu0 %1082, %v1068
    %v1084 = vpop.permute.xlu0 %1083
    %v1087 = vperm.slane %v1075, 0
    %v1088 = vperm.slane %v1075, 1
    %v1089 = vperm.slane %v1075, 2
    %v1090 = vperm.slane %v1075, 3
    %v1095 = vmul.f32 %v1079, %v1087
    %v1096 = vmul.f32 %v1079, %v1088
    %v1097 = vmul.f32 %v1079, %v1089
    %v1098 = vmul.f32 %v1079, %v1090
    %v1099 = vmul.f32 %v1084, %v1087
    %v1100 = vmul.f32 %v1084, %v1088
    %v1101 = vmul.f32 %v1084, %v1089
    %v1102 = vmul.f32 %v1084, %v1090
    %v1103 = vadd.f32 %v1056, %v1095
    %v1104 = vadd.f32 %v1057, %v1096
    %v1105 = vadd.f32 %v1058, %v1097
    %v1106 = vadd.f32 %v1059, %v1098
    %v1107 = vadd.f32 %v1060, %v1099
    %v1108 = vadd.f32 %v1061, %v1100
    %v1109 = vadd.f32 %v1062, %v1101
    %v1110 = vadd.f32 %v1063, %v1102
    %v1111 = vtanh.pop %v1103
    %v1112 = vtanh.pop %v1104
    %v1113 = vtanh.pop %v1105
    %v1114 = vtanh.pop %v1106
    %v1115 = vtanh.pop %v1107
    %v1116 = vtanh.pop %v1108
    %v1117 = vtanh.pop %v1109
    %v1118 = vtanh.pop %v1110
    %1119 = vst [vmem:[#allocation5] sm:$0xff] 0.0
    %1120 = vst [vmem:[#allocation5 + $0x8] sm:$0xff] 0.0
    %1121 = vst [vmem:[#allocation5 + $0x10] sm:$0xff] 0.0
    %1122 = vst [vmem:[#allocation5 + $0x18] sm:$0xff] 0.0
    %1123 = vst [vmem:[#allocation5 + $0x20] sm:$0xff] 0.0
    %1124 = vst [vmem:[#allocation5 + $0x28] sm:$0xff] 0.0
    %1125 = vst [vmem:[#allocation5 + $0x30] sm:$0xff] 0.0
    %1126 = vst [vmem:[#allocation5 + $0x38] sm:$0xff] 0.0
    %1127 = vst [vmem:[#allocation5 + $0x40] sm:$0xff] 0.0
    %1128 = vst [vmem:[#allocation5 + $0x48] sm:$0xff] 0.0
    %1129 = vst [vmem:[#allocation5 + $0x50] sm:$0xff] 0.0
    %1130 = vst [vmem:[#allocation5 + $0x58] sm:$0xff] 0.0
    %1131 = vst [vmem:[#allocation5 + $0x8] sm:$0xff] %v1111
    %1132 = vst [vmem:[#allocation5 + $0x10] sm:$0xff] %v1112
    %1133 = vst [vmem:[#allocation5 + $0x18] sm:$0xff] %v1113
    %1134 = vst [vmem:[#allocation5 + $0x20] sm:$0xff] %v1114
    %1135 = vst [vmem:[#allocation5 + $0x38] sm:$0xff] %v1115
    %1136 = vst [vmem:[#allocation5 + $0x40] sm:$0xff] %v1116
    %1137 = vst [vmem:[#allocation5 + $0x48] sm:$0xff] %v1117
    %1138 = vst [vmem:[#allocation5 + $0x50] sm:$0xff] %v1118
    %v1139 = vld [vmem:[%s3] sm:$0xff]
    %v1140 = vld [vmem:[%s3 + $0x8] sm:$0xff]
    %v1141 = vld [vmem:[%s3 + $0x10] sm:$0xff]
    %v1142 = vld [vmem:[%s3 + $0x18] sm:$0xff]
    %v1143 = vld [vmem:[%s3 + $0x20] sm:$0xff]
    %v1144 = vld [vmem:[%s3 + $0x28] sm:$0xff]
    %v1145 = vld [vmem:[%s3 + $0x30] sm:$0xff]
    %v1146 = vld [vmem:[%s3 + $0x38] sm:$0xff]
    %v1147 = vld [vmem:[%s3 + $0x40] sm:$0xff]
    %v1148 = vld [vmem:[%s3 + $0x48] sm:$0xff]
    %v1149 = vld [vmem:[%s3 + $0x50] sm:$0xff]
    %v1150 = vld [vmem:[%s3 + $0x58] sm:$0xff]
    %v1151 = vld [vmem:[%s3 + $0x60] sm:$0xff]
    %v1152 = vld [vmem:[%s3 + $0x68] sm:$0xff]
    %v1153 = vld [vmem:[%s3 + $0x70] sm:$0xff]
    %v1154 = vld [vmem:[%s3 + $0x78] sm:$0xff]
    %v1155 = vld [vmem:[%s3 + $0x80] sm:$0xff]
    %v1156 = vld [vmem:[%s3 + $0x88] sm:$0xff]
    %v1157 = vld [vmem:[%s3 + $0x90] sm:$0xff]
    %v1158 = vld [vmem:[%s3 + $0x98] sm:$0xff]
    %v1159 = vld [vmem:[%s3 + $0xa0] sm:$0xff]
    %v1160 = vld [vmem:[%s3 + $0xa8] sm:$0xff]
    %v1161 = vld [vmem:[%s3 + $0xb0] sm:$0xff]
    %v1162 = vld [vmem:[%s3 + $0xb8] sm:$0xff]
    %v1163 = vld [vmem:[%s3 + $0xc0] sm:$0xff]
    %v1164 = vld [vmem:[%s3 + $0xc8] sm:$0xff]
    %v1165 = vld [vmem:[%s3 + $0xd0] sm:$0xff]
    %v1166 = vld [vmem:[%s3 + $0xd8] sm:$0xff]
    %v1167 = vld [vmem:[%s3 + $0xe0] sm:$0xff]
    %v1168 = vld [vmem:[%s3 + $0xe8] sm:$0xff]
    %v1169 = vld [vmem:[%s3 + $0xf0] sm:$0xff]
    %v1170 = vld [vmem:[%s3 + $0xf8] sm:$0xff]
    %v1171 = vld [vmem:[%s3 + $0x100] sm:$0xff]
    %v1172 = vld [vmem:[%s3 + $0x108] sm:$0xff]
    %v1173 = vld [vmem:[%s3 + $0x110] sm:$0xff]
    %v1174 = vld [vmem:[%s3 + $0x118] sm:$0xff]
    %v1175 = vld [vmem:[%s3 + $0x120] sm:$0xff]
    %v1176 = vld [vmem:[%s3 + $0x128] sm:$0xff]
    %v1177 = vld [vmem:[%s3 + $0x130] sm:$0xff]
    %v1178 = vld [vmem:[%s3 + $0x138] sm:$0xff]
    %v1179 = vld [vmem:[%s3 + $0x140] sm:$0xff]
    %v1180 = vld [vmem:[%s3 + $0x148] sm:$0xff]
    %v1181 = vld [vmem:[%s3 + $0x150] sm:$0xff]
    %v1182 = vld [vmem:[%s3 + $0x158] sm:$0xff]
    %v1183 = vld [vmem:[%s3 + $0x160] sm:$0xff]
    %v1184 = vld [vmem:[%s3 + $0x168] sm:$0xff]
    %v1185 = vld [vmem:[%s3 + $0x170] sm:$0xff]
    %v1186 = vld [vmem:[%s3 + $0x178] sm:$0xff]
    %v1187 = vld [vmem:[%s3 + $0x180] sm:$0xff]
    %v1188 = vld [vmem:[%s3 + $0x188] sm:$0xff]
    %v1189 = vld [vmem:[%s3 + $0x190] sm:$0xff]
    %v1190 = vld [vmem:[%s3 + $0x198] sm:$0xff]
    %v1191 = vld [vmem:[%s3 + $0x1a0] sm:$0xff]
    %v1192 = vld [vmem:[%s3 + $0x1a8] sm:$0xff]
    %v1193 = vld [vmem:[%s3 + $0x1b0] sm:$0xff]
    %v1194 = vld [vmem:[%s3 + $0x1b8] sm:$0xff]
    %v1195 = vld [vmem:[%s3 + $0x1c0] sm:$0xff]
    %v1196 = vld [vmem:[%s3 + $0x1c8] sm:$0xff]
    %v1197 = vld [vmem:[%s3 + $0x1d0] sm:$0xff]
    %v1198 = vld [vmem:[%s3 + $0x1d8] sm:$0xff]
    %v1199 = vld [vmem:[%s3 + $0x1e0] sm:$0xff]
    %v1200 = vld [vmem:[%s3 + $0x1e8] sm:$0xff]
    %v1201 = vld [vmem:[%s3 + $0x1f0] sm:$0xff]
    %v1202 = vld [vmem:[%s3 + $0x1f8] sm:$0xff]
    %1203 = vmatpush.msra.mxu0 %v1154
    %1204 = vmatpush.msra.mxu0 %v1153
    %1205 = vmatpush.msra.mxu0 %v1152
    %1206 = vmatpush.msra.mxu0 %v1151
    %1207 = vmatpush.msra.mxu0 %v1150
    %1208 = vmatpush.msra.mxu0 %v1149
    %1209 = vmatpush.msra.mxu0 %v1148
    %1210 = vmatpush.msra.mxu0 %v1147
    %1211 = vmatpush.msra.mxu0 %v1146
    %1212 = vmatpush.msra.mxu0 %v1145
    %1213 = vmatpush.msra.mxu0 %v1144
    %1214 = vmatpush.msra.mxu0 %v1143
    %1215 = vmatpush.msra.mxu0 %v1142
    %1216 = vmatpush.msra.mxu0 %v1141
    %1217 = vmatpush.msra.mxu0 %v1140
    %1218 = vmatpush.msra.mxu0 %v1139
    %1219 = vmatmul.f32.gmra.mxu0 %v1111
    %v1220 = vpop.f32.mrf.mxu0
    %v1221 = vadd.f32 0.0, %v1220
    %1222 = vmatmul.f32.gmra.mxu0 %v1115
    %v1223 = vpop.f32.mrf.mxu0
    %v1224 = vadd.f32 0.0, %v1223
    %1225 = vdwg.mxu0
    %1226 = vmatpush.msra.mxu0 %v1170
    %1227 = vmatpush.msra.mxu0 %v1169
    %1228 = vmatpush.msra.mxu0 %v1168
    %1229 = vmatpush.msra.mxu0 %v1167
    %1230 = vmatpush.msra.mxu0 %v1166
    %1231 = vmatpush.msra.mxu0 %v1165
    %1232 = vmatpush.msra.mxu0 %v1164
    %1233 = vmatpush.msra.mxu0 %v1163
    %1234 = vmatpush.msra.mxu0 %v1162
    %1235 = vmatpush.msra.mxu0 %v1161
    %1236 = vmatpush.msra.mxu0 %v1160
    %1237 = vmatpush.msra.mxu0 %v1159
    %1238 = vmatpush.msra.mxu0 %v1158
    %1239 = vmatpush.msra.mxu0 %v1157
    %1240 = vmatpush.msra.mxu0 %v1156
    %1241 = vmatpush.msra.mxu0 %v1155
    %1242 = vmatmul.f32.gmra.mxu0 %v1112
    %v1243 = vpop.f32.mrf.mxu0
    %v1244 = vadd.f32 %v1221, %v1243
    %1245 = vmatmul.f32.gmra.mxu0 %v1116
    %v1246 = vpop.f32.mrf.mxu0
    %v1247 = vadd.f32 %v1224, %v1246
    %1248 = vdwg.mxu0
    %1249 = vmatpush.msra.mxu0 %v1186
    %1250 = vmatpush.msra.mxu0 %v1185
    %1251 = vmatpush.msra.mxu0 %v1184
    %1252 = vmatpush.msra.mxu0 %v1183
    %1253 = vmatpush.msra.mxu0 %v1182
    %1254 = vmatpush.msra.mxu0 %v1181
    %1255 = vmatpush.msra.mxu0 %v1180
    %1256 = vmatpush.msra.mxu0 %v1179
    %1257 = vmatpush.msra.mxu0 %v1178
    %1258 = vmatpush.msra.mxu0 %v1177
    %1259 = vmatpush.msra.mxu0 %v1176
    %1260 = vmatpush.msra.mxu0 %v1175
    %1261 = vmatpush.msra.mxu0 %v1174
    %1262 = vmatpush.msra.mxu0 %v1173
    %1263 = vmatpush.msra.mxu0 %v1172
    %1264 = vmatpush.msra.mxu0 %v1171
    %1265 = vmatmul.f32.gmra.mxu0 %v1113
    %v1266 = vpop.f32.mrf.mxu0
    %v1267 = vadd.f32 %v1244, %v1266
    %1268 = vmatmul.f32.gmra.mxu0 %v1117
    %v1269 = vpop.f32.mrf.mxu0
    %v1270 = vadd.f32 %v1247, %v1269
    %1271 = vdwg.mxu0
    %1272 = vmatpush.msra.mxu0 %v1202
    %1273 = vmatpush.msra.mxu0 %v1201
    %1274 = vmatpush.msra.mxu0 %v1200
    %1275 = vmatpush.msra.mxu0 %v1199
    %1276 = vmatpush.msra.mxu0 %v1198
    %1277 = vmatpush.msra.mxu0 %v1197
    %1278 = vmatpush.msra.mxu0 %v1196
    %1279 = vmatpush.msra.mxu0 %v1195
    %1280 = vmatpush.msra.mxu0 %v1194
    %1281 = vmatpush.msra.mxu0 %v1193
    %1282 = vmatpush.msra.mxu0 %v1192
    %1283 = vmatpush.msra.mxu0 %v1191
    %1284 = vmatpush.msra.mxu0 %v1190
    %1285 = vmatpush.msra.mxu0 %v1189
    %1286 = vmatpush.msra.mxu0 %v1188
    %1287 = vmatpush.msra.mxu0 %v1187
    %1288 = vmatmul.f32.gmra.mxu0 %v1114
    %v1289 = vpop.f32.mrf.mxu0
    %v1290 = vadd.f32 %v1267, %v1289
    %1291 = vmatmul.f32.gmra.mxu0 %v1118
    %v1292 = vpop.f32.mrf.mxu0
    %v1293 = vadd.f32 %v1270, %v1292
    %1294 = vdwg.mxu0
    %1295 = vst [vmem:[#allocation3] sm:$0xff] 0.0
    %1296 = vst [vmem:[#allocation3 + $0x8] sm:$0xff] 0.0
    %1297 = vst [vmem:[#allocation3 + $0x10] sm:$0xff] 0.0
    %1298 = vst [vmem:[#allocation3 + $0x18] sm:$0xff] 0.0
    %1299 = vst [vmem:[#allocation3 + $0x20] sm:$0xff] 0.0
    %1300 = vst [vmem:[#allocation3 + $0x28] sm:$0xff] 0.0
    %1301 = vst [vmem:[#allocation3 + $0x8] sm:$0xff] %v1290
    %1302 = vst [vmem:[#allocation3 + $0x20] sm:$0xff] %v1293
    %v1303 = vld [vmem:[#allocation3] sm:$0xff]
    %v1304 = vld [vmem:[#allocation3 + $0x8] sm:$0xff]
    %v1305 = vld [vmem:[#allocation3 + $0x18] sm:$0xff]
    %v1306 = vld [vmem:[#allocation3 + $0x20] sm:$0xff]
    %v1307 = vld [vmem:[#allocation8] sm:$0x1]
    %v1308 = vld [vmem:[%s4] sm:$0xff]
    %v1309 = vld [vmem:[%s4 + $0x8] sm:$0xff]
    %v1310 = vld [vmem:[%s4 + $0x10] sm:$0xff]
    %v1311 = vld [vmem:[%s4 + $0x18] sm:$0xff]
    %v1312 = vperm.slane %v1307, 0
    %1317 = vrot.lane.b32.xlu0 %v1303, 10
    %v1318 = vpop.permute.xlu0 %1317
    %1319 = vrot.lane.b32.xlu0 %v1304, 10
    %v1320 = vpop.permute.xlu0 %1319
    %1321 = vrot.lane.b32.xlu0 %v1305, 10
    %v1322 = vpop.permute.xlu0 %1321
    %1323 = vrot.lane.b32.xlu0 %v1306, 10
    %v1324 = vpop.permute.xlu0 %1323
    %vm1325 = vcmask 80896
    %v1326 = vsel %vm1325, %v1318, %v1320
    %v1327 = vsel %vm1325, %v1322, %v1324
    %v1330 = vmul.f32 %v1312, %v1326
    %v1331 = vmul.f32 %v1312, %v1327
    %v1332 = vld [vmem:[#allocation8 + $0x1] sm:$0x1]
    %s1333 = scalar_lea.vmem %s4, 32
    %v1334 = vld [vmem:[%s1333] sm:$0xff]
    %v1335 = vld [vmem:[%s1333 + $0x8] sm:$0xff]
    %v1336 = vld [vmem:[%s1333 + $0x10] sm:$0xff]
    %v1337 = vld [vmem:[%s1333 + $0x18] sm:$0xff]
    %v1338 = vperm.slane %v1332, 0
    %1339 = vrot.lane.b32.xlu0 %v1303, 9
    %v1340 = vpop.permute.xlu0 %1339
    %1341 = vrot.lane.b32.xlu0 %v1304, 9
    %v1342 = vpop.permute.xlu0 %1341
    %1343 = vrot.lane.b32.xlu0 %v1305, 9
    %v1344 = vpop.permute.xlu0 %1343
    %1345 = vrot.lane.b32.xlu0 %v1306, 9
    %v1346 = vpop.permute.xlu0 %1345
    %vm1347 = vcmask 72704
    %v1348 = vsel %vm1347, %v1340, %v1342
    %v1349 = vsel %vm1347, %v1344, %v1346
    %v1352 = vmul.f32 %v1338, %v1348
    %v1353 = vmul.f32 %v1338, %v1349
    %v1355 = vsel %vm276, %v1334, 0
    %v1358 = vsel %vm276, %v1335, 0
    %v1361 = vsel %vm276, %v1336, 0
    %v1364 = vsel %vm276, %v1337, 0
    %1366 = vmatpush.msra.mxu0 0.0
    %1367 = vmatpush.msra.mxu0 0.0
    %1368 = vmatpush.msra.mxu0 0.0
    %1369 = vmatpush.msra.mxu0 0.0
    %1370 = vmatpush.msra.mxu0 0.0
    %1371 = vmatpush.msra.mxu0 0.0
    %1372 = vmatpush.msra.mxu0 0.0
    %1373 = vmatpush.msra.mxu0 0.0
    %1374 = vmatpush.msra.mxu0 0.0
    %1375 = vmatpush.msra.mxu0 0.0
    %1376 = vmatpush.msra.mxu0 0.0
    %1377 = vmatpush.msra.mxu0 0.0
    %1378 = vmatpush.msra.mxu0 0.0
    %1379 = vmatpush.msra.mxu0 0.0
    %1380 = vmatpush.msra.mxu0 %v1353
    %1381 = vmatpush.msra.mxu0 %v1352
    %1382 = vmatmul.f32.gmra.mxu0 %v1355
    %v1383 = vpop.f32.mrf.mxu0
    %v1384 = vadd.f32 0.0, %v1383
    %1385 = vmatmul.f32.gmra.mxu0 %v1358
    %v1386 = vpop.f32.mrf.mxu0
    %v1387 = vadd.f32 0.0, %v1386
    %1388 = vmatmul.f32.gmra.mxu0 %v1361
    %v1389 = vpop.f32.mrf.mxu0
    %v1390 = vadd.f32 0.0, %v1389
    %1391 = vmatmul.f32.gmra.mxu0 %v1364
    %v1392 = vpop.f32.mrf.mxu0
    %v1393 = vadd.f32 0.0, %v1392
    %1394 = vdwg.mxu0
    %v1396 = vsel %vm276, %v1308, 0
    %v1399 = vsel %vm276, %v1309, 0
    %v1402 = vsel %vm276, %v1310, 0
    %v1405 = vsel %vm276, %v1311, 0
    %1407 = vmatpush.msra.mxu0 0.0
    %1408 = vmatpush.msra.mxu0 0.0
    %1409 = vmatpush.msra.mxu0 0.0
    %1410 = vmatpush.msra.mxu0 0.0
    %1411 = vmatpush.msra.mxu0 0.0
    %1412 = vmatpush.msra.mxu0 0.0
    %1413 = vmatpush.msra.mxu0 0.0
    %1414 = vmatpush.msra.mxu0 0.0
    %1415 = vmatpush.msra.mxu0 0.0
    %1416 = vmatpush.msra.mxu0 0.0
    %1417 = vmatpush.msra.mxu0 0.0
    %1418 = vmatpush.msra.mxu0 0.0
    %1419 = vmatpush.msra.mxu0 0.0
    %1420 = vmatpush.msra.mxu0 0.0
    %1421 = vmatpush.msra.mxu0 %v1331
    %1422 = vmatpush.msra.mxu0 %v1330
    %1423 = vmatmul.f32.gmra.mxu0 %v1396
    %v1424 = vpop.f32.mrf.mxu0
    %v1425 = vadd.f32 %v1384, %v1424
    %1426 = vmatmul.f32.gmra.mxu0 %v1399
    %v1427 = vpop.f32.mrf.mxu0
    %v1428 = vadd.f32 %v1387, %v1427
    %1429 = vmatmul.f32.gmra.mxu0 %v1402
    %v1430 = vpop.f32.mrf.mxu0
    %v1431 = vadd.f32 %v1390, %v1430
    %1432 = vmatmul.f32.gmra.mxu0 %v1405
    %v1433 = vpop.f32.mrf.mxu0
    %v1434 = vadd.f32 %v1393, %v1433
    %1435 = vdwg.mxu0
    %v1436 = vld [vmem:[#allocation8 + $0x2] sm:$0x1]
    %s1437 = scalar_lea.vmem %s4, 64
    %v1438 = vld [vmem:[%s1437] sm:$0xff]
    %v1439 = vld [vmem:[%s1437 + $0x8] sm:$0xff]
    %v1440 = vld [vmem:[%s1437 + $0x10] sm:$0xff]
    %v1441 = vld [vmem:[%s1437 + $0x18] sm:$0xff]
    %v1442 = vperm.slane %v1436, 0
    %1443 = vrot.lane.b32.xlu0 %v1303, 8
    %v1444 = vpop.permute.xlu0 %1443
    %1445 = vrot.lane.b32.xlu0 %v1304, 8
    %v1446 = vpop.permute.xlu0 %1445
    %1447 = vrot.lane.b32.xlu0 %v1305, 8
    %v1448 = vpop.permute.xlu0 %1447
    %1449 = vrot.lane.b32.xlu0 %v1306, 8
    %v1450 = vpop.permute.xlu0 %1449
    %vm1451 = vcmask 64512
    %v1452 = vsel %vm1451, %v1444, %v1446
    %v1453 = vsel %vm1451, %v1448, %v1450
    %v1456 = vmul.f32 %v1442, %v1452
    %v1457 = vmul.f32 %v1442, %v1453
    %v1459 = vsel %vm276, %v1438, 0
    %v1462 = vsel %vm276, %v1439, 0
    %v1465 = vsel %vm276, %v1440, 0
    %v1468 = vsel %vm276, %v1441, 0
    %1470 = vmatpush.msra.mxu0 0.0
    %1471 = vmatpush.msra.mxu0 0.0
    %1472 = vmatpush.msra.mxu0 0.0
    %1473 = vmatpush.msra.mxu0 0.0
    %1474 = vmatpush.msra.mxu0 0.0
    %1475 = vmatpush.msra.mxu0 0.0
    %1476 = vmatpush.msra.mxu0 0.0
    %1477 = vmatpush.msra.mxu0 0.0
    %1478 = vmatpush.msra.mxu0 0.0
    %1479 = vmatpush.msra.mxu0 0.0
    %1480 = vmatpush.msra.mxu0 0.0
    %1481 = vmatpush.msra.mxu0 0.0
    %1482 = vmatpush.msra.mxu0 0.0
    %1483 = vmatpush.msra.mxu0 0.0
    %1484 = vmatpush.msra.mxu0 %v1457
    %1485 = vmatpush.msra.mxu0 %v1456
    %1486 = vmatmul.f32.gmra.mxu0 %v1459
    %v1487 = vpop.f32.mrf.mxu0
    %v1488 = vadd.f32 0.0, %v1487
    %1489 = vmatmul.f32.gmra.mxu0 %v1462
    %v1490 = vpop.f32.mrf.mxu0
    %v1491 = vadd.f32 0.0, %v1490
    %1492 = vmatmul.f32.gmra.mxu0 %v1465
    %v1493 = vpop.f32.mrf.mxu0
    %v1494 = vadd.f32 0.0, %v1493
    %1495 = vmatmul.f32.gmra.mxu0 %v1468
    %v1496 = vpop.f32.mrf.mxu0
    %v1497 = vadd.f32 0.0, %v1496
    %1498 = vdwg.mxu0
    %v1499 = vadd.f32 %v1425, %v1488
    %v1500 = vadd.f32 %v1428, %v1491
    %v1501 = vadd.f32 %v1431, %v1494
    %v1502 = vadd.f32 %v1434, %v1497
    %v1503 = vld [vmem:[#allocation8 + $0x3] sm:$0x1]
    %s1504 = scalar_lea.vmem %s4, 96
    %v1505 = vld [vmem:[%s1504] sm:$0xff]
    %v1506 = vld [vmem:[%s1504 + $0x8] sm:$0xff]
    %v1507 = vld [vmem:[%s1504 + $0x10] sm:$0xff]
    %v1508 = vld [vmem:[%s1504 + $0x18] sm:$0xff]
    %v1509 = vperm.slane %v1503, 0
    %1510 = vrot.lane.b32.xlu0 %v1303, 7
    %v1511 = vpop.permute.xlu0 %1510
    %1512 = vrot.lane.b32.xlu0 %v1304, 7
    %v1513 = vpop.permute.xlu0 %1512
    %1514 = vrot.lane.b32.xlu0 %v1305, 7
    %v1515 = vpop.permute.xlu0 %1514
    %1516 = vrot.lane.b32.xlu0 %v1306, 7
    %v1517 = vpop.permute.xlu0 %1516
    %vm1518 = vcmask 56320
    %v1519 = vsel %vm1518, %v1511, %v1513
    %v1520 = vsel %vm1518, %v1515, %v1517
    %v1523 = vmul.f32 %v1509, %v1519
    %v1524 = vmul.f32 %v1509, %v1520
    %v1526 = vsel %vm276, %v1505, 0
    %v1529 = vsel %vm276, %v1506, 0
    %v1532 = vsel %vm276, %v1507, 0
    %v1535 = vsel %vm276, %v1508, 0
    %1537 = vmatpush.msra.mxu0 0.0
    %1538 = vmatpush.msra.mxu0 0.0
    %1539 = vmatpush.msra.mxu0 0.0
    %1540 = vmatpush.msra.mxu0 0.0
    %1541 = vmatpush.msra.mxu0 0.0
    %1542 = vmatpush.msra.mxu0 0.0
    %1543 = vmatpush.msra.mxu0 0.0
    %1544 = vmatpush.msra.mxu0 0.0
    %1545 = vmatpush.msra.mxu0 0.0
    %1546 = vmatpush.msra.mxu0 0.0
    %1547 = vmatpush.msra.mxu0 0.0
    %1548 = vmatpush.msra.mxu0 0.0
    %1549 = vmatpush.msra.mxu0 0.0
    %1550 = vmatpush.msra.mxu0 0.0
    %1551 = vmatpush.msra.mxu0 %v1524
    %1552 = vmatpush.msra.mxu0 %v1523
    %1553 = vmatmul.f32.gmra.mxu0 %v1526
    %v1554 = vpop.f32.mrf.mxu0
    %v1555 = vadd.f32 0.0, %v1554
    %1556 = vmatmul.f32.gmra.mxu0 %v1529
    %v1557 = vpop.f32.mrf.mxu0
    %v1558 = vadd.f32 0.0, %v1557
    %1559 = vmatmul.f32.gmra.mxu0 %v1532
    %v1560 = vpop.f32.mrf.mxu0
    %v1561 = vadd.f32 0.0, %v1560
    %1562 = vmatmul.f32.gmra.mxu0 %v1535
    %v1563 = vpop.f32.mrf.mxu0
    %v1564 = vadd.f32 0.0, %v1563
    %1565 = vdwg.mxu0
    %v1566 = vadd.f32 %v1499, %v1555
    %v1567 = vadd.f32 %v1500, %v1558
    %v1568 = vadd.f32 %v1501, %v1561
    %v1569 = vadd.f32 %v1502, %v1564
    %v1570 = vld [vmem:[#allocation8 + $0x4] sm:$0x1]
    %s1571 = scalar_lea.vmem %s4, 128
    %v1572 = vld [vmem:[%s1571] sm:$0xff]
    %v1573 = vld [vmem:[%s1571 + $0x8] sm:$0xff]
    %v1574 = vld [vmem:[%s1571 + $0x10] sm:$0xff]
    %v1575 = vld [vmem:[%s1571 + $0x18] sm:$0xff]
    %v1576 = vperm.slane %v1570, 0
    %1577 = vrot.lane.b32.xlu0 %v1303, 6
    %v1578 = vpop.permute.xlu0 %1577
    %1579 = vrot.lane.b32.xlu0 %v1304, 6
    %v1580 = vpop.permute.xlu0 %1579
    %1581 = vrot.lane.b32.xlu0 %v1305, 6
    %v1582 = vpop.permute.xlu0 %1581
    %1583 = vrot.lane.b32.xlu0 %v1306, 6
    %v1584 = vpop.permute.xlu0 %1583
    %vm1585 = vcmask 48128
    %v1586 = vsel %vm1585, %v1578, %v1580
    %v1587 = vsel %vm1585, %v1582, %v1584
    %v1590 = vmul.f32 %v1576, %v1586
    %v1591 = vmul.f32 %v1576, %v1587
    %v1593 = vsel %vm276, %v1572, 0
    %v1596 = vsel %vm276, %v1573, 0
    %v1599 = vsel %vm276, %v1574, 0
    %v1602 = vsel %vm276, %v1575, 0
    %1604 = vmatpush.msra.mxu0 0.0
    %1605 = vmatpush.msra.mxu0 0.0
    %1606 = vmatpush.msra.mxu0 0.0
    %1607 = vmatpush.msra.mxu0 0.0
    %1608 = vmatpush.msra.mxu0 0.0
    %1609 = vmatpush.msra.mxu0 0.0
    %1610 = vmatpush.msra.mxu0 0.0
    %1611 = vmatpush.msra.mxu0 0.0
    %1612 = vmatpush.msra.mxu0 0.0
    %1613 = vmatpush.msra.mxu0 0.0
    %1614 = vmatpush.msra.mxu0 0.0
    %1615 = vmatpush.msra.mxu0 0.0
    %1616 = vmatpush.msra.mxu0 0.0
    %1617 = vmatpush.msra.mxu0 0.0
    %1618 = vmatpush.msra.mxu0 %v1591
    %1619 = vmatpush.msra.mxu0 %v1590
    %1620 = vmatmul.f32.gmra.mxu0 %v1593
    %v1621 = vpop.f32.mrf.mxu0
    %v1622 = vadd.f32 0.0, %v1621
    %1623 = vmatmul.f32.gmra.mxu0 %v1596
    %v1624 = vpop.f32.mrf.mxu0
    %v1625 = vadd.f32 0.0, %v1624
    %1626 = vmatmul.f32.gmra.mxu0 %v1599
    %v1627 = vpop.f32.mrf.mxu0
    %v1628 = vadd.f32 0.0, %v1627
    %1629 = vmatmul.f32.gmra.mxu0 %v1602
    %v1630 = vpop.f32.mrf.mxu0
    %v1631 = vadd.f32 0.0, %v1630
    %1632 = vdwg.mxu0
    %v1633 = vadd.f32 %v1566, %v1622
    %v1634 = vadd.f32 %v1567, %v1625
    %v1635 = vadd.f32 %v1568, %v1628
    %v1636 = vadd.f32 %v1569, %v1631
    %v1637 = vld [vmem:[#allocation8 + $0x5] sm:$0x1]
    %s1638 = scalar_lea.vmem %s4, 160
    %v1639 = vld [vmem:[%s1638] sm:$0xff]
    %v1640 = vld [vmem:[%s1638 + $0x8] sm:$0xff]
    %v1641 = vld [vmem:[%s1638 + $0x10] sm:$0xff]
    %v1642 = vld [vmem:[%s1638 + $0x18] sm:$0xff]
    %v1643 = vperm.slane %v1637, 0
    %1644 = vrot.lane.b32.xlu0 %v1303, 2
    %v1645 = vpop.permute.xlu0 %1644
    %1646 = vrot.lane.b32.xlu0 %v1304, 2
    %v1647 = vpop.permute.xlu0 %1646
    %1648 = vrot.lane.b32.xlu0 %v1305, 2
    %v1649 = vpop.permute.xlu0 %1648
    %1650 = vrot.lane.b32.xlu0 %v1306, 2
    %v1651 = vpop.permute.xlu0 %1650
    %v1652 = vsel %vm511, %v1645, %v1647
    %v1653 = vsel %vm511, %v1649, %v1651
    %v1656 = vmul.f32 %v1643, %v1652
    %v1657 = vmul.f32 %v1643, %v1653
    %v1659 = vsel %vm276, %v1639, 0
    %v1662 = vsel %vm276, %v1640, 0
    %v1665 = vsel %vm276, %v1641, 0
    %v1668 = vsel %vm276, %v1642, 0
    %1670 = vmatpush.msra.mxu0 0.0
    %1671 = vmatpush.msra.mxu0 0.0
    %1672 = vmatpush.msra.mxu0 0.0
    %1673 = vmatpush.msra.mxu0 0.0
    %1674 = vmatpush.msra.mxu0 0.0
    %1675 = vmatpush.msra.mxu0 0.0
    %1676 = vmatpush.msra.mxu0 0.0
    %1677 = vmatpush.msra.mxu0 0.0
    %1678 = vmatpush.msra.mxu0 0.0
    %1679 = vmatpush.msra.mxu0 0.0
    %1680 = vmatpush.msra.mxu0 0.0
    %1681 = vmatpush.msra.mxu0 0.0
    %1682 = vmatpush.msra.mxu0 0.0
    %1683 = vmatpush.msra.mxu0 0.0
    %1684 = vmatpush.msra.mxu0 %v1657
    %1685 = vmatpush.msra.mxu0 %v1656
    %1686 = vmatmul.f32.gmra.mxu0 %v1659
    %v1687 = vpop.f32.mrf.mxu0
    %v1688 = vadd.f32 0.0, %v1687
    %1689 = vmatmul.f32.gmra.mxu0 %v1662
    %v1690 = vpop.f32.mrf.mxu0
    %v1691 = vadd.f32 0.0, %v1690
    %1692 = vmatmul.f32.gmra.mxu0 %v1665
    %v1693 = vpop.f32.mrf.mxu0
    %v1694 = vadd.f32 0.0, %v1693
    %1695 = vmatmul.f32.gmra.mxu0 %v1668
    %v1696 = vpop.f32.mrf.mxu0
    %v1697 = vadd.f32 0.0, %v1696
    %1698 = vdwg.mxu0
    %v1699 = vadd.f32 %v1633, %v1688
    %v1700 = vadd.f32 %v1634, %v1691
    %v1701 = vadd.f32 %v1635, %v1694
    %v1702 = vadd.f32 %v1636, %v1697
    %v1703 = vld [vmem:[#allocation8 + $0x6] sm:$0x1]
    %s1704 = scalar_lea.vmem %s4, 192
    %v1705 = vld [vmem:[%s1704] sm:$0xff]
    %v1706 = vld [vmem:[%s1704 + $0x8] sm:$0xff]
    %v1707 = vld [vmem:[%s1704 + $0x10] sm:$0xff]
    %v1708 = vld [vmem:[%s1704 + $0x18] sm:$0xff]
    %v1709 = vperm.slane %v1703, 0
    %1710 = vrot.lane.b32.xlu0 %v1303, 1
    %v1711 = vpop.permute.xlu0 %1710
    %1712 = vrot.lane.b32.xlu0 %v1304, 1
    %v1713 = vpop.permute.xlu0 %1712
    %1714 = vrot.lane.b32.xlu0 %v1305, 1
    %v1715 = vpop.permute.xlu0 %1714
    %1716 = vrot.lane.b32.xlu0 %v1306, 1
    %v1717 = vpop.permute.xlu0 %1716
    %v1718 = vsel %vm558, %v1711, %v1713
    %v1719 = vsel %vm558, %v1715, %v1717
    %v1722 = vmul.f32 %v1709, %v1718
    %v1723 = vmul.f32 %v1709, %v1719
    %v1725 = vsel %vm276, %v1705, 0
    %v1728 = vsel %vm276, %v1706, 0
    %v1731 = vsel %vm276, %v1707, 0
    %v1734 = vsel %vm276, %v1708, 0
    %1736 = vmatpush.msra.mxu0 0.0
    %1737 = vmatpush.msra.mxu0 0.0
    %1738 = vmatpush.msra.mxu0 0.0
    %1739 = vmatpush.msra.mxu0 0.0
    %1740 = vmatpush.msra.mxu0 0.0
    %1741 = vmatpush.msra.mxu0 0.0
    %1742 = vmatpush.msra.mxu0 0.0
    %1743 = vmatpush.msra.mxu0 0.0
    %1744 = vmatpush.msra.mxu0 0.0
    %1745 = vmatpush.msra.mxu0 0.0
    %1746 = vmatpush.msra.mxu0 0.0
    %1747 = vmatpush.msra.mxu0 0.0
    %1748 = vmatpush.msra.mxu0 0.0
    %1749 = vmatpush.msra.mxu0 0.0
    %1750 = vmatpush.msra.mxu0 %v1723
    %1751 = vmatpush.msra.mxu0 %v1722
    %1752 = vmatmul.f32.gmra.mxu0 %v1725
    %v1753 = vpop.f32.mrf.mxu0
    %v1754 = vadd.f32 0.0, %v1753
    %1755 = vmatmul.f32.gmra.mxu0 %v1728
    %v1756 = vpop.f32.mrf.mxu0
    %v1757 = vadd.f32 0.0, %v1756
    %1758 = vmatmul.f32.gmra.mxu0 %v1731
    %v1759 = vpop.f32.mrf.mxu0
    %v1760 = vadd.f32 0.0, %v1759
    %1761 = vmatmul.f32.gmra.mxu0 %v1734
    %v1762 = vpop.f32.mrf.mxu0
    %v1763 = vadd.f32 0.0, %v1762
    %1764 = vdwg.mxu0
    %v1765 = vadd.f32 %v1699, %v1754
    %v1766 = vadd.f32 %v1700, %v1757
    %v1767 = vadd.f32 %v1701, %v1760
    %v1768 = vadd.f32 %v1702, %v1763
    %v1769 = vld [vmem:[#allocation8 + $0x7] sm:$0x1]
    %s1770 = scalar_lea.vmem %s4, 224
    %v1771 = vld [vmem:[%s1770] sm:$0xff]
    %v1772 = vld [vmem:[%s1770 + $0x8] sm:$0xff]
    %v1773 = vld [vmem:[%s1770 + $0x10] sm:$0xff]
    %v1774 = vld [vmem:[%s1770 + $0x18] sm:$0xff]
    %v1775 = vperm.slane %v1769, 0
    %v1776 = vmul.f32 %v1775, %v1304
    %v1777 = vmul.f32 %v1775, %v1306
    %v1779 = vsel %vm276, %v1771, 0
    %v1782 = vsel %vm276, %v1772, 0
    %v1785 = vsel %vm276, %v1773, 0
    %v1788 = vsel %vm276, %v1774, 0
    %1790 = vmatpush.msra.mxu0 0.0
    %1791 = vmatpush.msra.mxu0 0.0
    %1792 = vmatpush.msra.mxu0 0.0
    %1793 = vmatpush.msra.mxu0 0.0
    %1794 = vmatpush.msra.mxu0 0.0
    %1795 = vmatpush.msra.mxu0 0.0
    %1796 = vmatpush.msra.mxu0 0.0
    %1797 = vmatpush.msra.mxu0 0.0
    %1798 = vmatpush.msra.mxu0 0.0
    %1799 = vmatpush.msra.mxu0 0.0
    %1800 = vmatpush.msra.mxu0 0.0
    %1801 = vmatpush.msra.mxu0 0.0
    %1802 = vmatpush.msra.mxu0 0.0
    %1803 = vmatpush.msra.mxu0 0.0
    %1804 = vmatpush.msra.mxu0 %v1777
    %1805 = vmatpush.msra.mxu0 %v1776
    %1806 = vmatmul.f32.gmra.mxu0 %v1779
    %v1807 = vpop.f32.mrf.mxu0
    %v1808 = vadd.f32 0.0, %v1807
    %1809 = vmatmul.f32.gmra.mxu0 %v1782
    %v1810 = vpop.f32.mrf.mxu0
    %v1811 = vadd.f32 0.0, %v1810
    %1812 = vmatmul.f32.gmra.mxu0 %v1785
    %v1813 = vpop.f32.mrf.mxu0
    %v1814 = vadd.f32 0.0, %v1813
    %1815 = vmatmul.f32.gmra.mxu0 %v1788
    %v1816 = vpop.f32.mrf.mxu0
    %v1817 = vadd.f32 0.0, %v1816
    %1818 = vdwg.mxu0
    %v1819 = vadd.f32 %v1765, %v1808
    %v1820 = vadd.f32 %v1766, %v1811
    %v1821 = vadd.f32 %v1767, %v1814
    %v1822 = vadd.f32 %v1768, %v1817
    %v1823 = vld [vmem:[#allocation3 + $0x8] sm:$0xff]
    %v1824 = vld [vmem:[#allocation3 + $0x10] sm:$0xff]
    %v1825 = vld [vmem:[#allocation3 + $0x20] sm:$0xff]
    %v1826 = vld [vmem:[#allocation3 + $0x28] sm:$0xff]
    %v1827 = vld [vmem:[#allocation8 + $0x8] sm:$0x1]
    %s1828 = scalar_lea.vmem %s4, 256
    %v1829 = vld [vmem:[%s1828] sm:$0xff]
    %v1830 = vld [vmem:[%s1828 + $0x8] sm:$0xff]
    %v1831 = vld [vmem:[%s1828 + $0x10] sm:$0xff]
    %v1832 = vld [vmem:[%s1828 + $0x18] sm:$0xff]
    %v1833 = vperm.slane %v1827, 0
    %1838 = vrot.lane.b32.xlu0 %v1823, 127
    %v1839 = vpop.permute.xlu0 %1838
    %1840 = vrot.lane.b32.xlu0 %v1824, 127
    %v1841 = vpop.permute.xlu0 %1840
    %1842 = vrot.lane.b32.xlu0 %v1825, 127
    %v1843 = vpop.permute.xlu0 %1842
    %1844 = vrot.lane.b32.xlu0 %v1826, 127
    %v1845 = vpop.permute.xlu0 %1844
    %v1846 = vsel %vm649, %v1839, %v1841
    %v1847 = vsel %vm649, %v1843, %v1845
    %v1850 = vmul.f32 %v1833, %v1846
    %v1851 = vmul.f32 %v1833, %v1847
    %v1853 = vsel %vm276, %v1829, 0
    %v1856 = vsel %vm276, %v1830, 0
    %v1859 = vsel %vm276, %v1831, 0
    %v1862 = vsel %vm276, %v1832, 0
    %1864 = vmatpush.msra.mxu0 0.0
    %1865 = vmatpush.msra.mxu0 0.0
    %1866 = vmatpush.msra.mxu0 0.0
    %1867 = vmatpush.msra.mxu0 0.0
    %1868 = vmatpush.msra.mxu0 0.0
    %1869 = vmatpush.msra.mxu0 0.0
    %1870 = vmatpush.msra.mxu0 0.0
    %1871 = vmatpush.msra.mxu0 0.0
    %1872 = vmatpush.msra.mxu0 0.0
    %1873 = vmatpush.msra.mxu0 0.0
    %1874 = vmatpush.msra.mxu0 0.0
    %1875 = vmatpush.msra.mxu0 0.0
    %1876 = vmatpush.msra.mxu0 0.0
    %1877 = vmatpush.msra.mxu0 0.0
    %1878 = vmatpush.msra.mxu0 %v1851
    %1879 = vmatpush.msra.mxu0 %v1850
    %1880 = vmatmul.f32.gmra.mxu0 %v1853
    %v1881 = vpop.f32.mrf.mxu0
    %v1882 = vadd.f32 0.0, %v1881
    %1883 = vmatmul.f32.gmra.mxu0 %v1856
    %v1884 = vpop.f32.mrf.mxu0
    %v1885 = vadd.f32 0.0, %v1884
    %1886 = vmatmul.f32.gmra.mxu0 %v1859
    %v1887 = vpop.f32.mrf.mxu0
    %v1888 = vadd.f32 0.0, %v1887
    %1889 = vmatmul.f32.gmra.mxu0 %v1862
    %v1890 = vpop.f32.mrf.mxu0
    %v1891 = vadd.f32 0.0, %v1890
    %1892 = vdwg.mxu0
    %v1893 = vadd.f32 %v1819, %v1882
    %v1894 = vadd.f32 %v1820, %v1885
    %v1895 = vadd.f32 %v1821, %v1888
    %v1896 = vadd.f32 %v1822, %v1891
    %v1897 = vld [vmem:[#allocation8 + $0x9] sm:$0x1]
    %s1898 = scalar_lea.vmem %s4, 288
    %v1899 = vld [vmem:[%s1898] sm:$0xff]
    %v1900 = vld [vmem:[%s1898 + $0x8] sm:$0xff]
    %v1901 = vld [vmem:[%s1898 + $0x10] sm:$0xff]
    %v1902 = vld [vmem:[%s1898 + $0x18] sm:$0xff]
    %v1903 = vperm.slane %v1897, 0
    %1904 = vrot.lane.b32.xlu0 %v1823, 126
    %v1905 = vpop.permute.xlu0 %1904
    %1906 = vrot.lane.b32.xlu0 %v1824, 126
    %v1907 = vpop.permute.xlu0 %1906
    %1908 = vrot.lane.b32.xlu0 %v1825, 126
    %v1909 = vpop.permute.xlu0 %1908
    %1910 = vrot.lane.b32.xlu0 %v1826, 126
    %v1911 = vpop.permute.xlu0 %1910
    %v1912 = vsel %vm696, %v1905, %v1907
    %v1913 = vsel %vm696, %v1909, %v1911
    %v1916 = vmul.f32 %v1903, %v1912
    %v1917 = vmul.f32 %v1903, %v1913
    %v1919 = vsel %vm276, %v1899, 0
    %v1922 = vsel %vm276, %v1900, 0
    %v1925 = vsel %vm276, %v1901, 0
    %v1928 = vsel %vm276, %v1902, 0
    %1930 = vmatpush.msra.mxu0 0.0
    %1931 = vmatpush.msra.mxu0 0.0
    %1932 = vmatpush.msra.mxu0 0.0
    %1933 = vmatpush.msra.mxu0 0.0
    %1934 = vmatpush.msra.mxu0 0.0
    %1935 = vmatpush.msra.mxu0 0.0
    %1936 = vmatpush.msra.mxu0 0.0
    %1937 = vmatpush.msra.mxu0 0.0
    %1938 = vmatpush.msra.mxu0 0.0
    %1939 = vmatpush.msra.mxu0 0.0
    %1940 = vmatpush.msra.mxu0 0.0
    %1941 = vmatpush.msra.mxu0 0.0
    %1942 = vmatpush.msra.mxu0 0.0
    %1943 = vmatpush.msra.mxu0 0.0
    %1944 = vmatpush.msra.mxu0 %v1917
    %1945 = vmatpush.msra.mxu0 %v1916
    %1946 = vmatmul.f32.gmra.mxu0 %v1919
    %v1947 = vpop.f32.mrf.mxu0
    %v1948 = vadd.f32 0.0, %v1947
    %1949 = vmatmul.f32.gmra.mxu0 %v1922
    %v1950 = vpop.f32.mrf.mxu0
    %v1951 = vadd.f32 0.0, %v1950
    %1952 = vmatmul.f32.gmra.mxu0 %v1925
    %v1953 = vpop.f32.mrf.mxu0
    %v1954 = vadd.f32 0.0, %v1953
    %1955 = vmatmul.f32.gmra.mxu0 %v1928
    %v1956 = vpop.f32.mrf.mxu0
    %v1957 = vadd.f32 0.0, %v1956
    %1958 = vdwg.mxu0
    %v1959 = vadd.f32 %v1893, %v1948
    %v1960 = vadd.f32 %v1894, %v1951
    %v1961 = vadd.f32 %v1895, %v1954
    %v1962 = vadd.f32 %v1896, %v1957
    %v1963 = vld [vmem:[#allocation8 + $0xa] sm:$0x1]
    %s1964 = scalar_lea.vmem %s4, 320
    %v1965 = vld [vmem:[%s1964] sm:$0xff]
    %v1966 = vld [vmem:[%s1964 + $0x8] sm:$0xff]
    %v1967 = vld [vmem:[%s1964 + $0x10] sm:$0xff]
    %v1968 = vld [vmem:[%s1964 + $0x18] sm:$0xff]
    %v1969 = vperm.slane %v1963, 0
    %1970 = vrot.lane.b32.xlu0 %v1823, 122
    %v1971 = vpop.permute.xlu0 %1970
    %1972 = vrot.lane.b32.xlu0 %v1824, 122
    %v1973 = vpop.permute.xlu0 %1972
    %1974 = vrot.lane.b32.xlu0 %v1825, 122
    %v1975 = vpop.permute.xlu0 %1974
    %1976 = vrot.lane.b32.xlu0 %v1826, 122
    %v1977 = vpop.permute.xlu0 %1976
    %vm1978 = vcmask 998400
    %v1979 = vsel %vm1978, %v1971, %v1973
    %v1980 = vsel %vm1978, %v1975, %v1977
    %v1983 = vmul.f32 %v1969, %v1979
    %v1984 = vmul.f32 %v1969, %v1980
    %v1986 = vsel %vm276, %v1965, 0
    %v1989 = vsel %vm276, %v1966, 0
    %v1992 = vsel %vm276, %v1967, 0
    %v1995 = vsel %vm276, %v1968, 0
    %1997 = vmatpush.msra.mxu0 0.0
    %1998 = vmatpush.msra.mxu0 0.0
    %1999 = vmatpush.msra.mxu0 0.0
    %2000 = vmatpush.msra.mxu0 0.0
    %2001 = vmatpush.msra.mxu0 0.0
    %2002 = vmatpush.msra.mxu0 0.0
    %2003 = vmatpush.msra.mxu0 0.0
    %2004 = vmatpush.msra.mxu0 0.0
    %2005 = vmatpush.msra.mxu0 0.0
    %2006 = vmatpush.msra.mxu0 0.0
    %2007 = vmatpush.msra.mxu0 0.0
    %2008 = vmatpush.msra.mxu0 0.0
    %2009 = vmatpush.msra.mxu0 0.0
    %2010 = vmatpush.msra.mxu0 0.0
    %2011 = vmatpush.msra.mxu0 %v1984
    %2012 = vmatpush.msra.mxu0 %v1983
    %2013 = vmatmul.f32.gmra.mxu0 %v1986
    %v2014 = vpop.f32.mrf.mxu0
    %v2015 = vadd.f32 0.0, %v2014
    %2016 = vmatmul.f32.gmra.mxu0 %v1989
    %v2017 = vpop.f32.mrf.mxu0
    %v2018 = vadd.f32 0.0, %v2017
    %2019 = vmatmul.f32.gmra.mxu0 %v1992
    %v2020 = vpop.f32.mrf.mxu0
    %v2021 = vadd.f32 0.0, %v2020
    %2022 = vmatmul.f32.gmra.mxu0 %v1995
    %v2023 = vpop.f32.mrf.mxu0
    %v2024 = vadd.f32 0.0, %v2023
    %2025 = vdwg.mxu0
    %v2026 = vadd.f32 %v1959, %v2015
    %v2027 = vadd.f32 %v1960, %v2018
    %v2028 = vadd.f32 %v1961, %v2021
    %v2029 = vadd.f32 %v1962, %v2024
    %v2030 = vld [vmem:[#allocation8 + $0xb] sm:$0x1]
    %s2031 = scalar_lea.vmem %s4, 352
    %v2032 = vld [vmem:[%s2031] sm:$0xff]
    %v2033 = vld [vmem:[%s2031 + $0x8] sm:$0xff]
    %v2034 = vld [vmem:[%s2031 + $0x10] sm:$0xff]
    %v2035 = vld [vmem:[%s2031 + $0x18] sm:$0xff]
    %v2036 = vperm.slane %v2030, 0
    %2037 = vrot.lane.b32.xlu0 %v1823, 121
    %v2038 = vpop.permute.xlu0 %2037
    %2039 = vrot.lane.b32.xlu0 %v1824, 121
    %v2040 = vpop.permute.xlu0 %2039
    %2041 = vrot.lane.b32.xlu0 %v1825, 121
    %v2042 = vpop.permute.xlu0 %2041
    %2043 = vrot.lane.b32.xlu0 %v1826, 121
    %v2044 = vpop.permute.xlu0 %2043
    %vm2045 = vcmask 990208
    %v2046 = vsel %vm2045, %v2038, %v2040
    %v2047 = vsel %vm2045, %v2042, %v2044
    %v2050 = vmul.f32 %v2036, %v2046
    %v2051 = vmul.f32 %v2036, %v2047
    %v2053 = vsel %vm276, %v2032, 0
    %v2056 = vsel %vm276, %v2033, 0
    %v2059 = vsel %vm276, %v2034, 0
    %v2062 = vsel %vm276, %v2035, 0
    %2064 = vmatpush.msra.mxu0 0.0
    %2065 = vmatpush.msra.mxu0 0.0
    %2066 = vmatpush.msra.mxu0 0.0
    %2067 = vmatpush.msra.mxu0 0.0
    %2068 = vmatpush.msra.mxu0 0.0
    %2069 = vmatpush.msra.mxu0 0.0
    %2070 = vmatpush.msra.mxu0 0.0
    %2071 = vmatpush.msra.mxu0 0.0
    %2072 = vmatpush.msra.mxu0 0.0
    %2073 = vmatpush.msra.mxu0 0.0
    %2074 = vmatpush.msra.mxu0 0.0
    %2075 = vmatpush.msra.mxu0 0.0
    %2076 = vmatpush.msra.mxu0 0.0
    %2077 = vmatpush.msra.mxu0 0.0
    %2078 = vmatpush.msra.mxu0 %v2051
    %2079 = vmatpush.msra.mxu0 %v2050
    %2080 = vmatmul.f32.gmra.mxu0 %v2053
    %v2081 = vpop.f32.mrf.mxu0
    %v2082 = vadd.f32 0.0, %v2081
    %2083 = vmatmul.f32.gmra.mxu0 %v2056
    %v2084 = vpop.f32.mrf.mxu0
    %v2085 = vadd.f32 0.0, %v2084
    %2086 = vmatmul.f32.gmra.mxu0 %v2059
    %v2087 = vpop.f32.mrf.mxu0
    %v2088 = vadd.f32 0.0, %v2087
    %2089 = vmatmul.f32.gmra.mxu0 %v2062
    %v2090 = vpop.f32.mrf.mxu0
    %v2091 = vadd.f32 0.0, %v2090
    %2092 = vdwg.mxu0
    %v2093 = vadd.f32 %v2026, %v2082
    %v2094 = vadd.f32 %v2027, %v2085
    %v2095 = vadd.f32 %v2028, %v2088
    %v2096 = vadd.f32 %v2029, %v2091
    %v2097 = vld [vmem:[#allocation8 + $0xc] sm:$0x1]
    %s2098 = scalar_lea.vmem %s4, 384
    %v2099 = vld [vmem:[%s2098] sm:$0xff]
    %v2100 = vld [vmem:[%s2098 + $0x8] sm:$0xff]
    %v2101 = vld [vmem:[%s2098 + $0x10] sm:$0xff]
    %v2102 = vld [vmem:[%s2098 + $0x18] sm:$0xff]
    %v2103 = vperm.slane %v2097, 0
    %2104 = vrot.lane.b32.xlu0 %v1823, 120
    %v2105 = vpop.permute.xlu0 %2104
    %2106 = vrot.lane.b32.xlu0 %v1824, 120
    %v2107 = vpop.permute.xlu0 %2106
    %2108 = vrot.lane.b32.xlu0 %v1825, 120
    %v2109 = vpop.permute.xlu0 %2108
    %2110 = vrot.lane.b32.xlu0 %v1826, 120
    %v2111 = vpop.permute.xlu0 %2110
    %vm2112 = vcmask 982016
    %v2113 = vsel %vm2112, %v2105, %v2107
    %v2114 = vsel %vm2112, %v2109, %v2111
    %v2117 = vmul.f32 %v2103, %v2113
    %v2118 = vmul.f32 %v2103, %v2114
    %v2120 = vsel %vm276, %v2099, 0
    %v2123 = vsel %vm276, %v2100, 0
    %v2126 = vsel %vm276, %v2101, 0
    %v2129 = vsel %vm276, %v2102, 0
    %2131 = vmatpush.msra.mxu0 0.0
    %2132 = vmatpush.msra.mxu0 0.0
    %2133 = vmatpush.msra.mxu0 0.0
    %2134 = vmatpush.msra.mxu0 0.0
    %2135 = vmatpush.msra.mxu0 0.0
    %2136 = vmatpush.msra.mxu0 0.0
    %2137 = vmatpush.msra.mxu0 0.0
    %2138 = vmatpush.msra.mxu0 0.0
    %2139 = vmatpush.msra.mxu0 0.0
    %2140 = vmatpush.msra.mxu0 0.0
    %2141 = vmatpush.msra.mxu0 0.0
    %2142 = vmatpush.msra.mxu0 0.0
    %2143 = vmatpush.msra.mxu0 0.0
    %2144 = vmatpush.msra.mxu0 0.0
    %2145 = vmatpush.msra.mxu0 %v2118
    %2146 = vmatpush.msra.mxu0 %v2117
    %2147 = vmatmul.f32.gmra.mxu0 %v2120
    %v2148 = vpop.f32.mrf.mxu0
    %v2149 = vadd.f32 0.0, %v2148
    %2150 = vmatmul.f32.gmra.mxu0 %v2123
    %v2151 = vpop.f32.mrf.mxu0
    %v2152 = vadd.f32 0.0, %v2151
    %2153 = vmatmul.f32.gmra.mxu0 %v2126
    %v2154 = vpop.f32.mrf.mxu0
    %v2155 = vadd.f32 0.0, %v2154
    %2156 = vmatmul.f32.gmra.mxu0 %v2129
    %v2157 = vpop.f32.mrf.mxu0
    %v2158 = vadd.f32 0.0, %v2157
    %2159 = vdwg.mxu0
    %v2160 = vadd.f32 %v2093, %v2149
    %v2161 = vadd.f32 %v2094, %v2152
    %v2162 = vadd.f32 %v2095, %v2155
    %v2163 = vadd.f32 %v2096, %v2158
    %v2164 = vld [vmem:[#allocation8 + $0xd] sm:$0x1]
    %s2165 = scalar_lea.vmem %s4, 416
    %v2166 = vld [vmem:[%s2165] sm:$0xff]
    %v2167 = vld [vmem:[%s2165 + $0x8] sm:$0xff]
    %v2168 = vld [vmem:[%s2165 + $0x10] sm:$0xff]
    %v2169 = vld [vmem:[%s2165 + $0x18] sm:$0xff]
    %v2170 = vperm.slane %v2164, 0
    %2171 = vrot.lane.b32.xlu0 %v1823, 119
    %v2172 = vpop.permute.xlu0 %2171
    %2173 = vrot.lane.b32.xlu0 %v1824, 119
    %v2174 = vpop.permute.xlu0 %2173
    %2175 = vrot.lane.b32.xlu0 %v1825, 119
    %v2176 = vpop.permute.xlu0 %2175
    %2177 = vrot.lane.b32.xlu0 %v1826, 119
    %v2178 = vpop.permute.xlu0 %2177
    %vm2179 = vcmask 973824
    %v2180 = vsel %vm2179, %v2172, %v2174
    %v2181 = vsel %vm2179, %v2176, %v2178
    %v2184 = vmul.f32 %v2170, %v2180
    %v2185 = vmul.f32 %v2170, %v2181
    %v2187 = vsel %vm276, %v2166, 0
    %v2190 = vsel %vm276, %v2167, 0
    %v2193 = vsel %vm276, %v2168, 0
    %v2196 = vsel %vm276, %v2169, 0
    %2198 = vmatpush.msra.mxu0 0.0
    %2199 = vmatpush.msra.mxu0 0.0
    %2200 = vmatpush.msra.mxu0 0.0
    %2201 = vmatpush.msra.mxu0 0.0
    %2202 = vmatpush.msra.mxu0 0.0
    %2203 = vmatpush.msra.mxu0 0.0
    %2204 = vmatpush.msra.mxu0 0.0
    %2205 = vmatpush.msra.mxu0 0.0
    %2206 = vmatpush.msra.mxu0 0.0
    %2207 = vmatpush.msra.mxu0 0.0
    %2208 = vmatpush.msra.mxu0 0.0
    %2209 = vmatpush.msra.mxu0 0.0
    %2210 = vmatpush.msra.mxu0 0.0
    %2211 = vmatpush.msra.mxu0 0.0
    %2212 = vmatpush.msra.mxu0 %v2185
    %2213 = vmatpush.msra.mxu0 %v2184
    %2214 = vmatmul.f32.gmra.mxu0 %v2187
    %v2215 = vpop.f32.mrf.mxu0
    %v2216 = vadd.f32 0.0, %v2215
    %2217 = vmatmul.f32.gmra.mxu0 %v2190
    %v2218 = vpop.f32.mrf.mxu0
    %v2219 = vadd.f32 0.0, %v2218
    %2220 = vmatmul.f32.gmra.mxu0 %v2193
    %v2221 = vpop.f32.mrf.mxu0
    %v2222 = vadd.f32 0.0, %v2221
    %2223 = vmatmul.f32.gmra.mxu0 %v2196
    %v2224 = vpop.f32.mrf.mxu0
    %v2225 = vadd.f32 0.0, %v2224
    %2226 = vdwg.mxu0
    %v2227 = vadd.f32 %v2160, %v2216
    %v2228 = vadd.f32 %v2161, %v2219
    %v2229 = vadd.f32 %v2162, %v2222
    %v2230 = vadd.f32 %v2163, %v2225
    %v2231 = vld [vmem:[#allocation8 + $0xe] sm:$0x1]
    %s2232 = scalar_lea.vmem %s4, 448
    %v2233 = vld [vmem:[%s2232] sm:$0xff]
    %v2234 = vld [vmem:[%s2232 + $0x8] sm:$0xff]
    %v2235 = vld [vmem:[%s2232 + $0x10] sm:$0xff]
    %v2236 = vld [vmem:[%s2232 + $0x18] sm:$0xff]
    %v2237 = vperm.slane %v2231, 0
    %2238 = vrot.lane.b32.xlu0 %v1823, 118
    %v2239 = vpop.permute.xlu0 %2238
    %2240 = vrot.lane.b32.xlu0 %v1824, 118
    %v2241 = vpop.permute.xlu0 %2240
    %2242 = vrot.lane.b32.xlu0 %v1825, 118
    %v2243 = vpop.permute.xlu0 %2242
    %2244 = vrot.lane.b32.xlu0 %v1826, 118
    %v2245 = vpop.permute.xlu0 %2244
    %vm2246 = vcmask 965632
    %v2247 = vsel %vm2246, %v2239, %v2241
    %v2248 = vsel %vm2246, %v2243, %v2245
    %v2251 = vmul.f32 %v2237, %v2247
    %v2252 = vmul.f32 %v2237, %v2248
    %v2254 = vsel %vm276, %v2233, 0
    %v2257 = vsel %vm276, %v2234, 0
    %v2260 = vsel %vm276, %v2235, 0
    %v2263 = vsel %vm276, %v2236, 0
    %2265 = vmatpush.msra.mxu0 0.0
    %2266 = vmatpush.msra.mxu0 0.0
    %2267 = vmatpush.msra.mxu0 0.0
    %2268 = vmatpush.msra.mxu0 0.0
    %2269 = vmatpush.msra.mxu0 0.0
    %2270 = vmatpush.msra.mxu0 0.0
    %2271 = vmatpush.msra.mxu0 0.0
    %2272 = vmatpush.msra.mxu0 0.0
    %2273 = vmatpush.msra.mxu0 0.0
    %2274 = vmatpush.msra.mxu0 0.0
    %2275 = vmatpush.msra.mxu0 0.0
    %2276 = vmatpush.msra.mxu0 0.0
    %2277 = vmatpush.msra.mxu0 0.0
    %2278 = vmatpush.msra.mxu0 0.0
    %2279 = vmatpush.msra.mxu0 %v2252
    %2280 = vmatpush.msra.mxu0 %v2251
    %2281 = vmatmul.f32.gmra.mxu0 %v2254
    %v2282 = vpop.f32.mrf.mxu0
    %v2283 = vadd.f32 0.0, %v2282
    %2284 = vmatmul.f32.gmra.mxu0 %v2257
    %v2285 = vpop.f32.mrf.mxu0
    %v2286 = vadd.f32 0.0, %v2285
    %2287 = vmatmul.f32.gmra.mxu0 %v2260
    %v2288 = vpop.f32.mrf.mxu0
    %v2289 = vadd.f32 0.0, %v2288
    %2290 = vmatmul.f32.gmra.mxu0 %v2263
    %v2291 = vpop.f32.mrf.mxu0
    %v2292 = vadd.f32 0.0, %v2291
    %2293 = vdwg.mxu0
    %v2294 = vadd.f32 %v2227, %v2283
    %v2295 = vadd.f32 %v2228, %v2286
    %v2296 = vadd.f32 %v2229, %v2289
    %v2297 = vadd.f32 %v2230, %v2292
    %v2298 = vtanh.pop %v2294
    %v2299 = vtanh.pop %v2295
    %v2300 = vtanh.pop %v2296
    %v2301 = vtanh.pop %v2297
    %v2302 = vld [vmem:[#allocation10] sm:$0xff]
    %v2303 = vld [vmem:[#allocation10 + $0x8] sm:$0xff]
    %v2304 = vld [vmem:[%s8] sm:$0xff]
    %v2305 = vld [vmem:[%s8 + $0x8] sm:$0xff]
    %v2306 = vld [vmem:[%s8 + $0x10] sm:$0xff]
    %v2307 = vld [vmem:[%s8 + $0x18] sm:$0xff]
    %v2308 = vld [vmem:[%s8 + $0x20] sm:$0xff]
    %v2309 = vld [vmem:[%s8 + $0x28] sm:$0xff]
    %v2310 = vld [vmem:[%s8 + $0x30] sm:$0xff]
    %v2311 = vld [vmem:[%s8 + $0x38] sm:$0xff]
    %v2312 = vld [vmem:[%s8 + $0x40] sm:$0xff]
    %v2313 = vld [vmem:[%s8 + $0x48] sm:$0xff]
    %v2314 = vld [vmem:[%s8 + $0x50] sm:$0xff]
    %v2315 = vld [vmem:[%s8 + $0x58] sm:$0xff]
    %v2316 = vld [vmem:[%s8 + $0x60] sm:$0xff]
    %v2317 = vld [vmem:[%s8 + $0x68] sm:$0xff]
    %v2318 = vld [vmem:[%s8 + $0x70] sm:$0xff]
    %v2319 = vld [vmem:[%s8 + $0x78] sm:$0xff]
    %v2320 = vld [vmem:[%s8 + $0x80] sm:$0xff]
    %v2321 = vld [vmem:[%s8 + $0x88] sm:$0xff]
    %v2322 = vld [vmem:[%s8 + $0x90] sm:$0xff]
    %v2323 = vld [vmem:[%s8 + $0x98] sm:$0xff]
    %v2324 = vld [vmem:[%s8 + $0xa0] sm:$0xff]
    %v2325 = vld [vmem:[%s8 + $0xa8] sm:$0xff]
    %v2326 = vld [vmem:[%s8 + $0xb0] sm:$0xff]
    %v2327 = vld [vmem:[%s8 + $0xb8] sm:$0xff]
    %v2328 = vld [vmem:[%s8 + $0xc0] sm:$0xff]
    %v2329 = vld [vmem:[%s8 + $0xc8] sm:$0xff]
    %v2330 = vld [vmem:[%s8 + $0xd0] sm:$0xff]
    %v2331 = vld [vmem:[%s8 + $0xd8] sm:$0xff]
    %v2332 = vld [vmem:[%s8 + $0xe0] sm:$0xff]
    %v2333 = vld [vmem:[%s8 + $0xe8] sm:$0xff]
    %v2334 = vld [vmem:[%s8 + $0xf0] sm:$0xff]
    %v2335 = vld [vmem:[%s8 + $0xf8] sm:$0xff]
    %v2336 = vld [vmem:[%s8 + $0x100] sm:$0xff]
    %v2337 = vld [vmem:[%s8 + $0x108] sm:$0xff]
    %v2338 = vld [vmem:[%s8 + $0x110] sm:$0xff]
    %v2339 = vld [vmem:[%s8 + $0x118] sm:$0xff]
    %v2340 = vld [vmem:[%s8 + $0x120] sm:$0xff]
    %v2341 = vld [vmem:[%s8 + $0x128] sm:$0xff]
    %v2342 = vld [vmem:[%s8 + $0x130] sm:$0xff]
    %v2343 = vld [vmem:[%s8 + $0x138] sm:$0xff]
    %v2344 = vld [vmem:[%s8 + $0x140] sm:$0xff]
    %v2345 = vld [vmem:[%s8 + $0x148] sm:$0xff]
    %v2346 = vld [vmem:[%s8 + $0x150] sm:$0xff]
    %v2347 = vld [vmem:[%s8 + $0x158] sm:$0xff]
    %v2348 = vld [vmem:[%s8 + $0x160] sm:$0xff]
    %v2349 = vld [vmem:[%s8 + $0x168] sm:$0xff]
    %v2350 = vld [vmem:[%s8 + $0x170] sm:$0xff]
    %v2351 = vld [vmem:[%s8 + $0x178] sm:$0xff]
    %v2352 = vld [vmem:[%s8 + $0x180] sm:$0xff]
    %v2353 = vld [vmem:[%s8 + $0x188] sm:$0xff]
    %v2354 = vld [vmem:[%s8 + $0x190] sm:$0xff]
    %v2355 = vld [vmem:[%s8 + $0x198] sm:$0xff]
    %v2356 = vld [vmem:[%s8 + $0x1a0] sm:$0xff]
    %v2357 = vld [vmem:[%s8 + $0x1a8] sm:$0xff]
    %v2358 = vld [vmem:[%s8 + $0x1b0] sm:$0xff]
    %v2359 = vld [vmem:[%s8 + $0x1b8] sm:$0xff]
    %v2360 = vld [vmem:[%s8 + $0x1c0] sm:$0xff]
    %v2361 = vld [vmem:[%s8 + $0x1c8] sm:$0xff]
    %v2362 = vld [vmem:[%s8 + $0x1d0] sm:$0xff]
    %v2363 = vld [vmem:[%s8 + $0x1d8] sm:$0xff]
    %v2364 = vld [vmem:[%s8 + $0x1e0] sm:$0xff]
    %v2365 = vld [vmem:[%s8 + $0x1e8] sm:$0xff]
    %v2366 = vld [vmem:[%s8 + $0x1f0] sm:$0xff]
    %v2367 = vld [vmem:[%s8 + $0x1f8] sm:$0xff]
    %2368 = vmatpush.msra.mxu0 %v2364
    %2369 = vmatpush.msra.mxu0 %v2360
    %2370 = vmatpush.msra.mxu0 %v2356
    %2371 = vmatpush.msra.mxu0 %v2352
    %2372 = vmatpush.msra.mxu0 %v2348
    %2373 = vmatpush.msra.mxu0 %v2344
    %2374 = vmatpush.msra.mxu0 %v2340
    %2375 = vmatpush.msra.mxu0 %v2336
    %2376 = vmatpush.msra.mxu0 %v2332
    %2377 = vmatpush.msra.mxu0 %v2328
    %2378 = vmatpush.msra.mxu0 %v2324
    %2379 = vmatpush.msra.mxu0 %v2320
    %2380 = vmatpush.msra.mxu0 %v2316
    %2381 = vmatpush.msra.mxu0 %v2312
    %2382 = vmatpush.msra.mxu0 %v2308
    %2383 = vmatpush.msra.mxu0 %v2304
    %2384 = vmatmul.f32.gmra.mxu0 %v2298
    %v2385 = vpop.f32.mrf.mxu0
    %v2386 = vadd.f32 0.0, %v2385
    %2387 = vmatmul.f32.gmra.mxu0 %v2299
    %v2388 = vpop.f32.mrf.mxu0
    %v2389 = vadd.f32 0.0, %v2388
    %2390 = vmatmul.f32.gmra.mxu0 %v2300
    %v2391 = vpop.f32.mrf.mxu0
    %v2392 = vadd.f32 0.0, %v2391
    %2393 = vmatmul.f32.gmra.mxu0 %v2301
    %v2394 = vpop.f32.mrf.mxu0
    %v2395 = vadd.f32 0.0, %v2394
    %2396 = vdwg.mxu0
    %2397 = vmatpush.msra.mxu0 %v2365
    %2398 = vmatpush.msra.mxu0 %v2361
    %2399 = vmatpush.msra.mxu0 %v2357
    %2400 = vmatpush.msra.mxu0 %v2353
    %2401 = vmatpush.msra.mxu0 %v2349
    %2402 = vmatpush.msra.mxu0 %v2345
    %2403 = vmatpush.msra.mxu0 %v2341
    %2404 = vmatpush.msra.mxu0 %v2337
    %2405 = vmatpush.msra.mxu0 %v2333
    %2406 = vmatpush.msra.mxu0 %v2329
    %2407 = vmatpush.msra.mxu0 %v2325
    %2408 = vmatpush.msra.mxu0 %v2321
    %2409 = vmatpush.msra.mxu0 %v2317
    %2410 = vmatpush.msra.mxu0 %v2313
    %2411 = vmatpush.msra.mxu0 %v2309
    %2412 = vmatpush.msra.mxu0 %v2305
    %2413 = vmatmul.f32.gmra.mxu0 %v2298
    %v2414 = vpop.f32.mrf.mxu0
    %v2415 = vadd.f32 0.0, %v2414
    %2416 = vmatmul.f32.gmra.mxu0 %v2299
    %v2417 = vpop.f32.mrf.mxu0
    %v2418 = vadd.f32 0.0, %v2417
    %2419 = vmatmul.f32.gmra.mxu0 %v2300
    %v2420 = vpop.f32.mrf.mxu0
    %v2421 = vadd.f32 0.0, %v2420
    %2422 = vmatmul.f32.gmra.mxu0 %v2301
    %v2423 = vpop.f32.mrf.mxu0
    %v2424 = vadd.f32 0.0, %v2423
    %2425 = vdwg.mxu0
    %2426 = vmatpush.msra.mxu0 %v2366
    %2427 = vmatpush.msra.mxu0 %v2362
    %2428 = vmatpush.msra.mxu0 %v2358
    %2429 = vmatpush.msra.mxu0 %v2354
    %2430 = vmatpush.msra.mxu0 %v2350
    %2431 = vmatpush.msra.mxu0 %v2346
    %2432 = vmatpush.msra.mxu0 %v2342
    %2433 = vmatpush.msra.mxu0 %v2338
    %2434 = vmatpush.msra.mxu0 %v2334
    %2435 = vmatpush.msra.mxu0 %v2330
    %2436 = vmatpush.msra.mxu0 %v2326
    %2437 = vmatpush.msra.mxu0 %v2322
    %2438 = vmatpush.msra.mxu0 %v2318
    %2439 = vmatpush.msra.mxu0 %v2314
    %2440 = vmatpush.msra.mxu0 %v2310
    %2441 = vmatpush.msra.mxu0 %v2306
    %2442 = vmatmul.f32.gmra.mxu0 %v2298
    %v2443 = vpop.f32.mrf.mxu0
    %v2444 = vadd.f32 0.0, %v2443
    %2445 = vmatmul.f32.gmra.mxu0 %v2299
    %v2446 = vpop.f32.mrf.mxu0
    %v2447 = vadd.f32 0.0, %v2446
    %2448 = vmatmul.f32.gmra.mxu0 %v2300
    %v2449 = vpop.f32.mrf.mxu0
    %v2450 = vadd.f32 0.0, %v2449
    %2451 = vmatmul.f32.gmra.mxu0 %v2301
    %v2452 = vpop.f32.mrf.mxu0
    %v2453 = vadd.f32 0.0, %v2452
    %2454 = vdwg.mxu0
    %2455 = vmatpush.msra.mxu0 %v2367
    %2456 = vmatpush.msra.mxu0 %v2363
    %2457 = vmatpush.msra.mxu0 %v2359
    %2458 = vmatpush.msra.mxu0 %v2355
    %2459 = vmatpush.msra.mxu0 %v2351
    %2460 = vmatpush.msra.mxu0 %v2347
    %2461 = vmatpush.msra.mxu0 %v2343
    %2462 = vmatpush.msra.mxu0 %v2339
    %2463 = vmatpush.msra.mxu0 %v2335
    %2464 = vmatpush.msra.mxu0 %v2331
    %2465 = vmatpush.msra.mxu0 %v2327
    %2466 = vmatpush.msra.mxu0 %v2323
    %2467 = vmatpush.msra.mxu0 %v2319
    %2468 = vmatpush.msra.mxu0 %v2315
    %2469 = vmatpush.msra.mxu0 %v2311
    %2470 = vmatpush.msra.mxu0 %v2307
    %2471 = vmatmul.f32.gmra.mxu0 %v2298
    %v2472 = vpop.f32.mrf.mxu0
    %v2473 = vadd.f32 0.0, %v2472
    %2474 = vmatmul.f32.gmra.mxu0 %v2299
    %v2475 = vpop.f32.mrf.mxu0
    %v2476 = vadd.f32 0.0, %v2475
    %2477 = vmatmul.f32.gmra.mxu0 %v2300
    %v2478 = vpop.f32.mrf.mxu0
    %v2479 = vadd.f32 0.0, %v2478
    %2480 = vmatmul.f32.gmra.mxu0 %v2301
    %v2481 = vpop.f32.mrf.mxu0
    %v2482 = vadd.f32 0.0, %v2481
    %2483 = vdwg.mxu0
    %v2484 = vld [vmem:[%s6] sm:$0xff]
    %v2485 = vld [vmem:[%s6 + $0x8] sm:$0xff]
    %v2486 = vld [vmem:[%s6 + $0x10] sm:$0xff]
    %v2487 = vld [vmem:[%s6 + $0x18] sm:$0xff]
    %2490 = vst [vmem:[#allocation1] ss:$2 sm:$0xff] %v2302
    %s2491 = scalar_lea.vmem [#allocation1], 16
    %2492 = vst [vmem:[%s2491] ss:$2 sm:$0xff] %v2303
    %v2493 = vld.sshfl [vmem:[#allocation1] sm:$0xff pattern:$0x75316420]
    %v2494 = vld.sshfl [vmem:[#allocation1 + $0x8] sm:$0xff pattern:$0x75316420]
    %v2495 = vld.sshfl [vmem:[#allocation1 + $0x10] sm:$0xff pattern:$0x75316420]
    %v2496 = vld.sshfl [vmem:[#allocation1 + $0x18] sm:$0xff pattern:$0x75316420]
    %vm2497 = vcmask 31744
    %v2499 = vsel %vm2497, %v2484, 0
    %v2502 = vsel %vm2497, %v2485, 0
    %v2505 = vsel %vm2497, %v2486, 0
    %v2508 = vsel %vm2497, %v2487, 0
    %vm2510 = vcmask 1043456
    %v2511 = vsel %vm2510, %v2493, 0
    %v2513 = vsel %vm2510, %v2494, 0
    %v2515 = vsel %vm2510, %v2495, 0
    %v2517 = vsel %vm2510, %v2496, 0
    %2519 = vmatpush.msra.mxu0 0.0
    %2520 = vmatpush.msra.mxu0 0.0
    %2521 = vmatpush.msra.mxu0 0.0
    %2522 = vmatpush.msra.mxu0 0.0
    %2523 = vmatpush.msra.mxu0 0.0
    %2524 = vmatpush.msra.mxu0 0.0
    %2525 = vmatpush.msra.mxu0 0.0
    %2526 = vmatpush.msra.mxu0 0.0
    %2527 = vmatpush.msra.mxu0 0.0
    %2528 = vmatpush.msra.mxu0 0.0
    %2529 = vmatpush.msra.mxu0 0.0
    %2530 = vmatpush.msra.mxu0 0.0
    %2531 = vmatpush.msra.mxu0 0.0
    %2532 = vmatpush.msra.mxu0 0.0
    %2533 = vmatpush.msra.mxu0 0.0
    %2534 = vmatpush.msra.mxu0 %v2511
    %2535 = vmatmul.f32.gmra.mxu0 %v2499
    %v2536 = vpop.f32.mrf.mxu0
    %v2537 = vadd.f32 0.0, %v2536
    %2538 = vmatmul.f32.gmra.mxu0 %v2502
    %v2539 = vpop.f32.mrf.mxu0
    %v2540 = vadd.f32 0.0, %v2539
    %2541 = vmatmul.f32.gmra.mxu0 %v2505
    %v2542 = vpop.f32.mrf.mxu0
    %v2543 = vadd.f32 0.0, %v2542
    %2544 = vmatmul.f32.gmra.mxu0 %v2508
    %v2545 = vpop.f32.mrf.mxu0
    %v2546 = vadd.f32 0.0, %v2545
    %2547 = vdwg.mxu0
    %2548 = vmatpush.msra.mxu0 0.0
    %2549 = vmatpush.msra.mxu0 0.0
    %2550 = vmatpush.msra.mxu0 0.0
    %2551 = vmatpush.msra.mxu0 0.0
    %2552 = vmatpush.msra.mxu0 0.0
    %2553 = vmatpush.msra.mxu0 0.0
    %2554 = vmatpush.msra.mxu0 0.0
    %2555 = vmatpush.msra.mxu0 0.0
    %2556 = vmatpush.msra.mxu0 0.0
    %2557 = vmatpush.msra.mxu0 0.0
    %2558 = vmatpush.msra.mxu0 0.0
    %2559 = vmatpush.msra.mxu0 0.0
    %2560 = vmatpush.msra.mxu0 0.0
    %2561 = vmatpush.msra.mxu0 0.0
    %2562 = vmatpush.msra.mxu0 0.0
    %2563 = vmatpush.msra.mxu0 %v2513
    %2564 = vmatmul.f32.gmra.mxu0 %v2499
    %v2565 = vpop.f32.mrf.mxu0
    %v2566 = vadd.f32 0.0, %v2565
    %2567 = vmatmul.f32.gmra.mxu0 %v2502
    %v2568 = vpop.f32.mrf.mxu0
    %v2569 = vadd.f32 0.0, %v2568
    %2570 = vmatmul.f32.gmra.mxu0 %v2505
    %v2571 = vpop.f32.mrf.mxu0
    %v2572 = vadd.f32 0.0, %v2571
    %2573 = vmatmul.f32.gmra.mxu0 %v2508
    %v2574 = vpop.f32.mrf.mxu0
    %v2575 = vadd.f32 0.0, %v2574
    %2576 = vdwg.mxu0
    %2577 = vmatpush.msra.mxu0 0.0
    %2578 = vmatpush.msra.mxu0 0.0
    %2579 = vmatpush.msra.mxu0 0.0
    %2580 = vmatpush.msra.mxu0 0.0
    %2581 = vmatpush.msra.mxu0 0.0
    %2582 = vmatpush.msra.mxu0 0.0
    %2583 = vmatpush.msra.mxu0 0.0
    %2584 = vmatpush.msra.mxu0 0.0
    %2585 = vmatpush.msra.mxu0 0.0
    %2586 = vmatpush.msra.mxu0 0.0
    %2587 = vmatpush.msra.mxu0 0.0
    %2588 = vmatpush.msra.mxu0 0.0
    %2589 = vmatpush.msra.mxu0 0.0
    %2590 = vmatpush.msra.mxu0 0.0
    %2591 = vmatpush.msra.mxu0 0.0
    %2592 = vmatpush.msra.mxu0 %v2515
    %2593 = vmatmul.f32.gmra.mxu0 %v2499
    %v2594 = vpop.f32.mrf.mxu0
    %v2595 = vadd.f32 0.0, %v2594
    %2596 = vmatmul.f32.gmra.mxu0 %v2502
    %v2597 = vpop.f32.mrf.mxu0
    %v2598 = vadd.f32 0.0, %v2597
    %2599 = vmatmul.f32.gmra.mxu0 %v2505
    %v2600 = vpop.f32.mrf.mxu0
    %v2601 = vadd.f32 0.0, %v2600
    %2602 = vmatmul.f32.gmra.mxu0 %v2508
    %v2603 = vpop.f32.mrf.mxu0
    %v2604 = vadd.f32 0.0, %v2603
    %2605 = vdwg.mxu0
    %2606 = vmatpush.msra.mxu0 0.0
    %2607 = vmatpush.msra.mxu0 0.0
    %2608 = vmatpush.msra.mxu0 0.0
    %2609 = vmatpush.msra.mxu0 0.0
    %2610 = vmatpush.msra.mxu0 0.0
    %2611 = vmatpush.msra.mxu0 0.0
    %2612 = vmatpush.msra.mxu0 0.0
    %2613 = vmatpush.msra.mxu0 0.0
    %2614 = vmatpush.msra.mxu0 0.0
    %2615 = vmatpush.msra.mxu0 0.0
    %2616 = vmatpush.msra.mxu0 0.0
    %2617 = vmatpush.msra.mxu0 0.0
    %2618 = vmatpush.msra.mxu0 0.0
    %2619 = vmatpush.msra.mxu0 0.0
    %2620 = vmatpush.msra.mxu0 0.0
    %2621 = vmatpush.msra.mxu0 %v2517
    %2622 = vmatmul.f32.gmra.mxu0 %v2499
    %v2623 = vpop.f32.mrf.mxu0
    %v2624 = vadd.f32 0.0, %v2623
    %2625 = vmatmul.f32.gmra.mxu0 %v2502
    %v2626 = vpop.f32.mrf.mxu0
    %v2627 = vadd.f32 0.0, %v2626
    %2628 = vmatmul.f32.gmra.mxu0 %v2505
    %v2629 = vpop.f32.mrf.mxu0
    %v2630 = vadd.f32 0.0, %v2629
    %2631 = vmatmul.f32.gmra.mxu0 %v2508
    %v2632 = vpop.f32.mrf.mxu0
    %v2633 = vadd.f32 0.0, %v2632
    %2634 = vdwg.mxu0
    %v2635 = vmul.f32 %v2386, %v2537
    %v2636 = vmul.f32 %v2415, %v2566
    %v2637 = vmul.f32 %v2444, %v2595
    %v2638 = vmul.f32 %v2473, %v2624
    %v2639 = vmul.f32 %v2389, %v2540
    %v2640 = vmul.f32 %v2418, %v2569
    %v2641 = vmul.f32 %v2447, %v2598
    %v2642 = vmul.f32 %v2476, %v2627
    %v2643 = vmul.f32 %v2392, %v2543
    %v2644 = vmul.f32 %v2421, %v2572
    %v2645 = vmul.f32 %v2450, %v2601
    %v2646 = vmul.f32 %v2479, %v2630
    %v2647 = vmul.f32 %v2395, %v2546
    %v2648 = vmul.f32 %v2424, %v2575
    %v2649 = vmul.f32 %v2453, %v2604
    %v2650 = vmul.f32 %v2482, %v2633
    %s2651 = scalar_lea.vmem %s8, 512
    %v2652 = vld [vmem:[%s2651] sm:$0xff]
    %v2653 = vld [vmem:[%s2651 + $0x8] sm:$0xff]
    %v2654 = vld [vmem:[%s2651 + $0x10] sm:$0xff]
    %v2655 = vld [vmem:[%s2651 + $0x18] sm:$0xff]
    %v2656 = vld [vmem:[%s2651 + $0x20] sm:$0xff]
    %v2657 = vld [vmem:[%s2651 + $0x28] sm:$0xff]
    %v2658 = vld [vmem:[%s2651 + $0x30] sm:$0xff]
    %v2659 = vld [vmem:[%s2651 + $0x38] sm:$0xff]
    %v2660 = vld [vmem:[%s2651 + $0x40] sm:$0xff]
    %v2661 = vld [vmem:[%s2651 + $0x48] sm:$0xff]
    %v2662 = vld [vmem:[%s2651 + $0x50] sm:$0xff]
    %v2663 = vld [vmem:[%s2651 + $0x58] sm:$0xff]
    %v2664 = vld [vmem:[%s2651 + $0x60] sm:$0xff]
    %v2665 = vld [vmem:[%s2651 + $0x68] sm:$0xff]
    %v2666 = vld [vmem:[%s2651 + $0x70] sm:$0xff]
    %v2667 = vld [vmem:[%s2651 + $0x78] sm:$0xff]
    %v2668 = vld [vmem:[%s2651 + $0x80] sm:$0xff]
    %v2669 = vld [vmem:[%s2651 + $0x88] sm:$0xff]
    %v2670 = vld [vmem:[%s2651 + $0x90] sm:$0xff]
    %v2671 = vld [vmem:[%s2651 + $0x98] sm:$0xff]
    %v2672 = vld [vmem:[%s2651 + $0xa0] sm:$0xff]
    %v2673 = vld [vmem:[%s2651 + $0xa8] sm:$0xff]
    %v2674 = vld [vmem:[%s2651 + $0xb0] sm:$0xff]
    %v2675 = vld [vmem:[%s2651 + $0xb8] sm:$0xff]
    %v2676 = vld [vmem:[%s2651 + $0xc0] sm:$0xff]
    %v2677 = vld [vmem:[%s2651 + $0xc8] sm:$0xff]
    %v2678 = vld [vmem:[%s2651 + $0xd0] sm:$0xff]
    %v2679 = vld [vmem:[%s2651 + $0xd8] sm:$0xff]
    %v2680 = vld [vmem:[%s2651 + $0xe0] sm:$0xff]
    %v2681 = vld [vmem:[%s2651 + $0xe8] sm:$0xff]
    %v2682 = vld [vmem:[%s2651 + $0xf0] sm:$0xff]
    %v2683 = vld [vmem:[%s2651 + $0xf8] sm:$0xff]
    %v2684 = vld [vmem:[%s2651 + $0x100] sm:$0xff]
    %v2685 = vld [vmem:[%s2651 + $0x108] sm:$0xff]
    %v2686 = vld [vmem:[%s2651 + $0x110] sm:$0xff]
    %v2687 = vld [vmem:[%s2651 + $0x118] sm:$0xff]
    %v2688 = vld [vmem:[%s2651 + $0x120] sm:$0xff]
    %v2689 = vld [vmem:[%s2651 + $0x128] sm:$0xff]
    %v2690 = vld [vmem:[%s2651 + $0x130] sm:$0xff]
    %v2691 = vld [vmem:[%s2651 + $0x138] sm:$0xff]
    %v2692 = vld [vmem:[%s2651 + $0x140] sm:$0xff]
    %v2693 = vld [vmem:[%s2651 + $0x148] sm:$0xff]
    %v2694 = vld [vmem:[%s2651 + $0x150] sm:$0xff]
    %v2695 = vld [vmem:[%s2651 + $0x158] sm:$0xff]
    %v2696 = vld [vmem:[%s2651 + $0x160] sm:$0xff]
    %v2697 = vld [vmem:[%s2651 + $0x168] sm:$0xff]
    %v2698 = vld [vmem:[%s2651 + $0x170] sm:$0xff]
    %v2699 = vld [vmem:[%s2651 + $0x178] sm:$0xff]
    %v2700 = vld [vmem:[%s2651 + $0x180] sm:$0xff]
    %v2701 = vld [vmem:[%s2651 + $0x188] sm:$0xff]
    %v2702 = vld [vmem:[%s2651 + $0x190] sm:$0xff]
    %v2703 = vld [vmem:[%s2651 + $0x198] sm:$0xff]
    %v2704 = vld [vmem:[%s2651 + $0x1a0] sm:$0xff]
    %v2705 = vld [vmem:[%s2651 + $0x1a8] sm:$0xff]
    %v2706 = vld [vmem:[%s2651 + $0x1b0] sm:$0xff]
    %v2707 = vld [vmem:[%s2651 + $0x1b8] sm:$0xff]
    %v2708 = vld [vmem:[%s2651 + $0x1c0] sm:$0xff]
    %v2709 = vld [vmem:[%s2651 + $0x1c8] sm:$0xff]
    %v2710 = vld [vmem:[%s2651 + $0x1d0] sm:$0xff]
    %v2711 = vld [vmem:[%s2651 + $0x1d8] sm:$0xff]
    %v2712 = vld [vmem:[%s2651 + $0x1e0] sm:$0xff]
    %v2713 = vld [vmem:[%s2651 + $0x1e8] sm:$0xff]
    %v2714 = vld [vmem:[%s2651 + $0x1f0] sm:$0xff]
    %v2715 = vld [vmem:[%s2651 + $0x1f8] sm:$0xff]
    %2716 = vmatpush.msra.mxu0 %v2712
    %2717 = vmatpush.msra.mxu0 %v2708
    %2718 = vmatpush.msra.mxu0 %v2704
    %2719 = vmatpush.msra.mxu0 %v2700
    %2720 = vmatpush.msra.mxu0 %v2696
    %2721 = vmatpush.msra.mxu0 %v2692
    %2722 = vmatpush.msra.mxu0 %v2688
    %2723 = vmatpush.msra.mxu0 %v2684
    %2724 = vmatpush.msra.mxu0 %v2680
    %2725 = vmatpush.msra.mxu0 %v2676
    %2726 = vmatpush.msra.mxu0 %v2672
    %2727 = vmatpush.msra.mxu0 %v2668
    %2728 = vmatpush.msra.mxu0 %v2664
    %2729 = vmatpush.msra.mxu0 %v2660
    %2730 = vmatpush.msra.mxu0 %v2656
    %2731 = vmatpush.msra.mxu0 %v2652
    %2732 = vmatmul.f32.gmra.mxu0 %v2298
    %v2733 = vpop.f32.mrf.mxu0
    %v2734 = vadd.f32 0.0, %v2733
    %2735 = vmatmul.f32.gmra.mxu0 %v2299
    %v2736 = vpop.f32.mrf.mxu0
    %v2737 = vadd.f32 0.0, %v2736
    %2738 = vmatmul.f32.gmra.mxu0 %v2300
    %v2739 = vpop.f32.mrf.mxu0
    %v2740 = vadd.f32 0.0, %v2739
    %2741 = vmatmul.f32.gmra.mxu0 %v2301
    %v2742 = vpop.f32.mrf.mxu0
    %v2743 = vadd.f32 0.0, %v2742
    %2744 = vdwg.mxu0
    %2745 = vmatpush.msra.mxu0 %v2713
    %2746 = vmatpush.msra.mxu0 %v2709
    %2747 = vmatpush.msra.mxu0 %v2705
    %2748 = vmatpush.msra.mxu0 %v2701
    %2749 = vmatpush.msra.mxu0 %v2697
    %2750 = vmatpush.msra.mxu0 %v2693
    %2751 = vmatpush.msra.mxu0 %v2689
    %2752 = vmatpush.msra.mxu0 %v2685
    %2753 = vmatpush.msra.mxu0 %v2681
    %2754 = vmatpush.msra.mxu0 %v2677
    %2755 = vmatpush.msra.mxu0 %v2673
    %2756 = vmatpush.msra.mxu0 %v2669
    %2757 = vmatpush.msra.mxu0 %v2665
    %2758 = vmatpush.msra.mxu0 %v2661
    %2759 = vmatpush.msra.mxu0 %v2657
    %2760 = vmatpush.msra.mxu0 %v2653
    %2761 = vmatmul.f32.gmra.mxu0 %v2298
    %v2762 = vpop.f32.mrf.mxu0
    %v2763 = vadd.f32 0.0, %v2762
    %2764 = vmatmul.f32.gmra.mxu0 %v2299
    %v2765 = vpop.f32.mrf.mxu0
    %v2766 = vadd.f32 0.0, %v2765
    %2767 = vmatmul.f32.gmra.mxu0 %v2300
    %v2768 = vpop.f32.mrf.mxu0
    %v2769 = vadd.f32 0.0, %v2768
    %2770 = vmatmul.f32.gmra.mxu0 %v2301
    %v2771 = vpop.f32.mrf.mxu0
    %v2772 = vadd.f32 0.0, %v2771
    %2773 = vdwg.mxu0
    %2774 = vmatpush.msra.mxu0 %v2714
    %2775 = vmatpush.msra.mxu0 %v2710
    %2776 = vmatpush.msra.mxu0 %v2706
    %2777 = vmatpush.msra.mxu0 %v2702
    %2778 = vmatpush.msra.mxu0 %v2698
    %2779 = vmatpush.msra.mxu0 %v2694
    %2780 = vmatpush.msra.mxu0 %v2690
    %2781 = vmatpush.msra.mxu0 %v2686
    %2782 = vmatpush.msra.mxu0 %v2682
    %2783 = vmatpush.msra.mxu0 %v2678
    %2784 = vmatpush.msra.mxu0 %v2674
    %2785 = vmatpush.msra.mxu0 %v2670
    %2786 = vmatpush.msra.mxu0 %v2666
    %2787 = vmatpush.msra.mxu0 %v2662
    %2788 = vmatpush.msra.mxu0 %v2658
    %2789 = vmatpush.msra.mxu0 %v2654
    %2790 = vmatmul.f32.gmra.mxu0 %v2298
    %v2791 = vpop.f32.mrf.mxu0
    %v2792 = vadd.f32 0.0, %v2791
    %2793 = vmatmul.f32.gmra.mxu0 %v2299
    %v2794 = vpop.f32.mrf.mxu0
    %v2795 = vadd.f32 0.0, %v2794
    %2796 = vmatmul.f32.gmra.mxu0 %v2300
    %v2797 = vpop.f32.mrf.mxu0
    %v2798 = vadd.f32 0.0, %v2797
    %2799 = vmatmul.f32.gmra.mxu0 %v2301
    %v2800 = vpop.f32.mrf.mxu0
    %v2801 = vadd.f32 0.0, %v2800
    %2802 = vdwg.mxu0
    %2803 = vmatpush.msra.mxu0 %v2715
    %2804 = vmatpush.msra.mxu0 %v2711
    %2805 = vmatpush.msra.mxu0 %v2707
    %2806 = vmatpush.msra.mxu0 %v2703
    %2807 = vmatpush.msra.mxu0 %v2699
    %2808 = vmatpush.msra.mxu0 %v2695
    %2809 = vmatpush.msra.mxu0 %v2691
    %2810 = vmatpush.msra.mxu0 %v2687
    %2811 = vmatpush.msra.mxu0 %v2683
    %2812 = vmatpush.msra.mxu0 %v2679
    %2813 = vmatpush.msra.mxu0 %v2675
    %2814 = vmatpush.msra.mxu0 %v2671
    %2815 = vmatpush.msra.mxu0 %v2667
    %2816 = vmatpush.msra.mxu0 %v2663
    %2817 = vmatpush.msra.mxu0 %v2659
    %2818 = vmatpush.msra.mxu0 %v2655
    %2819 = vmatmul.f32.gmra.mxu0 %v2298
    %v2820 = vpop.f32.mrf.mxu0
    %v2821 = vadd.f32 0.0, %v2820
    %2822 = vmatmul.f32.gmra.mxu0 %v2299
    %v2823 = vpop.f32.mrf.mxu0
    %v2824 = vadd.f32 0.0, %v2823
    %2825 = vmatmul.f32.gmra.mxu0 %v2300
    %v2826 = vpop.f32.mrf.mxu0
    %v2827 = vadd.f32 0.0, %v2826
    %2828 = vmatmul.f32.gmra.mxu0 %v2301
    %v2829 = vpop.f32.mrf.mxu0
    %v2830 = vadd.f32 0.0, %v2829
    %2831 = vdwg.mxu0
    %s2832 = scalar_lea.vmem %s6, 32
    %v2833 = vld [vmem:[%s2832] sm:$0xff]
    %v2834 = vld [vmem:[%s2832 + $0x8] sm:$0xff]
    %v2835 = vld [vmem:[%s2832 + $0x10] sm:$0xff]
    %v2836 = vld [vmem:[%s2832 + $0x18] sm:$0xff]
    %2837 = vst [vmem:[#allocation1] ss:$2 sm:$0xff] %v2302
    %s2838 = scalar_lea.vmem [#allocation1], 16
    %2839 = vst [vmem:[%s2838] ss:$2 sm:$0xff] %v2303
    %v2840 = vld.sshfl [vmem:[#allocation1] sm:$0xff pattern:$0x75316420]
    %v2841 = vld.sshfl [vmem:[#allocation1 + $0x8] sm:$0xff pattern:$0x75316420]
    %v2842 = vld.sshfl [vmem:[#allocation1 + $0x10] sm:$0xff pattern:$0x75316420]
    %v2843 = vld.sshfl [vmem:[#allocation1 + $0x18] sm:$0xff pattern:$0x75316420]
    %v2845 = vsel %vm2497, %v2833, 0
    %v2848 = vsel %vm2497, %v2834, 0
    %v2851 = vsel %vm2497, %v2835, 0
    %v2854 = vsel %vm2497, %v2836, 0
    %v2856 = vsel %vm2510, %v2840, 0
    %v2858 = vsel %vm2510, %v2841, 0
    %v2860 = vsel %vm2510, %v2842, 0
    %v2862 = vsel %vm2510, %v2843, 0
    %2864 = vmatpush.msra.mxu0 0.0
    %2865 = vmatpush.msra.mxu0 0.0
    %2866 = vmatpush.msra.mxu0 0.0
    %2867 = vmatpush.msra.mxu0 0.0
    %2868 = vmatpush.msra.mxu0 0.0
    %2869 = vmatpush.msra.mxu0 0.0
    %2870 = vmatpush.msra.mxu0 0.0
    %2871 = vmatpush.msra.mxu0 0.0
    %2872 = vmatpush.msra.mxu0 0.0
    %2873 = vmatpush.msra.mxu0 0.0
    %2874 = vmatpush.msra.mxu0 0.0
    %2875 = vmatpush.msra.mxu0 0.0
    %2876 = vmatpush.msra.mxu0 0.0
    %2877 = vmatpush.msra.mxu0 0.0
    %2878 = vmatpush.msra.mxu0 0.0
    %2879 = vmatpush.msra.mxu0 %v2856
    %2880 = vmatmul.f32.gmra.mxu0 %v2845
    %v2881 = vpop.f32.mrf.mxu0
    %v2882 = vadd.f32 0.0, %v2881
    %2883 = vmatmul.f32.gmra.mxu0 %v2848
    %v2884 = vpop.f32.mrf.mxu0
    %v2885 = vadd.f32 0.0, %v2884
    %2886 = vmatmul.f32.gmra.mxu0 %v2851
    %v2887 = vpop.f32.mrf.mxu0
    %v2888 = vadd.f32 0.0, %v2887
    %2889 = vmatmul.f32.gmra.mxu0 %v2854
    %v2890 = vpop.f32.mrf.mxu0
    %v2891 = vadd.f32 0.0, %v2890
    %2892 = vdwg.mxu0
    %2893 = vmatpush.msra.mxu0 0.0
    %2894 = vmatpush.msra.mxu0 0.0
    %2895 = vmatpush.msra.mxu0 0.0
    %2896 = vmatpush.msra.mxu0 0.0
    %2897 = vmatpush.msra.mxu0 0.0
    %2898 = vmatpush.msra.mxu0 0.0
    %2899 = vmatpush.msra.mxu0 0.0
    %2900 = vmatpush.msra.mxu0 0.0
    %2901 = vmatpush.msra.mxu0 0.0
    %2902 = vmatpush.msra.mxu0 0.0
    %2903 = vmatpush.msra.mxu0 0.0
    %2904 = vmatpush.msra.mxu0 0.0
    %2905 = vmatpush.msra.mxu0 0.0
    %2906 = vmatpush.msra.mxu0 0.0
    %2907 = vmatpush.msra.mxu0 0.0
    %2908 = vmatpush.msra.mxu0 %v2858
    %2909 = vmatmul.f32.gmra.mxu0 %v2845
    %v2910 = vpop.f32.mrf.mxu0
    %v2911 = vadd.f32 0.0, %v2910
    %2912 = vmatmul.f32.gmra.mxu0 %v2848
    %v2913 = vpop.f32.mrf.mxu0
    %v2914 = vadd.f32 0.0, %v2913
    %2915 = vmatmul.f32.gmra.mxu0 %v2851
    %v2916 = vpop.f32.mrf.mxu0
    %v2917 = vadd.f32 0.0, %v2916
    %2918 = vmatmul.f32.gmra.mxu0 %v2854
    %v2919 = vpop.f32.mrf.mxu0
    %v2920 = vadd.f32 0.0, %v2919
    %2921 = vdwg.mxu0
    %2922 = vmatpush.msra.mxu0 0.0
    %2923 = vmatpush.msra.mxu0 0.0
    %2924 = vmatpush.msra.mxu0 0.0
    %2925 = vmatpush.msra.mxu0 0.0
    %2926 = vmatpush.msra.mxu0 0.0
    %2927 = vmatpush.msra.mxu0 0.0
    %2928 = vmatpush.msra.mxu0 0.0
    %2929 = vmatpush.msra.mxu0 0.0
    %2930 = vmatpush.msra.mxu0 0.0
    %2931 = vmatpush.msra.mxu0 0.0
    %2932 = vmatpush.msra.mxu0 0.0
    %2933 = vmatpush.msra.mxu0 0.0
    %2934 = vmatpush.msra.mxu0 0.0
    %2935 = vmatpush.msra.mxu0 0.0
    %2936 = vmatpush.msra.mxu0 0.0
    %2937 = vmatpush.msra.mxu0 %v2860
    %2938 = vmatmul.f32.gmra.mxu0 %v2845
    %v2939 = vpop.f32.mrf.mxu0
    %v2940 = vadd.f32 0.0, %v2939
    %2941 = vmatmul.f32.gmra.mxu0 %v2848
    %v2942 = vpop.f32.mrf.mxu0
    %v2943 = vadd.f32 0.0, %v2942
    %2944 = vmatmul.f32.gmra.mxu0 %v2851
    %v2945 = vpop.f32.mrf.mxu0
    %v2946 = vadd.f32 0.0, %v2945
    %2947 = vmatmul.f32.gmra.mxu0 %v2854
    %v2948 = vpop.f32.mrf.mxu0
    %v2949 = vadd.f32 0.0, %v2948
    %2950 = vdwg.mxu0
    %2951 = vmatpush.msra.mxu0 0.0
    %2952 = vmatpush.msra.mxu0 0.0
    %2953 = vmatpush.msra.mxu0 0.0
    %2954 = vmatpush.msra.mxu0 0.0
    %2955 = vmatpush.msra.mxu0 0.0
    %2956 = vmatpush.msra.mxu0 0.0
    %2957 = vmatpush.msra.mxu0 0.0
    %2958 = vmatpush.msra.mxu0 0.0
    %2959 = vmatpush.msra.mxu0 0.0
    %2960 = vmatpush.msra.mxu0 0.0
    %2961 = vmatpush.msra.mxu0 0.0
    %2962 = vmatpush.msra.mxu0 0.0
    %2963 = vmatpush.msra.mxu0 0.0
    %2964 = vmatpush.msra.mxu0 0.0
    %2965 = vmatpush.msra.mxu0 0.0
    %2966 = vmatpush.msra.mxu0 %v2862
    %2967 = vmatmul.f32.gmra.mxu0 %v2845
    %v2968 = vpop.f32.mrf.mxu0
    %v2969 = vadd.f32 0.0, %v2968
    %2970 = vmatmul.f32.gmra.mxu0 %v2848
    %v2971 = vpop.f32.mrf.mxu0
    %v2972 = vadd.f32 0.0, %v2971
    %2973 = vmatmul.f32.gmra.mxu0 %v2851
    %v2974 = vpop.f32.mrf.mxu0
    %v2975 = vadd.f32 0.0, %v2974
    %2976 = vmatmul.f32.gmra.mxu0 %v2854
    %v2977 = vpop.f32.mrf.mxu0
    %v2978 = vadd.f32 0.0, %v2977
    %2979 = vdwg.mxu0
    %v2980 = vmul.f32 %v2734, %v2882
    %v2981 = vmul.f32 %v2763, %v2911
    %v2982 = vmul.f32 %v2792, %v2940
    %v2983 = vmul.f32 %v2821, %v2969
    %v2984 = vmul.f32 %v2737, %v2885
    %v2985 = vmul.f32 %v2766, %v2914
    %v2986 = vmul.f32 %v2795, %v2943
    %v2987 = vmul.f32 %v2824, %v2972
    %v2988 = vmul.f32 %v2740, %v2888
    %v2989 = vmul.f32 %v2769, %v2917
    %v2990 = vmul.f32 %v2798, %v2946
    %v2991 = vmul.f32 %v2827, %v2975
    %v2992 = vmul.f32 %v2743, %v2891
    %v2993 = vmul.f32 %v2772, %v2920
    %v2994 = vmul.f32 %v2801, %v2949
    %v2995 = vmul.f32 %v2830, %v2978
    %v2996 = vadd.f32 %v2635, %v2980
    %v2997 = vadd.f32 %v2636, %v2981
    %v2998 = vadd.f32 %v2637, %v2982
    %v2999 = vadd.f32 %v2638, %v2983
    %v3000 = vadd.f32 %v2639, %v2984
    %v3001 = vadd.f32 %v2640, %v2985
    %v3002 = vadd.f32 %v2641, %v2986
    %v3003 = vadd.f32 %v2642, %v2987
    %v3004 = vadd.f32 %v2643, %v2988
    %v3005 = vadd.f32 %v2644, %v2989
    %v3006 = vadd.f32 %v2645, %v2990
    %v3007 = vadd.f32 %v2646, %v2991
    %v3008 = vadd.f32 %v2647, %v2992
    %v3009 = vadd.f32 %v2648, %v2993
    %v3010 = vadd.f32 %v2649, %v2994
    %v3011 = vadd.f32 %v2650, %v2995
    %s3012 = scalar_lea.vmem %s8, 1024
    %v3013 = vld [vmem:[%s3012] sm:$0xff]
    %v3014 = vld [vmem:[%s3012 + $0x8] sm:$0xff]
    %v3015 = vld [vmem:[%s3012 + $0x10] sm:$0xff]
    %v3016 = vld [vmem:[%s3012 + $0x18] sm:$0xff]
    %v3017 = vld [vmem:[%s3012 + $0x20] sm:$0xff]
    %v3018 = vld [vmem:[%s3012 + $0x28] sm:$0xff]
    %v3019 = vld [vmem:[%s3012 + $0x30] sm:$0xff]
    %v3020 = vld [vmem:[%s3012 + $0x38] sm:$0xff]
    %v3021 = vld [vmem:[%s3012 + $0x40] sm:$0xff]
    %v3022 = vld [vmem:[%s3012 + $0x48] sm:$0xff]
    %v3023 = vld [vmem:[%s3012 + $0x50] sm:$0xff]
    %v3024 = vld [vmem:[%s3012 + $0x58] sm:$0xff]
    %v3025 = vld [vmem:[%s3012 + $0x60] sm:$0xff]
    %v3026 = vld [vmem:[%s3012 + $0x68] sm:$0xff]
    %v3027 = vld [vmem:[%s3012 + $0x70] sm:$0xff]
    %v3028 = vld [vmem:[%s3012 + $0x78] sm:$0xff]
    %v3029 = vld [vmem:[%s3012 + $0x80] sm:$0xff]
    %v3030 = vld [vmem:[%s3012 + $0x88] sm:$0xff]
    %v3031 = vld [vmem:[%s3012 + $0x90] sm:$0xff]
    %v3032 = vld [vmem:[%s3012 + $0x98] sm:$0xff]
    %v3033 = vld [vmem:[%s3012 + $0xa0] sm:$0xff]
    %v3034 = vld [vmem:[%s3012 + $0xa8] sm:$0xff]
    %v3035 = vld [vmem:[%s3012 + $0xb0] sm:$0xff]
    %v3036 = vld [vmem:[%s3012 + $0xb8] sm:$0xff]
    %v3037 = vld [vmem:[%s3012 + $0xc0] sm:$0xff]
    %v3038 = vld [vmem:[%s3012 + $0xc8] sm:$0xff]
    %v3039 = vld [vmem:[%s3012 + $0xd0] sm:$0xff]
    %v3040 = vld [vmem:[%s3012 + $0xd8] sm:$0xff]
    %v3041 = vld [vmem:[%s3012 + $0xe0] sm:$0xff]
    %v3042 = vld [vmem:[%s3012 + $0xe8] sm:$0xff]
    %v3043 = vld [vmem:[%s3012 + $0xf0] sm:$0xff]
    %v3044 = vld [vmem:[%s3012 + $0xf8] sm:$0xff]
    %v3045 = vld [vmem:[%s3012 + $0x100] sm:$0xff]
    %v3046 = vld [vmem:[%s3012 + $0x108] sm:$0xff]
    %v3047 = vld [vmem:[%s3012 + $0x110] sm:$0xff]
    %v3048 = vld [vmem:[%s3012 + $0x118] sm:$0xff]
    %v3049 = vld [vmem:[%s3012 + $0x120] sm:$0xff]
    %v3050 = vld [vmem:[%s3012 + $0x128] sm:$0xff]
    %v3051 = vld [vmem:[%s3012 + $0x130] sm:$0xff]
    %v3052 = vld [vmem:[%s3012 + $0x138] sm:$0xff]
    %v3053 = vld [vmem:[%s3012 + $0x140] sm:$0xff]
    %v3054 = vld [vmem:[%s3012 + $0x148] sm:$0xff]
    %v3055 = vld [vmem:[%s3012 + $0x150] sm:$0xff]
    %v3056 = vld [vmem:[%s3012 + $0x158] sm:$0xff]
    %v3057 = vld [vmem:[%s3012 + $0x160] sm:$0xff]
    %v3058 = vld [vmem:[%s3012 + $0x168] sm:$0xff]
    %v3059 = vld [vmem:[%s3012 + $0x170] sm:$0xff]
    %v3060 = vld [vmem:[%s3012 + $0x178] sm:$0xff]
    %v3061 = vld [vmem:[%s3012 + $0x180] sm:$0xff]
    %v3062 = vld [vmem:[%s3012 + $0x188] sm:$0xff]
    %v3063 = vld [vmem:[%s3012 + $0x190] sm:$0xff]
    %v3064 = vld [vmem:[%s3012 + $0x198] sm:$0xff]
    %v3065 = vld [vmem:[%s3012 + $0x1a0] sm:$0xff]
    %v3066 = vld [vmem:[%s3012 + $0x1a8] sm:$0xff]
    %v3067 = vld [vmem:[%s3012 + $0x1b0] sm:$0xff]
    %v3068 = vld [vmem:[%s3012 + $0x1b8] sm:$0xff]
    %v3069 = vld [vmem:[%s3012 + $0x1c0] sm:$0xff]
    %v3070 = vld [vmem:[%s3012 + $0x1c8] sm:$0xff]
    %v3071 = vld [vmem:[%s3012 + $0x1d0] sm:$0xff]
    %v3072 = vld [vmem:[%s3012 + $0x1d8] sm:$0xff]
    %v3073 = vld [vmem:[%s3012 + $0x1e0] sm:$0xff]
    %v3074 = vld [vmem:[%s3012 + $0x1e8] sm:$0xff]
    %v3075 = vld [vmem:[%s3012 + $0x1f0] sm:$0xff]
    %v3076 = vld [vmem:[%s3012 + $0x1f8] sm:$0xff]
    %3077 = vmatpush.msra.mxu0 %v3073
    %3078 = vmatpush.msra.mxu0 %v3069
    %3079 = vmatpush.msra.mxu0 %v3065
    %3080 = vmatpush.msra.mxu0 %v3061
    %3081 = vmatpush.msra.mxu0 %v3057
    %3082 = vmatpush.msra.mxu0 %v3053
    %3083 = vmatpush.msra.mxu0 %v3049
    %3084 = vmatpush.msra.mxu0 %v3045
    %3085 = vmatpush.msra.mxu0 %v3041
    %3086 = vmatpush.msra.mxu0 %v3037
    %3087 = vmatpush.msra.mxu0 %v3033
    %3088 = vmatpush.msra.mxu0 %v3029
    %3089 = vmatpush.msra.mxu0 %v3025
    %3090 = vmatpush.msra.mxu0 %v3021
    %3091 = vmatpush.msra.mxu0 %v3017
    %3092 = vmatpush.msra.mxu0 %v3013
    %3093 = vmatmul.f32.gmra.mxu0 %v2298
    %v3094 = vpop.f32.mrf.mxu0
    %v3095 = vadd.f32 0.0, %v3094
    %3096 = vmatmul.f32.gmra.mxu0 %v2299
    %v3097 = vpop.f32.mrf.mxu0
    %v3098 = vadd.f32 0.0, %v3097
    %3099 = vmatmul.f32.gmra.mxu0 %v2300
    %v3100 = vpop.f32.mrf.mxu0
    %v3101 = vadd.f32 0.0, %v3100
    %3102 = vmatmul.f32.gmra.mxu0 %v2301
    %v3103 = vpop.f32.mrf.mxu0
    %v3104 = vadd.f32 0.0, %v3103
    %3105 = vdwg.mxu0
    %3106 = vmatpush.msra.mxu0 %v3074
    %3107 = vmatpush.msra.mxu0 %v3070
    %3108 = vmatpush.msra.mxu0 %v3066
    %3109 = vmatpush.msra.mxu0 %v3062
    %3110 = vmatpush.msra.mxu0 %v3058
    %3111 = vmatpush.msra.mxu0 %v3054
    %3112 = vmatpush.msra.mxu0 %v3050
    %3113 = vmatpush.msra.mxu0 %v3046
    %3114 = vmatpush.msra.mxu0 %v3042
    %3115 = vmatpush.msra.mxu0 %v3038
    %3116 = vmatpush.msra.mxu0 %v3034
    %3117 = vmatpush.msra.mxu0 %v3030
    %3118 = vmatpush.msra.mxu0 %v3026
    %3119 = vmatpush.msra.mxu0 %v3022
    %3120 = vmatpush.msra.mxu0 %v3018
    %3121 = vmatpush.msra.mxu0 %v3014
    %3122 = vmatmul.f32.gmra.mxu0 %v2298
    %v3123 = vpop.f32.mrf.mxu0
    %v3124 = vadd.f32 0.0, %v3123
    %3125 = vmatmul.f32.gmra.mxu0 %v2299
    %v3126 = vpop.f32.mrf.mxu0
    %v3127 = vadd.f32 0.0, %v3126
    %3128 = vmatmul.f32.gmra.mxu0 %v2300
    %v3129 = vpop.f32.mrf.mxu0
    %v3130 = vadd.f32 0.0, %v3129
    %3131 = vmatmul.f32.gmra.mxu0 %v2301
    %v3132 = vpop.f32.mrf.mxu0
    %v3133 = vadd.f32 0.0, %v3132
    %3134 = vdwg.mxu0
    %3135 = vmatpush.msra.mxu0 %v3075
    %3136 = vmatpush.msra.mxu0 %v3071
    %3137 = vmatpush.msra.mxu0 %v3067
    %3138 = vmatpush.msra.mxu0 %v3063
    %3139 = vmatpush.msra.mxu0 %v3059
    %3140 = vmatpush.msra.mxu0 %v3055
    %3141 = vmatpush.msra.mxu0 %v3051
    %3142 = vmatpush.msra.mxu0 %v3047
    %3143 = vmatpush.msra.mxu0 %v3043
    %3144 = vmatpush.msra.mxu0 %v3039
    %3145 = vmatpush.msra.mxu0 %v3035
    %3146 = vmatpush.msra.mxu0 %v3031
    %3147 = vmatpush.msra.mxu0 %v3027
    %3148 = vmatpush.msra.mxu0 %v3023
    %3149 = vmatpush.msra.mxu0 %v3019
    %3150 = vmatpush.msra.mxu0 %v3015
    %3151 = vmatmul.f32.gmra.mxu0 %v2298
    %v3152 = vpop.f32.mrf.mxu0
    %v3153 = vadd.f32 0.0, %v3152
    %3154 = vmatmul.f32.gmra.mxu0 %v2299
    %v3155 = vpop.f32.mrf.mxu0
    %v3156 = vadd.f32 0.0, %v3155
    %3157 = vmatmul.f32.gmra.mxu0 %v2300
    %v3158 = vpop.f32.mrf.mxu0
    %v3159 = vadd.f32 0.0, %v3158
    %3160 = vmatmul.f32.gmra.mxu0 %v2301
    %v3161 = vpop.f32.mrf.mxu0
    %v3162 = vadd.f32 0.0, %v3161
    %3163 = vdwg.mxu0
    %3164 = vmatpush.msra.mxu0 %v3076
    %3165 = vmatpush.msra.mxu0 %v3072
    %3166 = vmatpush.msra.mxu0 %v3068
    %3167 = vmatpush.msra.mxu0 %v3064
    %3168 = vmatpush.msra.mxu0 %v3060
    %3169 = vmatpush.msra.mxu0 %v3056
    %3170 = vmatpush.msra.mxu0 %v3052
    %3171 = vmatpush.msra.mxu0 %v3048
    %3172 = vmatpush.msra.mxu0 %v3044
    %3173 = vmatpush.msra.mxu0 %v3040
    %3174 = vmatpush.msra.mxu0 %v3036
    %3175 = vmatpush.msra.mxu0 %v3032
    %3176 = vmatpush.msra.mxu0 %v3028
    %3177 = vmatpush.msra.mxu0 %v3024
    %3178 = vmatpush.msra.mxu0 %v3020
    %3179 = vmatpush.msra.mxu0 %v3016
    %3180 = vmatmul.f32.gmra.mxu0 %v2298
    %v3181 = vpop.f32.mrf.mxu0
    %v3182 = vadd.f32 0.0, %v3181
    %3183 = vmatmul.f32.gmra.mxu0 %v2299
    %v3184 = vpop.f32.mrf.mxu0
    %v3185 = vadd.f32 0.0, %v3184
    %3186 = vmatmul.f32.gmra.mxu0 %v2300
    %v3187 = vpop.f32.mrf.mxu0
    %v3188 = vadd.f32 0.0, %v3187
    %3189 = vmatmul.f32.gmra.mxu0 %v2301
    %v3190 = vpop.f32.mrf.mxu0
    %v3191 = vadd.f32 0.0, %v3190
    %3192 = vdwg.mxu0
    %s3193 = scalar_lea.vmem %s6, 64
    %v3194 = vld [vmem:[%s3193] sm:$0xff]
    %v3195 = vld [vmem:[%s3193 + $0x8] sm:$0xff]
    %v3196 = vld [vmem:[%s3193 + $0x10] sm:$0xff]
    %v3197 = vld [vmem:[%s3193 + $0x18] sm:$0xff]
    %3198 = vst [vmem:[#allocation1] ss:$2 sm:$0xff] %v2302
    %s3199 = scalar_lea.vmem [#allocation1], 16
    %3200 = vst [vmem:[%s3199] ss:$2 sm:$0xff] %v2303
    %v3201 = vld.sshfl [vmem:[#allocation1] sm:$0xff pattern:$0x75316420]
    %v3202 = vld.sshfl [vmem:[#allocation1 + $0x8] sm:$0xff pattern:$0x75316420]
    %v3203 = vld.sshfl [vmem:[#allocation1 + $0x10] sm:$0xff pattern:$0x75316420]
    %v3204 = vld.sshfl [vmem:[#allocation1 + $0x18] sm:$0xff pattern:$0x75316420]
    %v3206 = vsel %vm2497, %v3194, 0
    %v3209 = vsel %vm2497, %v3195, 0
    %v3212 = vsel %vm2497, %v3196, 0
    %v3215 = vsel %vm2497, %v3197, 0
    %v3217 = vsel %vm2510, %v3201, 0
    %v3219 = vsel %vm2510, %v3202, 0
    %v3221 = vsel %vm2510, %v3203, 0
    %v3223 = vsel %vm2510, %v3204, 0
    %3225 = vmatpush.msra.mxu0 0.0
    %3226 = vmatpush.msra.mxu0 0.0
    %3227 = vmatpush.msra.mxu0 0.0
    %3228 = vmatpush.msra.mxu0 0.0
    %3229 = vmatpush.msra.mxu0 0.0
    %3230 = vmatpush.msra.mxu0 0.0
    %3231 = vmatpush.msra.mxu0 0.0
    %3232 = vmatpush.msra.mxu0 0.0
    %3233 = vmatpush.msra.mxu0 0.0
    %3234 = vmatpush.msra.mxu0 0.0
    %3235 = vmatpush.msra.mxu0 0.0
    %3236 = vmatpush.msra.mxu0 0.0
    %3237 = vmatpush.msra.mxu0 0.0
    %3238 = vmatpush.msra.mxu0 0.0
    %3239 = vmatpush.msra.mxu0 0.0
    %3240 = vmatpush.msra.mxu0 %v3217
    %3241 = vmatmul.f32.gmra.mxu0 %v3206
    %v3242 = vpop.f32.mrf.mxu0
    %v3243 = vadd.f32 0.0, %v3242
    %3244 = vmatmul.f32.gmra.mxu0 %v3209
    %v3245 = vpop.f32.mrf.mxu0
    %v3246 = vadd.f32 0.0, %v3245
    %3247 = vmatmul.f32.gmra.mxu0 %v3212
    %v3248 = vpop.f32.mrf.mxu0
    %v3249 = vadd.f32 0.0, %v3248
    %3250 = vmatmul.f32.gmra.mxu0 %v3215
    %v3251 = vpop.f32.mrf.mxu0
    %v3252 = vadd.f32 0.0, %v3251
    %3253 = vdwg.mxu0
    %3254 = vmatpush.msra.mxu0 0.0
    %3255 = vmatpush.msra.mxu0 0.0
    %3256 = vmatpush.msra.mxu0 0.0
    %3257 = vmatpush.msra.mxu0 0.0
    %3258 = vmatpush.msra.mxu0 0.0
    %3259 = vmatpush.msra.mxu0 0.0
    %3260 = vmatpush.msra.mxu0 0.0
    %3261 = vmatpush.msra.mxu0 0.0
    %3262 = vmatpush.msra.mxu0 0.0
    %3263 = vmatpush.msra.mxu0 0.0
    %3264 = vmatpush.msra.mxu0 0.0
    %3265 = vmatpush.msra.mxu0 0.0
    %3266 = vmatpush.msra.mxu0 0.0
    %3267 = vmatpush.msra.mxu0 0.0
    %3268 = vmatpush.msra.mxu0 0.0
    %3269 = vmatpush.msra.mxu0 %v3219
    %3270 = vmatmul.f32.gmra.mxu0 %v3206
    %v3271 = vpop.f32.mrf.mxu0
    %v3272 = vadd.f32 0.0, %v3271
    %3273 = vmatmul.f32.gmra.mxu0 %v3209
    %v3274 = vpop.f32.mrf.mxu0
    %v3275 = vadd.f32 0.0, %v3274
    %3276 = vmatmul.f32.gmra.mxu0 %v3212
    %v3277 = vpop.f32.mrf.mxu0
    %v3278 = vadd.f32 0.0, %v3277
    %3279 = vmatmul.f32.gmra.mxu0 %v3215
    %v3280 = vpop.f32.mrf.mxu0
    %v3281 = vadd.f32 0.0, %v3280
    %3282 = vdwg.mxu0
    %3283 = vmatpush.msra.mxu0 0.0
    %3284 = vmatpush.msra.mxu0 0.0
    %3285 = vmatpush.msra.mxu0 0.0
    %3286 = vmatpush.msra.mxu0 0.0
    %3287 = vmatpush.msra.mxu0 0.0
    %3288 = vmatpush.msra.mxu0 0.0
    %3289 = vmatpush.msra.mxu0 0.0
    %3290 = vmatpush.msra.mxu0 0.0
    %3291 = vmatpush.msra.mxu0 0.0
    %3292 = vmatpush.msra.mxu0 0.0
    %3293 = vmatpush.msra.mxu0 0.0
    %3294 = vmatpush.msra.mxu0 0.0
    %3295 = vmatpush.msra.mxu0 0.0
    %3296 = vmatpush.msra.mxu0 0.0
    %3297 = vmatpush.msra.mxu0 0.0
    %3298 = vmatpush.msra.mxu0 %v3221
    %3299 = vmatmul.f32.gmra.mxu0 %v3206
    %v3300 = vpop.f32.mrf.mxu0
    %v3301 = vadd.f32 0.0, %v3300
    %3302 = vmatmul.f32.gmra.mxu0 %v3209
    %v3303 = vpop.f32.mrf.mxu0
    %v3304 = vadd.f32 0.0, %v3303
    %3305 = vmatmul.f32.gmra.mxu0 %v3212
    %v3306 = vpop.f32.mrf.mxu0
    %v3307 = vadd.f32 0.0, %v3306
    %3308 = vmatmul.f32.gmra.mxu0 %v3215
    %v3309 = vpop.f32.mrf.mxu0
    %v3310 = vadd.f32 0.0, %v3309
    %3311 = vdwg.mxu0
    %3312 = vmatpush.msra.mxu0 0.0
    %3313 = vmatpush.msra.mxu0 0.0
    %3314 = vmatpush.msra.mxu0 0.0
    %3315 = vmatpush.msra.mxu0 0.0
    %3316 = vmatpush.msra.mxu0 0.0
    %3317 = vmatpush.msra.mxu0 0.0
    %3318 = vmatpush.msra.mxu0 0.0
    %3319 = vmatpush.msra.mxu0 0.0
    %3320 = vmatpush.msra.mxu0 0.0
    %3321 = vmatpush.msra.mxu0 0.0
    %3322 = vmatpush.msra.mxu0 0.0
    %3323 = vmatpush.msra.mxu0 0.0
    %3324 = vmatpush.msra.mxu0 0.0
    %3325 = vmatpush.msra.mxu0 0.0
    %3326 = vmatpush.msra.mxu0 0.0
    %3327 = vmatpush.msra.mxu0 %v3223
    %3328 = vmatmul.f32.gmra.mxu0 %v3206
    %v3329 = vpop.f32.mrf.mxu0
    %v3330 = vadd.f32 0.0, %v3329
    %3331 = vmatmul.f32.gmra.mxu0 %v3209
    %v3332 = vpop.f32.mrf.mxu0
    %v3333 = vadd.f32 0.0, %v3332
    %3334 = vmatmul.f32.gmra.mxu0 %v3212
    %v3335 = vpop.f32.mrf.mxu0
    %v3336 = vadd.f32 0.0, %v3335
    %3337 = vmatmul.f32.gmra.mxu0 %v3215
    %v3338 = vpop.f32.mrf.mxu0
    %v3339 = vadd.f32 0.0, %v3338
    %3340 = vdwg.mxu0
    %v3341 = vmul.f32 %v3095, %v3243
    %v3342 = vmul.f32 %v3124, %v3272
    %v3343 = vmul.f32 %v3153, %v3301
    %v3344 = vmul.f32 %v3182, %v3330
    %v3345 = vmul.f32 %v3098, %v3246
    %v3346 = vmul.f32 %v3127, %v3275
    %v3347 = vmul.f32 %v3156, %v3304
    %v3348 = vmul.f32 %v3185, %v3333
    %v3349 = vmul.f32 %v3101, %v3249
    %v3350 = vmul.f32 %v3130, %v3278
    %v3351 = vmul.f32 %v3159, %v3307
    %v3352 = vmul.f32 %v3188, %v3336
    %v3353 = vmul.f32 %v3104, %v3252
    %v3354 = vmul.f32 %v3133, %v3281
    %v3355 = vmul.f32 %v3162, %v3310
    %v3356 = vmul.f32 %v3191, %v3339
    %v3357 = vadd.f32 %v2996, %v3341
    %v3358 = vadd.f32 %v2997, %v3342
    %v3359 = vadd.f32 %v2998, %v3343
    %v3360 = vadd.f32 %v2999, %v3344
    %v3361 = vadd.f32 %v3000, %v3345
    %v3362 = vadd.f32 %v3001, %v3346
    %v3363 = vadd.f32 %v3002, %v3347
    %v3364 = vadd.f32 %v3003, %v3348
    %v3365 = vadd.f32 %v3004, %v3349
    %v3366 = vadd.f32 %v3005, %v3350
    %v3367 = vadd.f32 %v3006, %v3351
    %v3368 = vadd.f32 %v3007, %v3352
    %v3369 = vadd.f32 %v3008, %v3353
    %v3370 = vadd.f32 %v3009, %v3354
    %v3371 = vadd.f32 %v3010, %v3355
    %v3372 = vadd.f32 %v3011, %v3356
    %s3373 = scalar_lea.vmem %s8, 1536
    %v3374 = vld [vmem:[%s3373] sm:$0xff]
    %v3375 = vld [vmem:[%s3373 + $0x8] sm:$0xff]
    %v3376 = vld [vmem:[%s3373 + $0x10] sm:$0xff]
    %v3377 = vld [vmem:[%s3373 + $0x18] sm:$0xff]
    %v3378 = vld [vmem:[%s3373 + $0x20] sm:$0xff]
    %v3379 = vld [vmem:[%s3373 + $0x28] sm:$0xff]
    %v3380 = vld [vmem:[%s3373 + $0x30] sm:$0xff]
    %v3381 = vld [vmem:[%s3373 + $0x38] sm:$0xff]
    %v3382 = vld [vmem:[%s3373 + $0x40] sm:$0xff]
    %v3383 = vld [vmem:[%s3373 + $0x48] sm:$0xff]
    %v3384 = vld [vmem:[%s3373 + $0x50] sm:$0xff]
    %v3385 = vld [vmem:[%s3373 + $0x58] sm:$0xff]
    %v3386 = vld [vmem:[%s3373 + $0x60] sm:$0xff]
    %v3387 = vld [vmem:[%s3373 + $0x68] sm:$0xff]
    %v3388 = vld [vmem:[%s3373 + $0x70] sm:$0xff]
    %v3389 = vld [vmem:[%s3373 + $0x78] sm:$0xff]
    %v3390 = vld [vmem:[%s3373 + $0x80] sm:$0xff]
    %v3391 = vld [vmem:[%s3373 + $0x88] sm:$0xff]
    %v3392 = vld [vmem:[%s3373 + $0x90] sm:$0xff]
    %v3393 = vld [vmem:[%s3373 + $0x98] sm:$0xff]
    %v3394 = vld [vmem:[%s3373 + $0xa0] sm:$0xff]
    %v3395 = vld [vmem:[%s3373 + $0xa8] sm:$0xff]
    %v3396 = vld [vmem:[%s3373 + $0xb0] sm:$0xff]
    %v3397 = vld [vmem:[%s3373 + $0xb8] sm:$0xff]
    %v3398 = vld [vmem:[%s3373 + $0xc0] sm:$0xff]
    %v3399 = vld [vmem:[%s3373 + $0xc8] sm:$0xff]
    %v3400 = vld [vmem:[%s3373 + $0xd0] sm:$0xff]
    %v3401 = vld [vmem:[%s3373 + $0xd8] sm:$0xff]
    %v3402 = vld [vmem:[%s3373 + $0xe0] sm:$0xff]
    %v3403 = vld [vmem:[%s3373 + $0xe8] sm:$0xff]
    %v3404 = vld [vmem:[%s3373 + $0xf0] sm:$0xff]
    %v3405 = vld [vmem:[%s3373 + $0xf8] sm:$0xff]
    %v3406 = vld [vmem:[%s3373 + $0x100] sm:$0xff]
    %v3407 = vld [vmem:[%s3373 + $0x108] sm:$0xff]
    %v3408 = vld [vmem:[%s3373 + $0x110] sm:$0xff]
    %v3409 = vld [vmem:[%s3373 + $0x118] sm:$0xff]
    %v3410 = vld [vmem:[%s3373 + $0x120] sm:$0xff]
    %v3411 = vld [vmem:[%s3373 + $0x128] sm:$0xff]
    %v3412 = vld [vmem:[%s3373 + $0x130] sm:$0xff]
    %v3413 = vld [vmem:[%s3373 + $0x138] sm:$0xff]
    %v3414 = vld [vmem:[%s3373 + $0x140] sm:$0xff]
    %v3415 = vld [vmem:[%s3373 + $0x148] sm:$0xff]
    %v3416 = vld [vmem:[%s3373 + $0x150] sm:$0xff]
    %v3417 = vld [vmem:[%s3373 + $0x158] sm:$0xff]
    %v3418 = vld [vmem:[%s3373 + $0x160] sm:$0xff]
    %v3419 = vld [vmem:[%s3373 + $0x168] sm:$0xff]
    %v3420 = vld [vmem:[%s3373 + $0x170] sm:$0xff]
    %v3421 = vld [vmem:[%s3373 + $0x178] sm:$0xff]
    %v3422 = vld [vmem:[%s3373 + $0x180] sm:$0xff]
    %v3423 = vld [vmem:[%s3373 + $0x188] sm:$0xff]
    %v3424 = vld [vmem:[%s3373 + $0x190] sm:$0xff]
    %v3425 = vld [vmem:[%s3373 + $0x198] sm:$0xff]
    %v3426 = vld [vmem:[%s3373 + $0x1a0] sm:$0xff]
    %v3427 = vld [vmem:[%s3373 + $0x1a8] sm:$0xff]
    %v3428 = vld [vmem:[%s3373 + $0x1b0] sm:$0xff]
    %v3429 = vld [vmem:[%s3373 + $0x1b8] sm:$0xff]
    %v3430 = vld [vmem:[%s3373 + $0x1c0] sm:$0xff]
    %v3431 = vld [vmem:[%s3373 + $0x1c8] sm:$0xff]
    %v3432 = vld [vmem:[%s3373 + $0x1d0] sm:$0xff]
    %v3433 = vld [vmem:[%s3373 + $0x1d8] sm:$0xff]
    %v3434 = vld [vmem:[%s3373 + $0x1e0] sm:$0xff]
    %v3435 = vld [vmem:[%s3373 + $0x1e8] sm:$0xff]
    %v3436 = vld [vmem:[%s3373 + $0x1f0] sm:$0xff]
    %v3437 = vld [vmem:[%s3373 + $0x1f8] sm:$0xff]
    %3438 = vmatpush.msra.mxu0 %v3434
    %3439 = vmatpush.msra.mxu0 %v3430
    %3440 = vmatpush.msra.mxu0 %v3426
    %3441 = vmatpush.msra.mxu0 %v3422
    %3442 = vmatpush.msra.mxu0 %v3418
    %3443 = vmatpush.msra.mxu0 %v3414
    %3444 = vmatpush.msra.mxu0 %v3410
    %3445 = vmatpush.msra.mxu0 %v3406
    %3446 = vmatpush.msra.mxu0 %v3402
    %3447 = vmatpush.msra.mxu0 %v3398
    %3448 = vmatpush.msra.mxu0 %v3394
    %3449 = vmatpush.msra.mxu0 %v3390
    %3450 = vmatpush.msra.mxu0 %v3386
    %3451 = vmatpush.msra.mxu0 %v3382
    %3452 = vmatpush.msra.mxu0 %v3378
    %3453 = vmatpush.msra.mxu0 %v3374
    %3454 = vmatmul.f32.gmra.mxu0 %v2298
    %v3455 = vpop.f32.mrf.mxu0
    %v3456 = vadd.f32 0.0, %v3455
    %3457 = vmatmul.f32.gmra.mxu0 %v2299
    %v3458 = vpop.f32.mrf.mxu0
    %v3459 = vadd.f32 0.0, %v3458
    %3460 = vmatmul.f32.gmra.mxu0 %v2300
    %v3461 = vpop.f32.mrf.mxu0
    %v3462 = vadd.f32 0.0, %v3461
    %3463 = vmatmul.f32.gmra.mxu0 %v2301
    %v3464 = vpop.f32.mrf.mxu0
    %v3465 = vadd.f32 0.0, %v3464
    %3466 = vdwg.mxu0
    %3467 = vmatpush.msra.mxu0 %v3435
    %3468 = vmatpush.msra.mxu0 %v3431
    %3469 = vmatpush.msra.mxu0 %v3427
    %3470 = vmatpush.msra.mxu0 %v3423
    %3471 = vmatpush.msra.mxu0 %v3419
    %3472 = vmatpush.msra.mxu0 %v3415
    %3473 = vmatpush.msra.mxu0 %v3411
    %3474 = vmatpush.msra.mxu0 %v3407
    %3475 = vmatpush.msra.mxu0 %v3403
    %3476 = vmatpush.msra.mxu0 %v3399
    %3477 = vmatpush.msra.mxu0 %v3395
    %3478 = vmatpush.msra.mxu0 %v3391
    %3479 = vmatpush.msra.mxu0 %v3387
    %3480 = vmatpush.msra.mxu0 %v3383
    %3481 = vmatpush.msra.mxu0 %v3379
    %3482 = vmatpush.msra.mxu0 %v3375
    %3483 = vmatmul.f32.gmra.mxu0 %v2298
    %v3484 = vpop.f32.mrf.mxu0
    %v3485 = vadd.f32 0.0, %v3484
    %3486 = vmatmul.f32.gmra.mxu0 %v2299
    %v3487 = vpop.f32.mrf.mxu0
    %v3488 = vadd.f32 0.0, %v3487
    %3489 = vmatmul.f32.gmra.mxu0 %v2300
    %v3490 = vpop.f32.mrf.mxu0
    %v3491 = vadd.f32 0.0, %v3490
    %3492 = vmatmul.f32.gmra.mxu0 %v2301
    %v3493 = vpop.f32.mrf.mxu0
    %v3494 = vadd.f32 0.0, %v3493
    %3495 = vdwg.mxu0
    %3496 = vmatpush.msra.mxu0 %v3436
    %3497 = vmatpush.msra.mxu0 %v3432
    %3498 = vmatpush.msra.mxu0 %v3428
    %3499 = vmatpush.msra.mxu0 %v3424
    %3500 = vmatpush.msra.mxu0 %v3420
    %3501 = vmatpush.msra.mxu0 %v3416
    %3502 = vmatpush.msra.mxu0 %v3412
    %3503 = vmatpush.msra.mxu0 %v3408
    %3504 = vmatpush.msra.mxu0 %v3404
    %3505 = vmatpush.msra.mxu0 %v3400
    %3506 = vmatpush.msra.mxu0 %v3396
    %3507 = vmatpush.msra.mxu0 %v3392
    %3508 = vmatpush.msra.mxu0 %v3388
    %3509 = vmatpush.msra.mxu0 %v3384
    %3510 = vmatpush.msra.mxu0 %v3380
    %3511 = vmatpush.msra.mxu0 %v3376
    %3512 = vmatmul.f32.gmra.mxu0 %v2298
    %v3513 = vpop.f32.mrf.mxu0
    %v3514 = vadd.f32 0.0, %v3513
    %3515 = vmatmul.f32.gmra.mxu0 %v2299
    %v3516 = vpop.f32.mrf.mxu0
    %v3517 = vadd.f32 0.0, %v3516
    %3518 = vmatmul.f32.gmra.mxu0 %v2300
    %v3519 = vpop.f32.mrf.mxu0
    %v3520 = vadd.f32 0.0, %v3519
    %3521 = vmatmul.f32.gmra.mxu0 %v2301
    %v3522 = vpop.f32.mrf.mxu0
    %v3523 = vadd.f32 0.0, %v3522
    %3524 = vdwg.mxu0
    %3525 = vmatpush.msra.mxu0 %v3437
    %3526 = vmatpush.msra.mxu0 %v3433
    %3527 = vmatpush.msra.mxu0 %v3429
    %3528 = vmatpush.msra.mxu0 %v3425
    %3529 = vmatpush.msra.mxu0 %v3421
    %3530 = vmatpush.msra.mxu0 %v3417
    %3531 = vmatpush.msra.mxu0 %v3413
    %3532 = vmatpush.msra.mxu0 %v3409
    %3533 = vmatpush.msra.mxu0 %v3405
    %3534 = vmatpush.msra.mxu0 %v3401
    %3535 = vmatpush.msra.mxu0 %v3397
    %3536 = vmatpush.msra.mxu0 %v3393
    %3537 = vmatpush.msra.mxu0 %v3389
    %3538 = vmatpush.msra.mxu0 %v3385
    %3539 = vmatpush.msra.mxu0 %v3381
    %3540 = vmatpush.msra.mxu0 %v3377
    %3541 = vmatmul.f32.gmra.mxu0 %v2298
    %v3542 = vpop.f32.mrf.mxu0
    %v3543 = vadd.f32 0.0, %v3542
    %3544 = vmatmul.f32.gmra.mxu0 %v2299
    %v3545 = vpop.f32.mrf.mxu0
    %v3546 = vadd.f32 0.0, %v3545
    %3547 = vmatmul.f32.gmra.mxu0 %v2300
    %v3548 = vpop.f32.mrf.mxu0
    %v3549 = vadd.f32 0.0, %v3548
    %3550 = vmatmul.f32.gmra.mxu0 %v2301
    %v3551 = vpop.f32.mrf.mxu0
    %v3552 = vadd.f32 0.0, %v3551
    %3553 = vdwg.mxu0
    %s3554 = scalar_lea.vmem %s6, 96
    %v3555 = vld [vmem:[%s3554] sm:$0xff]
    %v3556 = vld [vmem:[%s3554 + $0x8] sm:$0xff]
    %v3557 = vld [vmem:[%s3554 + $0x10] sm:$0xff]
    %v3558 = vld [vmem:[%s3554 + $0x18] sm:$0xff]
    %3559 = vst [vmem:[#allocation1] ss:$2 sm:$0xff] %v2302
    %s3560 = scalar_lea.vmem [#allocation1], 16
    %3561 = vst [vmem:[%s3560] ss:$2 sm:$0xff] %v2303
    %v3562 = vld.sshfl [vmem:[#allocation1] sm:$0xff pattern:$0x75316420]
    %v3563 = vld.sshfl [vmem:[#allocation1 + $0x8] sm:$0xff pattern:$0x75316420]
    %v3564 = vld.sshfl [vmem:[#allocation1 + $0x10] sm:$0xff pattern:$0x75316420]
    %v3565 = vld.sshfl [vmem:[#allocation1 + $0x18] sm:$0xff pattern:$0x75316420]
    %v3567 = vsel %vm2497, %v3555, 0
    %v3570 = vsel %vm2497, %v3556, 0
    %v3573 = vsel %vm2497, %v3557, 0
    %v3576 = vsel %vm2497, %v3558, 0
    %v3578 = vsel %vm2510, %v3562, 0
    %v3580 = vsel %vm2510, %v3563, 0
    %v3582 = vsel %vm2510, %v3564, 0
    %v3584 = vsel %vm2510, %v3565, 0
    %3586 = vmatpush.msra.mxu0 0.0
    %3587 = vmatpush.msra.mxu0 0.0
    %3588 = vmatpush.msra.mxu0 0.0
    %3589 = vmatpush.msra.mxu0 0.0
    %3590 = vmatpush.msra.mxu0 0.0
    %3591 = vmatpush.msra.mxu0 0.0
    %3592 = vmatpush.msra.mxu0 0.0
    %3593 = vmatpush.msra.mxu0 0.0
    %3594 = vmatpush.msra.mxu0 0.0
    %3595 = vmatpush.msra.mxu0 0.0
    %3596 = vmatpush.msra.mxu0 0.0
    %3597 = vmatpush.msra.mxu0 0.0
    %3598 = vmatpush.msra.mxu0 0.0
    %3599 = vmatpush.msra.mxu0 0.0
    %3600 = vmatpush.msra.mxu0 0.0
    %3601 = vmatpush.msra.mxu0 %v3578
    %3602 = vmatmul.f32.gmra.mxu0 %v3567
    %v3603 = vpop.f32.mrf.mxu0
    %v3604 = vadd.f32 0.0, %v3603
    %3605 = vmatmul.f32.gmra.mxu0 %v3570
    %v3606 = vpop.f32.mrf.mxu0
    %v3607 = vadd.f32 0.0, %v3606
    %3608 = vmatmul.f32.gmra.mxu0 %v3573
    %v3609 = vpop.f32.mrf.mxu0
    %v3610 = vadd.f32 0.0, %v3609
    %3611 = vmatmul.f32.gmra.mxu0 %v3576
    %v3612 = vpop.f32.mrf.mxu0
    %v3613 = vadd.f32 0.0, %v3612
    %3614 = vdwg.mxu0
    %3615 = vmatpush.msra.mxu0 0.0
    %3616 = vmatpush.msra.mxu0 0.0
    %3617 = vmatpush.msra.mxu0 0.0
    %3618 = vmatpush.msra.mxu0 0.0
    %3619 = vmatpush.msra.mxu0 0.0
    %3620 = vmatpush.msra.mxu0 0.0
    %3621 = vmatpush.msra.mxu0 0.0
    %3622 = vmatpush.msra.mxu0 0.0
    %3623 = vmatpush.msra.mxu0 0.0
    %3624 = vmatpush.msra.mxu0 0.0
    %3625 = vmatpush.msra.mxu0 0.0
    %3626 = vmatpush.msra.mxu0 0.0
    %3627 = vmatpush.msra.mxu0 0.0
    %3628 = vmatpush.msra.mxu0 0.0
    %3629 = vmatpush.msra.mxu0 0.0
    %3630 = vmatpush.msra.mxu0 %v3580
    %3631 = vmatmul.f32.gmra.mxu0 %v3567
    %v3632 = vpop.f32.mrf.mxu0
    %v3633 = vadd.f32 0.0, %v3632
    %3634 = vmatmul.f32.gmra.mxu0 %v3570
    %v3635 = vpop.f32.mrf.mxu0
    %v3636 = vadd.f32 0.0, %v3635
    %3637 = vmatmul.f32.gmra.mxu0 %v3573
    %v3638 = vpop.f32.mrf.mxu0
    %v3639 = vadd.f32 0.0, %v3638
    %3640 = vmatmul.f32.gmra.mxu0 %v3576
    %v3641 = vpop.f32.mrf.mxu0
    %v3642 = vadd.f32 0.0, %v3641
    %3643 = vdwg.mxu0
    %3644 = vmatpush.msra.mxu0 0.0
    %3645 = vmatpush.msra.mxu0 0.0
    %3646 = vmatpush.msra.mxu0 0.0
    %3647 = vmatpush.msra.mxu0 0.0
    %3648 = vmatpush.msra.mxu0 0.0
    %3649 = vmatpush.msra.mxu0 0.0
    %3650 = vmatpush.msra.mxu0 0.0
    %3651 = vmatpush.msra.mxu0 0.0
    %3652 = vmatpush.msra.mxu0 0.0
    %3653 = vmatpush.msra.mxu0 0.0
    %3654 = vmatpush.msra.mxu0 0.0
    %3655 = vmatpush.msra.mxu0 0.0
    %3656 = vmatpush.msra.mxu0 0.0
    %3657 = vmatpush.msra.mxu0 0.0
    %3658 = vmatpush.msra.mxu0 0.0
    %3659 = vmatpush.msra.mxu0 %v3582
    %3660 = vmatmul.f32.gmra.mxu0 %v3567
    %v3661 = vpop.f32.mrf.mxu0
    %v3662 = vadd.f32 0.0, %v3661
    %3663 = vmatmul.f32.gmra.mxu0 %v3570
    %v3664 = vpop.f32.mrf.mxu0
    %v3665 = vadd.f32 0.0, %v3664
    %3666 = vmatmul.f32.gmra.mxu0 %v3573
    %v3667 = vpop.f32.mrf.mxu0
    %v3668 = vadd.f32 0.0, %v3667
    %3669 = vmatmul.f32.gmra.mxu0 %v3576
    %v3670 = vpop.f32.mrf.mxu0
    %v3671 = vadd.f32 0.0, %v3670
    %3672 = vdwg.mxu0
    %3673 = vmatpush.msra.mxu0 0.0
    %3674 = vmatpush.msra.mxu0 0.0
    %3675 = vmatpush.msra.mxu0 0.0
    %3676 = vmatpush.msra.mxu0 0.0
    %3677 = vmatpush.msra.mxu0 0.0
    %3678 = vmatpush.msra.mxu0 0.0
    %3679 = vmatpush.msra.mxu0 0.0
    %3680 = vmatpush.msra.mxu0 0.0
    %3681 = vmatpush.msra.mxu0 0.0
    %3682 = vmatpush.msra.mxu0 0.0
    %3683 = vmatpush.msra.mxu0 0.0
    %3684 = vmatpush.msra.mxu0 0.0
    %3685 = vmatpush.msra.mxu0 0.0
    %3686 = vmatpush.msra.mxu0 0.0
    %3687 = vmatpush.msra.mxu0 0.0
    %3688 = vmatpush.msra.mxu0 %v3584
    %3689 = vmatmul.f32.gmra.mxu0 %v3567
    %v3690 = vpop.f32.mrf.mxu0
    %v3691 = vadd.f32 0.0, %v3690
    %3692 = vmatmul.f32.gmra.mxu0 %v3570
    %v3693 = vpop.f32.mrf.mxu0
    %v3694 = vadd.f32 0.0, %v3693
    %3695 = vmatmul.f32.gmra.mxu0 %v3573
    %v3696 = vpop.f32.mrf.mxu0
    %v3697 = vadd.f32 0.0, %v3696
    %3698 = vmatmul.f32.gmra.mxu0 %v3576
    %v3699 = vpop.f32.mrf.mxu0
    %v3700 = vadd.f32 0.0, %v3699
    %3701 = vdwg.mxu0
    %v3702 = vmul.f32 %v3456, %v3604
    %v3703 = vmul.f32 %v3485, %v3633
    %v3704 = vmul.f32 %v3514, %v3662
    %v3705 = vmul.f32 %v3543, %v3691
    %v3706 = vmul.f32 %v3459, %v3607
    %v3707 = vmul.f32 %v3488, %v3636
    %v3708 = vmul.f32 %v3517, %v3665
    %v3709 = vmul.f32 %v3546, %v3694
    %v3710 = vmul.f32 %v3462, %v3610
    %v3711 = vmul.f32 %v3491, %v3639
    %v3712 = vmul.f32 %v3520, %v3668
    %v3713 = vmul.f32 %v3549, %v3697
    %v3714 = vmul.f32 %v3465, %v3613
    %v3715 = vmul.f32 %v3494, %v3642
    %v3716 = vmul.f32 %v3523, %v3671
    %v3717 = vmul.f32 %v3552, %v3700
    %v3718 = vadd.f32 %v3357, %v3702
    %v3719 = vadd.f32 %v3358, %v3703
    %v3720 = vadd.f32 %v3359, %v3704
    %v3721 = vadd.f32 %v3360, %v3705
    %v3722 = vadd.f32 %v3361, %v3706
    %v3723 = vadd.f32 %v3362, %v3707
    %v3724 = vadd.f32 %v3363, %v3708
    %v3725 = vadd.f32 %v3364, %v3709
    %v3726 = vadd.f32 %v3365, %v3710
    %v3727 = vadd.f32 %v3366, %v3711
    %v3728 = vadd.f32 %v3367, %v3712
    %v3729 = vadd.f32 %v3368, %v3713
    %v3730 = vadd.f32 %v3369, %v3714
    %v3731 = vadd.f32 %v3370, %v3715
    %v3732 = vadd.f32 %v3371, %v3716
    %v3733 = vadd.f32 %v3372, %v3717
    %v3734 = vld [vmem:[%s9] sm:$0xff]
    %v3735 = vld [vmem:[%s9 + $0x8] sm:$0xff]
    %v3736 = vld [vmem:[%s9 + $0x10] sm:$0xff]
    %v3737 = vld [vmem:[%s9 + $0x18] sm:$0xff]
    %3739 = vset.pattern.permute.xlu0 0
    %3740 = vperm.xlu0 %3739, %v3734
    %v3741 = vpop.permute.xlu0 %3740
    %3744 = vset.pattern.permute.xlu0 0
    %3745 = vperm.xlu0 %3744, %v3735
    %v3746 = vpop.permute.xlu0 %3745
    %3749 = vset.pattern.permute.xlu0 0
    %3750 = vperm.xlu0 %3749, %v3736
    %v3751 = vpop.permute.xlu0 %3750
    %3754 = vset.pattern.permute.xlu0 0
    %3755 = vperm.xlu0 %3754, %v3737
    %v3756 = vpop.permute.xlu0 %3755
    %v3758 = vadd.f32 %v3718, %v3741
    %v3759 = vadd.f32 %v3719, %v3741
    %v3760 = vadd.f32 %v3720, %v3741
    %v3761 = vadd.f32 %v3721, %v3741
    %v3762 = vadd.f32 %v3722, %v3746
    %v3763 = vadd.f32 %v3723, %v3746
    %v3764 = vadd.f32 %v3724, %v3746
    %v3765 = vadd.f32 %v3725, %v3746
    %v3766 = vadd.f32 %v3726, %v3751
    %v3767 = vadd.f32 %v3727, %v3751
    %v3768 = vadd.f32 %v3728, %v3751
    %v3769 = vadd.f32 %v3729, %v3751
    %v3770 = vadd.f32 %v3730, %v3756
    %v3771 = vadd.f32 %v3731, %v3756
    %v3772 = vadd.f32 %v3732, %v3756
    %v3773 = vadd.f32 %v3733, %v3756
    %3774 = vst [vmem:[#allocation6] sm:$0xff] 0.0
    %3775 = vst [vmem:[#allocation6 + $0x8] sm:$0xff] 0.0
    %3776 = vst [vmem:[#allocation6 + $0x10] sm:$0xff] 0.0
    %3777 = vst [vmem:[#allocation6 + $0x18] sm:$0xff] 0.0
    %3778 = vst [vmem:[#allocation6 + $0x20] sm:$0xff] 0.0
    %3779 = vst [vmem:[#allocation6 + $0x28] sm:$0xff] 0.0
    %3780 = vst [vmem:[#allocation6 + $0x30] sm:$0xff] 0.0
    %3781 = vst [vmem:[#allocation6 + $0x38] sm:$0xff] 0.0
    %3782 = vst [vmem:[#allocation6 + $0x40] sm:$0xff] 0.0
    %3783 = vst [vmem:[#allocation6 + $0x48] sm:$0xff] 0.0
    %3784 = vst [vmem:[#allocation6 + $0x50] sm:$0xff] 0.0
    %3785 = vst [vmem:[#allocation6 + $0x58] sm:$0xff] 0.0
    %3786 = vst [vmem:[#allocation6 + $0x60] sm:$0xff] 0.0
    %3787 = vst [vmem:[#allocation6 + $0x68] sm:$0xff] 0.0
    %3788 = vst [vmem:[#allocation6 + $0x70] sm:$0xff] 0.0
    %3789 = vst [vmem:[#allocation6 + $0x78] sm:$0xff] 0.0
    %3790 = vst [vmem:[#allocation6 + $0x80] sm:$0xff] 0.0
    %3791 = vst [vmem:[#allocation6 + $0x88] sm:$0xff] 0.0
    %3792 = vst [vmem:[#allocation6 + $0x90] sm:$0xff] 0.0
    %3793 = vst [vmem:[#allocation6 + $0x98] sm:$0xff] 0.0
    %3794 = vst [vmem:[#allocation6 + $0xa0] sm:$0xff] 0.0
    %3795 = vst [vmem:[#allocation6 + $0xa8] sm:$0xff] 0.0
    %3796 = vst [vmem:[#allocation6 + $0xb0] sm:$0xff] 0.0
    %3797 = vst [vmem:[#allocation6 + $0xb8] sm:$0xff] 0.0
    %3798 = vst [vmem:[#allocation6 + $0x8] sm:$0xff] %v3758
    %3799 = vst [vmem:[#allocation6 + $0x10] sm:$0xff] %v3759
    %3800 = vst [vmem:[#allocation6 + $0x18] sm:$0xff] %v3760
    %3801 = vst [vmem:[#allocation6 + $0x20] sm:$0xff] %v3761
    %3802 = vst [vmem:[#allocation6 + $0x38] sm:$0xff] %v3762
    %3803 = vst [vmem:[#allocation6 + $0x40] sm:$0xff] %v3763
    %3804 = vst [vmem:[#allocation6 + $0x48] sm:$0xff] %v3764
    %3805 = vst [vmem:[#allocation6 + $0x50] sm:$0xff] %v3765
    %3806 = vst [vmem:[#allocation6 + $0x68] sm:$0xff] %v3766
    %3807 = vst [vmem:[#allocation6 + $0x70] sm:$0xff] %v3767
    %3808 = vst [vmem:[#allocation6 + $0x78] sm:$0xff] %v3768
    %3809 = vst [vmem:[#allocation6 + $0x80] sm:$0xff] %v3769
    %3810 = vst [vmem:[#allocation6 + $0x98] sm:$0xff] %v3770
    %3811 = vst [vmem:[#allocation6 + $0xa0] sm:$0xff] %v3771
    %3812 = vst [vmem:[#allocation6 + $0xa8] sm:$0xff] %v3772
    %3813 = vst [vmem:[#allocation6 + $0xb0] sm:$0xff] %v3773
    %v3814 = vld [vmem:[%s10] sm:$0xff]
    %v3815 = vld [vmem:[%s10 + $0x8] sm:$0xff]
    %v3816 = vld [vmem:[%s10 + $0x10] sm:$0xff]
    %v3817 = vld [vmem:[%s10 + $0x18] sm:$0xff]
    %v3818 = vld [vmem:[%s10 + $0x20] sm:$0xff]
    %v3819 = vld [vmem:[%s10 + $0x28] sm:$0xff]
    %v3820 = vld [vmem:[%s10 + $0x30] sm:$0xff]
    %v3821 = vld [vmem:[%s10 + $0x38] sm:$0xff]
    %v3822 = vld [vmem:[%s10 + $0x40] sm:$0xff]
    %v3823 = vld [vmem:[%s10 + $0x48] sm:$0xff]
    %v3824 = vld [vmem:[%s10 + $0x50] sm:$0xff]
    %v3825 = vld [vmem:[%s10 + $0x58] sm:$0xff]
    %v3826 = vld [vmem:[%s10 + $0x60] sm:$0xff]
    %v3827 = vld [vmem:[%s10 + $0x68] sm:$0xff]
    %v3828 = vld [vmem:[%s10 + $0x70] sm:$0xff]
    %v3829 = vld [vmem:[%s10 + $0x78] sm:$0xff]
    %3830 = vmatpush.msra.mxu0 %v3829
    %3831 = vmatpush.msra.mxu0 %v3828
    %3832 = vmatpush.msra.mxu0 %v3827
    %3833 = vmatpush.msra.mxu0 %v3826
    %3834 = vmatpush.msra.mxu0 %v3825
    %3835 = vmatpush.msra.mxu0 %v3824
    %3836 = vmatpush.msra.mxu0 %v3823
    %3837 = vmatpush.msra.mxu0 %v3822
    %3838 = vmatpush.msra.mxu0 %v3821
    %3839 = vmatpush.msra.mxu0 %v3820
    %3840 = vmatpush.msra.mxu0 %v3819
    %3841 = vmatpush.msra.mxu0 %v3818
    %3842 = vmatpush.msra.mxu0 %v3817
    %3843 = vmatpush.msra.mxu0 %v3816
    %3844 = vmatpush.msra.mxu0 %v3815
    %3845 = vmatpush.msra.mxu0 %v3814
    %3846 = vmatmul.f32.gmra.mxu0 %v2298
    %v3847 = vpop.f32.mrf.mxu0
    %v3848 = vadd.f32 0.0, %v3847
    %3849 = vmatmul.f32.gmra.mxu0 %v2299
    %v3850 = vpop.f32.mrf.mxu0
    %v3851 = vadd.f32 0.0, %v3850
    %3852 = vmatmul.f32.gmra.mxu0 %v2300
    %v3853 = vpop.f32.mrf.mxu0
    %v3854 = vadd.f32 0.0, %v3853
    %3855 = vmatmul.f32.gmra.mxu0 %v2301
    %v3856 = vpop.f32.mrf.mxu0
    %v3857 = vadd.f32 0.0, %v3856
    %3858 = vdwg.mxu0
    %3859 = vst [vmem:[#allocation4] sm:$0xff] 0.0
    %3860 = vst [vmem:[#allocation4 + $0x8] sm:$0xff] 0.0
    %vm3861 = vcmask 261120
    %3862 = vst.msk [vmem:[#allocation4 + $0x10] sm:$0xff] %vm3861, 0.0
    %3863 = vst [vmem:[#allocation4 + $0x18] sm:$0xff] 0.0
    %3864 = vst [vmem:[#allocation4 + $0x20] sm:$0xff] 0.0
    %3865 = vst.msk [vmem:[#allocation4 + $0x28] sm:$0xff] %vm3861, 0.0
    %3866 = vst [vmem:[#allocation4 + $0x30] sm:$0xff] 0.0
    %3867 = vst [vmem:[#allocation4 + $0x38] sm:$0xff] 0.0
    %3868 = vst.msk [vmem:[#allocation4 + $0x40] sm:$0xff] %vm3861, 0.0
    %3869 = vst [vmem:[#allocation4 + $0x48] sm:$0xff] 0.0
    %3870 = vst [vmem:[#allocation4 + $0x50] sm:$0xff] 0.0
    %3871 = vst.msk [vmem:[#allocation4 + $0x58] sm:$0xff] %vm3861, 0.0
    %3872 = vst.msk [vmem:[#allocation4 + $0x8] sm:$0xff] %vm3861, %v3848
    %3873 = vst.msk [vmem:[#allocation4 + $0x20] sm:$0xff] %vm3861, %v3851
    %3874 = vst.msk [vmem:[#allocation4 + $0x38] sm:$0xff] %vm3861, %v3854
    %3875 = vst.msk [vmem:[#allocation4 + $0x50] sm:$0xff] %vm3861, %v3857
    %v3876 = vld [vmem:[#allocation4] sm:$0xff]
    %v3877 = vld [vmem:[#allocation4 + $0x8] sm:$0xff]
    %v3878 = vld [vmem:[#allocation4 + $0x18] sm:$0xff]
    %v3879 = vld [vmem:[#allocation4 + $0x20] sm:$0xff]
    %v3880 = vld [vmem:[#allocation4 + $0x30] sm:$0xff]
    %v3881 = vld [vmem:[#allocation4 + $0x38] sm:$0xff]
    %v3882 = vld [vmem:[#allocation4 + $0x48] sm:$0xff]
    %v3883 = vld [vmem:[#allocation4 + $0x50] sm:$0xff]
    %v3884 = vld [vmem:[#allocation12] sm:$0x1]
    %v3885 = vld [vmem:[%s11] sm:$0xff]
    %v3886 = vld [vmem:[%s11 + $0x8] sm:$0xff]
    %v3887 = vld [vmem:[%s11 + $0x10] sm:$0xff]
    %v3888 = vld [vmem:[%s11 + $0x18] sm:$0xff]
    %v3889 = vld [vmem:[%s11 + $0x20] sm:$0xff]
    %v3890 = vld [vmem:[%s11 + $0x28] sm:$0xff]
    %v3891 = vld [vmem:[%s11 + $0x30] sm:$0xff]
    %v3892 = vld [vmem:[%s11 + $0x38] sm:$0xff]
    %v3893 = vperm.slane %v3884, 0
    %3902 = vrot.lane.b32.xlu0 %v3876, 5
    %v3903 = vpop.permute.xlu0 %3902
    %3904 = vrot.lane.b32.xlu0 %v3877, 5
    %v3905 = vpop.permute.xlu0 %3904
    %3906 = vrot.lane.b32.xlu0 %v3878, 5
    %v3907 = vpop.permute.xlu0 %3906
    %3908 = vrot.lane.b32.xlu0 %v3879, 5
    %v3909 = vpop.permute.xlu0 %3908
    %3910 = vrot.lane.b32.xlu0 %v3880, 5
    %v3911 = vpop.permute.xlu0 %3910
    %3912 = vrot.lane.b32.xlu0 %v3881, 5
    %v3913 = vpop.permute.xlu0 %3912
    %3914 = vrot.lane.b32.xlu0 %v3882, 5
    %v3915 = vpop.permute.xlu0 %3914
    %3916 = vrot.lane.b32.xlu0 %v3883, 5
    %v3917 = vpop.permute.xlu0 %3916
    %vm3918 = vcmask 39936
    %v3919 = vsel %vm3918, %v3903, %v3905
    %v3920 = vsel %vm3918, %v3907, %v3909
    %v3921 = vsel %vm3918, %v3911, %v3913
    %v3922 = vsel %vm3918, %v3915, %v3917
    %v3927 = vmul.f32 %v3893, %v3919
    %v3928 = vmul.f32 %v3893, %v3920
    %v3929 = vmul.f32 %v3893, %v3921
    %v3930 = vmul.f32 %v3893, %v3922
    %v3931 = vld [vmem:[#allocation12 + $0x1] sm:$0x1]
    %s3932 = scalar_lea.vmem %s11, 64
    %v3933 = vld [vmem:[%s3932] sm:$0xff]
    %v3934 = vld [vmem:[%s3932 + $0x8] sm:$0xff]
    %v3935 = vld [vmem:[%s3932 + $0x10] sm:$0xff]
    %v3936 = vld [vmem:[%s3932 + $0x18] sm:$0xff]
    %v3937 = vld [vmem:[%s3932 + $0x20] sm:$0xff]
    %v3938 = vld [vmem:[%s3932 + $0x28] sm:$0xff]
    %v3939 = vld [vmem:[%s3932 + $0x30] sm:$0xff]
    %v3940 = vld [vmem:[%s3932 + $0x38] sm:$0xff]
    %v3941 = vperm.slane %v3931, 0
    %3942 = vrot.lane.b32.xlu0 %v3876, 4
    %v3943 = vpop.permute.xlu0 %3942
    %3944 = vrot.lane.b32.xlu0 %v3877, 4
    %v3945 = vpop.permute.xlu0 %3944
    %3946 = vrot.lane.b32.xlu0 %v3878, 4
    %v3947 = vpop.permute.xlu0 %3946
    %3948 = vrot.lane.b32.xlu0 %v3879, 4
    %v3949 = vpop.permute.xlu0 %3948
    %3950 = vrot.lane.b32.xlu0 %v3880, 4
    %v3951 = vpop.permute.xlu0 %3950
    %3952 = vrot.lane.b32.xlu0 %v3881, 4
    %v3953 = vpop.permute.xlu0 %3952
    %3954 = vrot.lane.b32.xlu0 %v3882, 4
    %v3955 = vpop.permute.xlu0 %3954
    %3956 = vrot.lane.b32.xlu0 %v3883, 4
    %v3957 = vpop.permute.xlu0 %3956
    %v3958 = vsel %vm2497, %v3943, %v3945
    %v3959 = vsel %vm2497, %v3947, %v3949
    %v3960 = vsel %vm2497, %v3951, %v3953
    %v3961 = vsel %vm2497, %v3955, %v3957
    %v3966 = vmul.f32 %v3941, %v3958
    %v3967 = vmul.f32 %v3941, %v3959
    %v3968 = vmul.f32 %v3941, %v3960
    %v3969 = vmul.f32 %v3941, %v3961
    %v3971 = vsel %vm3861, %v3933, 0
    %v3974 = vsel %vm3861, %v3934, 0
    %v3977 = vsel %vm3861, %v3935, 0
    %v3980 = vsel %vm3861, %v3936, 0
    %v3983 = vsel %vm3861, %v3937, 0
    %v3986 = vsel %vm3861, %v3938, 0
    %v3989 = vsel %vm3861, %v3939, 0
    %v3992 = vsel %vm3861, %v3940, 0
    %3994 = vmatpush.msra.mxu0 0.0
    %3995 = vmatpush.msra.mxu0 0.0
    %3996 = vmatpush.msra.mxu0 0.0
    %3997 = vmatpush.msra.mxu0 0.0
    %3998 = vmatpush.msra.mxu0 0.0
    %3999 = vmatpush.msra.mxu0 0.0
    %4000 = vmatpush.msra.mxu0 0.0
    %4001 = vmatpush.msra.mxu0 0.0
    %4002 = vmatpush.msra.mxu0 0.0
    %4003 = vmatpush.msra.mxu0 0.0
    %4004 = vmatpush.msra.mxu0 0.0
    %4005 = vmatpush.msra.mxu0 0.0
    %4006 = vmatpush.msra.mxu0 %v3969
    %4007 = vmatpush.msra.mxu0 %v3968
    %4008 = vmatpush.msra.mxu0 %v3967
    %4009 = vmatpush.msra.mxu0 %v3966
    %4010 = vmatmul.f32.gmra.mxu0 %v3971
    %v4011 = vpop.f32.mrf.mxu0
    %v4012 = vadd.f32 0.0, %v4011
    %4013 = vmatmul.f32.gmra.mxu0 %v3974
    %v4014 = vpop.f32.mrf.mxu0
    %v4015 = vadd.f32 0.0, %v4014
    %4016 = vmatmul.f32.gmra.mxu0 %v3977
    %v4017 = vpop.f32.mrf.mxu0
    %v4018 = vadd.f32 0.0, %v4017
    %4019 = vmatmul.f32.gmra.mxu0 %v3980
    %v4020 = vpop.f32.mrf.mxu0
    %v4021 = vadd.f32 0.0, %v4020
    %4022 = vmatmul.f32.gmra.mxu0 %v3983
    %v4023 = vpop.f32.mrf.mxu0
    %v4024 = vadd.f32 0.0, %v4023
    %4025 = vmatmul.f32.gmra.mxu0 %v3986
    %v4026 = vpop.f32.mrf.mxu0
    %v4027 = vadd.f32 0.0, %v4026
    %4028 = vmatmul.f32.gmra.mxu0 %v3989
    %v4029 = vpop.f32.mrf.mxu0
    %v4030 = vadd.f32 0.0, %v4029
    %4031 = vmatmul.f32.gmra.mxu0 %v3992
    %v4032 = vpop.f32.mrf.mxu0
    %v4033 = vadd.f32 0.0, %v4032
    %4034 = vdwg.mxu0
    %v4036 = vsel %vm3861, %v3885, 0
    %v4039 = vsel %vm3861, %v3886, 0
    %v4042 = vsel %vm3861, %v3887, 0
    %v4045 = vsel %vm3861, %v3888, 0
    %v4048 = vsel %vm3861, %v3889, 0
    %v4051 = vsel %vm3861, %v3890, 0
    %v4054 = vsel %vm3861, %v3891, 0
    %v4057 = vsel %vm3861, %v3892, 0
    %4059 = vmatpush.msra.mxu0 0.0
    %4060 = vmatpush.msra.mxu0 0.0
    %4061 = vmatpush.msra.mxu0 0.0
    %4062 = vmatpush.msra.mxu0 0.0
    %4063 = vmatpush.msra.mxu0 0.0
    %4064 = vmatpush.msra.mxu0 0.0
    %4065 = vmatpush.msra.mxu0 0.0
    %4066 = vmatpush.msra.mxu0 0.0
    %4067 = vmatpush.msra.mxu0 0.0
    %4068 = vmatpush.msra.mxu0 0.0
    %4069 = vmatpush.msra.mxu0 0.0
    %4070 = vmatpush.msra.mxu0 0.0
    %4071 = vmatpush.msra.mxu0 %v3930
    %4072 = vmatpush.msra.mxu0 %v3929
    %4073 = vmatpush.msra.mxu0 %v3928
    %4074 = vmatpush.msra.mxu0 %v3927
    %4075 = vmatmul.f32.gmra.mxu0 %v4036
    %v4076 = vpop.f32.mrf.mxu0
    %v4077 = vadd.f32 %v4012, %v4076
    %4078 = vmatmul.f32.gmra.mxu0 %v4039
    %v4079 = vpop.f32.mrf.mxu0
    %v4080 = vadd.f32 %v4015, %v4079
    %4081 = vmatmul.f32.gmra.mxu0 %v4042
    %v4082 = vpop.f32.mrf.mxu0
    %v4083 = vadd.f32 %v4018, %v4082
    %4084 = vmatmul.f32.gmra.mxu0 %v4045
    %v4085 = vpop.f32.mrf.mxu0
    %v4086 = vadd.f32 %v4021, %v4085
    %4087 = vmatmul.f32.gmra.mxu0 %v4048
    %v4088 = vpop.f32.mrf.mxu0
    %v4089 = vadd.f32 %v4024, %v4088
    %4090 = vmatmul.f32.gmra.mxu0 %v4051
    %v4091 = vpop.f32.mrf.mxu0
    %v4092 = vadd.f32 %v4027, %v4091
    %4093 = vmatmul.f32.gmra.mxu0 %v4054
    %v4094 = vpop.f32.mrf.mxu0
    %v4095 = vadd.f32 %v4030, %v4094
    %4096 = vmatmul.f32.gmra.mxu0 %v4057
    %v4097 = vpop.f32.mrf.mxu0
    %v4098 = vadd.f32 %v4033, %v4097
    %4099 = vdwg.mxu0
    %v4100 = vld [vmem:[#allocation12 + $0x2] sm:$0x1]
    %s4101 = scalar_lea.vmem %s11, 128
    %v4102 = vld [vmem:[%s4101] sm:$0xff]
    %v4103 = vld [vmem:[%s4101 + $0x8] sm:$0xff]
    %v4104 = vld [vmem:[%s4101 + $0x10] sm:$0xff]
    %v4105 = vld [vmem:[%s4101 + $0x18] sm:$0xff]
    %v4106 = vld [vmem:[%s4101 + $0x20] sm:$0xff]
    %v4107 = vld [vmem:[%s4101 + $0x28] sm:$0xff]
    %v4108 = vld [vmem:[%s4101 + $0x30] sm:$0xff]
    %v4109 = vld [vmem:[%s4101 + $0x38] sm:$0xff]
    %v4110 = vperm.slane %v4100, 0
    %4111 = vrot.lane.b32.xlu0 %v3876, 3
    %v4112 = vpop.permute.xlu0 %4111
    %4113 = vrot.lane.b32.xlu0 %v3877, 3
    %v4114 = vpop.permute.xlu0 %4113
    %4115 = vrot.lane.b32.xlu0 %v3878, 3
    %v4116 = vpop.permute.xlu0 %4115
    %4117 = vrot.lane.b32.xlu0 %v3879, 3
    %v4118 = vpop.permute.xlu0 %4117
    %4119 = vrot.lane.b32.xlu0 %v3880, 3
    %v4120 = vpop.permute.xlu0 %4119
    %4121 = vrot.lane.b32.xlu0 %v3881, 3
    %v4122 = vpop.permute.xlu0 %4121
    %4123 = vrot.lane.b32.xlu0 %v3882, 3
    %v4124 = vpop.permute.xlu0 %4123
    %4125 = vrot.lane.b32.xlu0 %v3883, 3
    %v4126 = vpop.permute.xlu0 %4125
    %v4127 = vsel %vm464, %v4112, %v4114
    %v4128 = vsel %vm464, %v4116, %v4118
    %v4129 = vsel %vm464, %v4120, %v4122
    %v4130 = vsel %vm464, %v4124, %v4126
    %v4135 = vmul.f32 %v4110, %v4127
    %v4136 = vmul.f32 %v4110, %v4128
    %v4137 = vmul.f32 %v4110, %v4129
    %v4138 = vmul.f32 %v4110, %v4130
    %v4140 = vsel %vm3861, %v4102, 0
    %v4143 = vsel %vm3861, %v4103, 0
    %v4146 = vsel %vm3861, %v4104, 0
    %v4149 = vsel %vm3861, %v4105, 0
    %v4152 = vsel %vm3861, %v4106, 0
    %v4155 = vsel %vm3861, %v4107, 0
    %v4158 = vsel %vm3861, %v4108, 0
    %v4161 = vsel %vm3861, %v4109, 0
    %4163 = vmatpush.msra.mxu0 0.0
    %4164 = vmatpush.msra.mxu0 0.0
    %4165 = vmatpush.msra.mxu0 0.0
    %4166 = vmatpush.msra.mxu0 0.0
    %4167 = vmatpush.msra.mxu0 0.0
    %4168 = vmatpush.msra.mxu0 0.0
    %4169 = vmatpush.msra.mxu0 0.0
    %4170 = vmatpush.msra.mxu0 0.0
    %4171 = vmatpush.msra.mxu0 0.0
    %4172 = vmatpush.msra.mxu0 0.0
    %4173 = vmatpush.msra.mxu0 0.0
    %4174 = vmatpush.msra.mxu0 0.0
    %4175 = vmatpush.msra.mxu0 %v4138
    %4176 = vmatpush.msra.mxu0 %v4137
    %4177 = vmatpush.msra.mxu0 %v4136
    %4178 = vmatpush.msra.mxu0 %v4135
    %4179 = vmatmul.f32.gmra.mxu0 %v4140
    %v4180 = vpop.f32.mrf.mxu0
    %v4181 = vadd.f32 0.0, %v4180
    %4182 = vmatmul.f32.gmra.mxu0 %v4143
    %v4183 = vpop.f32.mrf.mxu0
    %v4184 = vadd.f32 0.0, %v4183
    %4185 = vmatmul.f32.gmra.mxu0 %v4146
    %v4186 = vpop.f32.mrf.mxu0
    %v4187 = vadd.f32 0.0, %v4186
    %4188 = vmatmul.f32.gmra.mxu0 %v4149
    %v4189 = vpop.f32.mrf.mxu0
    %v4190 = vadd.f32 0.0, %v4189
    %4191 = vmatmul.f32.gmra.mxu0 %v4152
    %v4192 = vpop.f32.mrf.mxu0
    %v4193 = vadd.f32 0.0, %v4192
    %4194 = vmatmul.f32.gmra.mxu0 %v4155
    %v4195 = vpop.f32.mrf.mxu0
    %v4196 = vadd.f32 0.0, %v4195
    %4197 = vmatmul.f32.gmra.mxu0 %v4158
    %v4198 = vpop.f32.mrf.mxu0
    %v4199 = vadd.f32 0.0, %v4198
    %4200 = vmatmul.f32.gmra.mxu0 %v4161
    %v4201 = vpop.f32.mrf.mxu0
    %v4202 = vadd.f32 0.0, %v4201
    %4203 = vdwg.mxu0
    %v4204 = vadd.f32 %v4077, %v4181
    %v4205 = vadd.f32 %v4080, %v4184
    %v4206 = vadd.f32 %v4083, %v4187
    %v4207 = vadd.f32 %v4086, %v4190
    %v4208 = vadd.f32 %v4089, %v4193
    %v4209 = vadd.f32 %v4092, %v4196
    %v4210 = vadd.f32 %v4095, %v4199
    %v4211 = vadd.f32 %v4098, %v4202
    %v4212 = vld [vmem:[#allocation12 + $0x3] sm:$0x1]
    %s4213 = scalar_lea.vmem %s11, 192
    %v4214 = vld [vmem:[%s4213] sm:$0xff]
    %v4215 = vld [vmem:[%s4213 + $0x8] sm:$0xff]
    %v4216 = vld [vmem:[%s4213 + $0x10] sm:$0xff]
    %v4217 = vld [vmem:[%s4213 + $0x18] sm:$0xff]
    %v4218 = vld [vmem:[%s4213 + $0x20] sm:$0xff]
    %v4219 = vld [vmem:[%s4213 + $0x28] sm:$0xff]
    %v4220 = vld [vmem:[%s4213 + $0x30] sm:$0xff]
    %v4221 = vld [vmem:[%s4213 + $0x38] sm:$0xff]
    %v4222 = vperm.slane %v4212, 0
    %4223 = vrot.lane.b32.xlu0 %v3876, 1
    %v4224 = vpop.permute.xlu0 %4223
    %4225 = vrot.lane.b32.xlu0 %v3877, 1
    %v4226 = vpop.permute.xlu0 %4225
    %4227 = vrot.lane.b32.xlu0 %v3878, 1
    %v4228 = vpop.permute.xlu0 %4227
    %4229 = vrot.lane.b32.xlu0 %v3879, 1
    %v4230 = vpop.permute.xlu0 %4229
    %4231 = vrot.lane.b32.xlu0 %v3880, 1
    %v4232 = vpop.permute.xlu0 %4231
    %4233 = vrot.lane.b32.xlu0 %v3881, 1
    %v4234 = vpop.permute.xlu0 %4233
    %4235 = vrot.lane.b32.xlu0 %v3882, 1
    %v4236 = vpop.permute.xlu0 %4235
    %4237 = vrot.lane.b32.xlu0 %v3883, 1
    %v4238 = vpop.permute.xlu0 %4237
    %v4239 = vsel %vm558, %v4224, %v4226
    %v4240 = vsel %vm558, %v4228, %v4230
    %v4241 = vsel %vm558, %v4232, %v4234
    %v4242 = vsel %vm558, %v4236, %v4238
    %v4247 = vmul.f32 %v4222, %v4239
    %v4248 = vmul.f32 %v4222, %v4240
    %v4249 = vmul.f32 %v4222, %v4241
    %v4250 = vmul.f32 %v4222, %v4242
    %v4252 = vsel %vm3861, %v4214, 0
    %v4255 = vsel %vm3861, %v4215, 0
    %v4258 = vsel %vm3861, %v4216, 0
    %v4261 = vsel %vm3861, %v4217, 0
    %v4264 = vsel %vm3861, %v4218, 0
    %v4267 = vsel %vm3861, %v4219, 0
    %v4270 = vsel %vm3861, %v4220, 0
    %v4273 = vsel %vm3861, %v4221, 0
    %4275 = vmatpush.msra.mxu0 0.0
    %4276 = vmatpush.msra.mxu0 0.0
    %4277 = vmatpush.msra.mxu0 0.0
    %4278 = vmatpush.msra.mxu0 0.0
    %4279 = vmatpush.msra.mxu0 0.0
    %4280 = vmatpush.msra.mxu0 0.0
    %4281 = vmatpush.msra.mxu0 0.0
    %4282 = vmatpush.msra.mxu0 0.0
    %4283 = vmatpush.msra.mxu0 0.0
    %4284 = vmatpush.msra.mxu0 0.0
    %4285 = vmatpush.msra.mxu0 0.0
    %4286 = vmatpush.msra.mxu0 0.0
    %4287 = vmatpush.msra.mxu0 %v4250
    %4288 = vmatpush.msra.mxu0 %v4249
    %4289 = vmatpush.msra.mxu0 %v4248
    %4290 = vmatpush.msra.mxu0 %v4247
    %4291 = vmatmul.f32.gmra.mxu0 %v4252
    %v4292 = vpop.f32.mrf.mxu0
    %v4293 = vadd.f32 0.0, %v4292
    %4294 = vmatmul.f32.gmra.mxu0 %v4255
    %v4295 = vpop.f32.mrf.mxu0
    %v4296 = vadd.f32 0.0, %v4295
    %4297 = vmatmul.f32.gmra.mxu0 %v4258
    %v4298 = vpop.f32.mrf.mxu0
    %v4299 = vadd.f32 0.0, %v4298
    %4300 = vmatmul.f32.gmra.mxu0 %v4261
    %v4301 = vpop.f32.mrf.mxu0
    %v4302 = vadd.f32 0.0, %v4301
    %4303 = vmatmul.f32.gmra.mxu0 %v4264
    %v4304 = vpop.f32.mrf.mxu0
    %v4305 = vadd.f32 0.0, %v4304
    %4306 = vmatmul.f32.gmra.mxu0 %v4267
    %v4307 = vpop.f32.mrf.mxu0
    %v4308 = vadd.f32 0.0, %v4307
    %4309 = vmatmul.f32.gmra.mxu0 %v4270
    %v4310 = vpop.f32.mrf.mxu0
    %v4311 = vadd.f32 0.0, %v4310
    %4312 = vmatmul.f32.gmra.mxu0 %v4273
    %v4313 = vpop.f32.mrf.mxu0
    %v4314 = vadd.f32 0.0, %v4313
    %4315 = vdwg.mxu0
    %v4316 = vadd.f32 %v4204, %v4293
    %v4317 = vadd.f32 %v4205, %v4296
    %v4318 = vadd.f32 %v4206, %v4299
    %v4319 = vadd.f32 %v4207, %v4302
    %v4320 = vadd.f32 %v4208, %v4305
    %v4321 = vadd.f32 %v4209, %v4308
    %v4322 = vadd.f32 %v4210, %v4311
    %v4323 = vadd.f32 %v4211, %v4314
    %v4324 = vld [vmem:[#allocation12 + $0x4] sm:$0x1]
    %s4325 = scalar_lea.vmem %s11, 256
    %v4326 = vld [vmem:[%s4325] sm:$0xff]
    %v4327 = vld [vmem:[%s4325 + $0x8] sm:$0xff]
    %v4328 = vld [vmem:[%s4325 + $0x10] sm:$0xff]
    %v4329 = vld [vmem:[%s4325 + $0x18] sm:$0xff]
    %v4330 = vld [vmem:[%s4325 + $0x20] sm:$0xff]
    %v4331 = vld [vmem:[%s4325 + $0x28] sm:$0xff]
    %v4332 = vld [vmem:[%s4325 + $0x30] sm:$0xff]
    %v4333 = vld [vmem:[%s4325 + $0x38] sm:$0xff]
    %v4334 = vperm.slane %v4324, 0
    %v4335 = vmul.f32 %v4334, %v3877
    %v4336 = vmul.f32 %v4334, %v3879
    %v4337 = vmul.f32 %v4334, %v3881
    %v4338 = vmul.f32 %v4334, %v3883
    %v4340 = vsel %vm3861, %v4326, 0
    %v4343 = vsel %vm3861, %v4327, 0
    %v4346 = vsel %vm3861, %v4328, 0
    %v4349 = vsel %vm3861, %v4329, 0
    %v4352 = vsel %vm3861, %v4330, 0
    %v4355 = vsel %vm3861, %v4331, 0
    %v4358 = vsel %vm3861, %v4332, 0
    %v4361 = vsel %vm3861, %v4333, 0
    %4363 = vmatpush.msra.mxu0 0.0
    %4364 = vmatpush.msra.mxu0 0.0
    %4365 = vmatpush.msra.mxu0 0.0
    %4366 = vmatpush.msra.mxu0 0.0
    %4367 = vmatpush.msra.mxu0 0.0
    %4368 = vmatpush.msra.mxu0 0.0
    %4369 = vmatpush.msra.mxu0 0.0
    %4370 = vmatpush.msra.mxu0 0.0
    %4371 = vmatpush.msra.mxu0 0.0
    %4372 = vmatpush.msra.mxu0 0.0
    %4373 = vmatpush.msra.mxu0 0.0
    %4374 = vmatpush.msra.mxu0 0.0
    %4375 = vmatpush.msra.mxu0 %v4338
    %4376 = vmatpush.msra.mxu0 %v4337
    %4377 = vmatpush.msra.mxu0 %v4336
    %4378 = vmatpush.msra.mxu0 %v4335
    %4379 = vmatmul.f32.gmra.mxu0 %v4340
    %v4380 = vpop.f32.mrf.mxu0
    %v4381 = vadd.f32 0.0, %v4380
    %4382 = vmatmul.f32.gmra.mxu0 %v4343
    %v4383 = vpop.f32.mrf.mxu0
    %v4384 = vadd.f32 0.0, %v4383
    %4385 = vmatmul.f32.gmra.mxu0 %v4346
    %v4386 = vpop.f32.mrf.mxu0
    %v4387 = vadd.f32 0.0, %v4386
    %4388 = vmatmul.f32.gmra.mxu0 %v4349
    %v4389 = vpop.f32.mrf.mxu0
    %v4390 = vadd.f32 0.0, %v4389
    %4391 = vmatmul.f32.gmra.mxu0 %v4352
    %v4392 = vpop.f32.mrf.mxu0
    %v4393 = vadd.f32 0.0, %v4392
    %4394 = vmatmul.f32.gmra.mxu0 %v4355
    %v4395 = vpop.f32.mrf.mxu0
    %v4396 = vadd.f32 0.0, %v4395
    %4397 = vmatmul.f32.gmra.mxu0 %v4358
    %v4398 = vpop.f32.mrf.mxu0
    %v4399 = vadd.f32 0.0, %v4398
    %4400 = vmatmul.f32.gmra.mxu0 %v4361
    %v4401 = vpop.f32.mrf.mxu0
    %v4402 = vadd.f32 0.0, %v4401
    %4403 = vdwg.mxu0
    %v4404 = vadd.f32 %v4316, %v4381
    %v4405 = vadd.f32 %v4317, %v4384
    %v4406 = vadd.f32 %v4318, %v4387
    %v4407 = vadd.f32 %v4319, %v4390
    %v4408 = vadd.f32 %v4320, %v4393
    %v4409 = vadd.f32 %v4321, %v4396
    %v4410 = vadd.f32 %v4322, %v4399
    %v4411 = vadd.f32 %v4323, %v4402
    %v4412 = vld [vmem:[#allocation12 + $0x5] sm:$0x1]
    %s4413 = scalar_lea.vmem %s11, 320
    %v4414 = vld [vmem:[%s4413] sm:$0xff]
    %v4415 = vld [vmem:[%s4413 + $0x8] sm:$0xff]
    %v4416 = vld [vmem:[%s4413 + $0x10] sm:$0xff]
    %v4417 = vld [vmem:[%s4413 + $0x18] sm:$0xff]
    %v4418 = vld [vmem:[%s4413 + $0x20] sm:$0xff]
    %v4419 = vld [vmem:[%s4413 + $0x28] sm:$0xff]
    %v4420 = vld [vmem:[%s4413 + $0x30] sm:$0xff]
    %v4421 = vld [vmem:[%s4413 + $0x38] sm:$0xff]
    %v4422 = vperm.slane %v4412, 0
    %4423 = vrot.lane.b32.xlu0 %v3877, 127
    %v4424 = vpop.permute.xlu0 %4423
    %4425 = vrot.lane.b32.xlu0 %v3879, 127
    %v4426 = vpop.permute.xlu0 %4425
    %4427 = vrot.lane.b32.xlu0 %v3881, 127
    %v4428 = vpop.permute.xlu0 %4427
    %4429 = vrot.lane.b32.xlu0 %v3883, 127
    %v4430 = vpop.permute.xlu0 %4429
    %v4435 = vmul.f32 %v4422, %v4424
    %v4436 = vmul.f32 %v4422, %v4426
    %v4437 = vmul.f32 %v4422, %v4428
    %v4438 = vmul.f32 %v4422, %v4430
    %v4440 = vsel %vm3861, %v4414, 0
    %v4443 = vsel %vm3861, %v4415, 0
    %v4446 = vsel %vm3861, %v4416, 0
    %v4449 = vsel %vm3861, %v4417, 0
    %v4452 = vsel %vm3861, %v4418, 0
    %v4455 = vsel %vm3861, %v4419, 0
    %v4458 = vsel %vm3861, %v4420, 0
    %v4461 = vsel %vm3861, %v4421, 0
    %4463 = vmatpush.msra.mxu0 0.0
    %4464 = vmatpush.msra.mxu0 0.0
    %4465 = vmatpush.msra.mxu0 0.0
    %4466 = vmatpush.msra.mxu0 0.0
    %4467 = vmatpush.msra.mxu0 0.0
    %4468 = vmatpush.msra.mxu0 0.0
    %4469 = vmatpush.msra.mxu0 0.0
    %4470 = vmatpush.msra.mxu0 0.0
    %4471 = vmatpush.msra.mxu0 0.0
    %4472 = vmatpush.msra.mxu0 0.0
    %4473 = vmatpush.msra.mxu0 0.0
    %4474 = vmatpush.msra.mxu0 0.0
    %4475 = vmatpush.msra.mxu0 %v4438
    %4476 = vmatpush.msra.mxu0 %v4437
    %4477 = vmatpush.msra.mxu0 %v4436
    %4478 = vmatpush.msra.mxu0 %v4435
    %4479 = vmatmul.f32.gmra.mxu0 %v4440
    %v4480 = vpop.f32.mrf.mxu0
    %v4481 = vadd.f32 0.0, %v4480
    %4482 = vmatmul.f32.gmra.mxu0 %v4443
    %v4483 = vpop.f32.mrf.mxu0
    %v4484 = vadd.f32 0.0, %v4483
    %4485 = vmatmul.f32.gmra.mxu0 %v4446
    %v4486 = vpop.f32.mrf.mxu0
    %v4487 = vadd.f32 0.0, %v4486
    %4488 = vmatmul.f32.gmra.mxu0 %v4449
    %v4489 = vpop.f32.mrf.mxu0
    %v4490 = vadd.f32 0.0, %v4489
    %4491 = vmatmul.f32.gmra.mxu0 %v4452
    %v4492 = vpop.f32.mrf.mxu0
    %v4493 = vadd.f32 0.0, %v4492
    %4494 = vmatmul.f32.gmra.mxu0 %v4455
    %v4495 = vpop.f32.mrf.mxu0
    %v4496 = vadd.f32 0.0, %v4495
    %4497 = vmatmul.f32.gmra.mxu0 %v4458
    %v4498 = vpop.f32.mrf.mxu0
    %v4499 = vadd.f32 0.0, %v4498
    %4500 = vmatmul.f32.gmra.mxu0 %v4461
    %v4501 = vpop.f32.mrf.mxu0
    %v4502 = vadd.f32 0.0, %v4501
    %4503 = vdwg.mxu0
    %v4504 = vadd.f32 %v4404, %v4481
    %v4505 = vadd.f32 %v4405, %v4484
    %v4506 = vadd.f32 %v4406, %v4487
    %v4507 = vadd.f32 %v4407, %v4490
    %v4508 = vadd.f32 %v4408, %v4493
    %v4509 = vadd.f32 %v4409, %v4496
    %v4510 = vadd.f32 %v4410, %v4499
    %v4511 = vadd.f32 %v4411, %v4502
    %v4512 = vld [vmem:[#allocation12 + $0x6] sm:$0x1]
    %s4513 = scalar_lea.vmem %s11, 384
    %v4514 = vld [vmem:[%s4513] sm:$0xff]
    %v4515 = vld [vmem:[%s4513 + $0x8] sm:$0xff]
    %v4516 = vld [vmem:[%s4513 + $0x10] sm:$0xff]
    %v4517 = vld [vmem:[%s4513 + $0x18] sm:$0xff]
    %v4518 = vld [vmem:[%s4513 + $0x20] sm:$0xff]
    %v4519 = vld [vmem:[%s4513 + $0x28] sm:$0xff]
    %v4520 = vld [vmem:[%s4513 + $0x30] sm:$0xff]
    %v4521 = vld [vmem:[%s4513 + $0x38] sm:$0xff]
    %v4522 = vperm.slane %v4512, 0
    %4523 = vrot.lane.b32.xlu0 %v3877, 125
    %v4524 = vpop.permute.xlu0 %4523
    %4525 = vrot.lane.b32.xlu0 %v3879, 125
    %v4526 = vpop.permute.xlu0 %4525
    %4527 = vrot.lane.b32.xlu0 %v3881, 125
    %v4528 = vpop.permute.xlu0 %4527
    %4529 = vrot.lane.b32.xlu0 %v3883, 125
    %v4530 = vpop.permute.xlu0 %4529
    %v4535 = vmul.f32 %v4522, %v4524
    %v4536 = vmul.f32 %v4522, %v4526
    %v4537 = vmul.f32 %v4522, %v4528
    %v4538 = vmul.f32 %v4522, %v4530
    %v4540 = vsel %vm3861, %v4514, 0
    %v4543 = vsel %vm3861, %v4515, 0
    %v4546 = vsel %vm3861, %v4516, 0
    %v4549 = vsel %vm3861, %v4517, 0
    %v4552 = vsel %vm3861, %v4518, 0
    %v4555 = vsel %vm3861, %v4519, 0
    %v4558 = vsel %vm3861, %v4520, 0
    %v4561 = vsel %vm3861, %v4521, 0
    %4563 = vmatpush.msra.mxu0 0.0
    %4564 = vmatpush.msra.mxu0 0.0
    %4565 = vmatpush.msra.mxu0 0.0
    %4566 = vmatpush.msra.mxu0 0.0
    %4567 = vmatpush.msra.mxu0 0.0
    %4568 = vmatpush.msra.mxu0 0.0
    %4569 = vmatpush.msra.mxu0 0.0
    %4570 = vmatpush.msra.mxu0 0.0
    %4571 = vmatpush.msra.mxu0 0.0
    %4572 = vmatpush.msra.mxu0 0.0
    %4573 = vmatpush.msra.mxu0 0.0
    %4574 = vmatpush.msra.mxu0 0.0
    %4575 = vmatpush.msra.mxu0 %v4538
    %4576 = vmatpush.msra.mxu0 %v4537
    %4577 = vmatpush.msra.mxu0 %v4536
    %4578 = vmatpush.msra.mxu0 %v4535
    %4579 = vmatmul.f32.gmra.mxu0 %v4540
    %v4580 = vpop.f32.mrf.mxu0
    %v4581 = vadd.f32 0.0, %v4580
    %4582 = vmatmul.f32.gmra.mxu0 %v4543
    %v4583 = vpop.f32.mrf.mxu0
    %v4584 = vadd.f32 0.0, %v4583
    %4585 = vmatmul.f32.gmra.mxu0 %v4546
    %v4586 = vpop.f32.mrf.mxu0
    %v4587 = vadd.f32 0.0, %v4586
    %4588 = vmatmul.f32.gmra.mxu0 %v4549
    %v4589 = vpop.f32.mrf.mxu0
    %v4590 = vadd.f32 0.0, %v4589
    %4591 = vmatmul.f32.gmra.mxu0 %v4552
    %v4592 = vpop.f32.mrf.mxu0
    %v4593 = vadd.f32 0.0, %v4592
    %4594 = vmatmul.f32.gmra.mxu0 %v4555
    %v4595 = vpop.f32.mrf.mxu0
    %v4596 = vadd.f32 0.0, %v4595
    %4597 = vmatmul.f32.gmra.mxu0 %v4558
    %v4598 = vpop.f32.mrf.mxu0
    %v4599 = vadd.f32 0.0, %v4598
    %4600 = vmatmul.f32.gmra.mxu0 %v4561
    %v4601 = vpop.f32.mrf.mxu0
    %v4602 = vadd.f32 0.0, %v4601
    %4603 = vdwg.mxu0
    %v4604 = vadd.f32 %v4504, %v4581
    %v4605 = vadd.f32 %v4505, %v4584
    %v4606 = vadd.f32 %v4506, %v4587
    %v4607 = vadd.f32 %v4507, %v4590
    %v4608 = vadd.f32 %v4508, %v4593
    %v4609 = vadd.f32 %v4509, %v4596
    %v4610 = vadd.f32 %v4510, %v4599
    %v4611 = vadd.f32 %v4511, %v4602
    %v4612 = vld [vmem:[#allocation12 + $0x7] sm:$0x1]
    %s4613 = scalar_lea.vmem %s11, 448
    %v4614 = vld [vmem:[%s4613] sm:$0xff]
    %v4615 = vld [vmem:[%s4613 + $0x8] sm:$0xff]
    %v4616 = vld [vmem:[%s4613 + $0x10] sm:$0xff]
    %v4617 = vld [vmem:[%s4613 + $0x18] sm:$0xff]
    %v4618 = vld [vmem:[%s4613 + $0x20] sm:$0xff]
    %v4619 = vld [vmem:[%s4613 + $0x28] sm:$0xff]
    %v4620 = vld [vmem:[%s4613 + $0x30] sm:$0xff]
    %v4621 = vld [vmem:[%s4613 + $0x38] sm:$0xff]
    %v4622 = vperm.slane %v4612, 0
    %4623 = vrot.lane.b32.xlu0 %v3877, 124
    %v4624 = vpop.permute.xlu0 %4623
    %4625 = vrot.lane.b32.xlu0 %v3879, 124
    %v4626 = vpop.permute.xlu0 %4625
    %4627 = vrot.lane.b32.xlu0 %v3881, 124
    %v4628 = vpop.permute.xlu0 %4627
    %4629 = vrot.lane.b32.xlu0 %v3883, 124
    %v4630 = vpop.permute.xlu0 %4629
    %v4635 = vmul.f32 %v4622, %v4624
    %v4636 = vmul.f32 %v4622, %v4626
    %v4637 = vmul.f32 %v4622, %v4628
    %v4638 = vmul.f32 %v4622, %v4630
    %v4640 = vsel %vm3861, %v4614, 0
    %v4643 = vsel %vm3861, %v4615, 0
    %v4646 = vsel %vm3861, %v4616, 0
    %v4649 = vsel %vm3861, %v4617, 0
    %v4652 = vsel %vm3861, %v4618, 0
    %v4655 = vsel %vm3861, %v4619, 0
    %v4658 = vsel %vm3861, %v4620, 0
    %v4661 = vsel %vm3861, %v4621, 0
    %4663 = vmatpush.msra.mxu0 0.0
    %4664 = vmatpush.msra.mxu0 0.0
    %4665 = vmatpush.msra.mxu0 0.0
    %4666 = vmatpush.msra.mxu0 0.0
    %4667 = vmatpush.msra.mxu0 0.0
    %4668 = vmatpush.msra.mxu0 0.0
    %4669 = vmatpush.msra.mxu0 0.0
    %4670 = vmatpush.msra.mxu0 0.0
    %4671 = vmatpush.msra.mxu0 0.0
    %4672 = vmatpush.msra.mxu0 0.0
    %4673 = vmatpush.msra.mxu0 0.0
    %4674 = vmatpush.msra.mxu0 0.0
    %4675 = vmatpush.msra.mxu0 %v4638
    %4676 = vmatpush.msra.mxu0 %v4637
    %4677 = vmatpush.msra.mxu0 %v4636
    %4678 = vmatpush.msra.mxu0 %v4635
    %4679 = vmatmul.f32.gmra.mxu0 %v4640
    %v4680 = vpop.f32.mrf.mxu0
    %v4681 = vadd.f32 0.0, %v4680
    %4682 = vmatmul.f32.gmra.mxu0 %v4643
    %v4683 = vpop.f32.mrf.mxu0
    %v4684 = vadd.f32 0.0, %v4683
    %4685 = vmatmul.f32.gmra.mxu0 %v4646
    %v4686 = vpop.f32.mrf.mxu0
    %v4687 = vadd.f32 0.0, %v4686
    %4688 = vmatmul.f32.gmra.mxu0 %v4649
    %v4689 = vpop.f32.mrf.mxu0
    %v4690 = vadd.f32 0.0, %v4689
    %4691 = vmatmul.f32.gmra.mxu0 %v4652
    %v4692 = vpop.f32.mrf.mxu0
    %v4693 = vadd.f32 0.0, %v4692
    %4694 = vmatmul.f32.gmra.mxu0 %v4655
    %v4695 = vpop.f32.mrf.mxu0
    %v4696 = vadd.f32 0.0, %v4695
    %4697 = vmatmul.f32.gmra.mxu0 %v4658
    %v4698 = vpop.f32.mrf.mxu0
    %v4699 = vadd.f32 0.0, %v4698
    %4700 = vmatmul.f32.gmra.mxu0 %v4661
    %v4701 = vpop.f32.mrf.mxu0
    %v4702 = vadd.f32 0.0, %v4701
    %4703 = vdwg.mxu0
    %v4704 = vadd.f32 %v4604, %v4681
    %v4705 = vadd.f32 %v4605, %v4684
    %v4706 = vadd.f32 %v4606, %v4687
    %v4707 = vadd.f32 %v4607, %v4690
    %v4708 = vadd.f32 %v4608, %v4693
    %v4709 = vadd.f32 %v4609, %v4696
    %v4710 = vadd.f32 %v4610, %v4699
    %v4711 = vadd.f32 %v4611, %v4702
    %v4712 = vld [vmem:[#allocation12 + $0x8] sm:$0x1]
    %s4713 = scalar_lea.vmem %s11, 512
    %v4714 = vld [vmem:[%s4713] sm:$0xff]
    %v4715 = vld [vmem:[%s4713 + $0x8] sm:$0xff]
    %v4716 = vld [vmem:[%s4713 + $0x10] sm:$0xff]
    %v4717 = vld [vmem:[%s4713 + $0x18] sm:$0xff]
    %v4718 = vld [vmem:[%s4713 + $0x20] sm:$0xff]
    %v4719 = vld [vmem:[%s4713 + $0x28] sm:$0xff]
    %v4720 = vld [vmem:[%s4713 + $0x30] sm:$0xff]
    %v4721 = vld [vmem:[%s4713 + $0x38] sm:$0xff]
    %v4722 = vperm.slane %v4712, 0
    %4723 = vrot.lane.b32.xlu0 %v3877, 123
    %v4724 = vpop.permute.xlu0 %4723
    %4725 = vrot.lane.b32.xlu0 %v3879, 123
    %v4726 = vpop.permute.xlu0 %4725
    %4727 = vrot.lane.b32.xlu0 %v3881, 123
    %v4728 = vpop.permute.xlu0 %4727
    %4729 = vrot.lane.b32.xlu0 %v3883, 123
    %v4730 = vpop.permute.xlu0 %4729
    %v4735 = vmul.f32 %v4722, %v4724
    %v4736 = vmul.f32 %v4722, %v4726
    %v4737 = vmul.f32 %v4722, %v4728
    %v4738 = vmul.f32 %v4722, %v4730
    %v4740 = vsel %vm3861, %v4714, 0
    %v4743 = vsel %vm3861, %v4715, 0
    %v4746 = vsel %vm3861, %v4716, 0
    %v4749 = vsel %vm3861, %v4717, 0
    %v4752 = vsel %vm3861, %v4718, 0
    %v4755 = vsel %vm3861, %v4719, 0
    %v4758 = vsel %vm3861, %v4720, 0
    %v4761 = vsel %vm3861, %v4721, 0
    %4763 = vmatpush.msra.mxu0 0.0
    %4764 = vmatpush.msra.mxu0 0.0
    %4765 = vmatpush.msra.mxu0 0.0
    %4766 = vmatpush.msra.mxu0 0.0
    %4767 = vmatpush.msra.mxu0 0.0
    %4768 = vmatpush.msra.mxu0 0.0
    %4769 = vmatpush.msra.mxu0 0.0
    %4770 = vmatpush.msra.mxu0 0.0
    %4771 = vmatpush.msra.mxu0 0.0
    %4772 = vmatpush.msra.mxu0 0.0
    %4773 = vmatpush.msra.mxu0 0.0
    %4774 = vmatpush.msra.mxu0 0.0
    %4775 = vmatpush.msra.mxu0 %v4738
    %4776 = vmatpush.msra.mxu0 %v4737
    %4777 = vmatpush.msra.mxu0 %v4736
    %4778 = vmatpush.msra.mxu0 %v4735
    %4779 = vmatmul.f32.gmra.mxu0 %v4740
    %v4780 = vpop.f32.mrf.mxu0
    %v4781 = vadd.f32 0.0, %v4780
    %4782 = vmatmul.f32.gmra.mxu0 %v4743
    %v4783 = vpop.f32.mrf.mxu0
    %v4784 = vadd.f32 0.0, %v4783
    %4785 = vmatmul.f32.gmra.mxu0 %v4746
    %v4786 = vpop.f32.mrf.mxu0
    %v4787 = vadd.f32 0.0, %v4786
    %4788 = vmatmul.f32.gmra.mxu0 %v4749
    %v4789 = vpop.f32.mrf.mxu0
    %v4790 = vadd.f32 0.0, %v4789
    %4791 = vmatmul.f32.gmra.mxu0 %v4752
    %v4792 = vpop.f32.mrf.mxu0
    %v4793 = vadd.f32 0.0, %v4792
    %4794 = vmatmul.f32.gmra.mxu0 %v4755
    %v4795 = vpop.f32.mrf.mxu0
    %v4796 = vadd.f32 0.0, %v4795
    %4797 = vmatmul.f32.gmra.mxu0 %v4758
    %v4798 = vpop.f32.mrf.mxu0
    %v4799 = vadd.f32 0.0, %v4798
    %4800 = vmatmul.f32.gmra.mxu0 %v4761
    %v4801 = vpop.f32.mrf.mxu0
    %v4802 = vadd.f32 0.0, %v4801
    %4803 = vdwg.mxu0
    %v4804 = vadd.f32 %v4704, %v4781
    %v4805 = vadd.f32 %v4705, %v4784
    %v4806 = vadd.f32 %v4706, %v4787
    %v4807 = vadd.f32 %v4707, %v4790
    %v4808 = vadd.f32 %v4708, %v4793
    %v4809 = vadd.f32 %v4709, %v4796
    %v4810 = vadd.f32 %v4710, %v4799
    %v4811 = vadd.f32 %v4711, %v4802
    %v4812 = vtanh.pop %v4804
    %v4813 = vtanh.pop %v4805
    %v4814 = vtanh.pop %v4806
    %v4815 = vtanh.pop %v4807
    %v4816 = vtanh.pop %v4808
    %v4817 = vtanh.pop %v4809
    %v4818 = vtanh.pop %v4810
    %v4819 = vtanh.pop %v4811
    %v4820 = vld [vmem:[%s14] sm:$0xff]
    %v4821 = vld [vmem:[%s14 + $0x8] sm:$0xff]
    %v4822 = vld [vmem:[%s14 + $0x10] sm:$0xff]
    %v4823 = vld [vmem:[%s14 + $0x18] sm:$0xff]
    %v4824 = vld [vmem:[%s14 + $0x20] sm:$0xff]
    %v4825 = vld [vmem:[%s14 + $0x28] sm:$0xff]
    %v4826 = vld [vmem:[%s14 + $0x30] sm:$0xff]
    %v4827 = vld [vmem:[%s14 + $0x38] sm:$0xff]
    %v4828 = vld [vmem:[%s15] sm:$0xff]
    %v4829 = vld [vmem:[%s15 + $0x8] sm:$0xff]
    %v4830 = vld [vmem:[%s15 + $0x10] sm:$0xff]
    %v4831 = vld [vmem:[%s15 + $0x18] sm:$0xff]
    %v4832 = vld [vmem:[%s15 + $0x20] sm:$0xff]
    %v4833 = vld [vmem:[%s15 + $0x28] sm:$0xff]
    %v4834 = vld [vmem:[%s15 + $0x30] sm:$0xff]
    %v4835 = vld [vmem:[%s15 + $0x38] sm:$0xff]
    %v4836 = vld [vmem:[%s15 + $0x40] sm:$0xff]
    %v4837 = vld [vmem:[%s15 + $0x48] sm:$0xff]
    %v4838 = vld [vmem:[%s15 + $0x50] sm:$0xff]
    %v4839 = vld [vmem:[%s15 + $0x58] sm:$0xff]
    %v4840 = vld [vmem:[%s15 + $0x60] sm:$0xff]
    %v4841 = vld [vmem:[%s15 + $0x68] sm:$0xff]
    %v4842 = vld [vmem:[%s15 + $0x70] sm:$0xff]
    %v4843 = vld [vmem:[%s15 + $0x78] sm:$0xff]
    %v4845 = vsel %vm3861, %v4812, 0
    %v4848 = vsel %vm3861, %v4813, 0
    %v4851 = vsel %vm3861, %v4814, 0
    %v4854 = vsel %vm3861, %v4815, 0
    %v4857 = vsel %vm3861, %v4816, 0
    %v4860 = vsel %vm3861, %v4817, 0
    %v4863 = vsel %vm3861, %v4818, 0
    %v4866 = vsel %vm3861, %v4819, 0
    %4868 = vmatpush.msra.mxu0 0.0
    %4869 = vmatpush.msra.mxu0 0.0
    %4870 = vmatpush.msra.mxu0 0.0
    %4871 = vmatpush.msra.mxu0 0.0
    %4872 = vmatpush.msra.mxu0 0.0
    %4873 = vmatpush.msra.mxu0 0.0
    %4874 = vmatpush.msra.mxu0 0.0
    %4875 = vmatpush.msra.mxu0 0.0
    %4876 = vmatpush.msra.mxu0 0.0
    %4877 = vmatpush.msra.mxu0 0.0
    %4878 = vmatpush.msra.mxu0 0.0
    %4879 = vmatpush.msra.mxu0 0.0
    %4880 = vmatpush.msra.mxu0 %v4840
    %4881 = vmatpush.msra.mxu0 %v4836
    %4882 = vmatpush.msra.mxu0 %v4832
    %4883 = vmatpush.msra.mxu0 %v4828
    %4884 = vmatmul.f32.gmra.mxu0 %v4845
    %v4885 = vpop.f32.mrf.mxu0
    %v4886 = vadd.f32 0.0, %v4885
    %4887 = vmatmul.f32.gmra.mxu0 %v4848
    %v4888 = vpop.f32.mrf.mxu0
    %v4889 = vadd.f32 0.0, %v4888
    %4890 = vmatmul.f32.gmra.mxu0 %v4851
    %v4891 = vpop.f32.mrf.mxu0
    %v4892 = vadd.f32 0.0, %v4891
    %4893 = vmatmul.f32.gmra.mxu0 %v4854
    %v4894 = vpop.f32.mrf.mxu0
    %v4895 = vadd.f32 0.0, %v4894
    %4896 = vmatmul.f32.gmra.mxu0 %v4857
    %v4897 = vpop.f32.mrf.mxu0
    %v4898 = vadd.f32 0.0, %v4897
    %4899 = vmatmul.f32.gmra.mxu0 %v4860
    %v4900 = vpop.f32.mrf.mxu0
    %v4901 = vadd.f32 0.0, %v4900
    %4902 = vmatmul.f32.gmra.mxu0 %v4863
    %v4903 = vpop.f32.mrf.mxu0
    %v4904 = vadd.f32 0.0, %v4903
    %4905 = vmatmul.f32.gmra.mxu0 %v4866
    %v4906 = vpop.f32.mrf.mxu0
    %v4907 = vadd.f32 0.0, %v4906
    %4908 = vdwg.mxu0
    %4909 = vmatpush.msra.mxu0 0.0
    %4910 = vmatpush.msra.mxu0 0.0
    %4911 = vmatpush.msra.mxu0 0.0
    %4912 = vmatpush.msra.mxu0 0.0
    %4913 = vmatpush.msra.mxu0 0.0
    %4914 = vmatpush.msra.mxu0 0.0
    %4915 = vmatpush.msra.mxu0 0.0
    %4916 = vmatpush.msra.mxu0 0.0
    %4917 = vmatpush.msra.mxu0 0.0
    %4918 = vmatpush.msra.mxu0 0.0
    %4919 = vmatpush.msra.mxu0 0.0
    %4920 = vmatpush.msra.mxu0 0.0
    %4921 = vmatpush.msra.mxu0 %v4841
    %4922 = vmatpush.msra.mxu0 %v4837
    %4923 = vmatpush.msra.mxu0 %v4833
    %4924 = vmatpush.msra.mxu0 %v4829
    %4925 = vmatmul.f32.gmra.mxu0 %v4845
    %v4926 = vpop.f32.mrf.mxu0
    %v4927 = vadd.f32 0.0, %v4926
    %4928 = vmatmul.f32.gmra.mxu0 %v4848
    %v4929 = vpop.f32.mrf.mxu0
    %v4930 = vadd.f32 0.0, %v4929
    %4931 = vmatmul.f32.gmra.mxu0 %v4851
    %v4932 = vpop.f32.mrf.mxu0
    %v4933 = vadd.f32 0.0, %v4932
    %4934 = vmatmul.f32.gmra.mxu0 %v4854
    %v4935 = vpop.f32.mrf.mxu0
    %v4936 = vadd.f32 0.0, %v4935
    %4937 = vmatmul.f32.gmra.mxu0 %v4857
    %v4938 = vpop.f32.mrf.mxu0
    %v4939 = vadd.f32 0.0, %v4938
    %4940 = vmatmul.f32.gmra.mxu0 %v4860
    %v4941 = vpop.f32.mrf.mxu0
    %v4942 = vadd.f32 0.0, %v4941
    %4943 = vmatmul.f32.gmra.mxu0 %v4863
    %v4944 = vpop.f32.mrf.mxu0
    %v4945 = vadd.f32 0.0, %v4944
    %4946 = vmatmul.f32.gmra.mxu0 %v4866
    %v4947 = vpop.f32.mrf.mxu0
    %v4948 = vadd.f32 0.0, %v4947
    %4949 = vdwg.mxu0
    %4950 = vmatpush.msra.mxu0 0.0
    %4951 = vmatpush.msra.mxu0 0.0
    %4952 = vmatpush.msra.mxu0 0.0
    %4953 = vmatpush.msra.mxu0 0.0
    %4954 = vmatpush.msra.mxu0 0.0
    %4955 = vmatpush.msra.mxu0 0.0
    %4956 = vmatpush.msra.mxu0 0.0
    %4957 = vmatpush.msra.mxu0 0.0
    %4958 = vmatpush.msra.mxu0 0.0
    %4959 = vmatpush.msra.mxu0 0.0
    %4960 = vmatpush.msra.mxu0 0.0
    %4961 = vmatpush.msra.mxu0 0.0
    %4962 = vmatpush.msra.mxu0 %v4842
    %4963 = vmatpush.msra.mxu0 %v4838
    %4964 = vmatpush.msra.mxu0 %v4834
    %4965 = vmatpush.msra.mxu0 %v4830
    %4966 = vmatmul.f32.gmra.mxu0 %v4845
    %v4967 = vpop.f32.mrf.mxu0
    %v4968 = vadd.f32 0.0, %v4967
    %4969 = vmatmul.f32.gmra.mxu0 %v4848
    %v4970 = vpop.f32.mrf.mxu0
    %v4971 = vadd.f32 0.0, %v4970
    %4972 = vmatmul.f32.gmra.mxu0 %v4851
    %v4973 = vpop.f32.mrf.mxu0
    %v4974 = vadd.f32 0.0, %v4973
    %4975 = vmatmul.f32.gmra.mxu0 %v4854
    %v4976 = vpop.f32.mrf.mxu0
    %v4977 = vadd.f32 0.0, %v4976
    %4978 = vmatmul.f32.gmra.mxu0 %v4857
    %v4979 = vpop.f32.mrf.mxu0
    %v4980 = vadd.f32 0.0, %v4979
    %4981 = vmatmul.f32.gmra.mxu0 %v4860
    %v4982 = vpop.f32.mrf.mxu0
    %v4983 = vadd.f32 0.0, %v4982
    %4984 = vmatmul.f32.gmra.mxu0 %v4863
    %v4985 = vpop.f32.mrf.mxu0
    %v4986 = vadd.f32 0.0, %v4985
    %4987 = vmatmul.f32.gmra.mxu0 %v4866
    %v4988 = vpop.f32.mrf.mxu0
    %v4989 = vadd.f32 0.0, %v4988
    %4990 = vdwg.mxu0
    %4991 = vmatpush.msra.mxu0 0.0
    %4992 = vmatpush.msra.mxu0 0.0
    %4993 = vmatpush.msra.mxu0 0.0
    %4994 = vmatpush.msra.mxu0 0.0
    %4995 = vmatpush.msra.mxu0 0.0
    %4996 = vmatpush.msra.mxu0 0.0
    %4997 = vmatpush.msra.mxu0 0.0
    %4998 = vmatpush.msra.mxu0 0.0
    %4999 = vmatpush.msra.mxu0 0.0
    %5000 = vmatpush.msra.mxu0 0.0
    %5001 = vmatpush.msra.mxu0 0.0
    %5002 = vmatpush.msra.mxu0 0.0
    %5003 = vmatpush.msra.mxu0 %v4843
    %5004 = vmatpush.msra.mxu0 %v4839
    %5005 = vmatpush.msra.mxu0 %v4835
    %5006 = vmatpush.msra.mxu0 %v4831
    %5007 = vmatmul.f32.gmra.mxu0 %v4845
    %v5008 = vpop.f32.mrf.mxu0
    %v5009 = vadd.f32 0.0, %v5008
    %5010 = vmatmul.f32.gmra.mxu0 %v4848
    %v5011 = vpop.f32.mrf.mxu0
    %v5012 = vadd.f32 0.0, %v5011
    %5013 = vmatmul.f32.gmra.mxu0 %v4851
    %v5014 = vpop.f32.mrf.mxu0
    %v5015 = vadd.f32 0.0, %v5014
    %5016 = vmatmul.f32.gmra.mxu0 %v4854
    %v5017 = vpop.f32.mrf.mxu0
    %v5018 = vadd.f32 0.0, %v5017
    %5019 = vmatmul.f32.gmra.mxu0 %v4857
    %v5020 = vpop.f32.mrf.mxu0
    %v5021 = vadd.f32 0.0, %v5020
    %5022 = vmatmul.f32.gmra.mxu0 %v4860
    %v5023 = vpop.f32.mrf.mxu0
    %v5024 = vadd.f32 0.0, %v5023
    %5025 = vmatmul.f32.gmra.mxu0 %v4863
    %v5026 = vpop.f32.mrf.mxu0
    %v5027 = vadd.f32 0.0, %v5026
    %5028 = vmatmul.f32.gmra.mxu0 %v4866
    %v5029 = vpop.f32.mrf.mxu0
    %v5030 = vadd.f32 0.0, %v5029
    %5031 = vdwg.mxu0
    %v5032 = vld [vmem:[%s13] sm:$0xff]
    %v5033 = vld [vmem:[%s13 + $0x8] sm:$0xff]
    %v5034 = vld [vmem:[%s13 + $0x10] sm:$0xff]
    %v5035 = vld [vmem:[%s13 + $0x18] sm:$0xff]
    %v5036 = vld [vmem:[%s13 + $0x20] sm:$0xff]
    %v5037 = vld [vmem:[%s13 + $0x28] sm:$0xff]
    %v5038 = vld [vmem:[%s13 + $0x30] sm:$0xff]
    %v5039 = vld [vmem:[%s13 + $0x38] sm:$0xff]
    %v5041 = vsel %vm276, %v5032, 0
    %v5044 = vsel %vm276, %v5033, 0
    %v5047 = vsel %vm276, %v5034, 0
    %v5050 = vsel %vm276, %v5035, 0
    %v5053 = vsel %vm276, %v5036, 0
    %v5056 = vsel %vm276, %v5037, 0
    %v5059 = vsel %vm276, %v5038, 0
    %v5062 = vsel %vm276, %v5039, 0
    %5064 = vmatpush.msra.mxu0 0.0
    %5065 = vmatpush.msra.mxu0 0.0
    %5066 = vmatpush.msra.mxu0 0.0
    %5067 = vmatpush.msra.mxu0 0.0
    %5068 = vmatpush.msra.mxu0 0.0
    %5069 = vmatpush.msra.mxu0 0.0
    %5070 = vmatpush.msra.mxu0 0.0
    %5071 = vmatpush.msra.mxu0 0.0
    %5072 = vmatpush.msra.mxu0 0.0
    %5073 = vmatpush.msra.mxu0 0.0
    %5074 = vmatpush.msra.mxu0 0.0
    %5075 = vmatpush.msra.mxu0 0.0
    %5076 = vmatpush.msra.mxu0 0.0
    %5077 = vmatpush.msra.mxu0 0.0
    %5078 = vmatpush.msra.mxu0 %v4824
    %5079 = vmatpush.msra.mxu0 %v4820
    %5080 = vmatmul.f32.gmra.mxu0 %v5041
    %v5081 = vpop.f32.mrf.mxu0
    %v5082 = vadd.f32 0.0, %v5081
    %5083 = vmatmul.f32.gmra.mxu0 %v5044
    %v5084 = vpop.f32.mrf.mxu0
    %v5085 = vadd.f32 0.0, %v5084
    %5086 = vmatmul.f32.gmra.mxu0 %v5047
    %v5087 = vpop.f32.mrf.mxu0
    %v5088 = vadd.f32 0.0, %v5087
    %5089 = vmatmul.f32.gmra.mxu0 %v5050
    %v5090 = vpop.f32.mrf.mxu0
    %v5091 = vadd.f32 0.0, %v5090
    %5092 = vmatmul.f32.gmra.mxu0 %v5053
    %v5093 = vpop.f32.mrf.mxu0
    %v5094 = vadd.f32 0.0, %v5093
    %5095 = vmatmul.f32.gmra.mxu0 %v5056
    %v5096 = vpop.f32.mrf.mxu0
    %v5097 = vadd.f32 0.0, %v5096
    %5098 = vmatmul.f32.gmra.mxu0 %v5059
    %v5099 = vpop.f32.mrf.mxu0
    %v5100 = vadd.f32 0.0, %v5099
    %5101 = vmatmul.f32.gmra.mxu0 %v5062
    %v5102 = vpop.f32.mrf.mxu0
    %v5103 = vadd.f32 0.0, %v5102
    %5104 = vdwg.mxu0
    %5105 = vmatpush.msra.mxu0 0.0
    %5106 = vmatpush.msra.mxu0 0.0
    %5107 = vmatpush.msra.mxu0 0.0
    %5108 = vmatpush.msra.mxu0 0.0
    %5109 = vmatpush.msra.mxu0 0.0
    %5110 = vmatpush.msra.mxu0 0.0
    %5111 = vmatpush.msra.mxu0 0.0
    %5112 = vmatpush.msra.mxu0 0.0
    %5113 = vmatpush.msra.mxu0 0.0
    %5114 = vmatpush.msra.mxu0 0.0
    %5115 = vmatpush.msra.mxu0 0.0
    %5116 = vmatpush.msra.mxu0 0.0
    %5117 = vmatpush.msra.mxu0 0.0
    %5118 = vmatpush.msra.mxu0 0.0
    %5119 = vmatpush.msra.mxu0 %v4825
    %5120 = vmatpush.msra.mxu0 %v4821
    %5121 = vmatmul.f32.gmra.mxu0 %v5041
    %v5122 = vpop.f32.mrf.mxu0
    %v5123 = vadd.f32 0.0, %v5122
    %5124 = vmatmul.f32.gmra.mxu0 %v5044
    %v5125 = vpop.f32.mrf.mxu0
    %v5126 = vadd.f32 0.0, %v5125
    %5127 = vmatmul.f32.gmra.mxu0 %v5047
    %v5128 = vpop.f32.mrf.mxu0
    %v5129 = vadd.f32 0.0, %v5128
    %5130 = vmatmul.f32.gmra.mxu0 %v5050
    %v5131 = vpop.f32.mrf.mxu0
    %v5132 = vadd.f32 0.0, %v5131
    %5133 = vmatmul.f32.gmra.mxu0 %v5053
    %v5134 = vpop.f32.mrf.mxu0
    %v5135 = vadd.f32 0.0, %v5134
    %5136 = vmatmul.f32.gmra.mxu0 %v5056
    %v5137 = vpop.f32.mrf.mxu0
    %v5138 = vadd.f32 0.0, %v5137
    %5139 = vmatmul.f32.gmra.mxu0 %v5059
    %v5140 = vpop.f32.mrf.mxu0
    %v5141 = vadd.f32 0.0, %v5140
    %5142 = vmatmul.f32.gmra.mxu0 %v5062
    %v5143 = vpop.f32.mrf.mxu0
    %v5144 = vadd.f32 0.0, %v5143
    %5145 = vdwg.mxu0
    %5146 = vmatpush.msra.mxu0 0.0
    %5147 = vmatpush.msra.mxu0 0.0
    %5148 = vmatpush.msra.mxu0 0.0
    %5149 = vmatpush.msra.mxu0 0.0
    %5150 = vmatpush.msra.mxu0 0.0
    %5151 = vmatpush.msra.mxu0 0.0
    %5152 = vmatpush.msra.mxu0 0.0
    %5153 = vmatpush.msra.mxu0 0.0
    %5154 = vmatpush.msra.mxu0 0.0
    %5155 = vmatpush.msra.mxu0 0.0
    %5156 = vmatpush.msra.mxu0 0.0
    %5157 = vmatpush.msra.mxu0 0.0
    %5158 = vmatpush.msra.mxu0 0.0
    %5159 = vmatpush.msra.mxu0 0.0
    %5160 = vmatpush.msra.mxu0 %v4826
    %5161 = vmatpush.msra.mxu0 %v4822
    %5162 = vmatmul.f32.gmra.mxu0 %v5041
    %v5163 = vpop.f32.mrf.mxu0
    %v5164 = vadd.f32 0.0, %v5163
    %5165 = vmatmul.f32.gmra.mxu0 %v5044
    %v5166 = vpop.f32.mrf.mxu0
    %v5167 = vadd.f32 0.0, %v5166
    %5168 = vmatmul.f32.gmra.mxu0 %v5047
    %v5169 = vpop.f32.mrf.mxu0
    %v5170 = vadd.f32 0.0, %v5169
    %5171 = vmatmul.f32.gmra.mxu0 %v5050
    %v5172 = vpop.f32.mrf.mxu0
    %v5173 = vadd.f32 0.0, %v5172
    %5174 = vmatmul.f32.gmra.mxu0 %v5053
    %v5175 = vpop.f32.mrf.mxu0
    %v5176 = vadd.f32 0.0, %v5175
    %5177 = vmatmul.f32.gmra.mxu0 %v5056
    %v5178 = vpop.f32.mrf.mxu0
    %v5179 = vadd.f32 0.0, %v5178
    %5180 = vmatmul.f32.gmra.mxu0 %v5059
    %v5181 = vpop.f32.mrf.mxu0
    %v5182 = vadd.f32 0.0, %v5181
    %5183 = vmatmul.f32.gmra.mxu0 %v5062
    %v5184 = vpop.f32.mrf.mxu0
    %v5185 = vadd.f32 0.0, %v5184
    %5186 = vdwg.mxu0
    %5187 = vmatpush.msra.mxu0 0.0
    %5188 = vmatpush.msra.mxu0 0.0
    %5189 = vmatpush.msra.mxu0 0.0
    %5190 = vmatpush.msra.mxu0 0.0
    %5191 = vmatpush.msra.mxu0 0.0
    %5192 = vmatpush.msra.mxu0 0.0
    %5193 = vmatpush.msra.mxu0 0.0
    %5194 = vmatpush.msra.mxu0 0.0
    %5195 = vmatpush.msra.mxu0 0.0
    %5196 = vmatpush.msra.mxu0 0.0
    %5197 = vmatpush.msra.mxu0 0.0
    %5198 = vmatpush.msra.mxu0 0.0
    %5199 = vmatpush.msra.mxu0 0.0
    %5200 = vmatpush.msra.mxu0 0.0
    %5201 = vmatpush.msra.mxu0 %v4827
    %5202 = vmatpush.msra.mxu0 %v4823
    %5203 = vmatmul.f32.gmra.mxu0 %v5041
    %v5204 = vpop.f32.mrf.mxu0
    %v5205 = vadd.f32 0.0, %v5204
    %5206 = vmatmul.f32.gmra.mxu0 %v5044
    %v5207 = vpop.f32.mrf.mxu0
    %v5208 = vadd.f32 0.0, %v5207
    %5209 = vmatmul.f32.gmra.mxu0 %v5047
    %v5210 = vpop.f32.mrf.mxu0
    %v5211 = vadd.f32 0.0, %v5210
    %5212 = vmatmul.f32.gmra.mxu0 %v5050
    %v5213 = vpop.f32.mrf.mxu0
    %v5214 = vadd.f32 0.0, %v5213
    %5215 = vmatmul.f32.gmra.mxu0 %v5053
    %v5216 = vpop.f32.mrf.mxu0
    %v5217 = vadd.f32 0.0, %v5216
    %5218 = vmatmul.f32.gmra.mxu0 %v5056
    %v5219 = vpop.f32.mrf.mxu0
    %v5220 = vadd.f32 0.0, %v5219
    %5221 = vmatmul.f32.gmra.mxu0 %v5059
    %v5222 = vpop.f32.mrf.mxu0
    %v5223 = vadd.f32 0.0, %v5222
    %5224 = vmatmul.f32.gmra.mxu0 %v5062
    %v5225 = vpop.f32.mrf.mxu0
    %v5226 = vadd.f32 0.0, %v5225
    %5227 = vdwg.mxu0
    %v5228 = vmul.f32 %v4886, %v5082
    %v5229 = vmul.f32 %v4927, %v5123
    %v5230 = vmul.f32 %v4968, %v5164
    %v5231 = vmul.f32 %v5009, %v5205
    %v5232 = vmul.f32 %v4889, %v5085
    %v5233 = vmul.f32 %v4930, %v5126
    %v5234 = vmul.f32 %v4971, %v5167
    %v5235 = vmul.f32 %v5012, %v5208
    %v5236 = vmul.f32 %v4892, %v5088
    %v5237 = vmul.f32 %v4933, %v5129
    %v5238 = vmul.f32 %v4974, %v5170
    %v5239 = vmul.f32 %v5015, %v5211
    %v5240 = vmul.f32 %v4895, %v5091
    %v5241 = vmul.f32 %v4936, %v5132
    %v5242 = vmul.f32 %v4977, %v5173
    %v5243 = vmul.f32 %v5018, %v5214
    %v5244 = vmul.f32 %v4898, %v5094
    %v5245 = vmul.f32 %v4939, %v5135
    %v5246 = vmul.f32 %v4980, %v5176
    %v5247 = vmul.f32 %v5021, %v5217
    %v5248 = vmul.f32 %v4901, %v5097
    %v5249 = vmul.f32 %v4942, %v5138
    %v5250 = vmul.f32 %v4983, %v5179
    %v5251 = vmul.f32 %v5024, %v5220
    %v5252 = vmul.f32 %v4904, %v5100
    %v5253 = vmul.f32 %v4945, %v5141
    %v5254 = vmul.f32 %v4986, %v5182
    %v5255 = vmul.f32 %v5027, %v5223
    %v5256 = vmul.f32 %v4907, %v5103
    %v5257 = vmul.f32 %v4948, %v5144
    %v5258 = vmul.f32 %v4989, %v5185
    %v5259 = vmul.f32 %v5030, %v5226
    %s5260 = scalar_lea.vmem %s15, 128
    %v5261 = vld [vmem:[%s5260] sm:$0xff]
    %v5262 = vld [vmem:[%s5260 + $0x8] sm:$0xff]
    %v5263 = vld [vmem:[%s5260 + $0x10] sm:$0xff]
    %v5264 = vld [vmem:[%s5260 + $0x18] sm:$0xff]
    %v5265 = vld [vmem:[%s5260 + $0x20] sm:$0xff]
    %v5266 = vld [vmem:[%s5260 + $0x28] sm:$0xff]
    %v5267 = vld [vmem:[%s5260 + $0x30] sm:$0xff]
    %v5268 = vld [vmem:[%s5260 + $0x38] sm:$0xff]
    %v5269 = vld [vmem:[%s5260 + $0x40] sm:$0xff]
    %v5270 = vld [vmem:[%s5260 + $0x48] sm:$0xff]
    %v5271 = vld [vmem:[%s5260 + $0x50] sm:$0xff]
    %v5272 = vld [vmem:[%s5260 + $0x58] sm:$0xff]
    %v5273 = vld [vmem:[%s5260 + $0x60] sm:$0xff]
    %v5274 = vld [vmem:[%s5260 + $0x68] sm:$0xff]
    %v5275 = vld [vmem:[%s5260 + $0x70] sm:$0xff]
    %v5276 = vld [vmem:[%s5260 + $0x78] sm:$0xff]
    %5277 = vmatpush.msra.mxu0 0.0
    %5278 = vmatpush.msra.mxu0 0.0
    %5279 = vmatpush.msra.mxu0 0.0
    %5280 = vmatpush.msra.mxu0 0.0
    %5281 = vmatpush.msra.mxu0 0.0
    %5282 = vmatpush.msra.mxu0 0.0
    %5283 = vmatpush.msra.mxu0 0.0
    %5284 = vmatpush.msra.mxu0 0.0
    %5285 = vmatpush.msra.mxu0 0.0
    %5286 = vmatpush.msra.mxu0 0.0
    %5287 = vmatpush.msra.mxu0 0.0
    %5288 = vmatpush.msra.mxu0 0.0
    %5289 = vmatpush.msra.mxu0 %v5273
    %5290 = vmatpush.msra.mxu0 %v5269
    %5291 = vmatpush.msra.mxu0 %v5265
    %5292 = vmatpush.msra.mxu0 %v5261
    %5293 = vmatmul.f32.gmra.mxu0 %v4845
    %v5294 = vpop.f32.mrf.mxu0
    %v5295 = vadd.f32 0.0, %v5294
    %5296 = vmatmul.f32.gmra.mxu0 %v4848
    %v5297 = vpop.f32.mrf.mxu0
    %v5298 = vadd.f32 0.0, %v5297
    %5299 = vmatmul.f32.gmra.mxu0 %v4851
    %v5300 = vpop.f32.mrf.mxu0
    %v5301 = vadd.f32 0.0, %v5300
    %5302 = vmatmul.f32.gmra.mxu0 %v4854
    %v5303 = vpop.f32.mrf.mxu0
    %v5304 = vadd.f32 0.0, %v5303
    %5305 = vmatmul.f32.gmra.mxu0 %v4857
    %v5306 = vpop.f32.mrf.mxu0
    %v5307 = vadd.f32 0.0, %v5306
    %5308 = vmatmul.f32.gmra.mxu0 %v4860
    %v5309 = vpop.f32.mrf.mxu0
    %v5310 = vadd.f32 0.0, %v5309
    %5311 = vmatmul.f32.gmra.mxu0 %v4863
    %v5312 = vpop.f32.mrf.mxu0
    %v5313 = vadd.f32 0.0, %v5312
    %5314 = vmatmul.f32.gmra.mxu0 %v4866
    %v5315 = vpop.f32.mrf.mxu0
    %v5316 = vadd.f32 0.0, %v5315
    %5317 = vdwg.mxu0
    %5318 = vmatpush.msra.mxu0 0.0
    %5319 = vmatpush.msra.mxu0 0.0
    %5320 = vmatpush.msra.mxu0 0.0
    %5321 = vmatpush.msra.mxu0 0.0
    %5322 = vmatpush.msra.mxu0 0.0
    %5323 = vmatpush.msra.mxu0 0.0
    %5324 = vmatpush.msra.mxu0 0.0
    %5325 = vmatpush.msra.mxu0 0.0
    %5326 = vmatpush.msra.mxu0 0.0
    %5327 = vmatpush.msra.mxu0 0.0
    %5328 = vmatpush.msra.mxu0 0.0
    %5329 = vmatpush.msra.mxu0 0.0
    %5330 = vmatpush.msra.mxu0 %v5274
    %5331 = vmatpush.msra.mxu0 %v5270
    %5332 = vmatpush.msra.mxu0 %v5266
    %5333 = vmatpush.msra.mxu0 %v5262
    %5334 = vmatmul.f32.gmra.mxu0 %v4845
    %v5335 = vpop.f32.mrf.mxu0
    %v5336 = vadd.f32 0.0, %v5335
    %5337 = vmatmul.f32.gmra.mxu0 %v4848
    %v5338 = vpop.f32.mrf.mxu0
    %v5339 = vadd.f32 0.0, %v5338
    %5340 = vmatmul.f32.gmra.mxu0 %v4851
    %v5341 = vpop.f32.mrf.mxu0
    %v5342 = vadd.f32 0.0, %v5341
    %5343 = vmatmul.f32.gmra.mxu0 %v4854
    %v5344 = vpop.f32.mrf.mxu0
    %v5345 = vadd.f32 0.0, %v5344
    %5346 = vmatmul.f32.gmra.mxu0 %v4857
    %v5347 = vpop.f32.mrf.mxu0
    %v5348 = vadd.f32 0.0, %v5347
    %5349 = vmatmul.f32.gmra.mxu0 %v4860
    %v5350 = vpop.f32.mrf.mxu0
    %v5351 = vadd.f32 0.0, %v5350
    %5352 = vmatmul.f32.gmra.mxu0 %v4863
    %v5353 = vpop.f32.mrf.mxu0
    %v5354 = vadd.f32 0.0, %v5353
    %5355 = vmatmul.f32.gmra.mxu0 %v4866
    %v5356 = vpop.f32.mrf.mxu0
    %v5357 = vadd.f32 0.0, %v5356
    %5358 = vdwg.mxu0
    %5359 = vmatpush.msra.mxu0 0.0
    %5360 = vmatpush.msra.mxu0 0.0
    %5361 = vmatpush.msra.mxu0 0.0
    %5362 = vmatpush.msra.mxu0 0.0
    %5363 = vmatpush.msra.mxu0 0.0
    %5364 = vmatpush.msra.mxu0 0.0
    %5365 = vmatpush.msra.mxu0 0.0
    %5366 = vmatpush.msra.mxu0 0.0
    %5367 = vmatpush.msra.mxu0 0.0
    %5368 = vmatpush.msra.mxu0 0.0
    %5369 = vmatpush.msra.mxu0 0.0
    %5370 = vmatpush.msra.mxu0 0.0
    %5371 = vmatpush.msra.mxu0 %v5275
    %5372 = vmatpush.msra.mxu0 %v5271
    %5373 = vmatpush.msra.mxu0 %v5267
    %5374 = vmatpush.msra.mxu0 %v5263
    %5375 = vmatmul.f32.gmra.mxu0 %v4845
    %v5376 = vpop.f32.mrf.mxu0
    %v5377 = vadd.f32 0.0, %v5376
    %5378 = vmatmul.f32.gmra.mxu0 %v4848
    %v5379 = vpop.f32.mrf.mxu0
    %v5380 = vadd.f32 0.0, %v5379
    %5381 = vmatmul.f32.gmra.mxu0 %v4851
    %v5382 = vpop.f32.mrf.mxu0
    %v5383 = vadd.f32 0.0, %v5382
    %5384 = vmatmul.f32.gmra.mxu0 %v4854
    %v5385 = vpop.f32.mrf.mxu0
    %v5386 = vadd.f32 0.0, %v5385
    %5387 = vmatmul.f32.gmra.mxu0 %v4857
    %v5388 = vpop.f32.mrf.mxu0
    %v5389 = vadd.f32 0.0, %v5388
    %5390 = vmatmul.f32.gmra.mxu0 %v4860
    %v5391 = vpop.f32.mrf.mxu0
    %v5392 = vadd.f32 0.0, %v5391
    %5393 = vmatmul.f32.gmra.mxu0 %v4863
    %v5394 = vpop.f32.mrf.mxu0
    %v5395 = vadd.f32 0.0, %v5394
    %5396 = vmatmul.f32.gmra.mxu0 %v4866
    %v5397 = vpop.f32.mrf.mxu0
    %v5398 = vadd.f32 0.0, %v5397
    %5399 = vdwg.mxu0
    %5400 = vmatpush.msra.mxu0 0.0
    %5401 = vmatpush.msra.mxu0 0.0
    %5402 = vmatpush.msra.mxu0 0.0
    %5403 = vmatpush.msra.mxu0 0.0
    %5404 = vmatpush.msra.mxu0 0.0
    %5405 = vmatpush.msra.mxu0 0.0
    %5406 = vmatpush.msra.mxu0 0.0
    %5407 = vmatpush.msra.mxu0 0.0
    %5408 = vmatpush.msra.mxu0 0.0
    %5409 = vmatpush.msra.mxu0 0.0
    %5410 = vmatpush.msra.mxu0 0.0
    %5411 = vmatpush.msra.mxu0 0.0
    %5412 = vmatpush.msra.mxu0 %v5276
    %5413 = vmatpush.msra.mxu0 %v5272
    %5414 = vmatpush.msra.mxu0 %v5268
    %5415 = vmatpush.msra.mxu0 %v5264
    %5416 = vmatmul.f32.gmra.mxu0 %v4845
    %v5417 = vpop.f32.mrf.mxu0
    %v5418 = vadd.f32 0.0, %v5417
    %5419 = vmatmul.f32.gmra.mxu0 %v4848
    %v5420 = vpop.f32.mrf.mxu0
    %v5421 = vadd.f32 0.0, %v5420
    %5422 = vmatmul.f32.gmra.mxu0 %v4851
    %v5423 = vpop.f32.mrf.mxu0
    %v5424 = vadd.f32 0.0, %v5423
    %5425 = vmatmul.f32.gmra.mxu0 %v4854
    %v5426 = vpop.f32.mrf.mxu0
    %v5427 = vadd.f32 0.0, %v5426
    %5428 = vmatmul.f32.gmra.mxu0 %v4857
    %v5429 = vpop.f32.mrf.mxu0
    %v5430 = vadd.f32 0.0, %v5429
    %5431 = vmatmul.f32.gmra.mxu0 %v4860
    %v5432 = vpop.f32.mrf.mxu0
    %v5433 = vadd.f32 0.0, %v5432
    %5434 = vmatmul.f32.gmra.mxu0 %v4863
    %v5435 = vpop.f32.mrf.mxu0
    %v5436 = vadd.f32 0.0, %v5435
    %5437 = vmatmul.f32.gmra.mxu0 %v4866
    %v5438 = vpop.f32.mrf.mxu0
    %v5439 = vadd.f32 0.0, %v5438
    %5440 = vdwg.mxu0
    %s5441 = scalar_lea.vmem %s13, 64
    %v5442 = vld [vmem:[%s5441] sm:$0xff]
    %v5443 = vld [vmem:[%s5441 + $0x8] sm:$0xff]
    %v5444 = vld [vmem:[%s5441 + $0x10] sm:$0xff]
    %v5445 = vld [vmem:[%s5441 + $0x18] sm:$0xff]
    %v5446 = vld [vmem:[%s5441 + $0x20] sm:$0xff]
    %v5447 = vld [vmem:[%s5441 + $0x28] sm:$0xff]
    %v5448 = vld [vmem:[%s5441 + $0x30] sm:$0xff]
    %v5449 = vld [vmem:[%s5441 + $0x38] sm:$0xff]
    %v5451 = vsel %vm276, %v5442, 0
    %v5454 = vsel %vm276, %v5443, 0
    %v5457 = vsel %vm276, %v5444, 0
    %v5460 = vsel %vm276, %v5445, 0
    %v5463 = vsel %vm276, %v5446, 0
    %v5466 = vsel %vm276, %v5447, 0
    %v5469 = vsel %vm276, %v5448, 0
    %v5472 = vsel %vm276, %v5449, 0
    %5474 = vmatpush.msra.mxu0 0.0
    %5475 = vmatpush.msra.mxu0 0.0
    %5476 = vmatpush.msra.mxu0 0.0
    %5477 = vmatpush.msra.mxu0 0.0
    %5478 = vmatpush.msra.mxu0 0.0
    %5479 = vmatpush.msra.mxu0 0.0
    %5480 = vmatpush.msra.mxu0 0.0
    %5481 = vmatpush.msra.mxu0 0.0
    %5482 = vmatpush.msra.mxu0 0.0
    %5483 = vmatpush.msra.mxu0 0.0
    %5484 = vmatpush.msra.mxu0 0.0
    %5485 = vmatpush.msra.mxu0 0.0
    %5486 = vmatpush.msra.mxu0 0.0
    %5487 = vmatpush.msra.mxu0 0.0
    %5488 = vmatpush.msra.mxu0 %v4824
    %5489 = vmatpush.msra.mxu0 %v4820
    %5490 = vmatmul.f32.gmra.mxu0 %v5451
    %v5491 = vpop.f32.mrf.mxu0
    %v5492 = vadd.f32 0.0, %v5491
    %5493 = vmatmul.f32.gmra.mxu0 %v5454
    %v5494 = vpop.f32.mrf.mxu0
    %v5495 = vadd.f32 0.0, %v5494
    %5496 = vmatmul.f32.gmra.mxu0 %v5457
    %v5497 = vpop.f32.mrf.mxu0
    %v5498 = vadd.f32 0.0, %v5497
    %5499 = vmatmul.f32.gmra.mxu0 %v5460
    %v5500 = vpop.f32.mrf.mxu0
    %v5501 = vadd.f32 0.0, %v5500
    %5502 = vmatmul.f32.gmra.mxu0 %v5463
    %v5503 = vpop.f32.mrf.mxu0
    %v5504 = vadd.f32 0.0, %v5503
    %5505 = vmatmul.f32.gmra.mxu0 %v5466
    %v5506 = vpop.f32.mrf.mxu0
    %v5507 = vadd.f32 0.0, %v5506
    %5508 = vmatmul.f32.gmra.mxu0 %v5469
    %v5509 = vpop.f32.mrf.mxu0
    %v5510 = vadd.f32 0.0, %v5509
    %5511 = vmatmul.f32.gmra.mxu0 %v5472
    %v5512 = vpop.f32.mrf.mxu0
    %v5513 = vadd.f32 0.0, %v5512
    %5514 = vdwg.mxu0
    %5515 = vmatpush.msra.mxu0 0.0
    %5516 = vmatpush.msra.mxu0 0.0
    %5517 = vmatpush.msra.mxu0 0.0
    %5518 = vmatpush.msra.mxu0 0.0
    %5519 = vmatpush.msra.mxu0 0.0
    %5520 = vmatpush.msra.mxu0 0.0
    %5521 = vmatpush.msra.mxu0 0.0
    %5522 = vmatpush.msra.mxu0 0.0
    %5523 = vmatpush.msra.mxu0 0.0
    %5524 = vmatpush.msra.mxu0 0.0
    %5525 = vmatpush.msra.mxu0 0.0
    %5526 = vmatpush.msra.mxu0 0.0
    %5527 = vmatpush.msra.mxu0 0.0
    %5528 = vmatpush.msra.mxu0 0.0
    %5529 = vmatpush.msra.mxu0 %v4825
    %5530 = vmatpush.msra.mxu0 %v4821
    %5531 = vmatmul.f32.gmra.mxu0 %v5451
    %v5532 = vpop.f32.mrf.mxu0
    %v5533 = vadd.f32 0.0, %v5532
    %5534 = vmatmul.f32.gmra.mxu0 %v5454
    %v5535 = vpop.f32.mrf.mxu0
    %v5536 = vadd.f32 0.0, %v5535
    %5537 = vmatmul.f32.gmra.mxu0 %v5457
    %v5538 = vpop.f32.mrf.mxu0
    %v5539 = vadd.f32 0.0, %v5538
    %5540 = vmatmul.f32.gmra.mxu0 %v5460
    %v5541 = vpop.f32.mrf.mxu0
    %v5542 = vadd.f32 0.0, %v5541
    %5543 = vmatmul.f32.gmra.mxu0 %v5463
    %v5544 = vpop.f32.mrf.mxu0
    %v5545 = vadd.f32 0.0, %v5544
    %5546 = vmatmul.f32.gmra.mxu0 %v5466
    %v5547 = vpop.f32.mrf.mxu0
    %v5548 = vadd.f32 0.0, %v5547
    %5549 = vmatmul.f32.gmra.mxu0 %v5469
    %v5550 = vpop.f32.mrf.mxu0
    %v5551 = vadd.f32 0.0, %v5550
    %5552 = vmatmul.f32.gmra.mxu0 %v5472
    %v5553 = vpop.f32.mrf.mxu0
    %v5554 = vadd.f32 0.0, %v5553
    %5555 = vdwg.mxu0
    %5556 = vmatpush.msra.mxu0 0.0
    %5557 = vmatpush.msra.mxu0 0.0
    %5558 = vmatpush.msra.mxu0 0.0
    %5559 = vmatpush.msra.mxu0 0.0
    %5560 = vmatpush.msra.mxu0 0.0
    %5561 = vmatpush.msra.mxu0 0.0
    %5562 = vmatpush.msra.mxu0 0.0
    %5563 = vmatpush.msra.mxu0 0.0
    %5564 = vmatpush.msra.mxu0 0.0
    %5565 = vmatpush.msra.mxu0 0.0
    %5566 = vmatpush.msra.mxu0 0.0
    %5567 = vmatpush.msra.mxu0 0.0
    %5568 = vmatpush.msra.mxu0 0.0
    %5569 = vmatpush.msra.mxu0 0.0
    %5570 = vmatpush.msra.mxu0 %v4826
    %5571 = vmatpush.msra.mxu0 %v4822
    %5572 = vmatmul.f32.gmra.mxu0 %v5451
    %v5573 = vpop.f32.mrf.mxu0
    %v5574 = vadd.f32 0.0, %v5573
    %5575 = vmatmul.f32.gmra.mxu0 %v5454
    %v5576 = vpop.f32.mrf.mxu0
    %v5577 = vadd.f32 0.0, %v5576
    %5578 = vmatmul.f32.gmra.mxu0 %v5457
    %v5579 = vpop.f32.mrf.mxu0
    %v5580 = vadd.f32 0.0, %v5579
    %5581 = vmatmul.f32.gmra.mxu0 %v5460
    %v5582 = vpop.f32.mrf.mxu0
    %v5583 = vadd.f32 0.0, %v5582
    %5584 = vmatmul.f32.gmra.mxu0 %v5463
    %v5585 = vpop.f32.mrf.mxu0
    %v5586 = vadd.f32 0.0, %v5585
    %5587 = vmatmul.f32.gmra.mxu0 %v5466
    %v5588 = vpop.f32.mrf.mxu0
    %v5589 = vadd.f32 0.0, %v5588
    %5590 = vmatmul.f32.gmra.mxu0 %v5469
    %v5591 = vpop.f32.mrf.mxu0
    %v5592 = vadd.f32 0.0, %v5591
    %5593 = vmatmul.f32.gmra.mxu0 %v5472
    %v5594 = vpop.f32.mrf.mxu0
    %v5595 = vadd.f32 0.0, %v5594
    %5596 = vdwg.mxu0
    %5597 = vmatpush.msra.mxu0 0.0
    %5598 = vmatpush.msra.mxu0 0.0
    %5599 = vmatpush.msra.mxu0 0.0
    %5600 = vmatpush.msra.mxu0 0.0
    %5601 = vmatpush.msra.mxu0 0.0
    %5602 = vmatpush.msra.mxu0 0.0
    %5603 = vmatpush.msra.mxu0 0.0
    %5604 = vmatpush.msra.mxu0 0.0
    %5605 = vmatpush.msra.mxu0 0.0
    %5606 = vmatpush.msra.mxu0 0.0
    %5607 = vmatpush.msra.mxu0 0.0
    %5608 = vmatpush.msra.mxu0 0.0
    %5609 = vmatpush.msra.mxu0 0.0
    %5610 = vmatpush.msra.mxu0 0.0
    %5611 = vmatpush.msra.mxu0 %v4827
    %5612 = vmatpush.msra.mxu0 %v4823
    %5613 = vmatmul.f32.gmra.mxu0 %v5451
    %v5614 = vpop.f32.mrf.mxu0
    %v5615 = vadd.f32 0.0, %v5614
    %5616 = vmatmul.f32.gmra.mxu0 %v5454
    %v5617 = vpop.f32.mrf.mxu0
    %v5618 = vadd.f32 0.0, %v5617
    %5619 = vmatmul.f32.gmra.mxu0 %v5457
    %v5620 = vpop.f32.mrf.mxu0
    %v5621 = vadd.f32 0.0, %v5620
    %5622 = vmatmul.f32.gmra.mxu0 %v5460
    %v5623 = vpop.f32.mrf.mxu0
    %v5624 = vadd.f32 0.0, %v5623
    %5625 = vmatmul.f32.gmra.mxu0 %v5463
    %v5626 = vpop.f32.mrf.mxu0
    %v5627 = vadd.f32 0.0, %v5626
    %5628 = vmatmul.f32.gmra.mxu0 %v5466
    %v5629 = vpop.f32.mrf.mxu0
    %v5630 = vadd.f32 0.0, %v5629
    %5631 = vmatmul.f32.gmra.mxu0 %v5469
    %v5632 = vpop.f32.mrf.mxu0
    %v5633 = vadd.f32 0.0, %v5632
    %5634 = vmatmul.f32.gmra.mxu0 %v5472
    %v5635 = vpop.f32.mrf.mxu0
    %v5636 = vadd.f32 0.0, %v5635
    %5637 = vdwg.mxu0
    %v5638 = vmul.f32 %v5295, %v5492
    %v5639 = vmul.f32 %v5336, %v5533
    %v5640 = vmul.f32 %v5377, %v5574
    %v5641 = vmul.f32 %v5418, %v5615
    %v5642 = vmul.f32 %v5298, %v5495
    %v5643 = vmul.f32 %v5339, %v5536
    %v5644 = vmul.f32 %v5380, %v5577
    %v5645 = vmul.f32 %v5421, %v5618
    %v5646 = vmul.f32 %v5301, %v5498
    %v5647 = vmul.f32 %v5342, %v5539
    %v5648 = vmul.f32 %v5383, %v5580
    %v5649 = vmul.f32 %v5424, %v5621
    %v5650 = vmul.f32 %v5304, %v5501
    %v5651 = vmul.f32 %v5345, %v5542
    %v5652 = vmul.f32 %v5386, %v5583
    %v5653 = vmul.f32 %v5427, %v5624
    %v5654 = vmul.f32 %v5307, %v5504
    %v5655 = vmul.f32 %v5348, %v5545
    %v5656 = vmul.f32 %v5389, %v5586
    %v5657 = vmul.f32 %v5430, %v5627
    %v5658 = vmul.f32 %v5310, %v5507
    %v5659 = vmul.f32 %v5351, %v5548
    %v5660 = vmul.f32 %v5392, %v5589
    %v5661 = vmul.f32 %v5433, %v5630
    %v5662 = vmul.f32 %v5313, %v5510
    %v5663 = vmul.f32 %v5354, %v5551
    %v5664 = vmul.f32 %v5395, %v5592
    %v5665 = vmul.f32 %v5436, %v5633
    %v5666 = vmul.f32 %v5316, %v5513
    %v5667 = vmul.f32 %v5357, %v5554
    %v5668 = vmul.f32 %v5398, %v5595
    %v5669 = vmul.f32 %v5439, %v5636
    %v5670 = vadd.f32 %v5228, %v5638
    %v5671 = vadd.f32 %v5229, %v5639
    %v5672 = vadd.f32 %v5230, %v5640
    %v5673 = vadd.f32 %v5231, %v5641
    %v5674 = vadd.f32 %v5232, %v5642
    %v5675 = vadd.f32 %v5233, %v5643
    %v5676 = vadd.f32 %v5234, %v5644
    %v5677 = vadd.f32 %v5235, %v5645
    %v5678 = vadd.f32 %v5236, %v5646
    %v5679 = vadd.f32 %v5237, %v5647
    %v5680 = vadd.f32 %v5238, %v5648
    %v5681 = vadd.f32 %v5239, %v5649
    %v5682 = vadd.f32 %v5240, %v5650
    %v5683 = vadd.f32 %v5241, %v5651
    %v5684 = vadd.f32 %v5242, %v5652
    %v5685 = vadd.f32 %v5243, %v5653
    %v5686 = vadd.f32 %v5244, %v5654
    %v5687 = vadd.f32 %v5245, %v5655
    %v5688 = vadd.f32 %v5246, %v5656
    %v5689 = vadd.f32 %v5247, %v5657
    %v5690 = vadd.f32 %v5248, %v5658
    %v5691 = vadd.f32 %v5249, %v5659
    %v5692 = vadd.f32 %v5250, %v5660
    %v5693 = vadd.f32 %v5251, %v5661
    %v5694 = vadd.f32 %v5252, %v5662
    %v5695 = vadd.f32 %v5253, %v5663
    %v5696 = vadd.f32 %v5254, %v5664
    %v5697 = vadd.f32 %v5255, %v5665
    %v5698 = vadd.f32 %v5256, %v5666
    %v5699 = vadd.f32 %v5257, %v5667
    %v5700 = vadd.f32 %v5258, %v5668
    %v5701 = vadd.f32 %v5259, %v5669
    %s5702 = scalar_lea.vmem %s15, 256
    %v5703 = vld [vmem:[%s5702] sm:$0xff]
    %v5704 = vld [vmem:[%s5702 + $0x8] sm:$0xff]
    %v5705 = vld [vmem:[%s5702 + $0x10] sm:$0xff]
    %v5706 = vld [vmem:[%s5702 + $0x18] sm:$0xff]
    %v5707 = vld [vmem:[%s5702 + $0x20] sm:$0xff]
    %v5708 = vld [vmem:[%s5702 + $0x28] sm:$0xff]
    %v5709 = vld [vmem:[%s5702 + $0x30] sm:$0xff]
    %v5710 = vld [vmem:[%s5702 + $0x38] sm:$0xff]
    %v5711 = vld [vmem:[%s5702 + $0x40] sm:$0xff]
    %v5712 = vld [vmem:[%s5702 + $0x48] sm:$0xff]
    %v5713 = vld [vmem:[%s5702 + $0x50] sm:$0xff]
    %v5714 = vld [vmem:[%s5702 + $0x58] sm:$0xff]
    %v5715 = vld [vmem:[%s5702 + $0x60] sm:$0xff]
    %v5716 = vld [vmem:[%s5702 + $0x68] sm:$0xff]
    %v5717 = vld [vmem:[%s5702 + $0x70] sm:$0xff]
    %v5718 = vld [vmem:[%s5702 + $0x78] sm:$0xff]
    %5719 = vmatpush.msra.mxu0 0.0
    %5720 = vmatpush.msra.mxu0 0.0
    %5721 = vmatpush.msra.mxu0 0.0
    %5722 = vmatpush.msra.mxu0 0.0
    %5723 = vmatpush.msra.mxu0 0.0
    %5724 = vmatpush.msra.mxu0 0.0
    %5725 = vmatpush.msra.mxu0 0.0
    %5726 = vmatpush.msra.mxu0 0.0
    %5727 = vmatpush.msra.mxu0 0.0
    %5728 = vmatpush.msra.mxu0 0.0
    %5729 = vmatpush.msra.mxu0 0.0
    %5730 = vmatpush.msra.mxu0 0.0
    %5731 = vmatpush.msra.mxu0 %v5715
    %5732 = vmatpush.msra.mxu0 %v5711
    %5733 = vmatpush.msra.mxu0 %v5707
    %5734 = vmatpush.msra.mxu0 %v5703
    %5735 = vmatmul.f32.gmra.mxu0 %v4845
    %v5736 = vpop.f32.mrf.mxu0
    %v5737 = vadd.f32 0.0, %v5736
    %5738 = vmatmul.f32.gmra.mxu0 %v4848
    %v5739 = vpop.f32.mrf.mxu0
    %v5740 = vadd.f32 0.0, %v5739
    %5741 = vmatmul.f32.gmra.mxu0 %v4851
    %v5742 = vpop.f32.mrf.mxu0
    %v5743 = vadd.f32 0.0, %v5742
    %5744 = vmatmul.f32.gmra.mxu0 %v4854
    %v5745 = vpop.f32.mrf.mxu0
    %v5746 = vadd.f32 0.0, %v5745
    %5747 = vmatmul.f32.gmra.mxu0 %v4857
    %v5748 = vpop.f32.mrf.mxu0
    %v5749 = vadd.f32 0.0, %v5748
    %5750 = vmatmul.f32.gmra.mxu0 %v4860
    %v5751 = vpop.f32.mrf.mxu0
    %v5752 = vadd.f32 0.0, %v5751
    %5753 = vmatmul.f32.gmra.mxu0 %v4863
    %v5754 = vpop.f32.mrf.mxu0
    %v5755 = vadd.f32 0.0, %v5754
    %5756 = vmatmul.f32.gmra.mxu0 %v4866
    %v5757 = vpop.f32.mrf.mxu0
    %v5758 = vadd.f32 0.0, %v5757
    %5759 = vdwg.mxu0
    %5760 = vmatpush.msra.mxu0 0.0
    %5761 = vmatpush.msra.mxu0 0.0
    %5762 = vmatpush.msra.mxu0 0.0
    %5763 = vmatpush.msra.mxu0 0.0
    %5764 = vmatpush.msra.mxu0 0.0
    %5765 = vmatpush.msra.mxu0 0.0
    %5766 = vmatpush.msra.mxu0 0.0
    %5767 = vmatpush.msra.mxu0 0.0
    %5768 = vmatpush.msra.mxu0 0.0
    %5769 = vmatpush.msra.mxu0 0.0
    %5770 = vmatpush.msra.mxu0 0.0
    %5771 = vmatpush.msra.mxu0 0.0
    %5772 = vmatpush.msra.mxu0 %v5716
    %5773 = vmatpush.msra.mxu0 %v5712
    %5774 = vmatpush.msra.mxu0 %v5708
    %5775 = vmatpush.msra.mxu0 %v5704
    %5776 = vmatmul.f32.gmra.mxu0 %v4845
    %v5777 = vpop.f32.mrf.mxu0
    %v5778 = vadd.f32 0.0, %v5777
    %5779 = vmatmul.f32.gmra.mxu0 %v4848
    %v5780 = vpop.f32.mrf.mxu0
    %v5781 = vadd.f32 0.0, %v5780
    %5782 = vmatmul.f32.gmra.mxu0 %v4851
    %v5783 = vpop.f32.mrf.mxu0
    %v5784 = vadd.f32 0.0, %v5783
    %5785 = vmatmul.f32.gmra.mxu0 %v4854
    %v5786 = vpop.f32.mrf.mxu0
    %v5787 = vadd.f32 0.0, %v5786
    %5788 = vmatmul.f32.gmra.mxu0 %v4857
    %v5789 = vpop.f32.mrf.mxu0
    %v5790 = vadd.f32 0.0, %v5789
    %5791 = vmatmul.f32.gmra.mxu0 %v4860
    %v5792 = vpop.f32.mrf.mxu0
    %v5793 = vadd.f32 0.0, %v5792
    %5794 = vmatmul.f32.gmra.mxu0 %v4863
    %v5795 = vpop.f32.mrf.mxu0
    %v5796 = vadd.f32 0.0, %v5795
    %5797 = vmatmul.f32.gmra.mxu0 %v4866
    %v5798 = vpop.f32.mrf.mxu0
    %v5799 = vadd.f32 0.0, %v5798
    %5800 = vdwg.mxu0
    %5801 = vmatpush.msra.mxu0 0.0
    %5802 = vmatpush.msra.mxu0 0.0
    %5803 = vmatpush.msra.mxu0 0.0
    %5804 = vmatpush.msra.mxu0 0.0
    %5805 = vmatpush.msra.mxu0 0.0
    %5806 = vmatpush.msra.mxu0 0.0
    %5807 = vmatpush.msra.mxu0 0.0
    %5808 = vmatpush.msra.mxu0 0.0
    %5809 = vmatpush.msra.mxu0 0.0
    %5810 = vmatpush.msra.mxu0 0.0
    %5811 = vmatpush.msra.mxu0 0.0
    %5812 = vmatpush.msra.mxu0 0.0
    %5813 = vmatpush.msra.mxu0 %v5717
    %5814 = vmatpush.msra.mxu0 %v5713
    %5815 = vmatpush.msra.mxu0 %v5709
    %5816 = vmatpush.msra.mxu0 %v5705
    %5817 = vmatmul.f32.gmra.mxu0 %v4845
    %v5818 = vpop.f32.mrf.mxu0
    %v5819 = vadd.f32 0.0, %v5818
    %5820 = vmatmul.f32.gmra.mxu0 %v4848
    %v5821 = vpop.f32.mrf.mxu0
    %v5822 = vadd.f32 0.0, %v5821
    %5823 = vmatmul.f32.gmra.mxu0 %v4851
    %v5824 = vpop.f32.mrf.mxu0
    %v5825 = vadd.f32 0.0, %v5824
    %5826 = vmatmul.f32.gmra.mxu0 %v4854
    %v5827 = vpop.f32.mrf.mxu0
    %v5828 = vadd.f32 0.0, %v5827
    %5829 = vmatmul.f32.gmra.mxu0 %v4857
    %v5830 = vpop.f32.mrf.mxu0
    %v5831 = vadd.f32 0.0, %v5830
    %5832 = vmatmul.f32.gmra.mxu0 %v4860
    %v5833 = vpop.f32.mrf.mxu0
    %v5834 = vadd.f32 0.0, %v5833
    %5835 = vmatmul.f32.gmra.mxu0 %v4863
    %v5836 = vpop.f32.mrf.mxu0
    %v5837 = vadd.f32 0.0, %v5836
    %5838 = vmatmul.f32.gmra.mxu0 %v4866
    %v5839 = vpop.f32.mrf.mxu0
    %v5840 = vadd.f32 0.0, %v5839
    %5841 = vdwg.mxu0
    %5842 = vmatpush.msra.mxu0 0.0
    %5843 = vmatpush.msra.mxu0 0.0
    %5844 = vmatpush.msra.mxu0 0.0
    %5845 = vmatpush.msra.mxu0 0.0
    %5846 = vmatpush.msra.mxu0 0.0
    %5847 = vmatpush.msra.mxu0 0.0
    %5848 = vmatpush.msra.mxu0 0.0
    %5849 = vmatpush.msra.mxu0 0.0
    %5850 = vmatpush.msra.mxu0 0.0
    %5851 = vmatpush.msra.mxu0 0.0
    %5852 = vmatpush.msra.mxu0 0.0
    %5853 = vmatpush.msra.mxu0 0.0
    %5854 = vmatpush.msra.mxu0 %v5718
    %5855 = vmatpush.msra.mxu0 %v5714
    %5856 = vmatpush.msra.mxu0 %v5710
    %5857 = vmatpush.msra.mxu0 %v5706
    %5858 = vmatmul.f32.gmra.mxu0 %v4845
    %v5859 = vpop.f32.mrf.mxu0
    %v5860 = vadd.f32 0.0, %v5859
    %5861 = vmatmul.f32.gmra.mxu0 %v4848
    %v5862 = vpop.f32.mrf.mxu0
    %v5863 = vadd.f32 0.0, %v5862
    %5864 = vmatmul.f32.gmra.mxu0 %v4851
    %v5865 = vpop.f32.mrf.mxu0
    %v5866 = vadd.f32 0.0, %v5865
    %5867 = vmatmul.f32.gmra.mxu0 %v4854
    %v5868 = vpop.f32.mrf.mxu0
    %v5869 = vadd.f32 0.0, %v5868
    %5870 = vmatmul.f32.gmra.mxu0 %v4857
    %v5871 = vpop.f32.mrf.mxu0
    %v5872 = vadd.f32 0.0, %v5871
    %5873 = vmatmul.f32.gmra.mxu0 %v4860
    %v5874 = vpop.f32.mrf.mxu0
    %v5875 = vadd.f32 0.0, %v5874
    %5876 = vmatmul.f32.gmra.mxu0 %v4863
    %v5877 = vpop.f32.mrf.mxu0
    %v5878 = vadd.f32 0.0, %v5877
    %5879 = vmatmul.f32.gmra.mxu0 %v4866
    %v5880 = vpop.f32.mrf.mxu0
    %v5881 = vadd.f32 0.0, %v5880
    %5882 = vdwg.mxu0
    %s5883 = scalar_lea.vmem %s13, 128
    %v5884 = vld [vmem:[%s5883] sm:$0xff]
    %v5885 = vld [vmem:[%s5883 + $0x8] sm:$0xff]
    %v5886 = vld [vmem:[%s5883 + $0x10] sm:$0xff]
    %v5887 = vld [vmem:[%s5883 + $0x18] sm:$0xff]
    %v5888 = vld [vmem:[%s5883 + $0x20] sm:$0xff]
    %v5889 = vld [vmem:[%s5883 + $0x28] sm:$0xff]
    %v5890 = vld [vmem:[%s5883 + $0x30] sm:$0xff]
    %v5891 = vld [vmem:[%s5883 + $0x38] sm:$0xff]
    %v5893 = vsel %vm276, %v5884, 0
    %v5896 = vsel %vm276, %v5885, 0
    %v5899 = vsel %vm276, %v5886, 0
    %v5902 = vsel %vm276, %v5887, 0
    %v5905 = vsel %vm276, %v5888, 0
    %v5908 = vsel %vm276, %v5889, 0
    %v5911 = vsel %vm276, %v5890, 0
    %v5914 = vsel %vm276, %v5891, 0
    %5916 = vmatpush.msra.mxu0 0.0
    %5917 = vmatpush.msra.mxu0 0.0
    %5918 = vmatpush.msra.mxu0 0.0
    %5919 = vmatpush.msra.mxu0 0.0
    %5920 = vmatpush.msra.mxu0 0.0
    %5921 = vmatpush.msra.mxu0 0.0
    %5922 = vmatpush.msra.mxu0 0.0
    %5923 = vmatpush.msra.mxu0 0.0
    %5924 = vmatpush.msra.mxu0 0.0
    %5925 = vmatpush.msra.mxu0 0.0
    %5926 = vmatpush.msra.mxu0 0.0
    %5927 = vmatpush.msra.mxu0 0.0
    %5928 = vmatpush.msra.mxu0 0.0
    %5929 = vmatpush.msra.mxu0 0.0
    %5930 = vmatpush.msra.mxu0 %v4824
    %5931 = vmatpush.msra.mxu0 %v4820
    %5932 = vmatmul.f32.gmra.mxu0 %v5893
    %v5933 = vpop.f32.mrf.mxu0
    %v5934 = vadd.f32 0.0, %v5933
    %5935 = vmatmul.f32.gmra.mxu0 %v5896
    %v5936 = vpop.f32.mrf.mxu0
    %v5937 = vadd.f32 0.0, %v5936
    %5938 = vmatmul.f32.gmra.mxu0 %v5899
    %v5939 = vpop.f32.mrf.mxu0
    %v5940 = vadd.f32 0.0, %v5939
    %5941 = vmatmul.f32.gmra.mxu0 %v5902
    %v5942 = vpop.f32.mrf.mxu0
    %v5943 = vadd.f32 0.0, %v5942
    %5944 = vmatmul.f32.gmra.mxu0 %v5905
    %v5945 = vpop.f32.mrf.mxu0
    %v5946 = vadd.f32 0.0, %v5945
    %5947 = vmatmul.f32.gmra.mxu0 %v5908
    %v5948 = vpop.f32.mrf.mxu0
    %v5949 = vadd.f32 0.0, %v5948
    %5950 = vmatmul.f32.gmra.mxu0 %v5911
    %v5951 = vpop.f32.mrf.mxu0
    %v5952 = vadd.f32 0.0, %v5951
    %5953 = vmatmul.f32.gmra.mxu0 %v5914
    %v5954 = vpop.f32.mrf.mxu0
    %v5955 = vadd.f32 0.0, %v5954
    %5956 = vdwg.mxu0
    %5957 = vmatpush.msra.mxu0 0.0
    %5958 = vmatpush.msra.mxu0 0.0
    %5959 = vmatpush.msra.mxu0 0.0
    %5960 = vmatpush.msra.mxu0 0.0
    %5961 = vmatpush.msra.mxu0 0.0
    %5962 = vmatpush.msra.mxu0 0.0
    %5963 = vmatpush.msra.mxu0 0.0
    %5964 = vmatpush.msra.mxu0 0.0
    %5965 = vmatpush.msra.mxu0 0.0
    %5966 = vmatpush.msra.mxu0 0.0
    %5967 = vmatpush.msra.mxu0 0.0
    %5968 = vmatpush.msra.mxu0 0.0
    %5969 = vmatpush.msra.mxu0 0.0
    %5970 = vmatpush.msra.mxu0 0.0
    %5971 = vmatpush.msra.mxu0 %v4825
    %5972 = vmatpush.msra.mxu0 %v4821
    %5973 = vmatmul.f32.gmra.mxu0 %v5893
    %v5974 = vpop.f32.mrf.mxu0
    %v5975 = vadd.f32 0.0, %v5974
    %5976 = vmatmul.f32.gmra.mxu0 %v5896
    %v5977 = vpop.f32.mrf.mxu0
    %v5978 = vadd.f32 0.0, %v5977
    %5979 = vmatmul.f32.gmra.mxu0 %v5899
    %v5980 = vpop.f32.mrf.mxu0
    %v5981 = vadd.f32 0.0, %v5980
    %5982 = vmatmul.f32.gmra.mxu0 %v5902
    %v5983 = vpop.f32.mrf.mxu0
    %v5984 = vadd.f32 0.0, %v5983
    %5985 = vmatmul.f32.gmra.mxu0 %v5905
    %v5986 = vpop.f32.mrf.mxu0
    %v5987 = vadd.f32 0.0, %v5986
    %5988 = vmatmul.f32.gmra.mxu0 %v5908
    %v5989 = vpop.f32.mrf.mxu0
    %v5990 = vadd.f32 0.0, %v5989
    %5991 = vmatmul.f32.gmra.mxu0 %v5911
    %v5992 = vpop.f32.mrf.mxu0
    %v5993 = vadd.f32 0.0, %v5992
    %5994 = vmatmul.f32.gmra.mxu0 %v5914
    %v5995 = vpop.f32.mrf.mxu0
    %v5996 = vadd.f32 0.0, %v5995
    %5997 = vdwg.mxu0
    %5998 = vmatpush.msra.mxu0 0.0
    %5999 = vmatpush.msra.mxu0 0.0
    %6000 = vmatpush.msra.mxu0 0.0
    %6001 = vmatpush.msra.mxu0 0.0
    %6002 = vmatpush.msra.mxu0 0.0
    %6003 = vmatpush.msra.mxu0 0.0
    %6004 = vmatpush.msra.mxu0 0.0
    %6005 = vmatpush.msra.mxu0 0.0
    %6006 = vmatpush.msra.mxu0 0.0
    %6007 = vmatpush.msra.mxu0 0.0
    %6008 = vmatpush.msra.mxu0 0.0
    %6009 = vmatpush.msra.mxu0 0.0
    %6010 = vmatpush.msra.mxu0 0.0
    %6011 = vmatpush.msra.mxu0 0.0
    %6012 = vmatpush.msra.mxu0 %v4826
    %6013 = vmatpush.msra.mxu0 %v4822
    %6014 = vmatmul.f32.gmra.mxu0 %v5893
    %v6015 = vpop.f32.mrf.mxu0
    %v6016 = vadd.f32 0.0, %v6015
    %6017 = vmatmul.f32.gmra.mxu0 %v5896
    %v6018 = vpop.f32.mrf.mxu0
    %v6019 = vadd.f32 0.0, %v6018
    %6020 = vmatmul.f32.gmra.mxu0 %v5899
    %v6021 = vpop.f32.mrf.mxu0
    %v6022 = vadd.f32 0.0, %v6021
    %6023 = vmatmul.f32.gmra.mxu0 %v5902
    %v6024 = vpop.f32.mrf.mxu0
    %v6025 = vadd.f32 0.0, %v6024
    %6026 = vmatmul.f32.gmra.mxu0 %v5905
    %v6027 = vpop.f32.mrf.mxu0
    %v6028 = vadd.f32 0.0, %v6027
    %6029 = vmatmul.f32.gmra.mxu0 %v5908
    %v6030 = vpop.f32.mrf.mxu0
    %v6031 = vadd.f32 0.0, %v6030
    %6032 = vmatmul.f32.gmra.mxu0 %v5911
    %v6033 = vpop.f32.mrf.mxu0
    %v6034 = vadd.f32 0.0, %v6033
    %6035 = vmatmul.f32.gmra.mxu0 %v5914
    %v6036 = vpop.f32.mrf.mxu0
    %v6037 = vadd.f32 0.0, %v6036
    %6038 = vdwg.mxu0
    %6039 = vmatpush.msra.mxu0 0.0
    %6040 = vmatpush.msra.mxu0 0.0
    %6041 = vmatpush.msra.mxu0 0.0
    %6042 = vmatpush.msra.mxu0 0.0
    %6043 = vmatpush.msra.mxu0 0.0
    %6044 = vmatpush.msra.mxu0 0.0
    %6045 = vmatpush.msra.mxu0 0.0
    %6046 = vmatpush.msra.mxu0 0.0
    %6047 = vmatpush.msra.mxu0 0.0
    %6048 = vmatpush.msra.mxu0 0.0
    %6049 = vmatpush.msra.mxu0 0.0
    %6050 = vmatpush.msra.mxu0 0.0
    %6051 = vmatpush.msra.mxu0 0.0
    %6052 = vmatpush.msra.mxu0 0.0
    %6053 = vmatpush.msra.mxu0 %v4827
    %6054 = vmatpush.msra.mxu0 %v4823
    %6055 = vmatmul.f32.gmra.mxu0 %v5893
    %v6056 = vpop.f32.mrf.mxu0
    %v6057 = vadd.f32 0.0, %v6056
    %6058 = vmatmul.f32.gmra.mxu0 %v5896
    %v6059 = vpop.f32.mrf.mxu0
    %v6060 = vadd.f32 0.0, %v6059
    %6061 = vmatmul.f32.gmra.mxu0 %v5899
    %v6062 = vpop.f32.mrf.mxu0
    %v6063 = vadd.f32 0.0, %v6062
    %6064 = vmatmul.f32.gmra.mxu0 %v5902
    %v6065 = vpop.f32.mrf.mxu0
    %v6066 = vadd.f32 0.0, %v6065
    %6067 = vmatmul.f32.gmra.mxu0 %v5905
    %v6068 = vpop.f32.mrf.mxu0
    %v6069 = vadd.f32 0.0, %v6068
    %6070 = vmatmul.f32.gmra.mxu0 %v5908
    %v6071 = vpop.f32.mrf.mxu0
    %v6072 = vadd.f32 0.0, %v6071
    %6073 = vmatmul.f32.gmra.mxu0 %v5911
    %v6074 = vpop.f32.mrf.mxu0
    %v6075 = vadd.f32 0.0, %v6074
    %6076 = vmatmul.f32.gmra.mxu0 %v5914
    %v6077 = vpop.f32.mrf.mxu0
    %v6078 = vadd.f32 0.0, %v6077
    %6079 = vdwg.mxu0
    %v6080 = vmul.f32 %v5737, %v5934
    %v6081 = vmul.f32 %v5778, %v5975
    %v6082 = vmul.f32 %v5819, %v6016
    %v6083 = vmul.f32 %v5860, %v6057
    %v6084 = vmul.f32 %v5740, %v5937
    %v6085 = vmul.f32 %v5781, %v5978
    %v6086 = vmul.f32 %v5822, %v6019
    %v6087 = vmul.f32 %v5863, %v6060
    %v6088 = vmul.f32 %v5743, %v5940
    %v6089 = vmul.f32 %v5784, %v5981
    %v6090 = vmul.f32 %v5825, %v6022
    %v6091 = vmul.f32 %v5866, %v6063
    %v6092 = vmul.f32 %v5746, %v5943
    %v6093 = vmul.f32 %v5787, %v5984
    %v6094 = vmul.f32 %v5828, %v6025
    %v6095 = vmul.f32 %v5869, %v6066
    %v6096 = vmul.f32 %v5749, %v5946
    %v6097 = vmul.f32 %v5790, %v5987
    %v6098 = vmul.f32 %v5831, %v6028
    %v6099 = vmul.f32 %v5872, %v6069
    %v6100 = vmul.f32 %v5752, %v5949
    %v6101 = vmul.f32 %v5793, %v5990
    %v6102 = vmul.f32 %v5834, %v6031
    %v6103 = vmul.f32 %v5875, %v6072
    %v6104 = vmul.f32 %v5755, %v5952
    %v6105 = vmul.f32 %v5796, %v5993
    %v6106 = vmul.f32 %v5837, %v6034
    %v6107 = vmul.f32 %v5878, %v6075
    %v6108 = vmul.f32 %v5758, %v5955
    %v6109 = vmul.f32 %v5799, %v5996
    %v6110 = vmul.f32 %v5840, %v6037
    %v6111 = vmul.f32 %v5881, %v6078
    %v6112 = vadd.f32 %v5670, %v6080
    %v6113 = vadd.f32 %v5671, %v6081
    %v6114 = vadd.f32 %v5672, %v6082
    %v6115 = vadd.f32 %v5673, %v6083
    %v6116 = vadd.f32 %v5674, %v6084
    %v6117 = vadd.f32 %v5675, %v6085
    %v6118 = vadd.f32 %v5676, %v6086
    %v6119 = vadd.f32 %v5677, %v6087
    %v6120 = vadd.f32 %v5678, %v6088
    %v6121 = vadd.f32 %v5679, %v6089
    %v6122 = vadd.f32 %v5680, %v6090
    %v6123 = vadd.f32 %v5681, %v6091
    %v6124 = vadd.f32 %v5682, %v6092
    %v6125 = vadd.f32 %v5683, %v6093
    %v6126 = vadd.f32 %v5684, %v6094
    %v6127 = vadd.f32 %v5685, %v6095
    %v6128 = vadd.f32 %v5686, %v6096
    %v6129 = vadd.f32 %v5687, %v6097
    %v6130 = vadd.f32 %v5688, %v6098
    %v6131 = vadd.f32 %v5689, %v6099
    %v6132 = vadd.f32 %v5690, %v6100
    %v6133 = vadd.f32 %v5691, %v6101
    %v6134 = vadd.f32 %v5692, %v6102
    %v6135 = vadd.f32 %v5693, %v6103
    %v6136 = vadd.f32 %v5694, %v6104
    %v6137 = vadd.f32 %v5695, %v6105
    %v6138 = vadd.f32 %v5696, %v6106
    %v6139 = vadd.f32 %v5697, %v6107
    %v6140 = vadd.f32 %v5698, %v6108
    %v6141 = vadd.f32 %v5699, %v6109
    %v6142 = vadd.f32 %v5700, %v6110
    %v6143 = vadd.f32 %v5701, %v6111
    %s6144 = scalar_lea.vmem %s15, 384
    %v6145 = vld [vmem:[%s6144] sm:$0xff]
    %v6146 = vld [vmem:[%s6144 + $0x8] sm:$0xff]
    %v6147 = vld [vmem:[%s6144 + $0x10] sm:$0xff]
    %v6148 = vld [vmem:[%s6144 + $0x18] sm:$0xff]
    %v6149 = vld [vmem:[%s6144 + $0x20] sm:$0xff]
    %v6150 = vld [vmem:[%s6144 + $0x28] sm:$0xff]
    %v6151 = vld [vmem:[%s6144 + $0x30] sm:$0xff]
    %v6152 = vld [vmem:[%s6144 + $0x38] sm:$0xff]
    %v6153 = vld [vmem:[%s6144 + $0x40] sm:$0xff]
    %v6154 = vld [vmem:[%s6144 + $0x48] sm:$0xff]
    %v6155 = vld [vmem:[%s6144 + $0x50] sm:$0xff]
    %v6156 = vld [vmem:[%s6144 + $0x58] sm:$0xff]
    %v6157 = vld [vmem:[%s6144 + $0x60] sm:$0xff]
    %v6158 = vld [vmem:[%s6144 + $0x68] sm:$0xff]
    %v6159 = vld [vmem:[%s6144 + $0x70] sm:$0xff]
    %v6160 = vld [vmem:[%s6144 + $0x78] sm:$0xff]
    %6161 = vmatpush.msra.mxu0 0.0
    %6162 = vmatpush.msra.mxu0 0.0
    %6163 = vmatpush.msra.mxu0 0.0
    %6164 = vmatpush.msra.mxu0 0.0
    %6165 = vmatpush.msra.mxu0 0.0
    %6166 = vmatpush.msra.mxu0 0.0
    %6167 = vmatpush.msra.mxu0 0.0
    %6168 = vmatpush.msra.mxu0 0.0
    %6169 = vmatpush.msra.mxu0 0.0
    %6170 = vmatpush.msra.mxu0 0.0
    %6171 = vmatpush.msra.mxu0 0.0
    %6172 = vmatpush.msra.mxu0 0.0
    %6173 = vmatpush.msra.mxu0 %v6157
    %6174 = vmatpush.msra.mxu0 %v6153
    %6175 = vmatpush.msra.mxu0 %v6149
    %6176 = vmatpush.msra.mxu0 %v6145
    %6177 = vmatmul.f32.gmra.mxu0 %v4845
    %v6178 = vpop.f32.mrf.mxu0
    %v6179 = vadd.f32 0.0, %v6178
    %6180 = vmatmul.f32.gmra.mxu0 %v4848
    %v6181 = vpop.f32.mrf.mxu0
    %v6182 = vadd.f32 0.0, %v6181
    %6183 = vmatmul.f32.gmra.mxu0 %v4851
    %v6184 = vpop.f32.mrf.mxu0
    %v6185 = vadd.f32 0.0, %v6184
    %6186 = vmatmul.f32.gmra.mxu0 %v4854
    %v6187 = vpop.f32.mrf.mxu0
    %v6188 = vadd.f32 0.0, %v6187
    %6189 = vmatmul.f32.gmra.mxu0 %v4857
    %v6190 = vpop.f32.mrf.mxu0
    %v6191 = vadd.f32 0.0, %v6190
    %6192 = vmatmul.f32.gmra.mxu0 %v4860
    %v6193 = vpop.f32.mrf.mxu0
    %v6194 = vadd.f32 0.0, %v6193
    %6195 = vmatmul.f32.gmra.mxu0 %v4863
    %v6196 = vpop.f32.mrf.mxu0
    %v6197 = vadd.f32 0.0, %v6196
    %6198 = vmatmul.f32.gmra.mxu0 %v4866
    %v6199 = vpop.f32.mrf.mxu0
    %v6200 = vadd.f32 0.0, %v6199
    %6201 = vdwg.mxu0
    %6202 = vmatpush.msra.mxu0 0.0
    %6203 = vmatpush.msra.mxu0 0.0
    %6204 = vmatpush.msra.mxu0 0.0
    %6205 = vmatpush.msra.mxu0 0.0
    %6206 = vmatpush.msra.mxu0 0.0
    %6207 = vmatpush.msra.mxu0 0.0
    %6208 = vmatpush.msra.mxu0 0.0
    %6209 = vmatpush.msra.mxu0 0.0
    %6210 = vmatpush.msra.mxu0 0.0
    %6211 = vmatpush.msra.mxu0 0.0
    %6212 = vmatpush.msra.mxu0 0.0
    %6213 = vmatpush.msra.mxu0 0.0
    %6214 = vmatpush.msra.mxu0 %v6158
    %6215 = vmatpush.msra.mxu0 %v6154
    %6216 = vmatpush.msra.mxu0 %v6150
    %6217 = vmatpush.msra.mxu0 %v6146
    %6218 = vmatmul.f32.gmra.mxu0 %v4845
    %v6219 = vpop.f32.mrf.mxu0
    %v6220 = vadd.f32 0.0, %v6219
    %6221 = vmatmul.f32.gmra.mxu0 %v4848
    %v6222 = vpop.f32.mrf.mxu0
    %v6223 = vadd.f32 0.0, %v6222
    %6224 = vmatmul.f32.gmra.mxu0 %v4851
    %v6225 = vpop.f32.mrf.mxu0
    %v6226 = vadd.f32 0.0, %v6225
    %6227 = vmatmul.f32.gmra.mxu0 %v4854
    %v6228 = vpop.f32.mrf.mxu0
    %v6229 = vadd.f32 0.0, %v6228
    %6230 = vmatmul.f32.gmra.mxu0 %v4857
    %v6231 = vpop.f32.mrf.mxu0
    %v6232 = vadd.f32 0.0, %v6231
    %6233 = vmatmul.f32.gmra.mxu0 %v4860
    %v6234 = vpop.f32.mrf.mxu0
    %v6235 = vadd.f32 0.0, %v6234
    %6236 = vmatmul.f32.gmra.mxu0 %v4863
    %v6237 = vpop.f32.mrf.mxu0
    %v6238 = vadd.f32 0.0, %v6237
    %6239 = vmatmul.f32.gmra.mxu0 %v4866
    %v6240 = vpop.f32.mrf.mxu0
    %v6241 = vadd.f32 0.0, %v6240
    %6242 = vdwg.mxu0
    %6243 = vmatpush.msra.mxu0 0.0
    %6244 = vmatpush.msra.mxu0 0.0
    %6245 = vmatpush.msra.mxu0 0.0
    %6246 = vmatpush.msra.mxu0 0.0
    %6247 = vmatpush.msra.mxu0 0.0
    %6248 = vmatpush.msra.mxu0 0.0
    %6249 = vmatpush.msra.mxu0 0.0
    %6250 = vmatpush.msra.mxu0 0.0
    %6251 = vmatpush.msra.mxu0 0.0
    %6252 = vmatpush.msra.mxu0 0.0
    %6253 = vmatpush.msra.mxu0 0.0
    %6254 = vmatpush.msra.mxu0 0.0
    %6255 = vmatpush.msra.mxu0 %v6159
    %6256 = vmatpush.msra.mxu0 %v6155
    %6257 = vmatpush.msra.mxu0 %v6151
    %6258 = vmatpush.msra.mxu0 %v6147
    %6259 = vmatmul.f32.gmra.mxu0 %v4845
    %v6260 = vpop.f32.mrf.mxu0
    %v6261 = vadd.f32 0.0, %v6260
    %6262 = vmatmul.f32.gmra.mxu0 %v4848
    %v6263 = vpop.f32.mrf.mxu0
    %v6264 = vadd.f32 0.0, %v6263
    %6265 = vmatmul.f32.gmra.mxu0 %v4851
    %v6266 = vpop.f32.mrf.mxu0
    %v6267 = vadd.f32 0.0, %v6266
    %6268 = vmatmul.f32.gmra.mxu0 %v4854
    %v6269 = vpop.f32.mrf.mxu0
    %v6270 = vadd.f32 0.0, %v6269
    %6271 = vmatmul.f32.gmra.mxu0 %v4857
    %v6272 = vpop.f32.mrf.mxu0
    %v6273 = vadd.f32 0.0, %v6272
    %6274 = vmatmul.f32.gmra.mxu0 %v4860
    %v6275 = vpop.f32.mrf.mxu0
    %v6276 = vadd.f32 0.0, %v6275
    %6277 = vmatmul.f32.gmra.mxu0 %v4863
    %v6278 = vpop.f32.mrf.mxu0
    %v6279 = vadd.f32 0.0, %v6278
    %6280 = vmatmul.f32.gmra.mxu0 %v4866
    %v6281 = vpop.f32.mrf.mxu0
    %v6282 = vadd.f32 0.0, %v6281
    %6283 = vdwg.mxu0
    %6284 = vmatpush.msra.mxu0 0.0
    %6285 = vmatpush.msra.mxu0 0.0
    %6286 = vmatpush.msra.mxu0 0.0
    %6287 = vmatpush.msra.mxu0 0.0
    %6288 = vmatpush.msra.mxu0 0.0
    %6289 = vmatpush.msra.mxu0 0.0
    %6290 = vmatpush.msra.mxu0 0.0
    %6291 = vmatpush.msra.mxu0 0.0
    %6292 = vmatpush.msra.mxu0 0.0
    %6293 = vmatpush.msra.mxu0 0.0
    %6294 = vmatpush.msra.mxu0 0.0
    %6295 = vmatpush.msra.mxu0 0.0
    %6296 = vmatpush.msra.mxu0 %v6160
    %6297 = vmatpush.msra.mxu0 %v6156
    %6298 = vmatpush.msra.mxu0 %v6152
    %6299 = vmatpush.msra.mxu0 %v6148
    %6300 = vmatmul.f32.gmra.mxu0 %v4845
    %v6301 = vpop.f32.mrf.mxu0
    %v6302 = vadd.f32 0.0, %v6301
    %6303 = vmatmul.f32.gmra.mxu0 %v4848
    %v6304 = vpop.f32.mrf.mxu0
    %v6305 = vadd.f32 0.0, %v6304
    %6306 = vmatmul.f32.gmra.mxu0 %v4851
    %v6307 = vpop.f32.mrf.mxu0
    %v6308 = vadd.f32 0.0, %v6307
    %6309 = vmatmul.f32.gmra.mxu0 %v4854
    %v6310 = vpop.f32.mrf.mxu0
    %v6311 = vadd.f32 0.0, %v6310
    %6312 = vmatmul.f32.gmra.mxu0 %v4857
    %v6313 = vpop.f32.mrf.mxu0
    %v6314 = vadd.f32 0.0, %v6313
    %6315 = vmatmul.f32.gmra.mxu0 %v4860
    %v6316 = vpop.f32.mrf.mxu0
    %v6317 = vadd.f32 0.0, %v6316
    %6318 = vmatmul.f32.gmra.mxu0 %v4863
    %v6319 = vpop.f32.mrf.mxu0
    %v6320 = vadd.f32 0.0, %v6319
    %6321 = vmatmul.f32.gmra.mxu0 %v4866
    %v6322 = vpop.f32.mrf.mxu0
    %v6323 = vadd.f32 0.0, %v6322
    %6324 = vdwg.mxu0
    %s6325 = scalar_lea.vmem %s13, 192
    %v6326 = vld [vmem:[%s6325] sm:$0xff]
    %v6327 = vld [vmem:[%s6325 + $0x8] sm:$0xff]
    %v6328 = vld [vmem:[%s6325 + $0x10] sm:$0xff]
    %v6329 = vld [vmem:[%s6325 + $0x18] sm:$0xff]
    %v6330 = vld [vmem:[%s6325 + $0x20] sm:$0xff]
    %v6331 = vld [vmem:[%s6325 + $0x28] sm:$0xff]
    %v6332 = vld [vmem:[%s6325 + $0x30] sm:$0xff]
    %v6333 = vld [vmem:[%s6325 + $0x38] sm:$0xff]
    %v6335 = vsel %vm276, %v6326, 0
    %v6338 = vsel %vm276, %v6327, 0
    %v6341 = vsel %vm276, %v6328, 0
    %v6344 = vsel %vm276, %v6329, 0
    %v6347 = vsel %vm276, %v6330, 0
    %v6350 = vsel %vm276, %v6331, 0
    %v6353 = vsel %vm276, %v6332, 0
    %v6356 = vsel %vm276, %v6333, 0
    %6358 = vmatpush.msra.mxu0 0.0
    %6359 = vmatpush.msra.mxu0 0.0
    %6360 = vmatpush.msra.mxu0 0.0
    %6361 = vmatpush.msra.mxu0 0.0
    %6362 = vmatpush.msra.mxu0 0.0
    %6363 = vmatpush.msra.mxu0 0.0
    %6364 = vmatpush.msra.mxu0 0.0
    %6365 = vmatpush.msra.mxu0 0.0
    %6366 = vmatpush.msra.mxu0 0.0
    %6367 = vmatpush.msra.mxu0 0.0
    %6368 = vmatpush.msra.mxu0 0.0
    %6369 = vmatpush.msra.mxu0 0.0
    %6370 = vmatpush.msra.mxu0 0.0
    %6371 = vmatpush.msra.mxu0 0.0
    %6372 = vmatpush.msra.mxu0 %v4824
    %6373 = vmatpush.msra.mxu0 %v4820
    %6374 = vmatmul.f32.gmra.mxu0 %v6335
    %v6375 = vpop.f32.mrf.mxu0
    %v6376 = vadd.f32 0.0, %v6375
    %6377 = vmatmul.f32.gmra.mxu0 %v6338
    %v6378 = vpop.f32.mrf.mxu0
    %v6379 = vadd.f32 0.0, %v6378
    %6380 = vmatmul.f32.gmra.mxu0 %v6341
    %v6381 = vpop.f32.mrf.mxu0
    %v6382 = vadd.f32 0.0, %v6381
    %6383 = vmatmul.f32.gmra.mxu0 %v6344
    %v6384 = vpop.f32.mrf.mxu0
    %v6385 = vadd.f32 0.0, %v6384
    %6386 = vmatmul.f32.gmra.mxu0 %v6347
    %v6387 = vpop.f32.mrf.mxu0
    %v6388 = vadd.f32 0.0, %v6387
    %6389 = vmatmul.f32.gmra.mxu0 %v6350
    %v6390 = vpop.f32.mrf.mxu0
    %v6391 = vadd.f32 0.0, %v6390
    %6392 = vmatmul.f32.gmra.mxu0 %v6353
    %v6393 = vpop.f32.mrf.mxu0
    %v6394 = vadd.f32 0.0, %v6393
    %6395 = vmatmul.f32.gmra.mxu0 %v6356
    %v6396 = vpop.f32.mrf.mxu0
    %v6397 = vadd.f32 0.0, %v6396
    %6398 = vdwg.mxu0
    %6399 = vmatpush.msra.mxu0 0.0
    %6400 = vmatpush.msra.mxu0 0.0
    %6401 = vmatpush.msra.mxu0 0.0
    %6402 = vmatpush.msra.mxu0 0.0
    %6403 = vmatpush.msra.mxu0 0.0
    %6404 = vmatpush.msra.mxu0 0.0
    %6405 = vmatpush.msra.mxu0 0.0
    %6406 = vmatpush.msra.mxu0 0.0
    %6407 = vmatpush.msra.mxu0 0.0
    %6408 = vmatpush.msra.mxu0 0.0
    %6409 = vmatpush.msra.mxu0 0.0
    %6410 = vmatpush.msra.mxu0 0.0
    %6411 = vmatpush.msra.mxu0 0.0
    %6412 = vmatpush.msra.mxu0 0.0
    %6413 = vmatpush.msra.mxu0 %v4825
    %6414 = vmatpush.msra.mxu0 %v4821
    %6415 = vmatmul.f32.gmra.mxu0 %v6335
    %v6416 = vpop.f32.mrf.mxu0
    %v6417 = vadd.f32 0.0, %v6416
    %6418 = vmatmul.f32.gmra.mxu0 %v6338
    %v6419 = vpop.f32.mrf.mxu0
    %v6420 = vadd.f32 0.0, %v6419
    %6421 = vmatmul.f32.gmra.mxu0 %v6341
    %v6422 = vpop.f32.mrf.mxu0
    %v6423 = vadd.f32 0.0, %v6422
    %6424 = vmatmul.f32.gmra.mxu0 %v6344
    %v6425 = vpop.f32.mrf.mxu0
    %v6426 = vadd.f32 0.0, %v6425
    %6427 = vmatmul.f32.gmra.mxu0 %v6347
    %v6428 = vpop.f32.mrf.mxu0
    %v6429 = vadd.f32 0.0, %v6428
    %6430 = vmatmul.f32.gmra.mxu0 %v6350
    %v6431 = vpop.f32.mrf.mxu0
    %v6432 = vadd.f32 0.0, %v6431
    %6433 = vmatmul.f32.gmra.mxu0 %v6353
    %v6434 = vpop.f32.mrf.mxu0
    %v6435 = vadd.f32 0.0, %v6434
    %6436 = vmatmul.f32.gmra.mxu0 %v6356
    %v6437 = vpop.f32.mrf.mxu0
    %v6438 = vadd.f32 0.0, %v6437
    %6439 = vdwg.mxu0
    %6440 = vmatpush.msra.mxu0 0.0
    %6441 = vmatpush.msra.mxu0 0.0
    %6442 = vmatpush.msra.mxu0 0.0
    %6443 = vmatpush.msra.mxu0 0.0
    %6444 = vmatpush.msra.mxu0 0.0
    %6445 = vmatpush.msra.mxu0 0.0
    %6446 = vmatpush.msra.mxu0 0.0
    %6447 = vmatpush.msra.mxu0 0.0
    %6448 = vmatpush.msra.mxu0 0.0
    %6449 = vmatpush.msra.mxu0 0.0
    %6450 = vmatpush.msra.mxu0 0.0
    %6451 = vmatpush.msra.mxu0 0.0
    %6452 = vmatpush.msra.mxu0 0.0
    %6453 = vmatpush.msra.mxu0 0.0
    %6454 = vmatpush.msra.mxu0 %v4826
    %6455 = vmatpush.msra.mxu0 %v4822
    %6456 = vmatmul.f32.gmra.mxu0 %v6335
    %v6457 = vpop.f32.mrf.mxu0
    %v6458 = vadd.f32 0.0, %v6457
    %6459 = vmatmul.f32.gmra.mxu0 %v6338
    %v6460 = vpop.f32.mrf.mxu0
    %v6461 = vadd.f32 0.0, %v6460
    %6462 = vmatmul.f32.gmra.mxu0 %v6341
    %v6463 = vpop.f32.mrf.mxu0
    %v6464 = vadd.f32 0.0, %v6463
    %6465 = vmatmul.f32.gmra.mxu0 %v6344
    %v6466 = vpop.f32.mrf.mxu0
    %v6467 = vadd.f32 0.0, %v6466
    %6468 = vmatmul.f32.gmra.mxu0 %v6347
    %v6469 = vpop.f32.mrf.mxu0
    %v6470 = vadd.f32 0.0, %v6469
    %6471 = vmatmul.f32.gmra.mxu0 %v6350
    %v6472 = vpop.f32.mrf.mxu0
    %v6473 = vadd.f32 0.0, %v6472
    %6474 = vmatmul.f32.gmra.mxu0 %v6353
    %v6475 = vpop.f32.mrf.mxu0
    %v6476 = vadd.f32 0.0, %v6475
    %6477 = vmatmul.f32.gmra.mxu0 %v6356
    %v6478 = vpop.f32.mrf.mxu0
    %v6479 = vadd.f32 0.0, %v6478
    %6480 = vdwg.mxu0
    %6481 = vmatpush.msra.mxu0 0.0
    %6482 = vmatpush.msra.mxu0 0.0
    %6483 = vmatpush.msra.mxu0 0.0
    %6484 = vmatpush.msra.mxu0 0.0
    %6485 = vmatpush.msra.mxu0 0.0
    %6486 = vmatpush.msra.mxu0 0.0
    %6487 = vmatpush.msra.mxu0 0.0
    %6488 = vmatpush.msra.mxu0 0.0
    %6489 = vmatpush.msra.mxu0 0.0
    %6490 = vmatpush.msra.mxu0 0.0
    %6491 = vmatpush.msra.mxu0 0.0
    %6492 = vmatpush.msra.mxu0 0.0
    %6493 = vmatpush.msra.mxu0 0.0
    %6494 = vmatpush.msra.mxu0 0.0
    %6495 = vmatpush.msra.mxu0 %v4827
    %6496 = vmatpush.msra.mxu0 %v4823
    %6497 = vmatmul.f32.gmra.mxu0 %v6335
    %v6498 = vpop.f32.mrf.mxu0
    %v6499 = vadd.f32 0.0, %v6498
    %6500 = vmatmul.f32.gmra.mxu0 %v6338
    %v6501 = vpop.f32.mrf.mxu0
    %v6502 = vadd.f32 0.0, %v6501
    %6503 = vmatmul.f32.gmra.mxu0 %v6341
    %v6504 = vpop.f32.mrf.mxu0
    %v6505 = vadd.f32 0.0, %v6504
    %6506 = vmatmul.f32.gmra.mxu0 %v6344
    %v6507 = vpop.f32.mrf.mxu0
    %v6508 = vadd.f32 0.0, %v6507
    %6509 = vmatmul.f32.gmra.mxu0 %v6347
    %v6510 = vpop.f32.mrf.mxu0
    %v6511 = vadd.f32 0.0, %v6510
    %6512 = vmatmul.f32.gmra.mxu0 %v6350
    %v6513 = vpop.f32.mrf.mxu0
    %v6514 = vadd.f32 0.0, %v6513
    %6515 = vmatmul.f32.gmra.mxu0 %v6353
    %v6516 = vpop.f32.mrf.mxu0
    %v6517 = vadd.f32 0.0, %v6516
    %6518 = vmatmul.f32.gmra.mxu0 %v6356
    %v6519 = vpop.f32.mrf.mxu0
    %v6520 = vadd.f32 0.0, %v6519
    %6521 = vdwg.mxu0
    %v6522 = vmul.f32 %v6179, %v6376
    %v6523 = vmul.f32 %v6220, %v6417
    %v6524 = vmul.f32 %v6261, %v6458
    %v6525 = vmul.f32 %v6302, %v6499
    %v6526 = vmul.f32 %v6182, %v6379
    %v6527 = vmul.f32 %v6223, %v6420
    %v6528 = vmul.f32 %v6264, %v6461
    %v6529 = vmul.f32 %v6305, %v6502
    %v6530 = vmul.f32 %v6185, %v6382
    %v6531 = vmul.f32 %v6226, %v6423
    %v6532 = vmul.f32 %v6267, %v6464
    %v6533 = vmul.f32 %v6308, %v6505
    %v6534 = vmul.f32 %v6188, %v6385
    %v6535 = vmul.f32 %v6229, %v6426
    %v6536 = vmul.f32 %v6270, %v6467
    %v6537 = vmul.f32 %v6311, %v6508
    %v6538 = vmul.f32 %v6191, %v6388
    %v6539 = vmul.f32 %v6232, %v6429
    %v6540 = vmul.f32 %v6273, %v6470
    %v6541 = vmul.f32 %v6314, %v6511
    %v6542 = vmul.f32 %v6194, %v6391
    %v6543 = vmul.f32 %v6235, %v6432
    %v6544 = vmul.f32 %v6276, %v6473
    %v6545 = vmul.f32 %v6317, %v6514
    %v6546 = vmul.f32 %v6197, %v6394
    %v6547 = vmul.f32 %v6238, %v6435
    %v6548 = vmul.f32 %v6279, %v6476
    %v6549 = vmul.f32 %v6320, %v6517
    %v6550 = vmul.f32 %v6200, %v6397
    %v6551 = vmul.f32 %v6241, %v6438
    %v6552 = vmul.f32 %v6282, %v6479
    %v6553 = vmul.f32 %v6323, %v6520
    %v6554 = vadd.f32 %v6112, %v6522
    %v6555 = vadd.f32 %v6113, %v6523
    %v6556 = vadd.f32 %v6114, %v6524
    %v6557 = vadd.f32 %v6115, %v6525
    %v6558 = vadd.f32 %v6116, %v6526
    %v6559 = vadd.f32 %v6117, %v6527
    %v6560 = vadd.f32 %v6118, %v6528
    %v6561 = vadd.f32 %v6119, %v6529
    %v6562 = vadd.f32 %v6120, %v6530
    %v6563 = vadd.f32 %v6121, %v6531
    %v6564 = vadd.f32 %v6122, %v6532
    %v6565 = vadd.f32 %v6123, %v6533
    %v6566 = vadd.f32 %v6124, %v6534
    %v6567 = vadd.f32 %v6125, %v6535
    %v6568 = vadd.f32 %v6126, %v6536
    %v6569 = vadd.f32 %v6127, %v6537
    %v6570 = vadd.f32 %v6128, %v6538
    %v6571 = vadd.f32 %v6129, %v6539
    %v6572 = vadd.f32 %v6130, %v6540
    %v6573 = vadd.f32 %v6131, %v6541
    %v6574 = vadd.f32 %v6132, %v6542
    %v6575 = vadd.f32 %v6133, %v6543
    %v6576 = vadd.f32 %v6134, %v6544
    %v6577 = vadd.f32 %v6135, %v6545
    %v6578 = vadd.f32 %v6136, %v6546
    %v6579 = vadd.f32 %v6137, %v6547
    %v6580 = vadd.f32 %v6138, %v6548
    %v6581 = vadd.f32 %v6139, %v6549
    %v6582 = vadd.f32 %v6140, %v6550
    %v6583 = vadd.f32 %v6141, %v6551
    %v6584 = vadd.f32 %v6142, %v6552
    %v6585 = vadd.f32 %v6143, %v6553
    %6586 = vst [vmem:[#allocation7] sm:$0xff] 0.0
    %6587 = vst [vmem:[#allocation7 + $0x8] sm:$0xff] 0.0
    %6588 = vst [vmem:[#allocation7 + $0x10] sm:$0xff] 0.0
    %6589 = vst [vmem:[#allocation7 + $0x18] sm:$0xff] 0.0
    %6590 = vst [vmem:[#allocation7 + $0x20] sm:$0xff] 0.0
    %6591 = vst [vmem:[#allocation7 + $0x28] sm:$0xff] 0.0
    %6592 = vst [vmem:[#allocation7 + $0x30] sm:$0xff] 0.0
    %6593 = vst [vmem:[#allocation7 + $0x38] sm:$0xff] 0.0
    %6594 = vst [vmem:[#allocation7 + $0x40] sm:$0xff] 0.0
    %6595 = vst [vmem:[#allocation7 + $0x48] sm:$0xff] 0.0
    %6596 = vst [vmem:[#allocation7 + $0x50] sm:$0xff] 0.0
    %6597 = vst [vmem:[#allocation7 + $0x58] sm:$0xff] 0.0
    %6598 = vst [vmem:[#allocation7 + $0x60] sm:$0xff] 0.0
    %6599 = vst [vmem:[#allocation7 + $0x68] sm:$0xff] 0.0
    %6600 = vst [vmem:[#allocation7 + $0x70] sm:$0xff] 0.0
    %6601 = vst [vmem:[#allocation7 + $0x78] sm:$0xff] 0.0
    %6602 = vst [vmem:[#allocation7 + $0x80] sm:$0xff] 0.0
    %6603 = vst [vmem:[#allocation7 + $0x88] sm:$0xff] 0.0
    %6604 = vst [vmem:[#allocation7 + $0x90] sm:$0xff] 0.0
    %6605 = vst [vmem:[#allocation7 + $0x98] sm:$0xff] 0.0
    %6606 = vst [vmem:[#allocation7 + $0xa0] sm:$0xff] 0.0
    %6607 = vst [vmem:[#allocation7 + $0xa8] sm:$0xff] 0.0
    %6608 = vst [vmem:[#allocation7 + $0xb0] sm:$0xff] 0.0
    %6609 = vst [vmem:[#allocation7 + $0xb8] sm:$0xff] 0.0
    %6610 = vst [vmem:[#allocation7 + $0xc0] sm:$0xff] 0.0
    %6611 = vst [vmem:[#allocation7 + $0xc8] sm:$0xff] 0.0
    %6612 = vst [vmem:[#allocation7 + $0xd0] sm:$0xff] 0.0
    %6613 = vst [vmem:[#allocation7 + $0xd8] sm:$0xff] 0.0
    %6614 = vst [vmem:[#allocation7 + $0xe0] sm:$0xff] 0.0
    %6615 = vst [vmem:[#allocation7 + $0xe8] sm:$0xff] 0.0
    %6616 = vst [vmem:[#allocation7 + $0xf0] sm:$0xff] 0.0
    %6617 = vst [vmem:[#allocation7 + $0xf8] sm:$0xff] 0.0
    %6618 = vst [vmem:[#allocation7 + $0x100] sm:$0xff] 0.0
    %6619 = vst [vmem:[#allocation7 + $0x108] sm:$0xff] 0.0
    %6620 = vst [vmem:[#allocation7 + $0x110] sm:$0xff] 0.0
    %6621 = vst [vmem:[#allocation7 + $0x118] sm:$0xff] 0.0
    %6622 = vst [vmem:[#allocation7 + $0x120] sm:$0xff] 0.0
    %6623 = vst [vmem:[#allocation7 + $0x128] sm:$0xff] 0.0
    %6624 = vst [vmem:[#allocation7 + $0x130] sm:$0xff] 0.0
    %6625 = vst [vmem:[#allocation7 + $0x138] sm:$0xff] 0.0
    %6626 = vst [vmem:[#allocation7 + $0x140] sm:$0xff] 0.0
    %6627 = vst [vmem:[#allocation7 + $0x148] sm:$0xff] 0.0
    %6628 = vst [vmem:[#allocation7 + $0x150] sm:$0xff] 0.0
    %6629 = vst [vmem:[#allocation7 + $0x158] sm:$0xff] 0.0
    %6630 = vst [vmem:[#allocation7 + $0x160] sm:$0xff] 0.0
    %6631 = vst [vmem:[#allocation7 + $0x168] sm:$0xff] 0.0
    %6632 = vst [vmem:[#allocation7 + $0x170] sm:$0xff] 0.0
    %6633 = vst [vmem:[#allocation7 + $0x178] sm:$0xff] 0.0
    %6634 = vst [vmem:[#allocation7 + $0x8] sm:$0xff] %v6554
    %6635 = vst [vmem:[#allocation7 + $0x10] sm:$0xff] %v6555
    %6636 = vst [vmem:[#allocation7 + $0x18] sm:$0xff] %v6556
    %6637 = vst [vmem:[#allocation7 + $0x20] sm:$0xff] %v6557
    %6638 = vst [vmem:[#allocation7 + $0x38] sm:$0xff] %v6558
    %6639 = vst [vmem:[#allocation7 + $0x40] sm:$0xff] %v6559
    %6640 = vst [vmem:[#allocation7 + $0x48] sm:$0xff] %v6560
    %6641 = vst [vmem:[#allocation7 + $0x50] sm:$0xff] %v6561
    %6642 = vst [vmem:[#allocation7 + $0x68] sm:$0xff] %v6562
    %6643 = vst [vmem:[#allocation7 + $0x70] sm:$0xff] %v6563
    %6644 = vst [vmem:[#allocation7 + $0x78] sm:$0xff] %v6564
    %6645 = vst [vmem:[#allocation7 + $0x80] sm:$0xff] %v6565
    %6646 = vst [vmem:[#allocation7 + $0x98] sm:$0xff] %v6566
    %6647 = vst [vmem:[#allocation7 + $0xa0] sm:$0xff] %v6567
    %6648 = vst [vmem:[#allocation7 + $0xa8] sm:$0xff] %v6568
    %6649 = vst [vmem:[#allocation7 + $0xb0] sm:$0xff] %v6569
    %6650 = vst [vmem:[#allocation7 + $0xc8] sm:$0xff] %v6570
    %6651 = vst [vmem:[#allocation7 + $0xd0] sm:$0xff] %v6571
    %6652 = vst [vmem:[#allocation7 + $0xd8] sm:$0xff] %v6572
    %6653 = vst [vmem:[#allocation7 + $0xe0] sm:$0xff] %v6573
    %6654 = vst [vmem:[#allocation7 + $0xf8] sm:$0xff] %v6574
    %6655 = vst [vmem:[#allocation7 + $0x100] sm:$0xff] %v6575
    %6656 = vst [vmem:[#allocation7 + $0x108] sm:$0xff] %v6576
    %6657 = vst [vmem:[#allocation7 + $0x110] sm:$0xff] %v6577
    %6658 = vst [vmem:[#allocation7 + $0x128] sm:$0xff] %v6578
    %6659 = vst [vmem:[#allocation7 + $0x130] sm:$0xff] %v6579
    %6660 = vst [vmem:[#allocation7 + $0x138] sm:$0xff] %v6580
    %6661 = vst [vmem:[#allocation7 + $0x140] sm:$0xff] %v6581
    %6662 = vst [vmem:[#allocation7 + $0x158] sm:$0xff] %v6582
    %6663 = vst [vmem:[#allocation7 + $0x160] sm:$0xff] %v6583
    %6664 = vst [vmem:[#allocation7 + $0x168] sm:$0xff] %v6584
    %6665 = vst [vmem:[#allocation7 + $0x170] sm:$0xff] %v6585
    %v6666 = vld [vmem:[#allocation5] sm:$0xff]
    %v6667 = vld [vmem:[#allocation5 + $0x8] sm:$0xff]
    %v6668 = vld [vmem:[#allocation5 + $0x10] sm:$0xff]
    %v6669 = vld [vmem:[#allocation5 + $0x18] sm:$0xff]
    %v6670 = vld [vmem:[#allocation5 + $0x20] sm:$0xff]
    %v6671 = vld [vmem:[#allocation5 + $0x30] sm:$0xff]
    %v6672 = vld [vmem:[#allocation5 + $0x38] sm:$0xff]
    %v6673 = vld [vmem:[#allocation5 + $0x40] sm:$0xff]
    %v6674 = vld [vmem:[#allocation5 + $0x48] sm:$0xff]
    %v6675 = vld [vmem:[#allocation5 + $0x50] sm:$0xff]
    %v6676 = vld [vmem:[#allocation13] ss:$8 sm:$0xf]
    %v6677 = vld [vmem:[%s16] sm:$0xff]
    %v6678 = vld [vmem:[%s16 + $0x8] sm:$0xff]
    %6680 = vset.pattern.permute.xlu0 0
    %6681 = vperm.xlu0 %6680, %v6677
    %v6682 = vpop.permute.xlu0 %6681
    %6685 = vset.pattern.permute.xlu0 0
    %6686 = vperm.xlu0 %6685, %v6678
    %v6687 = vpop.permute.xlu0 %6686
    %v6689 = vmul.f32 %v6666, %v6682
    %v6690 = vmul.f32 %v6667, %v6682
    %v6691 = vmul.f32 %v6668, %v6682
    %v6692 = vmul.f32 %v6669, %v6682
    %v6693 = vmul.f32 %v6670, %v6682
    %v6694 = vmul.f32 %v6671, %v6687
    %v6695 = vmul.f32 %v6672, %v6687
    %v6696 = vmul.f32 %v6673, %v6687
    %v6697 = vmul.f32 %v6674, %v6687
    %v6698 = vmul.f32 %v6675, %v6687
    %vm6699 = vcmask 1048440
    %v6700 = vsel %vm6699, %v6689, 0.0
    %v6701 = vsel %vm6699, %v6694, 0.0
    %v6702 = vadd.f32 %v6700, %v6701
    %v6703 = vrot.slane %v6702, 4
    %v6704 = vadd.f32 %v6702, %v6703
    %v6705 = vrot.slane %v6704, 2
    %v6706 = vadd.f32 %v6704, %v6705
    %v6707 = vrot.slane %v6706, 1
    %v6708 = vadd.f32 %v6706, %v6707
    %v6709 = vadd.f32 %v6690, %v6695
    %v6710 = vrot.slane %v6709, 4
    %v6711 = vadd.f32 %v6709, %v6710
    %v6712 = vrot.slane %v6711, 2
    %v6713 = vadd.f32 %v6711, %v6712
    %v6714 = vrot.slane %v6713, 1
    %v6715 = vadd.f32 %v6713, %v6714
    %v6716 = vadd.f32 %v6691, %v6696
    %v6717 = vrot.slane %v6716, 4
    %v6718 = vadd.f32 %v6716, %v6717
    %v6719 = vrot.slane %v6718, 2
    %v6720 = vadd.f32 %v6718, %v6719
    %v6721 = vrot.slane %v6720, 1
    %v6722 = vadd.f32 %v6720, %v6721
    %v6723 = vadd.f32 %v6692, %v6697
    %v6724 = vrot.slane %v6723, 4
    %v6725 = vadd.f32 %v6723, %v6724
    %v6726 = vrot.slane %v6725, 2
    %v6727 = vadd.f32 %v6725, %v6726
    %v6728 = vrot.slane %v6727, 1
    %v6729 = vadd.f32 %v6727, %v6728
    %v6730 = vsel %vm978, %v6693, 0.0
    %v6731 = vsel %vm978, %v6698, 0.0
    %v6732 = vadd.f32 %v6730, %v6731
    %v6733 = vrot.slane %v6732, 4
    %v6734 = vadd.f32 %v6732, %v6733
    %v6735 = vrot.slane %v6734, 2
    %v6736 = vadd.f32 %v6734, %v6735
    %v6737 = vrot.slane %v6736, 1
    %v6738 = vadd.f32 %v6736, %v6737
    %v6744 = vrot.slane %v6715, 7
    %v6745 = vrot.slane %v6722, 6
    %v6746 = vrot.slane %v6729, 5
    %v6747 = vrot.slane %v6738, 4
    %vm6748 = vcmask 1040384
    %v6749 = vsel %vm6748, %v6708, %v6744
    %vm6750 = vcmask 1041408
    %v6751 = vsel %vm6750, %v6749, %v6745
    %vm6752 = vcmask 1043459
    %v6753 = vsel %vm6752, %v6746, %v6747
    %vm6754 = vcmask 1042432
    %v6755 = vsel %vm6754, %v6751, %v6753
    %6756 = vrot.lane.b32.xlu0 %v6755, 17
    %v6757 = vpop.permute.xlu0 %6756
    %v6758 = vrot.slane %v6757, 1
    %v6759 = vsel %vm229, %v6757, %v6758
    %v6761 = vmul.f32 %v6676, %v6759
    %s6762 = scalar_lea.vmem [#allocation13], 1
    %v6763 = vld [vmem:[%s6762] ss:$8 sm:$0xf]
    %s6764 = scalar_lea.vmem %s16, 16
    %v6765 = vld [vmem:[%s6764] sm:$0xff]
    %v6766 = vld [vmem:[%s6764 + $0x8] sm:$0xff]
    %6768 = vset.pattern.permute.xlu0 0
    %6769 = vperm.xlu0 %6768, %v6765
    %v6770 = vpop.permute.xlu0 %6769
    %6773 = vset.pattern.permute.xlu0 0
    %6774 = vperm.xlu0 %6773, %v6766
    %v6775 = vpop.permute.xlu0 %6774
    %v6777 = vmul.f32 %v6666, %v6770
    %v6778 = vmul.f32 %v6667, %v6770
    %v6779 = vmul.f32 %v6668, %v6770
    %v6780 = vmul.f32 %v6669, %v6770
    %v6781 = vmul.f32 %v6670, %v6770
    %v6782 = vmul.f32 %v6671, %v6775
    %v6783 = vmul.f32 %v6672, %v6775
    %v6784 = vmul.f32 %v6673, %v6775
    %v6785 = vmul.f32 %v6674, %v6775
    %v6786 = vmul.f32 %v6675, %v6775
    %vm6787 = vcmask 1048448
    %v6788 = vsel %vm6787, %v6777, 0.0
    %v6789 = vsel %vm6787, %v6782, 0.0
    %v6790 = vadd.f32 %v6788, %v6789
    %v6791 = vrot.slane %v6790, 4
    %v6792 = vadd.f32 %v6790, %v6791
    %v6793 = vrot.slane %v6792, 2
    %v6794 = vadd.f32 %v6792, %v6793
    %v6795 = vrot.slane %v6794, 1
    %v6796 = vadd.f32 %v6794, %v6795
    %v6797 = vadd.f32 %v6778, %v6783
    %v6798 = vrot.slane %v6797, 4
    %v6799 = vadd.f32 %v6797, %v6798
    %v6800 = vrot.slane %v6799, 2
    %v6801 = vadd.f32 %v6799, %v6800
    %v6802 = vrot.slane %v6801, 1
    %v6803 = vadd.f32 %v6801, %v6802
    %v6804 = vadd.f32 %v6779, %v6784
    %v6805 = vrot.slane %v6804, 4
    %v6806 = vadd.f32 %v6804, %v6805
    %v6807 = vrot.slane %v6806, 2
    %v6808 = vadd.f32 %v6806, %v6807
    %v6809 = vrot.slane %v6808, 1
    %v6810 = vadd.f32 %v6808, %v6809
    %v6811 = vadd.f32 %v6780, %v6785
    %v6812 = vrot.slane %v6811, 4
    %v6813 = vadd.f32 %v6811, %v6812
    %v6814 = vrot.slane %v6813, 2
    %v6815 = vadd.f32 %v6813, %v6814
    %v6816 = vrot.slane %v6815, 1
    %v6817 = vadd.f32 %v6815, %v6816
    %v6818 = vsel %vm931, %v6781, 0.0
    %v6819 = vsel %vm931, %v6786, 0.0
    %v6820 = vadd.f32 %v6818, %v6819
    %v6821 = vrot.slane %v6820, 4
    %v6822 = vadd.f32 %v6820, %v6821
    %v6823 = vrot.slane %v6822, 2
    %v6824 = vadd.f32 %v6822, %v6823
    %v6825 = vrot.slane %v6824, 1
    %v6826 = vadd.f32 %v6824, %v6825
    %v6832 = vrot.slane %v6803, 7
    %v6833 = vrot.slane %v6810, 6
    %v6834 = vrot.slane %v6817, 5
    %v6835 = vrot.slane %v6826, 4
    %v6836 = vsel %vm6748, %v6796, %v6832
    %v6837 = vsel %vm6750, %v6836, %v6833
    %v6838 = vsel %vm6752, %v6834, %v6835
    %v6839 = vsel %vm6754, %v6837, %v6838
    %6840 = vrot.lane.b32.xlu0 %v6839, 16
    %v6841 = vpop.permute.xlu0 %6840
    %v6842 = vrot.slane %v6841, 1
    %v6843 = vsel %vm276, %v6841, %v6842
    %v6845 = vmul.f32 %v6763, %v6843
    %v6846 = vadd.f32 %v6761, %v6845
    %s6847 = scalar_lea.vmem [#allocation13], 2
    %v6848 = vld [vmem:[%s6847] ss:$8 sm:$0xf]
    %s6849 = scalar_lea.vmem %s16, 32
    %v6850 = vld [vmem:[%s6849] sm:$0xff]
    %v6851 = vld [vmem:[%s6849 + $0x8] sm:$0xff]
    %6853 = vset.pattern.permute.xlu0 0
    %6854 = vperm.xlu0 %6853, %v6850
    %v6855 = vpop.permute.xlu0 %6854
    %6858 = vset.pattern.permute.xlu0 0
    %6859 = vperm.xlu0 %6858, %v6851
    %v6860 = vpop.permute.xlu0 %6859
    %v6862 = vmul.f32 %v6666, %v6855
    %v6863 = vmul.f32 %v6667, %v6855
    %v6864 = vmul.f32 %v6668, %v6855
    %v6865 = vmul.f32 %v6669, %v6855
    %v6866 = vmul.f32 %v6670, %v6855
    %v6867 = vmul.f32 %v6671, %v6860
    %v6868 = vmul.f32 %v6672, %v6860
    %v6869 = vmul.f32 %v6673, %v6860
    %v6870 = vmul.f32 %v6674, %v6860
    %v6871 = vmul.f32 %v6675, %v6860
    %vm6872 = vcmask 1048456
    %v6873 = vsel %vm6872, %v6862, 0.0
    %v6874 = vsel %vm6872, %v6867, 0.0
    %v6875 = vadd.f32 %v6873, %v6874
    %v6876 = vrot.slane %v6875, 4
    %v6877 = vadd.f32 %v6875, %v6876
    %v6878 = vrot.slane %v6877, 2
    %v6879 = vadd.f32 %v6877, %v6878
    %v6880 = vrot.slane %v6879, 1
    %v6881 = vadd.f32 %v6879, %v6880
    %v6882 = vadd.f32 %v6863, %v6868
    %v6883 = vrot.slane %v6882, 4
    %v6884 = vadd.f32 %v6882, %v6883
    %v6885 = vrot.slane %v6884, 2
    %v6886 = vadd.f32 %v6884, %v6885
    %v6887 = vrot.slane %v6886, 1
    %v6888 = vadd.f32 %v6886, %v6887
    %v6889 = vadd.f32 %v6864, %v6869
    %v6890 = vrot.slane %v6889, 4
    %v6891 = vadd.f32 %v6889, %v6890
    %v6892 = vrot.slane %v6891, 2
    %v6893 = vadd.f32 %v6891, %v6892
    %v6894 = vrot.slane %v6893, 1
    %v6895 = vadd.f32 %v6893, %v6894
    %v6896 = vadd.f32 %v6865, %v6870
    %v6897 = vrot.slane %v6896, 4
    %v6898 = vadd.f32 %v6896, %v6897
    %v6899 = vrot.slane %v6898, 2
    %v6900 = vadd.f32 %v6898, %v6899
    %v6901 = vrot.slane %v6900, 1
    %v6902 = vadd.f32 %v6900, %v6901
    %v6903 = vsel %vm884, %v6866, 0.0
    %v6904 = vsel %vm884, %v6871, 0.0
    %v6905 = vadd.f32 %v6903, %v6904
    %v6906 = vrot.slane %v6905, 4
    %v6907 = vadd.f32 %v6905, %v6906
    %v6908 = vrot.slane %v6907, 2
    %v6909 = vadd.f32 %v6907, %v6908
    %v6910 = vrot.slane %v6909, 1
    %v6911 = vadd.f32 %v6909, %v6910
    %v6917 = vrot.slane %v6888, 7
    %v6918 = vrot.slane %v6895, 6
    %v6919 = vrot.slane %v6902, 5
    %v6920 = vrot.slane %v6911, 4
    %v6921 = vsel %vm6748, %v6881, %v6917
    %v6922 = vsel %vm6750, %v6921, %v6918
    %v6923 = vsel %vm6752, %v6919, %v6920
    %v6924 = vsel %vm6754, %v6922, %v6923
    %6925 = vrot.lane.b32.xlu0 %v6924, 15
    %v6926 = vpop.permute.xlu0 %6925
    %v6927 = vrot.slane %v6926, 1
    %v6928 = vsel %vm323, %v6926, %v6927
    %v6930 = vmul.f32 %v6848, %v6928
    %v6931 = vadd.f32 %v6846, %v6930
    %s6932 = scalar_lea.vmem [#allocation13], 3
    %v6933 = vld [vmem:[%s6932] ss:$8 sm:$0xf]
    %s6934 = scalar_lea.vmem %s16, 48
    %v6935 = vld [vmem:[%s6934] sm:$0xff]
    %v6936 = vld [vmem:[%s6934 + $0x8] sm:$0xff]
    %6938 = vset.pattern.permute.xlu0 0
    %6939 = vperm.xlu0 %6938, %v6935
    %v6940 = vpop.permute.xlu0 %6939
    %6943 = vset.pattern.permute.xlu0 0
    %6944 = vperm.xlu0 %6943, %v6936
    %v6945 = vpop.permute.xlu0 %6944
    %v6947 = vmul.f32 %v6666, %v6940
    %v6948 = vmul.f32 %v6667, %v6940
    %v6949 = vmul.f32 %v6668, %v6940
    %v6950 = vmul.f32 %v6669, %v6940
    %v6951 = vmul.f32 %v6670, %v6940
    %v6952 = vmul.f32 %v6671, %v6945
    %v6953 = vmul.f32 %v6672, %v6945
    %v6954 = vmul.f32 %v6673, %v6945
    %v6955 = vmul.f32 %v6674, %v6945
    %v6956 = vmul.f32 %v6675, %v6945
    %vm6957 = vcmask 1048568
    %v6958 = vsel %vm6957, %v6947, 0.0
    %v6959 = vsel %vm6957, %v6952, 0.0
    %v6960 = vadd.f32 %v6958, %v6959
    %v6961 = vrot.slane %v6960, 4
    %v6962 = vadd.f32 %v6960, %v6961
    %v6963 = vrot.slane %v6962, 2
    %v6964 = vadd.f32 %v6962, %v6963
    %v6965 = vrot.slane %v6964, 1
    %v6966 = vadd.f32 %v6964, %v6965
    %v6967 = vadd.f32 %v6948, %v6953
    %v6968 = vrot.slane %v6967, 4
    %v6969 = vadd.f32 %v6967, %v6968
    %v6970 = vrot.slane %v6969, 2
    %v6971 = vadd.f32 %v6969, %v6970
    %v6972 = vrot.slane %v6971, 1
    %v6973 = vadd.f32 %v6971, %v6972
    %v6974 = vadd.f32 %v6949, %v6954
    %v6975 = vrot.slane %v6974, 4
    %v6976 = vadd.f32 %v6974, %v6975
    %v6977 = vrot.slane %v6976, 2
    %v6978 = vadd.f32 %v6976, %v6977
    %v6979 = vrot.slane %v6978, 1
    %v6980 = vadd.f32 %v6978, %v6979
    %v6981 = vadd.f32 %v6950, %v6955
    %v6982 = vrot.slane %v6981, 4
    %v6983 = vadd.f32 %v6981, %v6982
    %v6984 = vrot.slane %v6983, 2
    %v6985 = vadd.f32 %v6983, %v6984
    %v6986 = vrot.slane %v6985, 1
    %v6987 = vadd.f32 %v6985, %v6986
    %v6988 = vsel %vm649, %v6951, 0.0
    %v6989 = vsel %vm649, %v6956, 0.0
    %v6990 = vadd.f32 %v6988, %v6989
    %v6991 = vrot.slane %v6990, 4
    %v6992 = vadd.f32 %v6990, %v6991
    %v6993 = vrot.slane %v6992, 2
    %v6994 = vadd.f32 %v6992, %v6993
    %v6995 = vrot.slane %v6994, 1
    %v6996 = vadd.f32 %v6994, %v6995
    %v7002 = vrot.slane %v6973, 7
    %v7003 = vrot.slane %v6980, 6
    %v7004 = vrot.slane %v6987, 5
    %v7005 = vrot.slane %v6996, 4
    %v7006 = vsel %vm6748, %v6966, %v7002
    %v7007 = vsel %vm6750, %v7006, %v7003
    %v7008 = vsel %vm6752, %v7004, %v7005
    %v7009 = vsel %vm6754, %v7007, %v7008
    %7010 = vrot.lane.b32.xlu0 %v7009, 1
    %v7011 = vpop.permute.xlu0 %7010
    %v7012 = vrot.slane %v7011, 1
    %v7013 = vsel %vm558, %v7011, %v7012
    %v7015 = vmul.f32 %v6933, %v7013
    %v7016 = vadd.f32 %v6931, %v7015
    %s7017 = scalar_lea.vmem [#allocation13], 4
    %v7018 = vld [vmem:[%s7017] ss:$8 sm:$0xf]
    %s7019 = scalar_lea.vmem %s16, 64
    %v7020 = vld [vmem:[%s7019] sm:$0xff]
    %v7021 = vld [vmem:[%s7019 + $0x8] sm:$0xff]
    %7023 = vset.pattern.permute.xlu0 0
    %7024 = vperm.xlu0 %7023, %v7020
    %v7025 = vpop.permute.xlu0 %7024
    %7028 = vset.pattern.permute.xlu0 0
    %7029 = vperm.xlu0 %7028, %v7021
    %v7030 = vpop.permute.xlu0 %7029
    %v7032 = vmul.f32 %v6667, %v7025
    %v7033 = vmul.f32 %v6668, %v7025
    %v7034 = vmul.f32 %v6669, %v7025
    %v7035 = vmul.f32 %v6670, %v7025
    %v7036 = vmul.f32 %v6672, %v7030
    %v7037 = vmul.f32 %v6673, %v7030
    %v7038 = vmul.f32 %v6674, %v7030
    %v7039 = vmul.f32 %v6675, %v7030
    %v7040 = vadd.f32 %v7032, %v7036
    %v7041 = vrot.slane %v7040, 4
    %v7042 = vadd.f32 %v7040, %v7041
    %v7043 = vrot.slane %v7042, 2
    %v7044 = vadd.f32 %v7042, %v7043
    %v7045 = vrot.slane %v7044, 1
    %v7046 = vadd.f32 %v7044, %v7045
    %v7047 = vadd.f32 %v7033, %v7037
    %v7048 = vrot.slane %v7047, 4
    %v7049 = vadd.f32 %v7047, %v7048
    %v7050 = vrot.slane %v7049, 2
    %v7051 = vadd.f32 %v7049, %v7050
    %v7052 = vrot.slane %v7051, 1
    %v7053 = vadd.f32 %v7051, %v7052
    %v7054 = vadd.f32 %v7034, %v7038
    %v7055 = vrot.slane %v7054, 4
    %v7056 = vadd.f32 %v7054, %v7055
    %v7057 = vrot.slane %v7056, 2
    %v7058 = vadd.f32 %v7056, %v7057
    %v7059 = vrot.slane %v7058, 1
    %v7060 = vadd.f32 %v7058, %v7059
    %v7061 = vadd.f32 %v7035, %v7039
    %v7062 = vrot.slane %v7061, 4
    %v7063 = vadd.f32 %v7061, %v7062
    %v7064 = vrot.slane %v7063, 2
    %v7065 = vadd.f32 %v7063, %v7064
    %v7066 = vrot.slane %v7065, 1
    %v7067 = vadd.f32 %v7065, %v7066
    %v7072 = vrot.slane %v7053, 7
    %v7073 = vrot.slane %v7060, 6
    %v7074 = vrot.slane %v7067, 5
    %v7075 = vsel %vm6748, %v7046, %v7072
    %vm7076 = vcmask 1042434
    %v7077 = vsel %vm7076, %v7073, %v7074
    %v7078 = vsel %vm6750, %v7075, %v7077
    %v7080 = vmul.f32 %v7018, %v7078
    %v7081 = vadd.f32 %v7016, %v7080
    %v7082 = vld [vmem:[#allocation5 + $0x8] sm:$0xff]
    %v7083 = vld [vmem:[#allocation5 + $0x10] sm:$0xff]
    %v7084 = vld [vmem:[#allocation5 + $0x18] sm:$0xff]
    %v7085 = vld [vmem:[#allocation5 + $0x20] sm:$0xff]
    %v7086 = vld [vmem:[#allocation5 + $0x28] sm:$0xff]
    %v7087 = vld [vmem:[#allocation5 + $0x38] sm:$0xff]
    %v7088 = vld [vmem:[#allocation5 + $0x40] sm:$0xff]
    %v7089 = vld [vmem:[#allocation5 + $0x48] sm:$0xff]
    %v7090 = vld [vmem:[#allocation5 + $0x50] sm:$0xff]
    %v7091 = vld [vmem:[#allocation5 + $0x58] sm:$0xff]
    %s7092 = scalar_lea.vmem [#allocation13], 5
    %v7093 = vld [vmem:[%s7092] ss:$8 sm:$0xf]
    %s7094 = scalar_lea.vmem %s16, 80
    %v7095 = vld [vmem:[%s7094] sm:$0xff]
    %v7096 = vld [vmem:[%s7094 + $0x8] sm:$0xff]
    %7098 = vset.pattern.permute.xlu0 0
    %7099 = vperm.xlu0 %7098, %v7095
    %v7100 = vpop.permute.xlu0 %7099
    %7103 = vset.pattern.permute.xlu0 0
    %7104 = vperm.xlu0 %7103, %v7096
    %v7105 = vpop.permute.xlu0 %7104
    %v7107 = vmul.f32 %v7082, %v7100
    %v7108 = vmul.f32 %v7083, %v7100
    %v7109 = vmul.f32 %v7084, %v7100
    %v7110 = vmul.f32 %v7085, %v7100
    %v7111 = vmul.f32 %v7086, %v7100
    %v7112 = vmul.f32 %v7087, %v7105
    %v7113 = vmul.f32 %v7088, %v7105
    %v7114 = vmul.f32 %v7089, %v7105
    %v7115 = vmul.f32 %v7090, %v7105
    %v7116 = vmul.f32 %v7091, %v7105
    %vm7117 = vcmask 1047560
    %v7118 = vsel %vm7117, %v7107, 0.0
    %v7119 = vsel %vm7117, %v7112, 0.0
    %v7120 = vadd.f32 %v7118, %v7119
    %v7121 = vrot.slane %v7120, 4
    %v7122 = vadd.f32 %v7120, %v7121
    %v7123 = vrot.slane %v7122, 2
    %v7124 = vadd.f32 %v7122, %v7123
    %v7125 = vrot.slane %v7124, 1
    %v7126 = vadd.f32 %v7124, %v7125
    %v7127 = vadd.f32 %v7108, %v7113
    %v7128 = vrot.slane %v7127, 4
    %v7129 = vadd.f32 %v7127, %v7128
    %v7130 = vrot.slane %v7129, 2
    %v7131 = vadd.f32 %v7129, %v7130
    %v7132 = vrot.slane %v7131, 1
    %v7133 = vadd.f32 %v7131, %v7132
    %v7134 = vadd.f32 %v7109, %v7114
    %v7135 = vrot.slane %v7134, 4
    %v7136 = vadd.f32 %v7134, %v7135
    %v7137 = vrot.slane %v7136, 2
    %v7138 = vadd.f32 %v7136, %v7137
    %v7139 = vrot.slane %v7138, 1
    %v7140 = vadd.f32 %v7138, %v7139
    %v7141 = vadd.f32 %v7110, %v7115
    %v7142 = vrot.slane %v7141, 4
    %v7143 = vadd.f32 %v7141, %v7142
    %v7144 = vrot.slane %v7143, 2
    %v7145 = vadd.f32 %v7143, %v7144
    %v7146 = vrot.slane %v7145, 1
    %v7147 = vadd.f32 %v7145, %v7146
    %v7148 = vsel %vm558, %v7111, 0.0
    %v7149 = vsel %vm558, %v7116, 0.0
    %v7150 = vadd.f32 %v7148, %v7149
    %v7151 = vrot.slane %v7150, 4
    %v7152 = vadd.f32 %v7150, %v7151
    %v7153 = vrot.slane %v7152, 2
    %v7154 = vadd.f32 %v7152, %v7153
    %v7155 = vrot.slane %v7154, 1
    %v7156 = vadd.f32 %v7154, %v7155
    %v7162 = vrot.slane %v7133, 7
    %v7163 = vrot.slane %v7140, 6
    %v7164 = vrot.slane %v7147, 5
    %v7165 = vrot.slane %v7156, 4
    %v7166 = vsel %vm6748, %v7126, %v7162
    %v7167 = vsel %vm6750, %v7166, %v7163
    %v7168 = vsel %vm6752, %v7164, %v7165
    %v7169 = vsel %vm6754, %v7167, %v7168
    %7170 = vrot.lane.b32.xlu0 %v7169, 127
    %v7171 = vpop.permute.xlu0 %7170
    %v7172 = vrot.slane %v7171, 1
    %v7173 = vsel %vm649, %v7171, %v7172
    %v7175 = vmul.f32 %v7093, %v7173
    %v7176 = vadd.f32 %v7081, %v7175
    %s7177 = scalar_lea.vmem [#allocation13], 6
    %v7178 = vld [vmem:[%s7177] ss:$8 sm:$0xf]
    %s7179 = scalar_lea.vmem %s16, 96
    %v7180 = vld [vmem:[%s7179] sm:$0xff]
    %v7181 = vld [vmem:[%s7179 + $0x8] sm:$0xff]
    %7183 = vset.pattern.permute.xlu0 0
    %7184 = vperm.xlu0 %7183, %v7180
    %v7185 = vpop.permute.xlu0 %7184
    %7188 = vset.pattern.permute.xlu0 0
    %7189 = vperm.xlu0 %7188, %v7181
    %v7190 = vpop.permute.xlu0 %7189
    %v7192 = vmul.f32 %v7082, %v7185
    %v7193 = vmul.f32 %v7083, %v7185
    %v7194 = vmul.f32 %v7084, %v7185
    %v7195 = vmul.f32 %v7085, %v7185
    %v7196 = vmul.f32 %v7086, %v7185
    %v7197 = vmul.f32 %v7087, %v7190
    %v7198 = vmul.f32 %v7088, %v7190
    %v7199 = vmul.f32 %v7089, %v7190
    %v7200 = vmul.f32 %v7090, %v7190
    %v7201 = vmul.f32 %v7091, %v7190
    %vm7202 = vcmask 1047672
    %v7203 = vsel %vm7202, %v7192, 0.0
    %v7204 = vsel %vm7202, %v7197, 0.0
    %v7205 = vadd.f32 %v7203, %v7204
    %v7206 = vrot.slane %v7205, 4
    %v7207 = vadd.f32 %v7205, %v7206
    %v7208 = vrot.slane %v7207, 2
    %v7209 = vadd.f32 %v7207, %v7208
    %v7210 = vrot.slane %v7209, 1
    %v7211 = vadd.f32 %v7209, %v7210
    %v7212 = vadd.f32 %v7193, %v7198
    %v7213 = vrot.slane %v7212, 4
    %v7214 = vadd.f32 %v7212, %v7213
    %v7215 = vrot.slane %v7214, 2
    %v7216 = vadd.f32 %v7214, %v7215
    %v7217 = vrot.slane %v7216, 1
    %v7218 = vadd.f32 %v7216, %v7217
    %v7219 = vadd.f32 %v7194, %v7199
    %v7220 = vrot.slane %v7219, 4
    %v7221 = vadd.f32 %v7219, %v7220
    %v7222 = vrot.slane %v7221, 2
    %v7223 = vadd.f32 %v7221, %v7222
    %v7224 = vrot.slane %v7223, 1
    %v7225 = vadd.f32 %v7223, %v7224
    %v7226 = vadd.f32 %v7195, %v7200
    %v7227 = vrot.slane %v7226, 4
    %v7228 = vadd.f32 %v7226, %v7227
    %v7229 = vrot.slane %v7228, 2
    %v7230 = vadd.f32 %v7228, %v7229
    %v7231 = vrot.slane %v7230, 1
    %v7232 = vadd.f32 %v7230, %v7231
    %v7233 = vsel %vm323, %v7196, 0.0
    %v7234 = vsel %vm323, %v7201, 0.0
    %v7235 = vadd.f32 %v7233, %v7234
    %v7236 = vrot.slane %v7235, 4
    %v7237 = vadd.f32 %v7235, %v7236
    %v7238 = vrot.slane %v7237, 2
    %v7239 = vadd.f32 %v7237, %v7238
    %v7240 = vrot.slane %v7239, 1
    %v7241 = vadd.f32 %v7239, %v7240
    %v7247 = vrot.slane %v7218, 7
    %v7248 = vrot.slane %v7225, 6
    %v7249 = vrot.slane %v7232, 5
    %v7250 = vrot.slane %v7241, 4
    %v7251 = vsel %vm6748, %v7211, %v7247
    %v7252 = vsel %vm6750, %v7251, %v7248
    %v7253 = vsel %vm6752, %v7249, %v7250
    %v7254 = vsel %vm6754, %v7252, %v7253
    %7255 = vrot.lane.b32.xlu0 %v7254, 113
    %v7256 = vpop.permute.xlu0 %7255
    %v7257 = vrot.slane %v7256, 1
    %v7258 = vsel %vm884, %v7256, %v7257
    %v7260 = vmul.f32 %v7178, %v7258
    %v7261 = vadd.f32 %v7176, %v7260
    %s7262 = scalar_lea.vmem [#allocation13], 7
    %v7263 = vld [vmem:[%s7262] ss:$8 sm:$0xf]
    %s7264 = scalar_lea.vmem %s16, 112
    %v7265 = vld [vmem:[%s7264] sm:$0xff]
    %v7266 = vld [vmem:[%s7264 + $0x8] sm:$0xff]
    %7268 = vset.pattern.permute.xlu0 0
    %7269 = vperm.xlu0 %7268, %v7265
    %v7270 = vpop.permute.xlu0 %7269
    %7273 = vset.pattern.permute.xlu0 0
    %7274 = vperm.xlu0 %7273, %v7266
    %v7275 = vpop.permute.xlu0 %7274
    %v7277 = vmul.f32 %v7082, %v7270
    %v7278 = vmul.f32 %v7083, %v7270
    %v7279 = vmul.f32 %v7084, %v7270
    %v7280 = vmul.f32 %v7085, %v7270
    %v7281 = vmul.f32 %v7086, %v7270
    %v7282 = vmul.f32 %v7087, %v7275
    %v7283 = vmul.f32 %v7088, %v7275
    %v7284 = vmul.f32 %v7089, %v7275
    %v7285 = vmul.f32 %v7090, %v7275
    %v7286 = vmul.f32 %v7091, %v7275
    %vm7287 = vcmask 1047680
    %v7288 = vsel %vm7287, %v7277, 0.0
    %v7289 = vsel %vm7287, %v7282, 0.0
    %v7290 = vadd.f32 %v7288, %v7289
    %v7291 = vrot.slane %v7290, 4
    %v7292 = vadd.f32 %v7290, %v7291
    %v7293 = vrot.slane %v7292, 2
    %v7294 = vadd.f32 %v7292, %v7293
    %v7295 = vrot.slane %v7294, 1
    %v7296 = vadd.f32 %v7294, %v7295
    %v7297 = vadd.f32 %v7278, %v7283
    %v7298 = vrot.slane %v7297, 4
    %v7299 = vadd.f32 %v7297, %v7298
    %v7300 = vrot.slane %v7299, 2
    %v7301 = vadd.f32 %v7299, %v7300
    %v7302 = vrot.slane %v7301, 1
    %v7303 = vadd.f32 %v7301, %v7302
    %v7304 = vadd.f32 %v7279, %v7284
    %v7305 = vrot.slane %v7304, 4
    %v7306 = vadd.f32 %v7304, %v7305
    %v7307 = vrot.slane %v7306, 2
    %v7308 = vadd.f32 %v7306, %v7307
    %v7309 = vrot.slane %v7308, 1
    %v7310 = vadd.f32 %v7308, %v7309
    %v7311 = vadd.f32 %v7280, %v7285
    %v7312 = vrot.slane %v7311, 4
    %v7313 = vadd.f32 %v7311, %v7312
    %v7314 = vrot.slane %v7313, 2
    %v7315 = vadd.f32 %v7313, %v7314
    %v7316 = vrot.slane %v7315, 1
    %v7317 = vadd.f32 %v7315, %v7316
    %v7318 = vsel %vm276, %v7281, 0.0
    %v7319 = vsel %vm276, %v7286, 0.0
    %v7320 = vadd.f32 %v7318, %v7319
    %v7321 = vrot.slane %v7320, 4
    %v7322 = vadd.f32 %v7320, %v7321
    %v7323 = vrot.slane %v7322, 2
    %v7324 = vadd.f32 %v7322, %v7323
    %v7325 = vrot.slane %v7324, 1
    %v7326 = vadd.f32 %v7324, %v7325
    %v7332 = vrot.slane %v7303, 7
    %v7333 = vrot.slane %v7310, 6
    %v7334 = vrot.slane %v7317, 5
    %v7335 = vrot.slane %v7326, 4
    %v7336 = vsel %vm6748, %v7296, %v7332
    %v7337 = vsel %vm6750, %v7336, %v7333
    %v7338 = vsel %vm6752, %v7334, %v7335
    %v7339 = vsel %vm6754, %v7337, %v7338
    %7340 = vrot.lane.b32.xlu0 %v7339, 112
    %v7341 = vpop.permute.xlu0 %7340
    %v7342 = vrot.slane %v7341, 1
    %v7343 = vsel %vm931, %v7341, %v7342
    %v7345 = vmul.f32 %v7263, %v7343
    %v7346 = vadd.f32 %v7261, %v7345
    %s7347 = scalar_lea.vmem [#allocation13], 32
    %v7348 = vld [vmem:[%s7347] ss:$8 sm:$0xf]
    %s7349 = scalar_lea.vmem %s16, 128
    %v7350 = vld [vmem:[%s7349] sm:$0xff]
    %v7351 = vld [vmem:[%s7349 + $0x8] sm:$0xff]
    %7353 = vset.pattern.permute.xlu0 0
    %7354 = vperm.xlu0 %7353, %v7350
    %v7355 = vpop.permute.xlu0 %7354
    %7358 = vset.pattern.permute.xlu0 0
    %7359 = vperm.xlu0 %7358, %v7351
    %v7360 = vpop.permute.xlu0 %7359
    %v7362 = vmul.f32 %v7082, %v7355
    %v7363 = vmul.f32 %v7083, %v7355
    %v7364 = vmul.f32 %v7084, %v7355
    %v7365 = vmul.f32 %v7085, %v7355
    %v7366 = vmul.f32 %v7086, %v7355
    %v7367 = vmul.f32 %v7087, %v7360
    %v7368 = vmul.f32 %v7088, %v7360
    %v7369 = vmul.f32 %v7089, %v7360
    %v7370 = vmul.f32 %v7090, %v7360
    %v7371 = vmul.f32 %v7091, %v7360
    %vm7372 = vcmask 1047688
    %v7373 = vsel %vm7372, %v7362, 0.0
    %v7374 = vsel %vm7372, %v7367, 0.0
    %v7375 = vadd.f32 %v7373, %v7374
    %v7376 = vrot.slane %v7375, 4
    %v7377 = vadd.f32 %v7375, %v7376
    %v7378 = vrot.slane %v7377, 2
    %v7379 = vadd.f32 %v7377, %v7378
    %v7380 = vrot.slane %v7379, 1
    %v7381 = vadd.f32 %v7379, %v7380
    %v7382 = vadd.f32 %v7363, %v7368
    %v7383 = vrot.slane %v7382, 4
    %v7384 = vadd.f32 %v7382, %v7383
    %v7385 = vrot.slane %v7384, 2
    %v7386 = vadd.f32 %v7384, %v7385
    %v7387 = vrot.slane %v7386, 1
    %v7388 = vadd.f32 %v7386, %v7387
    %v7389 = vadd.f32 %v7364, %v7369
    %v7390 = vrot.slane %v7389, 4
    %v7391 = vadd.f32 %v7389, %v7390
    %v7392 = vrot.slane %v7391, 2
    %v7393 = vadd.f32 %v7391, %v7392
    %v7394 = vrot.slane %v7393, 1
    %v7395 = vadd.f32 %v7393, %v7394
    %v7396 = vadd.f32 %v7365, %v7370
    %v7397 = vrot.slane %v7396, 4
    %v7398 = vadd.f32 %v7396, %v7397
    %v7399 = vrot.slane %v7398, 2
    %v7400 = vadd.f32 %v7398, %v7399
    %v7401 = vrot.slane %v7400, 1
    %v7402 = vadd.f32 %v7400, %v7401
    %v7403 = vsel %vm229, %v7366, 0.0
    %v7404 = vsel %vm229, %v7371, 0.0
    %v7405 = vadd.f32 %v7403, %v7404
    %v7406 = vrot.slane %v7405, 4
    %v7407 = vadd.f32 %v7405, %v7406
    %v7408 = vrot.slane %v7407, 2
    %v7409 = vadd.f32 %v7407, %v7408
    %v7410 = vrot.slane %v7409, 1
    %v7411 = vadd.f32 %v7409, %v7410
    %v7417 = vrot.slane %v7388, 7
    %v7418 = vrot.slane %v7395, 6
    %v7419 = vrot.slane %v7402, 5
    %v7420 = vrot.slane %v7411, 4
    %v7421 = vsel %vm6748, %v7381, %v7417
    %v7422 = vsel %vm6750, %v7421, %v7418
    %v7423 = vsel %vm6752, %v7419, %v7420
    %v7424 = vsel %vm6754, %v7422, %v7423
    %7425 = vrot.lane.b32.xlu0 %v7424, 111
    %v7426 = vpop.permute.xlu0 %7425
    %v7427 = vrot.slane %v7426, 1
    %v7428 = vsel %vm978, %v7426, %v7427
    %v7430 = vmul.f32 %v7348, %v7428
    %v7431 = vadd.f32 %v7346, %v7430
    %v7432 = vld [vmem:[#allocation6] sm:$0xff]
    %v7433 = vld [vmem:[#allocation6 + $0x8] sm:$0xff]
    %v7434 = vld [vmem:[#allocation6 + $0x10] sm:$0xff]
    %v7435 = vld [vmem:[#allocation6 + $0x18] sm:$0xff]
    %v7436 = vld [vmem:[#allocation6 + $0x20] sm:$0xff]
    %v7437 = vld [vmem:[#allocation6 + $0x30] sm:$0xff]
    %v7438 = vld [vmem:[#allocation6 + $0x38] sm:$0xff]
    %v7439 = vld [vmem:[#allocation6 + $0x40] sm:$0xff]
    %v7440 = vld [vmem:[#allocation6 + $0x48] sm:$0xff]
    %v7441 = vld [vmem:[#allocation6 + $0x50] sm:$0xff]
    %v7442 = vld [vmem:[#allocation6 + $0x60] sm:$0xff]
    %v7443 = vld [vmem:[#allocation6 + $0x68] sm:$0xff]
    %v7444 = vld [vmem:[#allocation6 + $0x70] sm:$0xff]
    %v7445 = vld [vmem:[#allocation6 + $0x78] sm:$0xff]
    %v7446 = vld [vmem:[#allocation6 + $0x80] sm:$0xff]
    %v7447 = vld [vmem:[#allocation6 + $0x90] sm:$0xff]
    %v7448 = vld [vmem:[#allocation6 + $0x98] sm:$0xff]
    %v7449 = vld [vmem:[#allocation6 + $0xa0] sm:$0xff]
    %v7450 = vld [vmem:[#allocation6 + $0xa8] sm:$0xff]
    %v7451 = vld [vmem:[#allocation6 + $0xb0] sm:$0xff]
    %v7452 = vld [vmem:[%s17] sm:$0xff]
    %v7453 = vld [vmem:[%s17 + $0x8] sm:$0xff]
    %v7454 = vld [vmem:[%s17 + $0x10] sm:$0xff]
    %v7455 = vld [vmem:[%s17 + $0x18] sm:$0xff]
    %7457 = vset.pattern.permute.xlu0 0
    %7458 = vperm.xlu0 %7457, %v7452
    %v7459 = vpop.permute.xlu0 %7458
    %7462 = vset.pattern.permute.xlu0 0
    %7463 = vperm.xlu0 %7462, %v7453
    %v7464 = vpop.permute.xlu0 %7463
    %7467 = vset.pattern.permute.xlu0 0
    %7468 = vperm.xlu0 %7467, %v7454
    %v7469 = vpop.permute.xlu0 %7468
    %7472 = vset.pattern.permute.xlu0 0
    %7473 = vperm.xlu0 %7472, %v7455
    %v7474 = vpop.permute.xlu0 %7473
    %v7476 = vmul.f32 %v7432, %v7459
    %v7477 = vmul.f32 %v7433, %v7459
    %v7478 = vmul.f32 %v7434, %v7459
    %v7479 = vmul.f32 %v7435, %v7459
    %v7480 = vmul.f32 %v7436, %v7459
    %v7481 = vmul.f32 %v7437, %v7464
    %v7482 = vmul.f32 %v7438, %v7464
    %v7483 = vmul.f32 %v7439, %v7464
    %v7484 = vmul.f32 %v7440, %v7464
    %v7485 = vmul.f32 %v7441, %v7464
    %v7486 = vmul.f32 %v7442, %v7469
    %v7487 = vmul.f32 %v7443, %v7469
    %v7488 = vmul.f32 %v7444, %v7469
    %v7489 = vmul.f32 %v7445, %v7469
    %v7490 = vmul.f32 %v7446, %v7469
    %v7491 = vmul.f32 %v7447, %v7474
    %v7492 = vmul.f32 %v7448, %v7474
    %v7493 = vmul.f32 %v7449, %v7474
    %v7494 = vmul.f32 %v7450, %v7474
    %v7495 = vmul.f32 %v7451, %v7474
    %v7496 = vsel %vm6699, %v7476, 0.0
    %v7497 = vsel %vm6699, %v7481, 0.0
    %v7498 = vadd.f32 %v7496, %v7497
    %v7499 = vsel %vm6699, %v7486, 0.0
    %v7500 = vadd.f32 %v7498, %v7499
    %v7501 = vsel %vm6699, %v7491, 0.0
    %v7502 = vadd.f32 %v7500, %v7501
    %v7503 = vrot.slane %v7502, 4
    %v7504 = vadd.f32 %v7502, %v7503
    %v7505 = vrot.slane %v7504, 2
    %v7506 = vadd.f32 %v7504, %v7505
    %v7507 = vrot.slane %v7506, 1
    %v7508 = vadd.f32 %v7506, %v7507
    %v7509 = vadd.f32 %v7477, %v7482
    %v7510 = vadd.f32 %v7509, %v7487
    %v7511 = vadd.f32 %v7510, %v7492
    %v7512 = vrot.slane %v7511, 4
    %v7513 = vadd.f32 %v7511, %v7512
    %v7514 = vrot.slane %v7513, 2
    %v7515 = vadd.f32 %v7513, %v7514
    %v7516 = vrot.slane %v7515, 1
    %v7517 = vadd.f32 %v7515, %v7516
    %v7518 = vadd.f32 %v7478, %v7483
    %v7519 = vadd.f32 %v7518, %v7488
    %v7520 = vadd.f32 %v7519, %v7493
    %v7521 = vrot.slane %v7520, 4
    %v7522 = vadd.f32 %v7520, %v7521
    %v7523 = vrot.slane %v7522, 2
    %v7524 = vadd.f32 %v7522, %v7523
    %v7525 = vrot.slane %v7524, 1
    %v7526 = vadd.f32 %v7524, %v7525
    %v7527 = vadd.f32 %v7479, %v7484
    %v7528 = vadd.f32 %v7527, %v7489
    %v7529 = vadd.f32 %v7528, %v7494
    %v7530 = vrot.slane %v7529, 4
    %v7531 = vadd.f32 %v7529, %v7530
    %v7532 = vrot.slane %v7531, 2
    %v7533 = vadd.f32 %v7531, %v7532
    %v7534 = vrot.slane %v7533, 1
    %v7535 = vadd.f32 %v7533, %v7534
    %v7536 = vsel %vm978, %v7480, 0.0
    %v7537 = vsel %vm978, %v7485, 0.0
    %v7538 = vadd.f32 %v7536, %v7537
    %v7539 = vsel %vm978, %v7490, 0.0
    %v7540 = vadd.f32 %v7538, %v7539
    %v7541 = vsel %vm978, %v7495, 0.0
    %v7542 = vadd.f32 %v7540, %v7541
    %v7543 = vrot.slane %v7542, 4
    %v7544 = vadd.f32 %v7542, %v7543
    %v7545 = vrot.slane %v7544, 2
    %v7546 = vadd.f32 %v7544, %v7545
    %v7547 = vrot.slane %v7546, 1
    %v7548 = vadd.f32 %v7546, %v7547
    %v7554 = vrot.slane %v7517, 7
    %v7555 = vrot.slane %v7526, 6
    %v7556 = vrot.slane %v7535, 5
    %v7557 = vrot.slane %v7548, 4
    %v7558 = vsel %vm6748, %v7508, %v7554
    %v7559 = vsel %vm6750, %v7558, %v7555
    %v7560 = vsel %vm6752, %v7556, %v7557
    %v7561 = vsel %vm6754, %v7559, %v7560
    %7562 = vrot.lane.b32.xlu0 %v7561, 17
    %v7563 = vpop.permute.xlu0 %7562
    %v7564 = vrot.slane %v7563, 1
    %v7565 = vsel %vm229, %v7563, %v7564
    %v7567 = vmul.f32 %v6676, %v7565
    %s7568 = scalar_lea.vmem %s17, 32
    %v7569 = vld [vmem:[%s7568] sm:$0xff]
    %v7570 = vld [vmem:[%s7568 + $0x8] sm:$0xff]
    %v7571 = vld [vmem:[%s7568 + $0x10] sm:$0xff]
    %v7572 = vld [vmem:[%s7568 + $0x18] sm:$0xff]
    %7574 = vset.pattern.permute.xlu0 0
    %7575 = vperm.xlu0 %7574, %v7569
    %v7576 = vpop.permute.xlu0 %7575
    %7579 = vset.pattern.permute.xlu0 0
    %7580 = vperm.xlu0 %7579, %v7570
    %v7581 = vpop.permute.xlu0 %7580
    %7584 = vset.pattern.permute.xlu0 0
    %7585 = vperm.xlu0 %7584, %v7571
    %v7586 = vpop.permute.xlu0 %7585
    %7589 = vset.pattern.permute.xlu0 0
    %7590 = vperm.xlu0 %7589, %v7572
    %v7591 = vpop.permute.xlu0 %7590
    %v7593 = vmul.f32 %v7432, %v7576
    %v7594 = vmul.f32 %v7433, %v7576
    %v7595 = vmul.f32 %v7434, %v7576
    %v7596 = vmul.f32 %v7435, %v7576
    %v7597 = vmul.f32 %v7436, %v7576
    %v7598 = vmul.f32 %v7437, %v7581
    %v7599 = vmul.f32 %v7438, %v7581
    %v7600 = vmul.f32 %v7439, %v7581
    %v7601 = vmul.f32 %v7440, %v7581
    %v7602 = vmul.f32 %v7441, %v7581
    %v7603 = vmul.f32 %v7442, %v7586
    %v7604 = vmul.f32 %v7443, %v7586
    %v7605 = vmul.f32 %v7444, %v7586
    %v7606 = vmul.f32 %v7445, %v7586
    %v7607 = vmul.f32 %v7446, %v7586
    %v7608 = vmul.f32 %v7447, %v7591
    %v7609 = vmul.f32 %v7448, %v7591
    %v7610 = vmul.f32 %v7449, %v7591
    %v7611 = vmul.f32 %v7450, %v7591
    %v7612 = vmul.f32 %v7451, %v7591
    %v7613 = vsel %vm6787, %v7593, 0.0
    %v7614 = vsel %vm6787, %v7598, 0.0
    %v7615 = vadd.f32 %v7613, %v7614
    %v7616 = vsel %vm6787, %v7603, 0.0
    %v7617 = vadd.f32 %v7615, %v7616
    %v7618 = vsel %vm6787, %v7608, 0.0
    %v7619 = vadd.f32 %v7617, %v7618
    %v7620 = vrot.slane %v7619, 4
    %v7621 = vadd.f32 %v7619, %v7620
    %v7622 = vrot.slane %v7621, 2
    %v7623 = vadd.f32 %v7621, %v7622
    %v7624 = vrot.slane %v7623, 1
    %v7625 = vadd.f32 %v7623, %v7624
    %v7626 = vadd.f32 %v7594, %v7599
    %v7627 = vadd.f32 %v7626, %v7604
    %v7628 = vadd.f32 %v7627, %v7609
    %v7629 = vrot.slane %v7628, 4
    %v7630 = vadd.f32 %v7628, %v7629
    %v7631 = vrot.slane %v7630, 2
    %v7632 = vadd.f32 %v7630, %v7631
    %v7633 = vrot.slane %v7632, 1
    %v7634 = vadd.f32 %v7632, %v7633
    %v7635 = vadd.f32 %v7595, %v7600
    %v7636 = vadd.f32 %v7635, %v7605
    %v7637 = vadd.f32 %v7636, %v7610
    %v7638 = vrot.slane %v7637, 4
    %v7639 = vadd.f32 %v7637, %v7638
    %v7640 = vrot.slane %v7639, 2
    %v7641 = vadd.f32 %v7639, %v7640
    %v7642 = vrot.slane %v7641, 1
    %v7643 = vadd.f32 %v7641, %v7642
    %v7644 = vadd.f32 %v7596, %v7601
    %v7645 = vadd.f32 %v7644, %v7606
    %v7646 = vadd.f32 %v7645, %v7611
    %v7647 = vrot.slane %v7646, 4
    %v7648 = vadd.f32 %v7646, %v7647
    %v7649 = vrot.slane %v7648, 2
    %v7650 = vadd.f32 %v7648, %v7649
    %v7651 = vrot.slane %v7650, 1
    %v7652 = vadd.f32 %v7650, %v7651
    %v7653 = vsel %vm931, %v7597, 0.0
    %v7654 = vsel %vm931, %v7602, 0.0
    %v7655 = vadd.f32 %v7653, %v7654
    %v7656 = vsel %vm931, %v7607, 0.0
    %v7657 = vadd.f32 %v7655, %v7656
    %v7658 = vsel %vm931, %v7612, 0.0
    %v7659 = vadd.f32 %v7657, %v7658
    %v7660 = vrot.slane %v7659, 4
    %v7661 = vadd.f32 %v7659, %v7660
    %v7662 = vrot.slane %v7661, 2
    %v7663 = vadd.f32 %v7661, %v7662
    %v7664 = vrot.slane %v7663, 1
    %v7665 = vadd.f32 %v7663, %v7664
    %v7671 = vrot.slane %v7634, 7
    %v7672 = vrot.slane %v7643, 6
    %v7673 = vrot.slane %v7652, 5
    %v7674 = vrot.slane %v7665, 4
    %v7675 = vsel %vm6748, %v7625, %v7671
    %v7676 = vsel %vm6750, %v7675, %v7672
    %v7677 = vsel %vm6752, %v7673, %v7674
    %v7678 = vsel %vm6754, %v7676, %v7677
    %7679 = vrot.lane.b32.xlu0 %v7678, 16
    %v7680 = vpop.permute.xlu0 %7679
    %v7681 = vrot.slane %v7680, 1
    %v7682 = vsel %vm276, %v7680, %v7681
    %v7684 = vmul.f32 %v6763, %v7682
    %v7685 = vadd.f32 %v7567, %v7684
    %s7686 = scalar_lea.vmem %s17, 64
    %v7687 = vld [vmem:[%s7686] sm:$0xff]
    %v7688 = vld [vmem:[%s7686 + $0x8] sm:$0xff]
    %v7689 = vld [vmem:[%s7686 + $0x10] sm:$0xff]
    %v7690 = vld [vmem:[%s7686 + $0x18] sm:$0xff]
    %7692 = vset.pattern.permute.xlu0 0
    %7693 = vperm.xlu0 %7692, %v7687
    %v7694 = vpop.permute.xlu0 %7693
    %7697 = vset.pattern.permute.xlu0 0
    %7698 = vperm.xlu0 %7697, %v7688
    %v7699 = vpop.permute.xlu0 %7698
    %7702 = vset.pattern.permute.xlu0 0
    %7703 = vperm.xlu0 %7702, %v7689
    %v7704 = vpop.permute.xlu0 %7703
    %7707 = vset.pattern.permute.xlu0 0
    %7708 = vperm.xlu0 %7707, %v7690
    %v7709 = vpop.permute.xlu0 %7708
    %v7711 = vmul.f32 %v7432, %v7694
    %v7712 = vmul.f32 %v7433, %v7694
    %v7713 = vmul.f32 %v7434, %v7694
    %v7714 = vmul.f32 %v7435, %v7694
    %v7715 = vmul.f32 %v7436, %v7694
    %v7716 = vmul.f32 %v7437, %v7699
    %v7717 = vmul.f32 %v7438, %v7699
    %v7718 = vmul.f32 %v7439, %v7699
    %v7719 = vmul.f32 %v7440, %v7699
    %v7720 = vmul.f32 %v7441, %v7699
    %v7721 = vmul.f32 %v7442, %v7704
    %v7722 = vmul.f32 %v7443, %v7704
    %v7723 = vmul.f32 %v7444, %v7704
    %v7724 = vmul.f32 %v7445, %v7704
    %v7725 = vmul.f32 %v7446, %v7704
    %v7726 = vmul.f32 %v7447, %v7709
    %v7727 = vmul.f32 %v7448, %v7709
    %v7728 = vmul.f32 %v7449, %v7709
    %v7729 = vmul.f32 %v7450, %v7709
    %v7730 = vmul.f32 %v7451, %v7709
    %v7731 = vsel %vm6872, %v7711, 0.0
    %v7732 = vsel %vm6872, %v7716, 0.0
    %v7733 = vadd.f32 %v7731, %v7732
    %v7734 = vsel %vm6872, %v7721, 0.0
    %v7735 = vadd.f32 %v7733, %v7734
    %v7736 = vsel %vm6872, %v7726, 0.0
    %v7737 = vadd.f32 %v7735, %v7736
    %v7738 = vrot.slane %v7737, 4
    %v7739 = vadd.f32 %v7737, %v7738
    %v7740 = vrot.slane %v7739, 2
    %v7741 = vadd.f32 %v7739, %v7740
    %v7742 = vrot.slane %v7741, 1
    %v7743 = vadd.f32 %v7741, %v7742
    %v7744 = vadd.f32 %v7712, %v7717
    %v7745 = vadd.f32 %v7744, %v7722
    %v7746 = vadd.f32 %v7745, %v7727
    %v7747 = vrot.slane %v7746, 4
    %v7748 = vadd.f32 %v7746, %v7747
    %v7749 = vrot.slane %v7748, 2
    %v7750 = vadd.f32 %v7748, %v7749
    %v7751 = vrot.slane %v7750, 1
    %v7752 = vadd.f32 %v7750, %v7751
    %v7753 = vadd.f32 %v7713, %v7718
    %v7754 = vadd.f32 %v7753, %v7723
    %v7755 = vadd.f32 %v7754, %v7728
    %v7756 = vrot.slane %v7755, 4
    %v7757 = vadd.f32 %v7755, %v7756
    %v7758 = vrot.slane %v7757, 2
    %v7759 = vadd.f32 %v7757, %v7758
    %v7760 = vrot.slane %v7759, 1
    %v7761 = vadd.f32 %v7759, %v7760
    %v7762 = vadd.f32 %v7714, %v7719
    %v7763 = vadd.f32 %v7762, %v7724
    %v7764 = vadd.f32 %v7763, %v7729
    %v7765 = vrot.slane %v7764, 4
    %v7766 = vadd.f32 %v7764, %v7765
    %v7767 = vrot.slane %v7766, 2
    %v7768 = vadd.f32 %v7766, %v7767
    %v7769 = vrot.slane %v7768, 1
    %v7770 = vadd.f32 %v7768, %v7769
    %v7771 = vsel %vm884, %v7715, 0.0
    %v7772 = vsel %vm884, %v7720, 0.0
    %v7773 = vadd.f32 %v7771, %v7772
    %v7774 = vsel %vm884, %v7725, 0.0
    %v7775 = vadd.f32 %v7773, %v7774
    %v7776 = vsel %vm884, %v7730, 0.0
    %v7777 = vadd.f32 %v7775, %v7776
    %v7778 = vrot.slane %v7777, 4
    %v7779 = vadd.f32 %v7777, %v7778
    %v7780 = vrot.slane %v7779, 2
    %v7781 = vadd.f32 %v7779, %v7780
    %v7782 = vrot.slane %v7781, 1
    %v7783 = vadd.f32 %v7781, %v7782
    %v7789 = vrot.slane %v7752, 7
    %v7790 = vrot.slane %v7761, 6
    %v7791 = vrot.slane %v7770, 5
    %v7792 = vrot.slane %v7783, 4
    %v7793 = vsel %vm6748, %v7743, %v7789
    %v7794 = vsel %vm6750, %v7793, %v7790
    %v7795 = vsel %vm6752, %v7791, %v7792
    %v7796 = vsel %vm6754, %v7794, %v7795
    %7797 = vrot.lane.b32.xlu0 %v7796, 15
    %v7798 = vpop.permute.xlu0 %7797
    %v7799 = vrot.slane %v7798, 1
    %v7800 = vsel %vm323, %v7798, %v7799
    %v7802 = vmul.f32 %v6848, %v7800
    %v7803 = vadd.f32 %v7685, %v7802
    %s7804 = scalar_lea.vmem %s17, 96
    %v7805 = vld [vmem:[%s7804] sm:$0xff]
    %v7806 = vld [vmem:[%s7804 + $0x8] sm:$0xff]
    %v7807 = vld [vmem:[%s7804 + $0x10] sm:$0xff]
    %v7808 = vld [vmem:[%s7804 + $0x18] sm:$0xff]
    %7810 = vset.pattern.permute.xlu0 0
    %7811 = vperm.xlu0 %7810, %v7805
    %v7812 = vpop.permute.xlu0 %7811
    %7815 = vset.pattern.permute.xlu0 0
    %7816 = vperm.xlu0 %7815, %v7806
    %v7817 = vpop.permute.xlu0 %7816
    %7820 = vset.pattern.permute.xlu0 0
    %7821 = vperm.xlu0 %7820, %v7807
    %v7822 = vpop.permute.xlu0 %7821
    %7825 = vset.pattern.permute.xlu0 0
    %7826 = vperm.xlu0 %7825, %v7808
    %v7827 = vpop.permute.xlu0 %7826
    %v7829 = vmul.f32 %v7432, %v7812
    %v7830 = vmul.f32 %v7433, %v7812
    %v7831 = vmul.f32 %v7434, %v7812
    %v7832 = vmul.f32 %v7435, %v7812
    %v7833 = vmul.f32 %v7436, %v7812
    %v7834 = vmul.f32 %v7437, %v7817
    %v7835 = vmul.f32 %v7438, %v7817
    %v7836 = vmul.f32 %v7439, %v7817
    %v7837 = vmul.f32 %v7440, %v7817
    %v7838 = vmul.f32 %v7441, %v7817
    %v7839 = vmul.f32 %v7442, %v7822
    %v7840 = vmul.f32 %v7443, %v7822
    %v7841 = vmul.f32 %v7444, %v7822
    %v7842 = vmul.f32 %v7445, %v7822
    %v7843 = vmul.f32 %v7446, %v7822
    %v7844 = vmul.f32 %v7447, %v7827
    %v7845 = vmul.f32 %v7448, %v7827
    %v7846 = vmul.f32 %v7449, %v7827
    %v7847 = vmul.f32 %v7450, %v7827
    %v7848 = vmul.f32 %v7451, %v7827
    %v7849 = vsel %vm6957, %v7829, 0.0
    %v7850 = vsel %vm6957, %v7834, 0.0
    %v7851 = vadd.f32 %v7849, %v7850
    %v7852 = vsel %vm6957, %v7839, 0.0
    %v7853 = vadd.f32 %v7851, %v7852
    %v7854 = vsel %vm6957, %v7844, 0.0
    %v7855 = vadd.f32 %v7853, %v7854
    %v7856 = vrot.slane %v7855, 4
    %v7857 = vadd.f32 %v7855, %v7856
    %v7858 = vrot.slane %v7857, 2
    %v7859 = vadd.f32 %v7857, %v7858
    %v7860 = vrot.slane %v7859, 1
    %v7861 = vadd.f32 %v7859, %v7860
    %v7862 = vadd.f32 %v7830, %v7835
    %v7863 = vadd.f32 %v7862, %v7840
    %v7864 = vadd.f32 %v7863, %v7845
    %v7865 = vrot.slane %v7864, 4
    %v7866 = vadd.f32 %v7864, %v7865
    %v7867 = vrot.slane %v7866, 2
    %v7868 = vadd.f32 %v7866, %v7867
    %v7869 = vrot.slane %v7868, 1
    %v7870 = vadd.f32 %v7868, %v7869
    %v7871 = vadd.f32 %v7831, %v7836
    %v7872 = vadd.f32 %v7871, %v7841
    %v7873 = vadd.f32 %v7872, %v7846
    %v7874 = vrot.slane %v7873, 4
    %v7875 = vadd.f32 %v7873, %v7874
    %v7876 = vrot.slane %v7875, 2
    %v7877 = vadd.f32 %v7875, %v7876
    %v7878 = vrot.slane %v7877, 1
    %v7879 = vadd.f32 %v7877, %v7878
    %v7880 = vadd.f32 %v7832, %v7837
    %v7881 = vadd.f32 %v7880, %v7842
    %v7882 = vadd.f32 %v7881, %v7847
    %v7883 = vrot.slane %v7882, 4
    %v7884 = vadd.f32 %v7882, %v7883
    %v7885 = vrot.slane %v7884, 2
    %v7886 = vadd.f32 %v7884, %v7885
    %v7887 = vrot.slane %v7886, 1
    %v7888 = vadd.f32 %v7886, %v7887
    %v7889 = vsel %vm649, %v7833, 0.0
    %v7890 = vsel %vm649, %v7838, 0.0
    %v7891 = vadd.f32 %v7889, %v7890
    %v7892 = vsel %vm649, %v7843, 0.0
    %v7893 = vadd.f32 %v7891, %v7892
    %v7894 = vsel %vm649, %v7848, 0.0
    %v7895 = vadd.f32 %v7893, %v7894
    %v7896 = vrot.slane %v7895, 4
    %v7897 = vadd.f32 %v7895, %v7896
    %v7898 = vrot.slane %v7897, 2
    %v7899 = vadd.f32 %v7897, %v7898
    %v7900 = vrot.slane %v7899, 1
    %v7901 = vadd.f32 %v7899, %v7900
    %v7907 = vrot.slane %v7870, 7
    %v7908 = vrot.slane %v7879, 6
    %v7909 = vrot.slane %v7888, 5
    %v7910 = vrot.slane %v7901, 4
    %v7911 = vsel %vm6748, %v7861, %v7907
    %v7912 = vsel %vm6750, %v7911, %v7908
    %v7913 = vsel %vm6752, %v7909, %v7910
    %v7914 = vsel %vm6754, %v7912, %v7913
    %7915 = vrot.lane.b32.xlu0 %v7914, 1
    %v7916 = vpop.permute.xlu0 %7915
    %v7917 = vrot.slane %v7916, 1
    %v7918 = vsel %vm558, %v7916, %v7917
    %v7920 = vmul.f32 %v6933, %v7918
    %v7921 = vadd.f32 %v7803, %v7920
    %s7922 = scalar_lea.vmem %s17, 128
    %v7923 = vld [vmem:[%s7922] sm:$0xff]
    %v7924 = vld [vmem:[%s7922 + $0x8] sm:$0xff]
    %v7925 = vld [vmem:[%s7922 + $0x10] sm:$0xff]
    %v7926 = vld [vmem:[%s7922 + $0x18] sm:$0xff]
    %7928 = vset.pattern.permute.xlu0 0
    %7929 = vperm.xlu0 %7928, %v7923
    %v7930 = vpop.permute.xlu0 %7929
    %7933 = vset.pattern.permute.xlu0 0
    %7934 = vperm.xlu0 %7933, %v7924
    %v7935 = vpop.permute.xlu0 %7934
    %7938 = vset.pattern.permute.xlu0 0
    %7939 = vperm.xlu0 %7938, %v7925
    %v7940 = vpop.permute.xlu0 %7939
    %7943 = vset.pattern.permute.xlu0 0
    %7944 = vperm.xlu0 %7943, %v7926
    %v7945 = vpop.permute.xlu0 %7944
    %v7947 = vmul.f32 %v7433, %v7930
    %v7948 = vmul.f32 %v7434, %v7930
    %v7949 = vmul.f32 %v7435, %v7930
    %v7950 = vmul.f32 %v7436, %v7930
    %v7951 = vmul.f32 %v7438, %v7935
    %v7952 = vmul.f32 %v7439, %v7935
    %v7953 = vmul.f32 %v7440, %v7935
    %v7954 = vmul.f32 %v7441, %v7935
    %v7955 = vmul.f32 %v7443, %v7940
    %v7956 = vmul.f32 %v7444, %v7940
    %v7957 = vmul.f32 %v7445, %v7940
    %v7958 = vmul.f32 %v7446, %v7940
    %v7959 = vmul.f32 %v7448, %v7945
    %v7960 = vmul.f32 %v7449, %v7945
    %v7961 = vmul.f32 %v7450, %v7945
    %v7962 = vmul.f32 %v7451, %v7945
    %v7963 = vadd.f32 %v7947, %v7951
    %v7964 = vadd.f32 %v7963, %v7955
    %v7965 = vadd.f32 %v7964, %v7959
    %v7966 = vrot.slane %v7965, 4
    %v7967 = vadd.f32 %v7965, %v7966
    %v7968 = vrot.slane %v7967, 2
    %v7969 = vadd.f32 %v7967, %v7968
    %v7970 = vrot.slane %v7969, 1
    %v7971 = vadd.f32 %v7969, %v7970
    %v7972 = vadd.f32 %v7948, %v7952
    %v7973 = vadd.f32 %v7972, %v7956
    %v7974 = vadd.f32 %v7973, %v7960
    %v7975 = vrot.slane %v7974, 4
    %v7976 = vadd.f32 %v7974, %v7975
    %v7977 = vrot.slane %v7976, 2
    %v7978 = vadd.f32 %v7976, %v7977
    %v7979 = vrot.slane %v7978, 1
    %v7980 = vadd.f32 %v7978, %v7979
    %v7981 = vadd.f32 %v7949, %v7953
    %v7982 = vadd.f32 %v7981, %v7957
    %v7983 = vadd.f32 %v7982, %v7961
    %v7984 = vrot.slane %v7983, 4
    %v7985 = vadd.f32 %v7983, %v7984
    %v7986 = vrot.slane %v7985, 2
    %v7987 = vadd.f32 %v7985, %v7986
    %v7988 = vrot.slane %v7987, 1
    %v7989 = vadd.f32 %v7987, %v7988
    %v7990 = vadd.f32 %v7950, %v7954
    %v7991 = vadd.f32 %v7990, %v7958
    %v7992 = vadd.f32 %v7991, %v7962
    %v7993 = vrot.slane %v7992, 4
    %v7994 = vadd.f32 %v7992, %v7993
    %v7995 = vrot.slane %v7994, 2
    %v7996 = vadd.f32 %v7994, %v7995
    %v7997 = vrot.slane %v7996, 1
    %v7998 = vadd.f32 %v7996, %v7997
    %v8003 = vrot.slane %v7980, 7
    %v8004 = vrot.slane %v7989, 6
    %v8005 = vrot.slane %v7998, 5
    %v8006 = vsel %vm6748, %v7971, %v8003
    %v8007 = vsel %vm7076, %v8004, %v8005
    %v8008 = vsel %vm6750, %v8006, %v8007
    %v8010 = vmul.f32 %v7018, %v8008
    %v8011 = vadd.f32 %v7921, %v8010
    %v8012 = vld [vmem:[#allocation6 + $0x8] sm:$0xff]
    %v8013 = vld [vmem:[#allocation6 + $0x10] sm:$0xff]
    %v8014 = vld [vmem:[#allocation6 + $0x18] sm:$0xff]
    %v8015 = vld [vmem:[#allocation6 + $0x20] sm:$0xff]
    %v8016 = vld [vmem:[#allocation6 + $0x28] sm:$0xff]
    %v8017 = vld [vmem:[#allocation6 + $0x38] sm:$0xff]
    %v8018 = vld [vmem:[#allocation6 + $0x40] sm:$0xff]
    %v8019 = vld [vmem:[#allocation6 + $0x48] sm:$0xff]
    %v8020 = vld [vmem:[#allocation6 + $0x50] sm:$0xff]
    %v8021 = vld [vmem:[#allocation6 + $0x58] sm:$0xff]
    %v8022 = vld [vmem:[#allocation6 + $0x68] sm:$0xff]
    %v8023 = vld [vmem:[#allocation6 + $0x70] sm:$0xff]
    %v8024 = vld [vmem:[#allocation6 + $0x78] sm:$0xff]
    %v8025 = vld [vmem:[#allocation6 + $0x80] sm:$0xff]
    %v8026 = vld [vmem:[#allocation6 + $0x88] sm:$0xff]
    %v8027 = vld [vmem:[#allocation6 + $0x98] sm:$0xff]
    %v8028 = vld [vmem:[#allocation6 + $0xa0] sm:$0xff]
    %v8029 = vld [vmem:[#allocation6 + $0xa8] sm:$0xff]
    %v8030 = vld [vmem:[#allocation6 + $0xb0] sm:$0xff]
    %v8031 = vld [vmem:[#allocation6 + $0xb8] sm:$0xff]
    %s8032 = scalar_lea.vmem %s17, 160
    %v8033 = vld [vmem:[%s8032] sm:$0xff]
    %v8034 = vld [vmem:[%s8032 + $0x8] sm:$0xff]
    %v8035 = vld [vmem:[%s8032 + $0x10] sm:$0xff]
    %v8036 = vld [vmem:[%s8032 + $0x18] sm:$0xff]
    %8038 = vset.pattern.permute.xlu0 0
    %8039 = vperm.xlu0 %8038, %v8033
    %v8040 = vpop.permute.xlu0 %8039
    %8043 = vset.pattern.permute.xlu0 0
    %8044 = vperm.xlu0 %8043, %v8034
    %v8045 = vpop.permute.xlu0 %8044
    %8048 = vset.pattern.permute.xlu0 0
    %8049 = vperm.xlu0 %8048, %v8035
    %v8050 = vpop.permute.xlu0 %8049
    %8053 = vset.pattern.permute.xlu0 0
    %8054 = vperm.xlu0 %8053, %v8036
    %v8055 = vpop.permute.xlu0 %8054
    %v8057 = vmul.f32 %v8012, %v8040
    %v8058 = vmul.f32 %v8013, %v8040
    %v8059 = vmul.f32 %v8014, %v8040
    %v8060 = vmul.f32 %v8015, %v8040
    %v8061 = vmul.f32 %v8016, %v8040
    %v8062 = vmul.f32 %v8017, %v8045
    %v8063 = vmul.f32 %v8018, %v8045
    %v8064 = vmul.f32 %v8019, %v8045
    %v8065 = vmul.f32 %v8020, %v8045
    %v8066 = vmul.f32 %v8021, %v8045
    %v8067 = vmul.f32 %v8022, %v8050
    %v8068 = vmul.f32 %v8023, %v8050
    %v8069 = vmul.f32 %v8024, %v8050
    %v8070 = vmul.f32 %v8025, %v8050
    %v8071 = vmul.f32 %v8026, %v8050
    %v8072 = vmul.f32 %v8027, %v8055
    %v8073 = vmul.f32 %v8028, %v8055
    %v8074 = vmul.f32 %v8029, %v8055
    %v8075 = vmul.f32 %v8030, %v8055
    %v8076 = vmul.f32 %v8031, %v8055
    %v8077 = vsel %vm7117, %v8057, 0.0
    %v8078 = vsel %vm7117, %v8062, 0.0
    %v8079 = vadd.f32 %v8077, %v8078
    %v8080 = vsel %vm7117, %v8067, 0.0
    %v8081 = vadd.f32 %v8079, %v8080
    %v8082 = vsel %vm7117, %v8072, 0.0
    %v8083 = vadd.f32 %v8081, %v8082
    %v8084 = vrot.slane %v8083, 4
    %v8085 = vadd.f32 %v8083, %v8084
    %v8086 = vrot.slane %v8085, 2
    %v8087 = vadd.f32 %v8085, %v8086
    %v8088 = vrot.slane %v8087, 1
    %v8089 = vadd.f32 %v8087, %v8088
    %v8090 = vadd.f32 %v8058, %v8063
    %v8091 = vadd.f32 %v8090, %v8068
    %v8092 = vadd.f32 %v8091, %v8073
    %v8093 = vrot.slane %v8092, 4
    %v8094 = vadd.f32 %v8092, %v8093
    %v8095 = vrot.slane %v8094, 2
    %v8096 = vadd.f32 %v8094, %v8095
    %v8097 = vrot.slane %v8096, 1
    %v8098 = vadd.f32 %v8096, %v8097
    %v8099 = vadd.f32 %v8059, %v8064
    %v8100 = vadd.f32 %v8099, %v8069
    %v8101 = vadd.f32 %v8100, %v8074
    %v8102 = vrot.slane %v8101, 4
    %v8103 = vadd.f32 %v8101, %v8102
    %v8104 = vrot.slane %v8103, 2
    %v8105 = vadd.f32 %v8103, %v8104
    %v8106 = vrot.slane %v8105, 1
    %v8107 = vadd.f32 %v8105, %v8106
    %v8108 = vadd.f32 %v8060, %v8065
    %v8109 = vadd.f32 %v8108, %v8070
    %v8110 = vadd.f32 %v8109, %v8075
    %v8111 = vrot.slane %v8110, 4
    %v8112 = vadd.f32 %v8110, %v8111
    %v8113 = vrot.slane %v8112, 2
    %v8114 = vadd.f32 %v8112, %v8113
    %v8115 = vrot.slane %v8114, 1
    %v8116 = vadd.f32 %v8114, %v8115
    %v8117 = vsel %vm558, %v8061, 0.0
    %v8118 = vsel %vm558, %v8066, 0.0
    %v8119 = vadd.f32 %v8117, %v8118
    %v8120 = vsel %vm558, %v8071, 0.0
    %v8121 = vadd.f32 %v8119, %v8120
    %v8122 = vsel %vm558, %v8076, 0.0
    %v8123 = vadd.f32 %v8121, %v8122
    %v8124 = vrot.slane %v8123, 4
    %v8125 = vadd.f32 %v8123, %v8124
    %v8126 = vrot.slane %v8125, 2
    %v8127 = vadd.f32 %v8125, %v8126
    %v8128 = vrot.slane %v8127, 1
    %v8129 = vadd.f32 %v8127, %v8128
    %v8135 = vrot.slane %v8098, 7
    %v8136 = vrot.slane %v8107, 6
    %v8137 = vrot.slane %v8116, 5
    %v8138 = vrot.slane %v8129, 4
    %v8139 = vsel %vm6748, %v8089, %v8135
    %v8140 = vsel %vm6750, %v8139, %v8136
    %v8141 = vsel %vm6752, %v8137, %v8138
    %v8142 = vsel %vm6754, %v8140, %v8141
    %8143 = vrot.lane.b32.xlu0 %v8142, 127
    %v8144 = vpop.permute.xlu0 %8143
    %v8145 = vrot.slane %v8144, 1
    %v8146 = vsel %vm649, %v8144, %v8145
    %v8148 = vmul.f32 %v7093, %v8146
    %v8149 = vadd.f32 %v8011, %v8148
    %s8150 = scalar_lea.vmem %s17, 192
    %v8151 = vld [vmem:[%s8150] sm:$0xff]
    %v8152 = vld [vmem:[%s8150 + $0x8] sm:$0xff]
    %v8153 = vld [vmem:[%s8150 + $0x10] sm:$0xff]
    %v8154 = vld [vmem:[%s8150 + $0x18] sm:$0xff]
    %8156 = vset.pattern.permute.xlu0 0
    %8157 = vperm.xlu0 %8156, %v8151
    %v8158 = vpop.permute.xlu0 %8157
    %8161 = vset.pattern.permute.xlu0 0
    %8162 = vperm.xlu0 %8161, %v8152
    %v8163 = vpop.permute.xlu0 %8162
    %8166 = vset.pattern.permute.xlu0 0
    %8167 = vperm.xlu0 %8166, %v8153
    %v8168 = vpop.permute.xlu0 %8167
    %8171 = vset.pattern.permute.xlu0 0
    %8172 = vperm.xlu0 %8171, %v8154
    %v8173 = vpop.permute.xlu0 %8172
    %v8175 = vmul.f32 %v8012, %v8158
    %v8176 = vmul.f32 %v8013, %v8158
    %v8177 = vmul.f32 %v8014, %v8158
    %v8178 = vmul.f32 %v8015, %v8158
    %v8179 = vmul.f32 %v8016, %v8158
    %v8180 = vmul.f32 %v8017, %v8163
    %v8181 = vmul.f32 %v8018, %v8163
    %v8182 = vmul.f32 %v8019, %v8163
    %v8183 = vmul.f32 %v8020, %v8163
    %v8184 = vmul.f32 %v8021, %v8163
    %v8185 = vmul.f32 %v8022, %v8168
    %v8186 = vmul.f32 %v8023, %v8168
    %v8187 = vmul.f32 %v8024, %v8168
    %v8188 = vmul.f32 %v8025, %v8168
    %v8189 = vmul.f32 %v8026, %v8168
    %v8190 = vmul.f32 %v8027, %v8173
    %v8191 = vmul.f32 %v8028, %v8173
    %v8192 = vmul.f32 %v8029, %v8173
    %v8193 = vmul.f32 %v8030, %v8173
    %v8194 = vmul.f32 %v8031, %v8173
    %v8195 = vsel %vm7202, %v8175, 0.0
    %v8196 = vsel %vm7202, %v8180, 0.0
    %v8197 = vadd.f32 %v8195, %v8196
    %v8198 = vsel %vm7202, %v8185, 0.0
    %v8199 = vadd.f32 %v8197, %v8198
    %v8200 = vsel %vm7202, %v8190, 0.0
    %v8201 = vadd.f32 %v8199, %v8200
    %v8202 = vrot.slane %v8201, 4
    %v8203 = vadd.f32 %v8201, %v8202
    %v8204 = vrot.slane %v8203, 2
    %v8205 = vadd.f32 %v8203, %v8204
    %v8206 = vrot.slane %v8205, 1
    %v8207 = vadd.f32 %v8205, %v8206
    %v8208 = vadd.f32 %v8176, %v8181
    %v8209 = vadd.f32 %v8208, %v8186
    %v8210 = vadd.f32 %v8209, %v8191
    %v8211 = vrot.slane %v8210, 4
    %v8212 = vadd.f32 %v8210, %v8211
    %v8213 = vrot.slane %v8212, 2
    %v8214 = vadd.f32 %v8212, %v8213
    %v8215 = vrot.slane %v8214, 1
    %v8216 = vadd.f32 %v8214, %v8215
    %v8217 = vadd.f32 %v8177, %v8182
    %v8218 = vadd.f32 %v8217, %v8187
    %v8219 = vadd.f32 %v8218, %v8192
    %v8220 = vrot.slane %v8219, 4
    %v8221 = vadd.f32 %v8219, %v8220
    %v8222 = vrot.slane %v8221, 2
    %v8223 = vadd.f32 %v8221, %v8222
    %v8224 = vrot.slane %v8223, 1
    %v8225 = vadd.f32 %v8223, %v8224
    %v8226 = vadd.f32 %v8178, %v8183
    %v8227 = vadd.f32 %v8226, %v8188
    %v8228 = vadd.f32 %v8227, %v8193
    %v8229 = vrot.slane %v8228, 4
    %v8230 = vadd.f32 %v8228, %v8229
    %v8231 = vrot.slane %v8230, 2
    %v8232 = vadd.f32 %v8230, %v8231
    %v8233 = vrot.slane %v8232, 1
    %v8234 = vadd.f32 %v8232, %v8233
    %v8235 = vsel %vm323, %v8179, 0.0
    %v8236 = vsel %vm323, %v8184, 0.0
    %v8237 = vadd.f32 %v8235, %v8236
    %v8238 = vsel %vm323, %v8189, 0.0
    %v8239 = vadd.f32 %v8237, %v8238
    %v8240 = vsel %vm323, %v8194, 0.0
    %v8241 = vadd.f32 %v8239, %v8240
    %v8242 = vrot.slane %v8241, 4
    %v8243 = vadd.f32 %v8241, %v8242
    %v8244 = vrot.slane %v8243, 2
    %v8245 = vadd.f32 %v8243, %v8244
    %v8246 = vrot.slane %v8245, 1
    %v8247 = vadd.f32 %v8245, %v8246
    %v8253 = vrot.slane %v8216, 7
    %v8254 = vrot.slane %v8225, 6
    %v8255 = vrot.slane %v8234, 5
    %v8256 = vrot.slane %v8247, 4
    %v8257 = vsel %vm6748, %v8207, %v8253
    %v8258 = vsel %vm6750, %v8257, %v8254
    %v8259 = vsel %vm6752, %v8255, %v8256
    %v8260 = vsel %vm6754, %v8258, %v8259
    %8261 = vrot.lane.b32.xlu0 %v8260, 113
    %v8262 = vpop.permute.xlu0 %8261
    %v8263 = vrot.slane %v8262, 1
    %v8264 = vsel %vm884, %v8262, %v8263
    %v8266 = vmul.f32 %v7178, %v8264
    %v8267 = vadd.f32 %v8149, %v8266
    %s8268 = scalar_lea.vmem %s17, 224
    %v8269 = vld [vmem:[%s8268] sm:$0xff]
    %v8270 = vld [vmem:[%s8268 + $0x8] sm:$0xff]
    %v8271 = vld [vmem:[%s8268 + $0x10] sm:$0xff]
    %v8272 = vld [vmem:[%s8268 + $0x18] sm:$0xff]
    %8274 = vset.pattern.permute.xlu0 0
    %8275 = vperm.xlu0 %8274, %v8269
    %v8276 = vpop.permute.xlu0 %8275
    %8279 = vset.pattern.permute.xlu0 0
    %8280 = vperm.xlu0 %8279, %v8270
    %v8281 = vpop.permute.xlu0 %8280
    %8284 = vset.pattern.permute.xlu0 0
    %8285 = vperm.xlu0 %8284, %v8271
    %v8286 = vpop.permute.xlu0 %8285
    %8289 = vset.pattern.permute.xlu0 0
    %8290 = vperm.xlu0 %8289, %v8272
    %v8291 = vpop.permute.xlu0 %8290
    %v8293 = vmul.f32 %v8012, %v8276
    %v8294 = vmul.f32 %v8013, %v8276
    %v8295 = vmul.f32 %v8014, %v8276
    %v8296 = vmul.f32 %v8015, %v8276
    %v8297 = vmul.f32 %v8016, %v8276
    %v8298 = vmul.f32 %v8017, %v8281
    %v8299 = vmul.f32 %v8018, %v8281
    %v8300 = vmul.f32 %v8019, %v8281
    %v8301 = vmul.f32 %v8020, %v8281
    %v8302 = vmul.f32 %v8021, %v8281
    %v8303 = vmul.f32 %v8022, %v8286
    %v8304 = vmul.f32 %v8023, %v8286
    %v8305 = vmul.f32 %v8024, %v8286
    %v8306 = vmul.f32 %v8025, %v8286
    %v8307 = vmul.f32 %v8026, %v8286
    %v8308 = vmul.f32 %v8027, %v8291
    %v8309 = vmul.f32 %v8028, %v8291
    %v8310 = vmul.f32 %v8029, %v8291
    %v8311 = vmul.f32 %v8030, %v8291
    %v8312 = vmul.f32 %v8031, %v8291
    %v8313 = vsel %vm7287, %v8293, 0.0
    %v8314 = vsel %vm7287, %v8298, 0.0
    %v8315 = vadd.f32 %v8313, %v8314
    %v8316 = vsel %vm7287, %v8303, 0.0
    %v8317 = vadd.f32 %v8315, %v8316
    %v8318 = vsel %vm7287, %v8308, 0.0
    %v8319 = vadd.f32 %v8317, %v8318
    %v8320 = vrot.slane %v8319, 4
    %v8321 = vadd.f32 %v8319, %v8320
    %v8322 = vrot.slane %v8321, 2
    %v8323 = vadd.f32 %v8321, %v8322
    %v8324 = vrot.slane %v8323, 1
    %v8325 = vadd.f32 %v8323, %v8324
    %v8326 = vadd.f32 %v8294, %v8299
    %v8327 = vadd.f32 %v8326, %v8304
    %v8328 = vadd.f32 %v8327, %v8309
    %v8329 = vrot.slane %v8328, 4
    %v8330 = vadd.f32 %v8328, %v8329
    %v8331 = vrot.slane %v8330, 2
    %v8332 = vadd.f32 %v8330, %v8331
    %v8333 = vrot.slane %v8332, 1
    %v8334 = vadd.f32 %v8332, %v8333
    %v8335 = vadd.f32 %v8295, %v8300
    %v8336 = vadd.f32 %v8335, %v8305
    %v8337 = vadd.f32 %v8336, %v8310
    %v8338 = vrot.slane %v8337, 4
    %v8339 = vadd.f32 %v8337, %v8338
    %v8340 = vrot.slane %v8339, 2
    %v8341 = vadd.f32 %v8339, %v8340
    %v8342 = vrot.slane %v8341, 1
    %v8343 = vadd.f32 %v8341, %v8342
    %v8344 = vadd.f32 %v8296, %v8301
    %v8345 = vadd.f32 %v8344, %v8306
    %v8346 = vadd.f32 %v8345, %v8311
    %v8347 = vrot.slane %v8346, 4
    %v8348 = vadd.f32 %v8346, %v8347
    %v8349 = vrot.slane %v8348, 2
    %v8350 = vadd.f32 %v8348, %v8349
    %v8351 = vrot.slane %v8350, 1
    %v8352 = vadd.f32 %v8350, %v8351
    %v8353 = vsel %vm276, %v8297, 0.0
    %v8354 = vsel %vm276, %v8302, 0.0
    %v8355 = vadd.f32 %v8353, %v8354
    %v8356 = vsel %vm276, %v8307, 0.0
    %v8357 = vadd.f32 %v8355, %v8356
    %v8358 = vsel %vm276, %v8312, 0.0
    %v8359 = vadd.f32 %v8357, %v8358
    %v8360 = vrot.slane %v8359, 4
    %v8361 = vadd.f32 %v8359, %v8360
    %v8362 = vrot.slane %v8361, 2
    %v8363 = vadd.f32 %v8361, %v8362
    %v8364 = vrot.slane %v8363, 1
    %v8365 = vadd.f32 %v8363, %v8364
    %v8371 = vrot.slane %v8334, 7
    %v8372 = vrot.slane %v8343, 6
    %v8373 = vrot.slane %v8352, 5
    %v8374 = vrot.slane %v8365, 4
    %v8375 = vsel %vm6748, %v8325, %v8371
    %v8376 = vsel %vm6750, %v8375, %v8372
    %v8377 = vsel %vm6752, %v8373, %v8374
    %v8378 = vsel %vm6754, %v8376, %v8377
    %8379 = vrot.lane.b32.xlu0 %v8378, 112
    %v8380 = vpop.permute.xlu0 %8379
    %v8381 = vrot.slane %v8380, 1
    %v8382 = vsel %vm931, %v8380, %v8381
    %v8384 = vmul.f32 %v7263, %v8382
    %v8385 = vadd.f32 %v8267, %v8384
    %s8386 = scalar_lea.vmem %s17, 256
    %v8387 = vld [vmem:[%s8386] sm:$0xff]
    %v8388 = vld [vmem:[%s8386 + $0x8] sm:$0xff]
    %v8389 = vld [vmem:[%s8386 + $0x10] sm:$0xff]
    %v8390 = vld [vmem:[%s8386 + $0x18] sm:$0xff]
    %8392 = vset.pattern.permute.xlu0 0
    %8393 = vperm.xlu0 %8392, %v8387
    %v8394 = vpop.permute.xlu0 %8393
    %8397 = vset.pattern.permute.xlu0 0
    %8398 = vperm.xlu0 %8397, %v8388
    %v8399 = vpop.permute.xlu0 %8398
    %8402 = vset.pattern.permute.xlu0 0
    %8403 = vperm.xlu0 %8402, %v8389
    %v8404 = vpop.permute.xlu0 %8403
    %8407 = vset.pattern.permute.xlu0 0
    %8408 = vperm.xlu0 %8407, %v8390
    %v8409 = vpop.permute.xlu0 %8408
    %v8411 = vmul.f32 %v8012, %v8394
    %v8412 = vmul.f32 %v8013, %v8394
    %v8413 = vmul.f32 %v8014, %v8394
    %v8414 = vmul.f32 %v8015, %v8394
    %v8415 = vmul.f32 %v8016, %v8394
    %v8416 = vmul.f32 %v8017, %v8399
    %v8417 = vmul.f32 %v8018, %v8399
    %v8418 = vmul.f32 %v8019, %v8399
    %v8419 = vmul.f32 %v8020, %v8399
    %v8420 = vmul.f32 %v8021, %v8399
    %v8421 = vmul.f32 %v8022, %v8404
    %v8422 = vmul.f32 %v8023, %v8404
    %v8423 = vmul.f32 %v8024, %v8404
    %v8424 = vmul.f32 %v8025, %v8404
    %v8425 = vmul.f32 %v8026, %v8404
    %v8426 = vmul.f32 %v8027, %v8409
    %v8427 = vmul.f32 %v8028, %v8409
    %v8428 = vmul.f32 %v8029, %v8409
    %v8429 = vmul.f32 %v8030, %v8409
    %v8430 = vmul.f32 %v8031, %v8409
    %v8431 = vsel %vm7372, %v8411, 0.0
    %v8432 = vsel %vm7372, %v8416, 0.0
    %v8433 = vadd.f32 %v8431, %v8432
    %v8434 = vsel %vm7372, %v8421, 0.0
    %v8435 = vadd.f32 %v8433, %v8434
    %v8436 = vsel %vm7372, %v8426, 0.0
    %v8437 = vadd.f32 %v8435, %v8436
    %v8438 = vrot.slane %v8437, 4
    %v8439 = vadd.f32 %v8437, %v8438
    %v8440 = vrot.slane %v8439, 2
    %v8441 = vadd.f32 %v8439, %v8440
    %v8442 = vrot.slane %v8441, 1
    %v8443 = vadd.f32 %v8441, %v8442
    %v8444 = vadd.f32 %v8412, %v8417
    %v8445 = vadd.f32 %v8444, %v8422
    %v8446 = vadd.f32 %v8445, %v8427
    %v8447 = vrot.slane %v8446, 4
    %v8448 = vadd.f32 %v8446, %v8447
    %v8449 = vrot.slane %v8448, 2
    %v8450 = vadd.f32 %v8448, %v8449
    %v8451 = vrot.slane %v8450, 1
    %v8452 = vadd.f32 %v8450, %v8451
    %v8453 = vadd.f32 %v8413, %v8418
    %v8454 = vadd.f32 %v8453, %v8423
    %v8455 = vadd.f32 %v8454, %v8428
    %v8456 = vrot.slane %v8455, 4
    %v8457 = vadd.f32 %v8455, %v8456
    %v8458 = vrot.slane %v8457, 2
    %v8459 = vadd.f32 %v8457, %v8458
    %v8460 = vrot.slane %v8459, 1
    %v8461 = vadd.f32 %v8459, %v8460
    %v8462 = vadd.f32 %v8414, %v8419
    %v8463 = vadd.f32 %v8462, %v8424
    %v8464 = vadd.f32 %v8463, %v8429
    %v8465 = vrot.slane %v8464, 4
    %v8466 = vadd.f32 %v8464, %v8465
    %v8467 = vrot.slane %v8466, 2
    %v8468 = vadd.f32 %v8466, %v8467
    %v8469 = vrot.slane %v8468, 1
    %v8470 = vadd.f32 %v8468, %v8469
    %v8471 = vsel %vm229, %v8415, 0.0
    %v8472 = vsel %vm229, %v8420, 0.0
    %v8473 = vadd.f32 %v8471, %v8472
    %v8474 = vsel %vm229, %v8425, 0.0
    %v8475 = vadd.f32 %v8473, %v8474
    %v8476 = vsel %vm229, %v8430, 0.0
    %v8477 = vadd.f32 %v8475, %v8476
    %v8478 = vrot.slane %v8477, 4
    %v8479 = vadd.f32 %v8477, %v8478
    %v8480 = vrot.slane %v8479, 2
    %v8481 = vadd.f32 %v8479, %v8480
    %v8482 = vrot.slane %v8481, 1
    %v8483 = vadd.f32 %v8481, %v8482
    %v8489 = vrot.slane %v8452, 7
    %v8490 = vrot.slane %v8461, 6
    %v8491 = vrot.slane %v8470, 5
    %v8492 = vrot.slane %v8483, 4
    %v8493 = vsel %vm6748, %v8443, %v8489
    %v8494 = vsel %vm6750, %v8493, %v8490
    %v8495 = vsel %vm6752, %v8491, %v8492
    %v8496 = vsel %vm6754, %v8494, %v8495
    %8497 = vrot.lane.b32.xlu0 %v8496, 111
    %v8498 = vpop.permute.xlu0 %8497
    %v8499 = vrot.slane %v8498, 1
    %v8500 = vsel %vm978, %v8498, %v8499
    %v8502 = vmul.f32 %v7348, %v8500
    %v8503 = vadd.f32 %v8385, %v8502
    %v8504 = vadd.f32 %v7431, %v8503
    %v8505 = vld [vmem:[#allocation7] sm:$0xff]
    %v8506 = vld [vmem:[#allocation7 + $0x8] sm:$0xff]
    %v8507 = vld [vmem:[#allocation7 + $0x10] sm:$0xff]
    %v8508 = vld [vmem:[#allocation7 + $0x18] sm:$0xff]
    %v8509 = vld [vmem:[#allocation7 + $0x20] sm:$0xff]
    %v8510 = vld [vmem:[#allocation7 + $0x30] sm:$0xff]
    %v8511 = vld [vmem:[#allocation7 + $0x38] sm:$0xff]
    %v8512 = vld [vmem:[#allocation7 + $0x40] sm:$0xff]
    %v8513 = vld [vmem:[#allocation7 + $0x48] sm:$0xff]
    %v8514 = vld [vmem:[#allocation7 + $0x50] sm:$0xff]
    %v8515 = vld [vmem:[#allocation7 + $0x60] sm:$0xff]
    %v8516 = vld [vmem:[#allocation7 + $0x68] sm:$0xff]
    %v8517 = vld [vmem:[#allocation7 + $0x70] sm:$0xff]
    %v8518 = vld [vmem:[#allocation7 + $0x78] sm:$0xff]
    %v8519 = vld [vmem:[#allocation7 + $0x80] sm:$0xff]
    %v8520 = vld [vmem:[#allocation7 + $0x90] sm:$0xff]
    %v8521 = vld [vmem:[#allocation7 + $0x98] sm:$0xff]
    %v8522 = vld [vmem:[#allocation7 + $0xa0] sm:$0xff]
    %v8523 = vld [vmem:[#allocation7 + $0xa8] sm:$0xff]
    %v8524 = vld [vmem:[#allocation7 + $0xb0] sm:$0xff]
    %v8525 = vld [vmem:[#allocation7 + $0xc0] sm:$0xff]
    %v8526 = vld [vmem:[#allocation7 + $0xc8] sm:$0xff]
    %v8527 = vld [vmem:[#allocation7 + $0xd0] sm:$0xff]
    %v8528 = vld [vmem:[#allocation7 + $0xd8] sm:$0xff]
    %v8529 = vld [vmem:[#allocation7 + $0xe0] sm:$0xff]
    %v8530 = vld [vmem:[#allocation7 + $0xf0] sm:$0xff]
    %v8531 = vld [vmem:[#allocation7 + $0xf8] sm:$0xff]
    %v8532 = vld [vmem:[#allocation7 + $0x100] sm:$0xff]
    %v8533 = vld [vmem:[#allocation7 + $0x108] sm:$0xff]
    %v8534 = vld [vmem:[#allocation7 + $0x110] sm:$0xff]
    %v8535 = vld [vmem:[#allocation7 + $0x120] sm:$0xff]
    %v8536 = vld [vmem:[#allocation7 + $0x128] sm:$0xff]
    %v8537 = vld [vmem:[#allocation7 + $0x130] sm:$0xff]
    %v8538 = vld [vmem:[#allocation7 + $0x138] sm:$0xff]
    %v8539 = vld [vmem:[#allocation7 + $0x140] sm:$0xff]
    %v8540 = vld [vmem:[#allocation7 + $0x150] sm:$0xff]
    %v8541 = vld [vmem:[#allocation7 + $0x158] sm:$0xff]
    %v8542 = vld [vmem:[#allocation7 + $0x160] sm:$0xff]
    %v8543 = vld [vmem:[#allocation7 + $0x168] sm:$0xff]
    %v8544 = vld [vmem:[#allocation7 + $0x170] sm:$0xff]
    %v8545 = vld [vmem:[%s18] sm:$0xff]
    %v8546 = vld [vmem:[%s18 + $0x8] sm:$0xff]
    %v8547 = vld [vmem:[%s18 + $0x10] sm:$0xff]
    %v8548 = vld [vmem:[%s18 + $0x18] sm:$0xff]
    %v8549 = vld [vmem:[%s18 + $0x20] sm:$0xff]
    %v8550 = vld [vmem:[%s18 + $0x28] sm:$0xff]
    %v8551 = vld [vmem:[%s18 + $0x30] sm:$0xff]
    %v8552 = vld [vmem:[%s18 + $0x38] sm:$0xff]
    %8554 = vset.pattern.permute.xlu0 0
    %8555 = vperm.xlu0 %8554, %v8545
    %v8556 = vpop.permute.xlu0 %8555
    %8559 = vset.pattern.permute.xlu0 0
    %8560 = vperm.xlu0 %8559, %v8546
    %v8561 = vpop.permute.xlu0 %8560
    %8564 = vset.pattern.permute.xlu0 0
    %8565 = vperm.xlu0 %8564, %v8547
    %v8566 = vpop.permute.xlu0 %8565
    %8569 = vset.pattern.permute.xlu0 0
    %8570 = vperm.xlu0 %8569, %v8548
    %v8571 = vpop.permute.xlu0 %8570
    %8574 = vset.pattern.permute.xlu0 0
    %8575 = vperm.xlu0 %8574, %v8549
    %v8576 = vpop.permute.xlu0 %8575
    %8579 = vset.pattern.permute.xlu0 0
    %8580 = vperm.xlu0 %8579, %v8550
    %v8581 = vpop.permute.xlu0 %8580
    %8584 = vset.pattern.permute.xlu0 0
    %8585 = vperm.xlu0 %8584, %v8551
    %v8586 = vpop.permute.xlu0 %8585
    %8589 = vset.pattern.permute.xlu0 0
    %8590 = vperm.xlu0 %8589, %v8552
    %v8591 = vpop.permute.xlu0 %8590
    %v8593 = vmul.f32 %v8505, %v8556
    %v8594 = vmul.f32 %v8506, %v8556
    %v8595 = vmul.f32 %v8507, %v8556
    %v8596 = vmul.f32 %v8508, %v8556
    %v8597 = vmul.f32 %v8509, %v8556
    %v8598 = vmul.f32 %v8510, %v8561
    %v8599 = vmul.f32 %v8511, %v8561
    %v8600 = vmul.f32 %v8512, %v8561
    %v8601 = vmul.f32 %v8513, %v8561
    %v8602 = vmul.f32 %v8514, %v8561
    %v8603 = vmul.f32 %v8515, %v8566
    %v8604 = vmul.f32 %v8516, %v8566
    %v8605 = vmul.f32 %v8517, %v8566
    %v8606 = vmul.f32 %v8518, %v8566
    %v8607 = vmul.f32 %v8519, %v8566
    %v8608 = vmul.f32 %v8520, %v8571
    %v8609 = vmul.f32 %v8521, %v8571
    %v8610 = vmul.f32 %v8522, %v8571
    %v8611 = vmul.f32 %v8523, %v8571
    %v8612 = vmul.f32 %v8524, %v8571
    %v8613 = vmul.f32 %v8525, %v8576
    %v8614 = vmul.f32 %v8526, %v8576
    %v8615 = vmul.f32 %v8527, %v8576
    %v8616 = vmul.f32 %v8528, %v8576
    %v8617 = vmul.f32 %v8529, %v8576
    %v8618 = vmul.f32 %v8530, %v8581
    %v8619 = vmul.f32 %v8531, %v8581
    %v8620 = vmul.f32 %v8532, %v8581
    %v8621 = vmul.f32 %v8533, %v8581
    %v8622 = vmul.f32 %v8534, %v8581
    %v8623 = vmul.f32 %v8535, %v8586
    %v8624 = vmul.f32 %v8536, %v8586
    %v8625 = vmul.f32 %v8537, %v8586
    %v8626 = vmul.f32 %v8538, %v8586
    %v8627 = vmul.f32 %v8539, %v8586
    %v8628 = vmul.f32 %v8540, %v8591
    %v8629 = vmul.f32 %v8541, %v8591
    %v8630 = vmul.f32 %v8542, %v8591
    %v8631 = vmul.f32 %v8543, %v8591
    %v8632 = vmul.f32 %v8544, %v8591
    %v8633 = vsel %vm6699, %v8593, 0.0
    %v8634 = vsel %vm6699, %v8598, 0.0
    %v8635 = vadd.f32 %v8633, %v8634
    %v8636 = vsel %vm6699, %v8603, 0.0
    %v8637 = vadd.f32 %v8635, %v8636
    %v8638 = vsel %vm6699, %v8608, 0.0
    %v8639 = vadd.f32 %v8637, %v8638
    %v8640 = vsel %vm6699, %v8613, 0.0
    %v8641 = vadd.f32 %v8639, %v8640
    %v8642 = vsel %vm6699, %v8618, 0.0
    %v8643 = vadd.f32 %v8641, %v8642
    %v8644 = vsel %vm6699, %v8623, 0.0
    %v8645 = vadd.f32 %v8643, %v8644
    %v8646 = vsel %vm6699, %v8628, 0.0
    %v8647 = vadd.f32 %v8645, %v8646
    %v8648 = vrot.slane %v8647, 4
    %v8649 = vadd.f32 %v8647, %v8648
    %v8650 = vrot.slane %v8649, 2
    %v8651 = vadd.f32 %v8649, %v8650
    %v8652 = vrot.slane %v8651, 1
    %v8653 = vadd.f32 %v8651, %v8652
    %v8654 = vadd.f32 %v8594, %v8599
    %v8655 = vadd.f32 %v8654, %v8604
    %v8656 = vadd.f32 %v8655, %v8609
    %v8657 = vadd.f32 %v8656, %v8614
    %v8658 = vadd.f32 %v8657, %v8619
    %v8659 = vadd.f32 %v8658, %v8624
    %v8660 = vadd.f32 %v8659, %v8629
    %v8661 = vrot.slane %v8660, 4
    %v8662 = vadd.f32 %v8660, %v8661
    %v8663 = vrot.slane %v8662, 2
    %v8664 = vadd.f32 %v8662, %v8663
    %v8665 = vrot.slane %v8664, 1
    %v8666 = vadd.f32 %v8664, %v8665
    %v8667 = vadd.f32 %v8595, %v8600
    %v8668 = vadd.f32 %v8667, %v8605
    %v8669 = vadd.f32 %v8668, %v8610
    %v8670 = vadd.f32 %v8669, %v8615
    %v8671 = vadd.f32 %v8670, %v8620
    %v8672 = vadd.f32 %v8671, %v8625
    %v8673 = vadd.f32 %v8672, %v8630
    %v8674 = vrot.slane %v8673, 4
    %v8675 = vadd.f32 %v8673, %v8674
    %v8676 = vrot.slane %v8675, 2
    %v8677 = vadd.f32 %v8675, %v8676
    %v8678 = vrot.slane %v8677, 1
    %v8679 = vadd.f32 %v8677, %v8678
    %v8680 = vadd.f32 %v8596, %v8601
    %v8681 = vadd.f32 %v8680, %v8606
    %v8682 = vadd.f32 %v8681, %v8611
    %v8683 = vadd.f32 %v8682, %v8616
    %v8684 = vadd.f32 %v8683, %v8621
    %v8685 = vadd.f32 %v8684, %v8626
    %v8686 = vadd.f32 %v8685, %v8631
    %v8687 = vrot.slane %v8686, 4
    %v8688 = vadd.f32 %v8686, %v8687
    %v8689 = vrot.slane %v8688, 2
    %v8690 = vadd.f32 %v8688, %v8689
    %v8691 = vrot.slane %v8690, 1
    %v8692 = vadd.f32 %v8690, %v8691
    %v8693 = vsel %vm978, %v8597, 0.0
    %v8694 = vsel %vm978, %v8602, 0.0
    %v8695 = vadd.f32 %v8693, %v8694
    %v8696 = vsel %vm978, %v8607, 0.0
    %v8697 = vadd.f32 %v8695, %v8696
    %v8698 = vsel %vm978, %v8612, 0.0
    %v8699 = vadd.f32 %v8697, %v8698
    %v8700 = vsel %vm978, %v8617, 0.0
    %v8701 = vadd.f32 %v8699, %v8700
    %v8702 = vsel %vm978, %v8622, 0.0
    %v8703 = vadd.f32 %v8701, %v8702
    %v8704 = vsel %vm978, %v8627, 0.0
    %v8705 = vadd.f32 %v8703, %v8704
    %v8706 = vsel %vm978, %v8632, 0.0
    %v8707 = vadd.f32 %v8705, %v8706
    %v8708 = vrot.slane %v8707, 4
    %v8709 = vadd.f32 %v8707, %v8708
    %v8710 = vrot.slane %v8709, 2
    %v8711 = vadd.f32 %v8709, %v8710
    %v8712 = vrot.slane %v8711, 1
    %v8713 = vadd.f32 %v8711, %v8712
    %v8719 = vrot.slane %v8666, 7
    %v8720 = vrot.slane %v8679, 6
    %v8721 = vrot.slane %v8692, 5
    %v8722 = vrot.slane %v8713, 4
    %v8723 = vsel %vm6748, %v8653, %v8719
    %v8724 = vsel %vm6750, %v8723, %v8720
    %v8725 = vsel %vm6752, %v8721, %v8722
    %v8726 = vsel %vm6754, %v8724, %v8725
    %8727 = vrot.lane.b32.xlu0 %v8726, 17
    %v8728 = vpop.permute.xlu0 %8727
    %v8729 = vrot.slane %v8728, 1
    %v8730 = vsel %vm229, %v8728, %v8729
    %v8732 = vmul.f32 %v6676, %v8730
    %s8733 = scalar_lea.vmem %s18, 64
    %v8734 = vld [vmem:[%s8733] sm:$0xff]
    %v8735 = vld [vmem:[%s8733 + $0x8] sm:$0xff]
    %v8736 = vld [vmem:[%s8733 + $0x10] sm:$0xff]
    %v8737 = vld [vmem:[%s8733 + $0x18] sm:$0xff]
    %v8738 = vld [vmem:[%s8733 + $0x20] sm:$0xff]
    %v8739 = vld [vmem:[%s8733 + $0x28] sm:$0xff]
    %v8740 = vld [vmem:[%s8733 + $0x30] sm:$0xff]
    %v8741 = vld [vmem:[%s8733 + $0x38] sm:$0xff]
    %8743 = vset.pattern.permute.xlu0 0
    %8744 = vperm.xlu0 %8743, %v8734
    %v8745 = vpop.permute.xlu0 %8744
    %8748 = vset.pattern.permute.xlu0 0
    %8749 = vperm.xlu0 %8748, %v8735
    %v8750 = vpop.permute.xlu0 %8749
    %8753 = vset.pattern.permute.xlu0 0
    %8754 = vperm.xlu0 %8753, %v8736
    %v8755 = vpop.permute.xlu0 %8754
    %8758 = vset.pattern.permute.xlu0 0
    %8759 = vperm.xlu0 %8758, %v8737
    %v8760 = vpop.permute.xlu0 %8759
    %8763 = vset.pattern.permute.xlu0 0
    %8764 = vperm.xlu0 %8763, %v8738
    %v8765 = vpop.permute.xlu0 %8764
    %8768 = vset.pattern.permute.xlu0 0
    %8769 = vperm.xlu0 %8768, %v8739
    %v8770 = vpop.permute.xlu0 %8769
    %8773 = vset.pattern.permute.xlu0 0
    %8774 = vperm.xlu0 %8773, %v8740
    %v8775 = vpop.permute.xlu0 %8774
    %8778 = vset.pattern.permute.xlu0 0
    %8779 = vperm.xlu0 %8778, %v8741
    %v8780 = vpop.permute.xlu0 %8779
    %v8782 = vmul.f32 %v8505, %v8745
    %v8783 = vmul.f32 %v8506, %v8745
    %v8784 = vmul.f32 %v8507, %v8745
    %v8785 = vmul.f32 %v8508, %v8745
    %v8786 = vmul.f32 %v8509, %v8745
    %v8787 = vmul.f32 %v8510, %v8750
    %v8788 = vmul.f32 %v8511, %v8750
    %v8789 = vmul.f32 %v8512, %v8750
    %v8790 = vmul.f32 %v8513, %v8750
    %v8791 = vmul.f32 %v8514, %v8750
    %v8792 = vmul.f32 %v8515, %v8755
    %v8793 = vmul.f32 %v8516, %v8755
    %v8794 = vmul.f32 %v8517, %v8755
    %v8795 = vmul.f32 %v8518, %v8755
    %v8796 = vmul.f32 %v8519, %v8755
    %v8797 = vmul.f32 %v8520, %v8760
    %v8798 = vmul.f32 %v8521, %v8760
    %v8799 = vmul.f32 %v8522, %v8760
    %v8800 = vmul.f32 %v8523, %v8760
    %v8801 = vmul.f32 %v8524, %v8760
    %v8802 = vmul.f32 %v8525, %v8765
    %v8803 = vmul.f32 %v8526, %v8765
    %v8804 = vmul.f32 %v8527, %v8765
    %v8805 = vmul.f32 %v8528, %v8765
    %v8806 = vmul.f32 %v8529, %v8765
    %v8807 = vmul.f32 %v8530, %v8770
    %v8808 = vmul.f32 %v8531, %v8770
    %v8809 = vmul.f32 %v8532, %v8770
    %v8810 = vmul.f32 %v8533, %v8770
    %v8811 = vmul.f32 %v8534, %v8770
    %v8812 = vmul.f32 %v8535, %v8775
    %v8813 = vmul.f32 %v8536, %v8775
    %v8814 = vmul.f32 %v8537, %v8775
    %v8815 = vmul.f32 %v8538, %v8775
    %v8816 = vmul.f32 %v8539, %v8775
    %v8817 = vmul.f32 %v8540, %v8780
    %v8818 = vmul.f32 %v8541, %v8780
    %v8819 = vmul.f32 %v8542, %v8780
    %v8820 = vmul.f32 %v8543, %v8780
    %v8821 = vmul.f32 %v8544, %v8780
    %v8822 = vsel %vm6787, %v8782, 0.0
    %v8823 = vsel %vm6787, %v8787, 0.0
    %v8824 = vadd.f32 %v8822, %v8823
    %v8825 = vsel %vm6787, %v8792, 0.0
    %v8826 = vadd.f32 %v8824, %v8825
    %v8827 = vsel %vm6787, %v8797, 0.0
    %v8828 = vadd.f32 %v8826, %v8827
    %v8829 = vsel %vm6787, %v8802, 0.0
    %v8830 = vadd.f32 %v8828, %v8829
    %v8831 = vsel %vm6787, %v8807, 0.0
    %v8832 = vadd.f32 %v8830, %v8831
    %v8833 = vsel %vm6787, %v8812, 0.0
    %v8834 = vadd.f32 %v8832, %v8833
    %v8835 = vsel %vm6787, %v8817, 0.0
    %v8836 = vadd.f32 %v8834, %v8835
    %v8837 = vrot.slane %v8836, 4
    %v8838 = vadd.f32 %v8836, %v8837
    %v8839 = vrot.slane %v8838, 2
    %v8840 = vadd.f32 %v8838, %v8839
    %v8841 = vrot.slane %v8840, 1
    %v8842 = vadd.f32 %v8840, %v8841
    %v8843 = vadd.f32 %v8783, %v8788
    %v8844 = vadd.f32 %v8843, %v8793
    %v8845 = vadd.f32 %v8844, %v8798
    %v8846 = vadd.f32 %v8845, %v8803
    %v8847 = vadd.f32 %v8846, %v8808
    %v8848 = vadd.f32 %v8847, %v8813
    %v8849 = vadd.f32 %v8848, %v8818
    %v8850 = vrot.slane %v8849, 4
    %v8851 = vadd.f32 %v8849, %v8850
    %v8852 = vrot.slane %v8851, 2
    %v8853 = vadd.f32 %v8851, %v8852
    %v8854 = vrot.slane %v8853, 1
    %v8855 = vadd.f32 %v8853, %v8854
    %v8856 = vadd.f32 %v8784, %v8789
    %v8857 = vadd.f32 %v8856, %v8794
    %v8858 = vadd.f32 %v8857, %v8799
    %v8859 = vadd.f32 %v8858, %v8804
    %v8860 = vadd.f32 %v8859, %v8809
    %v8861 = vadd.f32 %v8860, %v8814
    %v8862 = vadd.f32 %v8861, %v8819
    %v8863 = vrot.slane %v8862, 4
    %v8864 = vadd.f32 %v8862, %v8863
    %v8865 = vrot.slane %v8864, 2
    %v8866 = vadd.f32 %v8864, %v8865
    %v8867 = vrot.slane %v8866, 1
    %v8868 = vadd.f32 %v8866, %v8867
    %v8869 = vadd.f32 %v8785, %v8790
    %v8870 = vadd.f32 %v8869, %v8795
    %v8871 = vadd.f32 %v8870, %v8800
    %v8872 = vadd.f32 %v8871, %v8805
    %v8873 = vadd.f32 %v8872, %v8810
    %v8874 = vadd.f32 %v8873, %v8815
    %v8875 = vadd.f32 %v8874, %v8820
    %v8876 = vrot.slane %v8875, 4
    %v8877 = vadd.f32 %v8875, %v8876
    %v8878 = vrot.slane %v8877, 2
    %v8879 = vadd.f32 %v8877, %v8878
    %v8880 = vrot.slane %v8879, 1
    %v8881 = vadd.f32 %v8879, %v8880
    %v8882 = vsel %vm931, %v8786, 0.0
    %v8883 = vsel %vm931, %v8791, 0.0
    %v8884 = vadd.f32 %v8882, %v8883
    %v8885 = vsel %vm931, %v8796, 0.0
    %v8886 = vadd.f32 %v8884, %v8885
    %v8887 = vsel %vm931, %v8801, 0.0
    %v8888 = vadd.f32 %v8886, %v8887
    %v8889 = vsel %vm931, %v8806, 0.0
    %v8890 = vadd.f32 %v8888, %v8889
    %v8891 = vsel %vm931, %v8811, 0.0
    %v8892 = vadd.f32 %v8890, %v8891
    %v8893 = vsel %vm931, %v8816, 0.0
    %v8894 = vadd.f32 %v8892, %v8893
    %v8895 = vsel %vm931, %v8821, 0.0
    %v8896 = vadd.f32 %v8894, %v8895
    %v8897 = vrot.slane %v8896, 4
    %v8898 = vadd.f32 %v8896, %v8897
    %v8899 = vrot.slane %v8898, 2
    %v8900 = vadd.f32 %v8898, %v8899
    %v8901 = vrot.slane %v8900, 1
    %v8902 = vadd.f32 %v8900, %v8901
    %v8908 = vrot.slane %v8855, 7
    %v8909 = vrot.slane %v8868, 6
    %v8910 = vrot.slane %v8881, 5
    %v8911 = vrot.slane %v8902, 4
    %v8912 = vsel %vm6748, %v8842, %v8908
    %v8913 = vsel %vm6750, %v8912, %v8909
    %v8914 = vsel %vm6752, %v8910, %v8911
    %v8915 = vsel %vm6754, %v8913, %v8914
    %8916 = vrot.lane.b32.xlu0 %v8915, 16
    %v8917 = vpop.permute.xlu0 %8916
    %v8918 = vrot.slane %v8917, 1
    %v8919 = vsel %vm276, %v8917, %v8918
    %v8921 = vmul.f32 %v6763, %v8919
    %v8922 = vadd.f32 %v8732, %v8921
    %s8923 = scalar_lea.vmem %s18, 128
    %v8924 = vld [vmem:[%s8923] sm:$0xff]
    %v8925 = vld [vmem:[%s8923 + $0x8] sm:$0xff]
    %v8926 = vld [vmem:[%s8923 + $0x10] sm:$0xff]
    %v8927 = vld [vmem:[%s8923 + $0x18] sm:$0xff]
    %v8928 = vld [vmem:[%s8923 + $0x20] sm:$0xff]
    %v8929 = vld [vmem:[%s8923 + $0x28] sm:$0xff]
    %v8930 = vld [vmem:[%s8923 + $0x30] sm:$0xff]
    %v8931 = vld [vmem:[%s8923 + $0x38] sm:$0xff]
    %8933 = vset.pattern.permute.xlu0 0
    %8934 = vperm.xlu0 %8933, %v8924
    %v8935 = vpop.permute.xlu0 %8934
    %8938 = vset.pattern.permute.xlu0 0
    %8939 = vperm.xlu0 %8938, %v8925
    %v8940 = vpop.permute.xlu0 %8939
    %8943 = vset.pattern.permute.xlu0 0
    %8944 = vperm.xlu0 %8943, %v8926
    %v8945 = vpop.permute.xlu0 %8944
    %8948 = vset.pattern.permute.xlu0 0
    %8949 = vperm.xlu0 %8948, %v8927
    %v8950 = vpop.permute.xlu0 %8949
    %8953 = vset.pattern.permute.xlu0 0
    %8954 = vperm.xlu0 %8953, %v8928
    %v8955 = vpop.permute.xlu0 %8954
    %8958 = vset.pattern.permute.xlu0 0
    %8959 = vperm.xlu0 %8958, %v8929
    %v8960 = vpop.permute.xlu0 %8959
    %8963 = vset.pattern.permute.xlu0 0
    %8964 = vperm.xlu0 %8963, %v8930
    %v8965 = vpop.permute.xlu0 %8964
    %8968 = vset.pattern.permute.xlu0 0
    %8969 = vperm.xlu0 %8968, %v8931
    %v8970 = vpop.permute.xlu0 %8969
    %v8972 = vmul.f32 %v8505, %v8935
    %v8973 = vmul.f32 %v8506, %v8935
    %v8974 = vmul.f32 %v8507, %v8935
    %v8975 = vmul.f32 %v8508, %v8935
    %v8976 = vmul.f32 %v8509, %v8935
    %v8977 = vmul.f32 %v8510, %v8940
    %v8978 = vmul.f32 %v8511, %v8940
    %v8979 = vmul.f32 %v8512, %v8940
    %v8980 = vmul.f32 %v8513, %v8940
    %v8981 = vmul.f32 %v8514, %v8940
    %v8982 = vmul.f32 %v8515, %v8945
    %v8983 = vmul.f32 %v8516, %v8945
    %v8984 = vmul.f32 %v8517, %v8945
    %v8985 = vmul.f32 %v8518, %v8945
    %v8986 = vmul.f32 %v8519, %v8945
    %v8987 = vmul.f32 %v8520, %v8950
    %v8988 = vmul.f32 %v8521, %v8950
    %v8989 = vmul.f32 %v8522, %v8950
    %v8990 = vmul.f32 %v8523, %v8950
    %v8991 = vmul.f32 %v8524, %v8950
    %v8992 = vmul.f32 %v8525, %v8955
    %v8993 = vmul.f32 %v8526, %v8955
    %v8994 = vmul.f32 %v8527, %v8955
    %v8995 = vmul.f32 %v8528, %v8955
    %v8996 = vmul.f32 %v8529, %v8955
    %v8997 = vmul.f32 %v8530, %v8960
    %v8998 = vmul.f32 %v8531, %v8960
    %v8999 = vmul.f32 %v8532, %v8960
    %v9000 = vmul.f32 %v8533, %v8960
    %v9001 = vmul.f32 %v8534, %v8960
    %v9002 = vmul.f32 %v8535, %v8965
    %v9003 = vmul.f32 %v8536, %v8965
    %v9004 = vmul.f32 %v8537, %v8965
    %v9005 = vmul.f32 %v8538, %v8965
    %v9006 = vmul.f32 %v8539, %v8965
    %v9007 = vmul.f32 %v8540, %v8970
    %v9008 = vmul.f32 %v8541, %v8970
    %v9009 = vmul.f32 %v8542, %v8970
    %v9010 = vmul.f32 %v8543, %v8970
    %v9011 = vmul.f32 %v8544, %v8970
    %v9012 = vsel %vm6872, %v8972, 0.0
    %v9013 = vsel %vm6872, %v8977, 0.0
    %v9014 = vadd.f32 %v9012, %v9013
    %v9015 = vsel %vm6872, %v8982, 0.0
    %v9016 = vadd.f32 %v9014, %v9015
    %v9017 = vsel %vm6872, %v8987, 0.0
    %v9018 = vadd.f32 %v9016, %v9017
    %v9019 = vsel %vm6872, %v8992, 0.0
    %v9020 = vadd.f32 %v9018, %v9019
    %v9021 = vsel %vm6872, %v8997, 0.0
    %v9022 = vadd.f32 %v9020, %v9021
    %v9023 = vsel %vm6872, %v9002, 0.0
    %v9024 = vadd.f32 %v9022, %v9023
    %v9025 = vsel %vm6872, %v9007, 0.0
    %v9026 = vadd.f32 %v9024, %v9025
    %v9027 = vrot.slane %v9026, 4
    %v9028 = vadd.f32 %v9026, %v9027
    %v9029 = vrot.slane %v9028, 2
    %v9030 = vadd.f32 %v9028, %v9029
    %v9031 = vrot.slane %v9030, 1
    %v9032 = vadd.f32 %v9030, %v9031
    %v9033 = vadd.f32 %v8973, %v8978
    %v9034 = vadd.f32 %v9033, %v8983
    %v9035 = vadd.f32 %v9034, %v8988
    %v9036 = vadd.f32 %v9035, %v8993
    %v9037 = vadd.f32 %v9036, %v8998
    %v9038 = vadd.f32 %v9037, %v9003
    %v9039 = vadd.f32 %v9038, %v9008
    %v9040 = vrot.slane %v9039, 4
    %v9041 = vadd.f32 %v9039, %v9040
    %v9042 = vrot.slane %v9041, 2
    %v9043 = vadd.f32 %v9041, %v9042
    %v9044 = vrot.slane %v9043, 1
    %v9045 = vadd.f32 %v9043, %v9044
    %v9046 = vadd.f32 %v8974, %v8979
    %v9047 = vadd.f32 %v9046, %v8984
    %v9048 = vadd.f32 %v9047, %v8989
    %v9049 = vadd.f32 %v9048, %v8994
    %v9050 = vadd.f32 %v9049, %v8999
    %v9051 = vadd.f32 %v9050, %v9004
    %v9052 = vadd.f32 %v9051, %v9009
    %v9053 = vrot.slane %v9052, 4
    %v9054 = vadd.f32 %v9052, %v9053
    %v9055 = vrot.slane %v9054, 2
    %v9056 = vadd.f32 %v9054, %v9055
    %v9057 = vrot.slane %v9056, 1
    %v9058 = vadd.f32 %v9056, %v9057
    %v9059 = vadd.f32 %v8975, %v8980
    %v9060 = vadd.f32 %v9059, %v8985
    %v9061 = vadd.f32 %v9060, %v8990
    %v9062 = vadd.f32 %v9061, %v8995
    %v9063 = vadd.f32 %v9062, %v9000
    %v9064 = vadd.f32 %v9063, %v9005
    %v9065 = vadd.f32 %v9064, %v9010
    %v9066 = vrot.slane %v9065, 4
    %v9067 = vadd.f32 %v9065, %v9066
    %v9068 = vrot.slane %v9067, 2
    %v9069 = vadd.f32 %v9067, %v9068
    %v9070 = vrot.slane %v9069, 1
    %v9071 = vadd.f32 %v9069, %v9070
    %v9072 = vsel %vm884, %v8976, 0.0
    %v9073 = vsel %vm884, %v8981, 0.0
    %v9074 = vadd.f32 %v9072, %v9073
    %v9075 = vsel %vm884, %v8986, 0.0
    %v9076 = vadd.f32 %v9074, %v9075
    %v9077 = vsel %vm884, %v8991, 0.0
    %v9078 = vadd.f32 %v9076, %v9077
    %v9079 = vsel %vm884, %v8996, 0.0
    %v9080 = vadd.f32 %v9078, %v9079
    %v9081 = vsel %vm884, %v9001, 0.0
    %v9082 = vadd.f32 %v9080, %v9081
    %v9083 = vsel %vm884, %v9006, 0.0
    %v9084 = vadd.f32 %v9082, %v9083
    %v9085 = vsel %vm884, %v9011, 0.0
    %v9086 = vadd.f32 %v9084, %v9085
    %v9087 = vrot.slane %v9086, 4
    %v9088 = vadd.f32 %v9086, %v9087
    %v9089 = vrot.slane %v9088, 2
    %v9090 = vadd.f32 %v9088, %v9089
    %v9091 = vrot.slane %v9090, 1
    %v9092 = vadd.f32 %v9090, %v9091
    %v9098 = vrot.slane %v9045, 7
    %v9099 = vrot.slane %v9058, 6
    %v9100 = vrot.slane %v9071, 5
    %v9101 = vrot.slane %v9092, 4
    %v9102 = vsel %vm6748, %v9032, %v9098
    %v9103 = vsel %vm6750, %v9102, %v9099
    %v9104 = vsel %vm6752, %v9100, %v9101
    %v9105 = vsel %vm6754, %v9103, %v9104
    %9106 = vrot.lane.b32.xlu0 %v9105, 15
    %v9107 = vpop.permute.xlu0 %9106
    %v9108 = vrot.slane %v9107, 1
    %v9109 = vsel %vm323, %v9107, %v9108
    %v9111 = vmul.f32 %v6848, %v9109
    %v9112 = vadd.f32 %v8922, %v9111
    %s9113 = scalar_lea.vmem %s18, 192
    %v9114 = vld [vmem:[%s9113] sm:$0xff]
    %v9115 = vld [vmem:[%s9113 + $0x8] sm:$0xff]
    %v9116 = vld [vmem:[%s9113 + $0x10] sm:$0xff]
    %v9117 = vld [vmem:[%s9113 + $0x18] sm:$0xff]
    %v9118 = vld [vmem:[%s9113 + $0x20] sm:$0xff]
    %v9119 = vld [vmem:[%s9113 + $0x28] sm:$0xff]
    %v9120 = vld [vmem:[%s9113 + $0x30] sm:$0xff]
    %v9121 = vld [vmem:[%s9113 + $0x38] sm:$0xff]
    %9123 = vset.pattern.permute.xlu0 0
    %9124 = vperm.xlu0 %9123, %v9114
    %v9125 = vpop.permute.xlu0 %9124
    %9128 = vset.pattern.permute.xlu0 0
    %9129 = vperm.xlu0 %9128, %v9115
    %v9130 = vpop.permute.xlu0 %9129
    %9133 = vset.pattern.permute.xlu0 0
    %9134 = vperm.xlu0 %9133, %v9116
    %v9135 = vpop.permute.xlu0 %9134
    %9138 = vset.pattern.permute.xlu0 0
    %9139 = vperm.xlu0 %9138, %v9117
    %v9140 = vpop.permute.xlu0 %9139
    %9143 = vset.pattern.permute.xlu0 0
    %9144 = vperm.xlu0 %9143, %v9118
    %v9145 = vpop.permute.xlu0 %9144
    %9148 = vset.pattern.permute.xlu0 0
    %9149 = vperm.xlu0 %9148, %v9119
    %v9150 = vpop.permute.xlu0 %9149
    %9153 = vset.pattern.permute.xlu0 0
    %9154 = vperm.xlu0 %9153, %v9120
    %v9155 = vpop.permute.xlu0 %9154
    %9158 = vset.pattern.permute.xlu0 0
    %9159 = vperm.xlu0 %9158, %v9121
    %v9160 = vpop.permute.xlu0 %9159
    %v9162 = vmul.f32 %v8505, %v9125
    %v9163 = vmul.f32 %v8506, %v9125
    %v9164 = vmul.f32 %v8507, %v9125
    %v9165 = vmul.f32 %v8508, %v9125
    %v9166 = vmul.f32 %v8509, %v9125
    %v9167 = vmul.f32 %v8510, %v9130
    %v9168 = vmul.f32 %v8511, %v9130
    %v9169 = vmul.f32 %v8512, %v9130
    %v9170 = vmul.f32 %v8513, %v9130
    %v9171 = vmul.f32 %v8514, %v9130
    %v9172 = vmul.f32 %v8515, %v9135
    %v9173 = vmul.f32 %v8516, %v9135
    %v9174 = vmul.f32 %v8517, %v9135
    %v9175 = vmul.f32 %v8518, %v9135
    %v9176 = vmul.f32 %v8519, %v9135
    %v9177 = vmul.f32 %v8520, %v9140
    %v9178 = vmul.f32 %v8521, %v9140
    %v9179 = vmul.f32 %v8522, %v9140
    %v9180 = vmul.f32 %v8523, %v9140
    %v9181 = vmul.f32 %v8524, %v9140
    %v9182 = vmul.f32 %v8525, %v9145
    %v9183 = vmul.f32 %v8526, %v9145
    %v9184 = vmul.f32 %v8527, %v9145
    %v9185 = vmul.f32 %v8528, %v9145
    %v9186 = vmul.f32 %v8529, %v9145
    %v9187 = vmul.f32 %v8530, %v9150
    %v9188 = vmul.f32 %v8531, %v9150
    %v9189 = vmul.f32 %v8532, %v9150
    %v9190 = vmul.f32 %v8533, %v9150
    %v9191 = vmul.f32 %v8534, %v9150
    %v9192 = vmul.f32 %v8535, %v9155
    %v9193 = vmul.f32 %v8536, %v9155
    %v9194 = vmul.f32 %v8537, %v9155
    %v9195 = vmul.f32 %v8538, %v9155
    %v9196 = vmul.f32 %v8539, %v9155
    %v9197 = vmul.f32 %v8540, %v9160
    %v9198 = vmul.f32 %v8541, %v9160
    %v9199 = vmul.f32 %v8542, %v9160
    %v9200 = vmul.f32 %v8543, %v9160
    %v9201 = vmul.f32 %v8544, %v9160
    %v9202 = vsel %vm6957, %v9162, 0.0
    %v9203 = vsel %vm6957, %v9167, 0.0
    %v9204 = vadd.f32 %v9202, %v9203
    %v9205 = vsel %vm6957, %v9172, 0.0
    %v9206 = vadd.f32 %v9204, %v9205
    %v9207 = vsel %vm6957, %v9177, 0.0
    %v9208 = vadd.f32 %v9206, %v9207
    %v9209 = vsel %vm6957, %v9182, 0.0
    %v9210 = vadd.f32 %v9208, %v9209
    %v9211 = vsel %vm6957, %v9187, 0.0
    %v9212 = vadd.f32 %v9210, %v9211
    %v9213 = vsel %vm6957, %v9192, 0.0
    %v9214 = vadd.f32 %v9212, %v9213
    %v9215 = vsel %vm6957, %v9197, 0.0
    %v9216 = vadd.f32 %v9214, %v9215
    %v9217 = vrot.slane %v9216, 4
    %v9218 = vadd.f32 %v9216, %v9217
    %v9219 = vrot.slane %v9218, 2
    %v9220 = vadd.f32 %v9218, %v9219
    %v9221 = vrot.slane %v9220, 1
    %v9222 = vadd.f32 %v9220, %v9221
    %v9223 = vadd.f32 %v9163, %v9168
    %v9224 = vadd.f32 %v9223, %v9173
    %v9225 = vadd.f32 %v9224, %v9178
    %v9226 = vadd.f32 %v9225, %v9183
    %v9227 = vadd.f32 %v9226, %v9188
    %v9228 = vadd.f32 %v9227, %v9193
    %v9229 = vadd.f32 %v9228, %v9198
    %v9230 = vrot.slane %v9229, 4
    %v9231 = vadd.f32 %v9229, %v9230
    %v9232 = vrot.slane %v9231, 2
    %v9233 = vadd.f32 %v9231, %v9232
    %v9234 = vrot.slane %v9233, 1
    %v9235 = vadd.f32 %v9233, %v9234
    %v9236 = vadd.f32 %v9164, %v9169
    %v9237 = vadd.f32 %v9236, %v9174
    %v9238 = vadd.f32 %v9237, %v9179
    %v9239 = vadd.f32 %v9238, %v9184
    %v9240 = vadd.f32 %v9239, %v9189
    %v9241 = vadd.f32 %v9240, %v9194
    %v9242 = vadd.f32 %v9241, %v9199
    %v9243 = vrot.slane %v9242, 4
    %v9244 = vadd.f32 %v9242, %v9243
    %v9245 = vrot.slane %v9244, 2
    %v9246 = vadd.f32 %v9244, %v9245
    %v9247 = vrot.slane %v9246, 1
    %v9248 = vadd.f32 %v9246, %v9247
    %v9249 = vadd.f32 %v9165, %v9170
    %v9250 = vadd.f32 %v9249, %v9175
    %v9251 = vadd.f32 %v9250, %v9180
    %v9252 = vadd.f32 %v9251, %v9185
    %v9253 = vadd.f32 %v9252, %v9190
    %v9254 = vadd.f32 %v9253, %v9195
    %v9255 = vadd.f32 %v9254, %v9200
    %v9256 = vrot.slane %v9255, 4
    %v9257 = vadd.f32 %v9255, %v9256
    %v9258 = vrot.slane %v9257, 2
    %v9259 = vadd.f32 %v9257, %v9258
    %v9260 = vrot.slane %v9259, 1
    %v9261 = vadd.f32 %v9259, %v9260
    %v9262 = vsel %vm649, %v9166, 0.0
    %v9263 = vsel %vm649, %v9171, 0.0
    %v9264 = vadd.f32 %v9262, %v9263
    %v9265 = vsel %vm649, %v9176, 0.0
    %v9266 = vadd.f32 %v9264, %v9265
    %v9267 = vsel %vm649, %v9181, 0.0
    %v9268 = vadd.f32 %v9266, %v9267
    %v9269 = vsel %vm649, %v9186, 0.0
    %v9270 = vadd.f32 %v9268, %v9269
    %v9271 = vsel %vm649, %v9191, 0.0
    %v9272 = vadd.f32 %v9270, %v9271
    %v9273 = vsel %vm649, %v9196, 0.0
    %v9274 = vadd.f32 %v9272, %v9273
    %v9275 = vsel %vm649, %v9201, 0.0
    %v9276 = vadd.f32 %v9274, %v9275
    %v9277 = vrot.slane %v9276, 4
    %v9278 = vadd.f32 %v9276, %v9277
    %v9279 = vrot.slane %v9278, 2
    %v9280 = vadd.f32 %v9278, %v9279
    %v9281 = vrot.slane %v9280, 1
    %v9282 = vadd.f32 %v9280, %v9281
    %v9288 = vrot.slane %v9235, 7
    %v9289 = vrot.slane %v9248, 6
    %v9290 = vrot.slane %v9261, 5
    %v9291 = vrot.slane %v9282, 4
    %v9292 = vsel %vm6748, %v9222, %v9288
    %v9293 = vsel %vm6750, %v9292, %v9289
    %v9294 = vsel %vm6752, %v9290, %v9291
    %v9295 = vsel %vm6754, %v9293, %v9294
    %9296 = vrot.lane.b32.xlu0 %v9295, 1
    %v9297 = vpop.permute.xlu0 %9296
    %v9298 = vrot.slane %v9297, 1
    %v9299 = vsel %vm558, %v9297, %v9298
    %v9301 = vmul.f32 %v6933, %v9299
    %v9302 = vadd.f32 %v9112, %v9301
    %s9303 = scalar_lea.vmem %s18, 256
    %v9304 = vld [vmem:[%s9303] sm:$0xff]
    %v9305 = vld [vmem:[%s9303 + $0x8] sm:$0xff]
    %v9306 = vld [vmem:[%s9303 + $0x10] sm:$0xff]
    %v9307 = vld [vmem:[%s9303 + $0x18] sm:$0xff]
    %v9308 = vld [vmem:[%s9303 + $0x20] sm:$0xff]
    %v9309 = vld [vmem:[%s9303 + $0x28] sm:$0xff]
    %v9310 = vld [vmem:[%s9303 + $0x30] sm:$0xff]
    %v9311 = vld [vmem:[%s9303 + $0x38] sm:$0xff]
    %9313 = vset.pattern.permute.xlu0 0
    %9314 = vperm.xlu0 %9313, %v9304
    %v9315 = vpop.permute.xlu0 %9314
    %9318 = vset.pattern.permute.xlu0 0
    %9319 = vperm.xlu0 %9318, %v9305
    %v9320 = vpop.permute.xlu0 %9319
    %9323 = vset.pattern.permute.xlu0 0
    %9324 = vperm.xlu0 %9323, %v9306
    %v9325 = vpop.permute.xlu0 %9324
    %9328 = vset.pattern.permute.xlu0 0
    %9329 = vperm.xlu0 %9328, %v9307
    %v9330 = vpop.permute.xlu0 %9329
    %9333 = vset.pattern.permute.xlu0 0
    %9334 = vperm.xlu0 %9333, %v9308
    %v9335 = vpop.permute.xlu0 %9334
    %9338 = vset.pattern.permute.xlu0 0
    %9339 = vperm.xlu0 %9338, %v9309
    %v9340 = vpop.permute.xlu0 %9339
    %9343 = vset.pattern.permute.xlu0 0
    %9344 = vperm.xlu0 %9343, %v9310
    %v9345 = vpop.permute.xlu0 %9344
    %9348 = vset.pattern.permute.xlu0 0
    %9349 = vperm.xlu0 %9348, %v9311
    %v9350 = vpop.permute.xlu0 %9349
    %v9352 = vmul.f32 %v8506, %v9315
    %v9353 = vmul.f32 %v8507, %v9315
    %v9354 = vmul.f32 %v8508, %v9315
    %v9355 = vmul.f32 %v8509, %v9315
    %v9356 = vmul.f32 %v8511, %v9320
    %v9357 = vmul.f32 %v8512, %v9320
    %v9358 = vmul.f32 %v8513, %v9320
    %v9359 = vmul.f32 %v8514, %v9320
    %v9360 = vmul.f32 %v8516, %v9325
    %v9361 = vmul.f32 %v8517, %v9325
    %v9362 = vmul.f32 %v8518, %v9325
    %v9363 = vmul.f32 %v8519, %v9325
    %v9364 = vmul.f32 %v8521, %v9330
    %v9365 = vmul.f32 %v8522, %v9330
    %v9366 = vmul.f32 %v8523, %v9330
    %v9367 = vmul.f32 %v8524, %v9330
    %v9368 = vmul.f32 %v8526, %v9335
    %v9369 = vmul.f32 %v8527, %v9335
    %v9370 = vmul.f32 %v8528, %v9335
    %v9371 = vmul.f32 %v8529, %v9335
    %v9372 = vmul.f32 %v8531, %v9340
    %v9373 = vmul.f32 %v8532, %v9340
    %v9374 = vmul.f32 %v8533, %v9340
    %v9375 = vmul.f32 %v8534, %v9340
    %v9376 = vmul.f32 %v8536, %v9345
    %v9377 = vmul.f32 %v8537, %v9345
    %v9378 = vmul.f32 %v8538, %v9345
    %v9379 = vmul.f32 %v8539, %v9345
    %v9380 = vmul.f32 %v8541, %v9350
    %v9381 = vmul.f32 %v8542, %v9350
    %v9382 = vmul.f32 %v8543, %v9350
    %v9383 = vmul.f32 %v8544, %v9350
    %v9384 = vadd.f32 %v9352, %v9356
    %v9385 = vadd.f32 %v9384, %v9360
    %v9386 = vadd.f32 %v9385, %v9364
    %v9387 = vadd.f32 %v9386, %v9368
    %v9388 = vadd.f32 %v9387, %v9372
    %v9389 = vadd.f32 %v9388, %v9376
    %v9390 = vadd.f32 %v9389, %v9380
    %v9391 = vrot.slane %v9390, 4
    %v9392 = vadd.f32 %v9390, %v9391
    %v9393 = vrot.slane %v9392, 2
    %v9394 = vadd.f32 %v9392, %v9393
    %v9395 = vrot.slane %v9394, 1
    %v9396 = vadd.f32 %v9394, %v9395
    %v9397 = vadd.f32 %v9353, %v9357
    %v9398 = vadd.f32 %v9397, %v9361
    %v9399 = vadd.f32 %v9398, %v9365
    %v9400 = vadd.f32 %v9399, %v9369
    %v9401 = vadd.f32 %v9400, %v9373
    %v9402 = vadd.f32 %v9401, %v9377
    %v9403 = vadd.f32 %v9402, %v9381
    %v9404 = vrot.slane %v9403, 4
    %v9405 = vadd.f32 %v9403, %v9404
    %v9406 = vrot.slane %v9405, 2
    %v9407 = vadd.f32 %v9405, %v9406
    %v9408 = vrot.slane %v9407, 1
    %v9409 = vadd.f32 %v9407, %v9408
    %v9410 = vadd.f32 %v9354, %v9358
    %v9411 = vadd.f32 %v9410, %v9362
    %v9412 = vadd.f32 %v9411, %v9366
    %v9413 = vadd.f32 %v9412, %v9370
    %v9414 = vadd.f32 %v9413, %v9374
    %v9415 = vadd.f32 %v9414, %v9378
    %v9416 = vadd.f32 %v9415, %v9382
    %v9417 = vrot.slane %v9416, 4
    %v9418 = vadd.f32 %v9416, %v9417
    %v9419 = vrot.slane %v9418, 2
    %v9420 = vadd.f32 %v9418, %v9419
    %v9421 = vrot.slane %v9420, 1
    %v9422 = vadd.f32 %v9420, %v9421
    %v9423 = vadd.f32 %v9355, %v9359
    %v9424 = vadd.f32 %v9423, %v9363
    %v9425 = vadd.f32 %v9424, %v9367
    %v9426 = vadd.f32 %v9425, %v9371
    %v9427 = vadd.f32 %v9426, %v9375
    %v9428 = vadd.f32 %v9427, %v9379
    %v9429 = vadd.f32 %v9428, %v9383
    %v9430 = vrot.slane %v9429, 4
    %v9431 = vadd.f32 %v9429, %v9430
    %v9432 = vrot.slane %v9431, 2
    %v9433 = vadd.f32 %v9431, %v9432
    %v9434 = vrot.slane %v9433, 1
    %v9435 = vadd.f32 %v9433, %v9434
    %v9440 = vrot.slane %v9409, 7
    %v9441 = vrot.slane %v9422, 6
    %v9442 = vrot.slane %v9435, 5
    %v9443 = vsel %vm6748, %v9396, %v9440
    %v9444 = vsel %vm7076, %v9441, %v9442
    %v9445 = vsel %vm6750, %v9443, %v9444
    %v9447 = vmul.f32 %v7018, %v9445
    %v9448 = vadd.f32 %v9302, %v9447
    %v9449 = vld [vmem:[#allocation7 + $0x8] sm:$0xff]
    %v9450 = vld [vmem:[#allocation7 + $0x10] sm:$0xff]
    %v9451 = vld [vmem:[#allocation7 + $0x18] sm:$0xff]
    %v9452 = vld [vmem:[#allocation7 + $0x20] sm:$0xff]
    %v9453 = vld [vmem:[#allocation7 + $0x28] sm:$0xff]
    %v9454 = vld [vmem:[#allocation7 + $0x38] sm:$0xff]
    %v9455 = vld [vmem:[#allocation7 + $0x40] sm:$0xff]
    %v9456 = vld [vmem:[#allocation7 + $0x48] sm:$0xff]
    %v9457 = vld [vmem:[#allocation7 + $0x50] sm:$0xff]
    %v9458 = vld [vmem:[#allocation7 + $0x58] sm:$0xff]
    %v9459 = vld [vmem:[#allocation7 + $0x68] sm:$0xff]
    %v9460 = vld [vmem:[#allocation7 + $0x70] sm:$0xff]
    %v9461 = vld [vmem:[#allocation7 + $0x78] sm:$0xff]
    %v9462 = vld [vmem:[#allocation7 + $0x80] sm:$0xff]
    %v9463 = vld [vmem:[#allocation7 + $0x88] sm:$0xff]
    %v9464 = vld [vmem:[#allocation7 + $0x98] sm:$0xff]
    %v9465 = vld [vmem:[#allocation7 + $0xa0] sm:$0xff]
    %v9466 = vld [vmem:[#allocation7 + $0xa8] sm:$0xff]
    %v9467 = vld [vmem:[#allocation7 + $0xb0] sm:$0xff]
    %v9468 = vld [vmem:[#allocation7 + $0xb8] sm:$0xff]
    %v9469 = vld [vmem:[#allocation7 + $0xc8] sm:$0xff]
    %v9470 = vld [vmem:[#allocation7 + $0xd0] sm:$0xff]
    %v9471 = vld [vmem:[#allocation7 + $0xd8] sm:$0xff]
    %v9472 = vld [vmem:[#allocation7 + $0xe0] sm:$0xff]
    %v9473 = vld [vmem:[#allocation7 + $0xe8] sm:$0xff]
    %v9474 = vld [vmem:[#allocation7 + $0xf8] sm:$0xff]
    %v9475 = vld [vmem:[#allocation7 + $0x100] sm:$0xff]
    %v9476 = vld [vmem:[#allocation7 + $0x108] sm:$0xff]
    %v9477 = vld [vmem:[#allocation7 + $0x110] sm:$0xff]
    %v9478 = vld [vmem:[#allocation7 + $0x118] sm:$0xff]
    %v9479 = vld [vmem:[#allocation7 + $0x128] sm:$0xff]
    %v9480 = vld [vmem:[#allocation7 + $0x130] sm:$0xff]
    %v9481 = vld [vmem:[#allocation7 + $0x138] sm:$0xff]
    %v9482 = vld [vmem:[#allocation7 + $0x140] sm:$0xff]
    %v9483 = vld [vmem:[#allocation7 + $0x148] sm:$0xff]
    %v9484 = vld [vmem:[#allocation7 + $0x158] sm:$0xff]
    %v9485 = vld [vmem:[#allocation7 + $0x160] sm:$0xff]
    %v9486 = vld [vmem:[#allocation7 + $0x168] sm:$0xff]
    %v9487 = vld [vmem:[#allocation7 + $0x170] sm:$0xff]
    %v9488 = vld [vmem:[#allocation7 + $0x178] sm:$0xff]
    %s9489 = scalar_lea.vmem %s18, 320
    %v9490 = vld [vmem:[%s9489] sm:$0xff]
    %v9491 = vld [vmem:[%s9489 + $0x8] sm:$0xff]
    %v9492 = vld [vmem:[%s9489 + $0x10] sm:$0xff]
    %v9493 = vld [vmem:[%s9489 + $0x18] sm:$0xff]
    %v9494 = vld [vmem:[%s9489 + $0x20] sm:$0xff]
    %v9495 = vld [vmem:[%s9489 + $0x28] sm:$0xff]
    %v9496 = vld [vmem:[%s9489 + $0x30] sm:$0xff]
    %v9497 = vld [vmem:[%s9489 + $0x38] sm:$0xff]
    %9499 = vset.pattern.permute.xlu0 0
    %9500 = vperm.xlu0 %9499, %v9490
    %v9501 = vpop.permute.xlu0 %9500
    %9504 = vset.pattern.permute.xlu0 0
    %9505 = vperm.xlu0 %9504, %v9491
    %v9506 = vpop.permute.xlu0 %9505
    %9509 = vset.pattern.permute.xlu0 0
    %9510 = vperm.xlu0 %9509, %v9492
    %v9511 = vpop.permute.xlu0 %9510
    %9514 = vset.pattern.permute.xlu0 0
    %9515 = vperm.xlu0 %9514, %v9493
    %v9516 = vpop.permute.xlu0 %9515
    %9519 = vset.pattern.permute.xlu0 0
    %9520 = vperm.xlu0 %9519, %v9494
    %v9521 = vpop.permute.xlu0 %9520
    %9524 = vset.pattern.permute.xlu0 0
    %9525 = vperm.xlu0 %9524, %v9495
    %v9526 = vpop.permute.xlu0 %9525
    %9529 = vset.pattern.permute.xlu0 0
    %9530 = vperm.xlu0 %9529, %v9496
    %v9531 = vpop.permute.xlu0 %9530
    %9534 = vset.pattern.permute.xlu0 0
    %9535 = vperm.xlu0 %9534, %v9497
    %v9536 = vpop.permute.xlu0 %9535
    %v9538 = vmul.f32 %v9449, %v9501
    %v9539 = vmul.f32 %v9450, %v9501
    %v9540 = vmul.f32 %v9451, %v9501
    %v9541 = vmul.f32 %v9452, %v9501
    %v9542 = vmul.f32 %v9453, %v9501
    %v9543 = vmul.f32 %v9454, %v9506
    %v9544 = vmul.f32 %v9455, %v9506
    %v9545 = vmul.f32 %v9456, %v9506
    %v9546 = vmul.f32 %v9457, %v9506
    %v9547 = vmul.f32 %v9458, %v9506
    %v9548 = vmul.f32 %v9459, %v9511
    %v9549 = vmul.f32 %v9460, %v9511
    %v9550 = vmul.f32 %v9461, %v9511
    %v9551 = vmul.f32 %v9462, %v9511
    %v9552 = vmul.f32 %v9463, %v9511
    %v9553 = vmul.f32 %v9464, %v9516
    %v9554 = vmul.f32 %v9465, %v9516
    %v9555 = vmul.f32 %v9466, %v9516
    %v9556 = vmul.f32 %v9467, %v9516
    %v9557 = vmul.f32 %v9468, %v9516
    %v9558 = vmul.f32 %v9469, %v9521
    %v9559 = vmul.f32 %v9470, %v9521
    %v9560 = vmul.f32 %v9471, %v9521
    %v9561 = vmul.f32 %v9472, %v9521
    %v9562 = vmul.f32 %v9473, %v9521
    %v9563 = vmul.f32 %v9474, %v9526
    %v9564 = vmul.f32 %v9475, %v9526
    %v9565 = vmul.f32 %v9476, %v9526
    %v9566 = vmul.f32 %v9477, %v9526
    %v9567 = vmul.f32 %v9478, %v9526
    %v9568 = vmul.f32 %v9479, %v9531
    %v9569 = vmul.f32 %v9480, %v9531
    %v9570 = vmul.f32 %v9481, %v9531
    %v9571 = vmul.f32 %v9482, %v9531
    %v9572 = vmul.f32 %v9483, %v9531
    %v9573 = vmul.f32 %v9484, %v9536
    %v9574 = vmul.f32 %v9485, %v9536
    %v9575 = vmul.f32 %v9486, %v9536
    %v9576 = vmul.f32 %v9487, %v9536
    %v9577 = vmul.f32 %v9488, %v9536
    %v9578 = vsel %vm7117, %v9538, 0.0
    %v9579 = vsel %vm7117, %v9543, 0.0
    %v9580 = vadd.f32 %v9578, %v9579
    %v9581 = vsel %vm7117, %v9548, 0.0
    %v9582 = vadd.f32 %v9580, %v9581
    %v9583 = vsel %vm7117, %v9553, 0.0
    %v9584 = vadd.f32 %v9582, %v9583
    %v9585 = vsel %vm7117, %v9558, 0.0
    %v9586 = vadd.f32 %v9584, %v9585
    %v9587 = vsel %vm7117, %v9563, 0.0
    %v9588 = vadd.f32 %v9586, %v9587
    %v9589 = vsel %vm7117, %v9568, 0.0
    %v9590 = vadd.f32 %v9588, %v9589
    %v9591 = vsel %vm7117, %v9573, 0.0
    %v9592 = vadd.f32 %v9590, %v9591
    %v9593 = vrot.slane %v9592, 4
    %v9594 = vadd.f32 %v9592, %v9593
    %v9595 = vrot.slane %v9594, 2
    %v9596 = vadd.f32 %v9594, %v9595
    %v9597 = vrot.slane %v9596, 1
    %v9598 = vadd.f32 %v9596, %v9597
    %v9599 = vadd.f32 %v9539, %v9544
    %v9600 = vadd.f32 %v9599, %v9549
    %v9601 = vadd.f32 %v9600, %v9554
    %v9602 = vadd.f32 %v9601, %v9559
    %v9603 = vadd.f32 %v9602, %v9564
    %v9604 = vadd.f32 %v9603, %v9569
    %v9605 = vadd.f32 %v9604, %v9574
    %v9606 = vrot.slane %v9605, 4
    %v9607 = vadd.f32 %v9605, %v9606
    %v9608 = vrot.slane %v9607, 2
    %v9609 = vadd.f32 %v9607, %v9608
    %v9610 = vrot.slane %v9609, 1
    %v9611 = vadd.f32 %v9609, %v9610
    %v9612 = vadd.f32 %v9540, %v9545
    %v9613 = vadd.f32 %v9612, %v9550
    %v9614 = vadd.f32 %v9613, %v9555
    %v9615 = vadd.f32 %v9614, %v9560
    %v9616 = vadd.f32 %v9615, %v9565
    %v9617 = vadd.f32 %v9616, %v9570
    %v9618 = vadd.f32 %v9617, %v9575
    %v9619 = vrot.slane %v9618, 4
    %v9620 = vadd.f32 %v9618, %v9619
    %v9621 = vrot.slane %v9620, 2
    %v9622 = vadd.f32 %v9620, %v9621
    %v9623 = vrot.slane %v9622, 1
    %v9624 = vadd.f32 %v9622, %v9623
    %v9625 = vadd.f32 %v9541, %v9546
    %v9626 = vadd.f32 %v9625, %v9551
    %v9627 = vadd.f32 %v9626, %v9556
    %v9628 = vadd.f32 %v9627, %v9561
    %v9629 = vadd.f32 %v9628, %v9566
    %v9630 = vadd.f32 %v9629, %v9571
    %v9631 = vadd.f32 %v9630, %v9576
    %v9632 = vrot.slane %v9631, 4
    %v9633 = vadd.f32 %v9631, %v9632
    %v9634 = vrot.slane %v9633, 2
    %v9635 = vadd.f32 %v9633, %v9634
    %v9636 = vrot.slane %v9635, 1
    %v9637 = vadd.f32 %v9635, %v9636
    %v9638 = vsel %vm558, %v9542, 0.0
    %v9639 = vsel %vm558, %v9547, 0.0
    %v9640 = vadd.f32 %v9638, %v9639
    %v9641 = vsel %vm558, %v9552, 0.0
    %v9642 = vadd.f32 %v9640, %v9641
    %v9643 = vsel %vm558, %v9557, 0.0
    %v9644 = vadd.f32 %v9642, %v9643
    %v9645 = vsel %vm558, %v9562, 0.0
    %v9646 = vadd.f32 %v9644, %v9645
    %v9647 = vsel %vm558, %v9567, 0.0
    %v9648 = vadd.f32 %v9646, %v9647
    %v9649 = vsel %vm558, %v9572, 0.0
    %v9650 = vadd.f32 %v9648, %v9649
    %v9651 = vsel %vm558, %v9577, 0.0
    %v9652 = vadd.f32 %v9650, %v9651
    %v9653 = vrot.slane %v9652, 4
    %v9654 = vadd.f32 %v9652, %v9653
    %v9655 = vrot.slane %v9654, 2
    %v9656 = vadd.f32 %v9654, %v9655
    %v9657 = vrot.slane %v9656, 1
    %v9658 = vadd.f32 %v9656, %v9657
    %v9664 = vrot.slane %v9611, 7
    %v9665 = vrot.slane %v9624, 6
    %v9666 = vrot.slane %v9637, 5
    %v9667 = vrot.slane %v9658, 4
    %v9668 = vsel %vm6748, %v9598, %v9664
    %v9669 = vsel %vm6750, %v9668, %v9665
    %v9670 = vsel %vm6752, %v9666, %v9667
    %v9671 = vsel %vm6754, %v9669, %v9670
    %9672 = vrot.lane.b32.xlu0 %v9671, 127
    %v9673 = vpop.permute.xlu0 %9672
    %v9674 = vrot.slane %v9673, 1
    %v9675 = vsel %vm649, %v9673, %v9674
    %v9677 = vmul.f32 %v7093, %v9675
    %v9678 = vadd.f32 %v9448, %v9677
    %s9679 = scalar_lea.vmem %s18, 384
    %v9680 = vld [vmem:[%s9679] sm:$0xff]
    %v9681 = vld [vmem:[%s9679 + $0x8] sm:$0xff]
    %v9682 = vld [vmem:[%s9679 + $0x10] sm:$0xff]
    %v9683 = vld [vmem:[%s9679 + $0x18] sm:$0xff]
    %v9684 = vld [vmem:[%s9679 + $0x20] sm:$0xff]
    %v9685 = vld [vmem:[%s9679 + $0x28] sm:$0xff]
    %v9686 = vld [vmem:[%s9679 + $0x30] sm:$0xff]
    %v9687 = vld [vmem:[%s9679 + $0x38] sm:$0xff]
    %9689 = vset.pattern.permute.xlu0 0
    %9690 = vperm.xlu0 %9689, %v9680
    %v9691 = vpop.permute.xlu0 %9690
    %9694 = vset.pattern.permute.xlu0 0
    %9695 = vperm.xlu0 %9694, %v9681
    %v9696 = vpop.permute.xlu0 %9695
    %9699 = vset.pattern.permute.xlu0 0
    %9700 = vperm.xlu0 %9699, %v9682
    %v9701 = vpop.permute.xlu0 %9700
    %9704 = vset.pattern.permute.xlu0 0
    %9705 = vperm.xlu0 %9704, %v9683
    %v9706 = vpop.permute.xlu0 %9705
    %9709 = vset.pattern.permute.xlu0 0
    %9710 = vperm.xlu0 %9709, %v9684
    %v9711 = vpop.permute.xlu0 %9710
    %9714 = vset.pattern.permute.xlu0 0
    %9715 = vperm.xlu0 %9714, %v9685
    %v9716 = vpop.permute.xlu0 %9715
    %9719 = vset.pattern.permute.xlu0 0
    %9720 = vperm.xlu0 %9719, %v9686
    %v9721 = vpop.permute.xlu0 %9720
    %9724 = vset.pattern.permute.xlu0 0
    %9725 = vperm.xlu0 %9724, %v9687
    %v9726 = vpop.permute.xlu0 %9725
    %v9728 = vmul.f32 %v9449, %v9691
    %v9729 = vmul.f32 %v9450, %v9691
    %v9730 = vmul.f32 %v9451, %v9691
    %v9731 = vmul.f32 %v9452, %v9691
    %v9732 = vmul.f32 %v9453, %v9691
    %v9733 = vmul.f32 %v9454, %v9696
    %v9734 = vmul.f32 %v9455, %v9696
    %v9735 = vmul.f32 %v9456, %v9696
    %v9736 = vmul.f32 %v9457, %v9696
    %v9737 = vmul.f32 %v9458, %v9696
    %v9738 = vmul.f32 %v9459, %v9701
    %v9739 = vmul.f32 %v9460, %v9701
    %v9740 = vmul.f32 %v9461, %v9701
    %v9741 = vmul.f32 %v9462, %v9701
    %v9742 = vmul.f32 %v9463, %v9701
    %v9743 = vmul.f32 %v9464, %v9706
    %v9744 = vmul.f32 %v9465, %v9706
    %v9745 = vmul.f32 %v9466, %v9706
    %v9746 = vmul.f32 %v9467, %v9706
    %v9747 = vmul.f32 %v9468, %v9706
    %v9748 = vmul.f32 %v9469, %v9711
    %v9749 = vmul.f32 %v9470, %v9711
    %v9750 = vmul.f32 %v9471, %v9711
    %v9751 = vmul.f32 %v9472, %v9711
    %v9752 = vmul.f32 %v9473, %v9711
    %v9753 = vmul.f32 %v9474, %v9716
    %v9754 = vmul.f32 %v9475, %v9716
    %v9755 = vmul.f32 %v9476, %v9716
    %v9756 = vmul.f32 %v9477, %v9716
    %v9757 = vmul.f32 %v9478, %v9716
    %v9758 = vmul.f32 %v9479, %v9721
    %v9759 = vmul.f32 %v9480, %v9721
    %v9760 = vmul.f32 %v9481, %v9721
    %v9761 = vmul.f32 %v9482, %v9721
    %v9762 = vmul.f32 %v9483, %v9721
    %v9763 = vmul.f32 %v9484, %v9726
    %v9764 = vmul.f32 %v9485, %v9726
    %v9765 = vmul.f32 %v9486, %v9726
    %v9766 = vmul.f32 %v9487, %v9726
    %v9767 = vmul.f32 %v9488, %v9726
    %v9768 = vsel %vm7202, %v9728, 0.0
    %v9769 = vsel %vm7202, %v9733, 0.0
    %v9770 = vadd.f32 %v9768, %v9769
    %v9771 = vsel %vm7202, %v9738, 0.0
    %v9772 = vadd.f32 %v9770, %v9771
    %v9773 = vsel %vm7202, %v9743, 0.0
    %v9774 = vadd.f32 %v9772, %v9773
    %v9775 = vsel %vm7202, %v9748, 0.0
    %v9776 = vadd.f32 %v9774, %v9775
    %v9777 = vsel %vm7202, %v9753, 0.0
    %v9778 = vadd.f32 %v9776, %v9777
    %v9779 = vsel %vm7202, %v9758, 0.0
    %v9780 = vadd.f32 %v9778, %v9779
    %v9781 = vsel %vm7202, %v9763, 0.0
    %v9782 = vadd.f32 %v9780, %v9781
    %v9783 = vrot.slane %v9782, 4
    %v9784 = vadd.f32 %v9782, %v9783
    %v9785 = vrot.slane %v9784, 2
    %v9786 = vadd.f32 %v9784, %v9785
    %v9787 = vrot.slane %v9786, 1
    %v9788 = vadd.f32 %v9786, %v9787
    %v9789 = vadd.f32 %v9729, %v9734
    %v9790 = vadd.f32 %v9789, %v9739
    %v9791 = vadd.f32 %v9790, %v9744
    %v9792 = vadd.f32 %v9791, %v9749
    %v9793 = vadd.f32 %v9792, %v9754
    %v9794 = vadd.f32 %v9793, %v9759
    %v9795 = vadd.f32 %v9794, %v9764
    %v9796 = vrot.slane %v9795, 4
    %v9797 = vadd.f32 %v9795, %v9796
    %v9798 = vrot.slane %v9797, 2
    %v9799 = vadd.f32 %v9797, %v9798
    %v9800 = vrot.slane %v9799, 1
    %v9801 = vadd.f32 %v9799, %v9800
    %v9802 = vadd.f32 %v9730, %v9735
    %v9803 = vadd.f32 %v9802, %v9740
    %v9804 = vadd.f32 %v9803, %v9745
    %v9805 = vadd.f32 %v9804, %v9750
    %v9806 = vadd.f32 %v9805, %v9755
    %v9807 = vadd.f32 %v9806, %v9760
    %v9808 = vadd.f32 %v9807, %v9765
    %v9809 = vrot.slane %v9808, 4
    %v9810 = vadd.f32 %v9808, %v9809
    %v9811 = vrot.slane %v9810, 2
    %v9812 = vadd.f32 %v9810, %v9811
    %v9813 = vrot.slane %v9812, 1
    %v9814 = vadd.f32 %v9812, %v9813
    %v9815 = vadd.f32 %v9731, %v9736
    %v9816 = vadd.f32 %v9815, %v9741
    %v9817 = vadd.f32 %v9816, %v9746
    %v9818 = vadd.f32 %v9817, %v9751
    %v9819 = vadd.f32 %v9818, %v9756
    %v9820 = vadd.f32 %v9819, %v9761
    %v9821 = vadd.f32 %v9820, %v9766
    %v9822 = vrot.slane %v9821, 4
    %v9823 = vadd.f32 %v9821, %v9822
    %v9824 = vrot.slane %v9823, 2
    %v9825 = vadd.f32 %v9823, %v9824
    %v9826 = vrot.slane %v9825, 1
    %v9827 = vadd.f32 %v9825, %v9826
    %v9828 = vsel %vm323, %v9732, 0.0
    %v9829 = vsel %vm323, %v9737, 0.0
    %v9830 = vadd.f32 %v9828, %v9829
    %v9831 = vsel %vm323, %v9742, 0.0
    %v9832 = vadd.f32 %v9830, %v9831
    %v9833 = vsel %vm323, %v9747, 0.0
    %v9834 = vadd.f32 %v9832, %v9833
    %v9835 = vsel %vm323, %v9752, 0.0
    %v9836 = vadd.f32 %v9834, %v9835
    %v9837 = vsel %vm323, %v9757, 0.0
    %v9838 = vadd.f32 %v9836, %v9837
    %v9839 = vsel %vm323, %v9762, 0.0
    %v9840 = vadd.f32 %v9838, %v9839
    %v9841 = vsel %vm323, %v9767, 0.0
    %v9842 = vadd.f32 %v9840, %v9841
    %v9843 = vrot.slane %v9842, 4
    %v9844 = vadd.f32 %v9842, %v9843
    %v9845 = vrot.slane %v9844, 2
    %v9846 = vadd.f32 %v9844, %v9845
    %v9847 = vrot.slane %v9846, 1
    %v9848 = vadd.f32 %v9846, %v9847
    %v9854 = vrot.slane %v9801, 7
    %v9855 = vrot.slane %v9814, 6
    %v9856 = vrot.slane %v9827, 5
    %v9857 = vrot.slane %v9848, 4
    %v9858 = vsel %vm6748, %v9788, %v9854
    %v9859 = vsel %vm6750, %v9858, %v9855
    %v9860 = vsel %vm6752, %v9856, %v9857
    %v9861 = vsel %vm6754, %v9859, %v9860
    %9862 = vrot.lane.b32.xlu0 %v9861, 113
    %v9863 = vpop.permute.xlu0 %9862
    %v9864 = vrot.slane %v9863, 1
    %v9865 = vsel %vm884, %v9863, %v9864
    %v9867 = vmul.f32 %v7178, %v9865
    %v9868 = vadd.f32 %v9678, %v9867
    %s9869 = scalar_lea.vmem %s18, 448
    %v9870 = vld [vmem:[%s9869] sm:$0xff]
    %v9871 = vld [vmem:[%s9869 + $0x8] sm:$0xff]
    %v9872 = vld [vmem:[%s9869 + $0x10] sm:$0xff]
    %v9873 = vld [vmem:[%s9869 + $0x18] sm:$0xff]
    %v9874 = vld [vmem:[%s9869 + $0x20] sm:$0xff]
    %v9875 = vld [vmem:[%s9869 + $0x28] sm:$0xff]
    %v9876 = vld [vmem:[%s9869 + $0x30] sm:$0xff]
    %v9877 = vld [vmem:[%s9869 + $0x38] sm:$0xff]
    %9879 = vset.pattern.permute.xlu0 0
    %9880 = vperm.xlu0 %9879, %v9870
    %v9881 = vpop.permute.xlu0 %9880
    %9884 = vset.pattern.permute.xlu0 0
    %9885 = vperm.xlu0 %9884, %v9871
    %v9886 = vpop.permute.xlu0 %9885
    %9889 = vset.pattern.permute.xlu0 0
    %9890 = vperm.xlu0 %9889, %v9872
    %v9891 = vpop.permute.xlu0 %9890
    %9894 = vset.pattern.permute.xlu0 0
    %9895 = vperm.xlu0 %9894, %v9873
    %v9896 = vpop.permute.xlu0 %9895
    %9899 = vset.pattern.permute.xlu0 0
    %9900 = vperm.xlu0 %9899, %v9874
    %v9901 = vpop.permute.xlu0 %9900
    %9904 = vset.pattern.permute.xlu0 0
    %9905 = vperm.xlu0 %9904, %v9875
    %v9906 = vpop.permute.xlu0 %9905
    %9909 = vset.pattern.permute.xlu0 0
    %9910 = vperm.xlu0 %9909, %v9876
    %v9911 = vpop.permute.xlu0 %9910
    %9914 = vset.pattern.permute.xlu0 0
    %9915 = vperm.xlu0 %9914, %v9877
    %v9916 = vpop.permute.xlu0 %9915
    %v9918 = vmul.f32 %v9449, %v9881
    %v9919 = vmul.f32 %v9450, %v9881
    %v9920 = vmul.f32 %v9451, %v9881
    %v9921 = vmul.f32 %v9452, %v9881
    %v9922 = vmul.f32 %v9453, %v9881
    %v9923 = vmul.f32 %v9454, %v9886
    %v9924 = vmul.f32 %v9455, %v9886
    %v9925 = vmul.f32 %v9456, %v9886
    %v9926 = vmul.f32 %v9457, %v9886
    %v9927 = vmul.f32 %v9458, %v9886
    %v9928 = vmul.f32 %v9459, %v9891
    %v9929 = vmul.f32 %v9460, %v9891
    %v9930 = vmul.f32 %v9461, %v9891
    %v9931 = vmul.f32 %v9462, %v9891
    %v9932 = vmul.f32 %v9463, %v9891
    %v9933 = vmul.f32 %v9464, %v9896
    %v9934 = vmul.f32 %v9465, %v9896
    %v9935 = vmul.f32 %v9466, %v9896
    %v9936 = vmul.f32 %v9467, %v9896
    %v9937 = vmul.f32 %v9468, %v9896
    %v9938 = vmul.f32 %v9469, %v9901
    %v9939 = vmul.f32 %v9470, %v9901
    %v9940 = vmul.f32 %v9471, %v9901
    %v9941 = vmul.f32 %v9472, %v9901
    %v9942 = vmul.f32 %v9473, %v9901
    %v9943 = vmul.f32 %v9474, %v9906
    %v9944 = vmul.f32 %v9475, %v9906
    %v9945 = vmul.f32 %v9476, %v9906
    %v9946 = vmul.f32 %v9477, %v9906
    %v9947 = vmul.f32 %v9478, %v9906
    %v9948 = vmul.f32 %v9479, %v9911
    %v9949 = vmul.f32 %v9480, %v9911
    %v9950 = vmul.f32 %v9481, %v9911
    %v9951 = vmul.f32 %v9482, %v9911
    %v9952 = vmul.f32 %v9483, %v9911
    %v9953 = vmul.f32 %v9484, %v9916
    %v9954 = vmul.f32 %v9485, %v9916
    %v9955 = vmul.f32 %v9486, %v9916
    %v9956 = vmul.f32 %v9487, %v9916
    %v9957 = vmul.f32 %v9488, %v9916
    %v9958 = vsel %vm7287, %v9918, 0.0
    %v9959 = vsel %vm7287, %v9923, 0.0
    %v9960 = vadd.f32 %v9958, %v9959
    %v9961 = vsel %vm7287, %v9928, 0.0
    %v9962 = vadd.f32 %v9960, %v9961
    %v9963 = vsel %vm7287, %v9933, 0.0
    %v9964 = vadd.f32 %v9962, %v9963
    %v9965 = vsel %vm7287, %v9938, 0.0
    %v9966 = vadd.f32 %v9964, %v9965
    %v9967 = vsel %vm7287, %v9943, 0.0
    %v9968 = vadd.f32 %v9966, %v9967
    %v9969 = vsel %vm7287, %v9948, 0.0
    %v9970 = vadd.f32 %v9968, %v9969
    %v9971 = vsel %vm7287, %v9953, 0.0
    %v9972 = vadd.f32 %v9970, %v9971
    %v9973 = vrot.slane %v9972, 4
    %v9974 = vadd.f32 %v9972, %v9973
    %v9975 = vrot.slane %v9974, 2
    %v9976 = vadd.f32 %v9974, %v9975
    %v9977 = vrot.slane %v9976, 1
    %v9978 = vadd.f32 %v9976, %v9977
    %v9979 = vadd.f32 %v9919, %v9924
    %v9980 = vadd.f32 %v9979, %v9929
    %v9981 = vadd.f32 %v9980, %v9934
    %v9982 = vadd.f32 %v9981, %v9939
    %v9983 = vadd.f32 %v9982, %v9944
    %v9984 = vadd.f32 %v9983, %v9949
    %v9985 = vadd.f32 %v9984, %v9954
    %v9986 = vrot.slane %v9985, 4
    %v9987 = vadd.f32 %v9985, %v9986
    %v9988 = vrot.slane %v9987, 2
    %v9989 = vadd.f32 %v9987, %v9988
    %v9990 = vrot.slane %v9989, 1
    %v9991 = vadd.f32 %v9989, %v9990
    %v9992 = vadd.f32 %v9920, %v9925
    %v9993 = vadd.f32 %v9992, %v9930
    %v9994 = vadd.f32 %v9993, %v9935
    %v9995 = vadd.f32 %v9994, %v9940
    %v9996 = vadd.f32 %v9995, %v9945
    %v9997 = vadd.f32 %v9996, %v9950
    %v9998 = vadd.f32 %v9997, %v9955
    %v9999 = vrot.slane %v9998, 4
    %v10000 = vadd.f32 %v9998, %v9999
    %v10001 = vrot.slane %v10000, 2
    %v10002 = vadd.f32 %v10000, %v10001
    %v10003 = vrot.slane %v10002, 1
    %v10004 = vadd.f32 %v10002, %v10003
    %v10005 = vadd.f32 %v9921, %v9926
    %v10006 = vadd.f32 %v10005, %v9931
    %v10007 = vadd.f32 %v10006, %v9936
    %v10008 = vadd.f32 %v10007, %v9941
    %v10009 = vadd.f32 %v10008, %v9946
    %v10010 = vadd.f32 %v10009, %v9951
    %v10011 = vadd.f32 %v10010, %v9956
    %v10012 = vrot.slane %v10011, 4
    %v10013 = vadd.f32 %v10011, %v10012
    %v10014 = vrot.slane %v10013, 2
    %v10015 = vadd.f32 %v10013, %v10014
    %v10016 = vrot.slane %v10015, 1
    %v10017 = vadd.f32 %v10015, %v10016
    %v10018 = vsel %vm276, %v9922, 0.0
    %v10019 = vsel %vm276, %v9927, 0.0
    %v10020 = vadd.f32 %v10018, %v10019
    %v10021 = vsel %vm276, %v9932, 0.0
    %v10022 = vadd.f32 %v10020, %v10021
    %v10023 = vsel %vm276, %v9937, 0.0
    %v10024 = vadd.f32 %v10022, %v10023
    %v10025 = vsel %vm276, %v9942, 0.0
    %v10026 = vadd.f32 %v10024, %v10025
    %v10027 = vsel %vm276, %v9947, 0.0
    %v10028 = vadd.f32 %v10026, %v10027
    %v10029 = vsel %vm276, %v9952, 0.0
    %v10030 = vadd.f32 %v10028, %v10029
    %v10031 = vsel %vm276, %v9957, 0.0
    %v10032 = vadd.f32 %v10030, %v10031
    %v10033 = vrot.slane %v10032, 4
    %v10034 = vadd.f32 %v10032, %v10033
    %v10035 = vrot.slane %v10034, 2
    %v10036 = vadd.f32 %v10034, %v10035
    %v10037 = vrot.slane %v10036, 1
    %v10038 = vadd.f32 %v10036, %v10037
    %v10044 = vrot.slane %v9991, 7
    %v10045 = vrot.slane %v10004, 6
    %v10046 = vrot.slane %v10017, 5
    %v10047 = vrot.slane %v10038, 4
    %v10048 = vsel %vm6748, %v9978, %v10044
    %v10049 = vsel %vm6750, %v10048, %v10045
    %v10050 = vsel %vm6752, %v10046, %v10047
    %v10051 = vsel %vm6754, %v10049, %v10050
    %10052 = vrot.lane.b32.xlu0 %v10051, 112
    %v10053 = vpop.permute.xlu0 %10052
    %v10054 = vrot.slane %v10053, 1
    %v10055 = vsel %vm931, %v10053, %v10054
    %v10057 = vmul.f32 %v7263, %v10055
    %v10058 = vadd.f32 %v9868, %v10057
    %s10059 = scalar_lea.vmem %s18, 512
    %v10060 = vld [vmem:[%s10059] sm:$0xff]
    %v10061 = vld [vmem:[%s10059 + $0x8] sm:$0xff]
    %v10062 = vld [vmem:[%s10059 + $0x10] sm:$0xff]
    %v10063 = vld [vmem:[%s10059 + $0x18] sm:$0xff]
    %v10064 = vld [vmem:[%s10059 + $0x20] sm:$0xff]
    %v10065 = vld [vmem:[%s10059 + $0x28] sm:$0xff]
    %v10066 = vld [vmem:[%s10059 + $0x30] sm:$0xff]
    %v10067 = vld [vmem:[%s10059 + $0x38] sm:$0xff]
    %10069 = vset.pattern.permute.xlu0 0
    %10070 = vperm.xlu0 %10069, %v10060
    %v10071 = vpop.permute.xlu0 %10070
    %10074 = vset.pattern.permute.xlu0 0
    %10075 = vperm.xlu0 %10074, %v10061
    %v10076 = vpop.permute.xlu0 %10075
    %10079 = vset.pattern.permute.xlu0 0
    %10080 = vperm.xlu0 %10079, %v10062
    %v10081 = vpop.permute.xlu0 %10080
    %10084 = vset.pattern.permute.xlu0 0
    %10085 = vperm.xlu0 %10084, %v10063
    %v10086 = vpop.permute.xlu0 %10085
    %10089 = vset.pattern.permute.xlu0 0
    %10090 = vperm.xlu0 %10089, %v10064
    %v10091 = vpop.permute.xlu0 %10090
    %10094 = vset.pattern.permute.xlu0 0
    %10095 = vperm.xlu0 %10094, %v10065
    %v10096 = vpop.permute.xlu0 %10095
    %10099 = vset.pattern.permute.xlu0 0
    %10100 = vperm.xlu0 %10099, %v10066
    %v10101 = vpop.permute.xlu0 %10100
    %10104 = vset.pattern.permute.xlu0 0
    %10105 = vperm.xlu0 %10104, %v10067
    %v10106 = vpop.permute.xlu0 %10105
    %v10108 = vmul.f32 %v9449, %v10071
    %v10109 = vmul.f32 %v9450, %v10071
    %v10110 = vmul.f32 %v9451, %v10071
    %v10111 = vmul.f32 %v9452, %v10071
    %v10112 = vmul.f32 %v9453, %v10071
    %v10113 = vmul.f32 %v9454, %v10076
    %v10114 = vmul.f32 %v9455, %v10076
    %v10115 = vmul.f32 %v9456, %v10076
    %v10116 = vmul.f32 %v9457, %v10076
    %v10117 = vmul.f32 %v9458, %v10076
    %v10118 = vmul.f32 %v9459, %v10081
    %v10119 = vmul.f32 %v9460, %v10081
    %v10120 = vmul.f32 %v9461, %v10081
    %v10121 = vmul.f32 %v9462, %v10081
    %v10122 = vmul.f32 %v9463, %v10081
    %v10123 = vmul.f32 %v9464, %v10086
    %v10124 = vmul.f32 %v9465, %v10086
    %v10125 = vmul.f32 %v9466, %v10086
    %v10126 = vmul.f32 %v9467, %v10086
    %v10127 = vmul.f32 %v9468, %v10086
    %v10128 = vmul.f32 %v9469, %v10091
    %v10129 = vmul.f32 %v9470, %v10091
    %v10130 = vmul.f32 %v9471, %v10091
    %v10131 = vmul.f32 %v9472, %v10091
    %v10132 = vmul.f32 %v9473, %v10091
    %v10133 = vmul.f32 %v9474, %v10096
    %v10134 = vmul.f32 %v9475, %v10096
    %v10135 = vmul.f32 %v9476, %v10096
    %v10136 = vmul.f32 %v9477, %v10096
    %v10137 = vmul.f32 %v9478, %v10096
    %v10138 = vmul.f32 %v9479, %v10101
    %v10139 = vmul.f32 %v9480, %v10101
    %v10140 = vmul.f32 %v9481, %v10101
    %v10141 = vmul.f32 %v9482, %v10101
    %v10142 = vmul.f32 %v9483, %v10101
    %v10143 = vmul.f32 %v9484, %v10106
    %v10144 = vmul.f32 %v9485, %v10106
    %v10145 = vmul.f32 %v9486, %v10106
    %v10146 = vmul.f32 %v9487, %v10106
    %v10147 = vmul.f32 %v9488, %v10106
    %v10148 = vsel %vm7372, %v10108, 0.0
    %v10149 = vsel %vm7372, %v10113, 0.0
    %v10150 = vadd.f32 %v10148, %v10149
    %v10151 = vsel %vm7372, %v10118, 0.0
    %v10152 = vadd.f32 %v10150, %v10151
    %v10153 = vsel %vm7372, %v10123, 0.0
    %v10154 = vadd.f32 %v10152, %v10153
    %v10155 = vsel %vm7372, %v10128, 0.0
    %v10156 = vadd.f32 %v10154, %v10155
    %v10157 = vsel %vm7372, %v10133, 0.0
    %v10158 = vadd.f32 %v10156, %v10157
    %v10159 = vsel %vm7372, %v10138, 0.0
    %v10160 = vadd.f32 %v10158, %v10159
    %v10161 = vsel %vm7372, %v10143, 0.0
    %v10162 = vadd.f32 %v10160, %v10161
    %v10163 = vrot.slane %v10162, 4
    %v10164 = vadd.f32 %v10162, %v10163
    %v10165 = vrot.slane %v10164, 2
    %v10166 = vadd.f32 %v10164, %v10165
    %v10167 = vrot.slane %v10166, 1
    %v10168 = vadd.f32 %v10166, %v10167
    %v10169 = vadd.f32 %v10109, %v10114
    %v10170 = vadd.f32 %v10169, %v10119
    %v10171 = vadd.f32 %v10170, %v10124
    %v10172 = vadd.f32 %v10171, %v10129
    %v10173 = vadd.f32 %v10172, %v10134
    %v10174 = vadd.f32 %v10173, %v10139
    %v10175 = vadd.f32 %v10174, %v10144
    %v10176 = vrot.slane %v10175, 4
    %v10177 = vadd.f32 %v10175, %v10176
    %v10178 = vrot.slane %v10177, 2
    %v10179 = vadd.f32 %v10177, %v10178
    %v10180 = vrot.slane %v10179, 1
    %v10181 = vadd.f32 %v10179, %v10180
    %v10182 = vadd.f32 %v10110, %v10115
    %v10183 = vadd.f32 %v10182, %v10120
    %v10184 = vadd.f32 %v10183, %v10125
    %v10185 = vadd.f32 %v10184, %v10130
    %v10186 = vadd.f32 %v10185, %v10135
    %v10187 = vadd.f32 %v10186, %v10140
    %v10188 = vadd.f32 %v10187, %v10145
    %v10189 = vrot.slane %v10188, 4
    %v10190 = vadd.f32 %v10188, %v10189
    %v10191 = vrot.slane %v10190, 2
    %v10192 = vadd.f32 %v10190, %v10191
    %v10193 = vrot.slane %v10192, 1
    %v10194 = vadd.f32 %v10192, %v10193
    %v10195 = vadd.f32 %v10111, %v10116
    %v10196 = vadd.f32 %v10195, %v10121
    %v10197 = vadd.f32 %v10196, %v10126
    %v10198 = vadd.f32 %v10197, %v10131
    %v10199 = vadd.f32 %v10198, %v10136
    %v10200 = vadd.f32 %v10199, %v10141
    %v10201 = vadd.f32 %v10200, %v10146
    %v10202 = vrot.slane %v10201, 4
    %v10203 = vadd.f32 %v10201, %v10202
    %v10204 = vrot.slane %v10203, 2
    %v10205 = vadd.f32 %v10203, %v10204
    %v10206 = vrot.slane %v10205, 1
    %v10207 = vadd.f32 %v10205, %v10206
    %v10208 = vsel %vm229, %v10112, 0.0
    %v10209 = vsel %vm229, %v10117, 0.0
    %v10210 = vadd.f32 %v10208, %v10209
    %v10211 = vsel %vm229, %v10122, 0.0
    %v10212 = vadd.f32 %v10210, %v10211
    %v10213 = vsel %vm229, %v10127, 0.0
    %v10214 = vadd.f32 %v10212, %v10213
    %v10215 = vsel %vm229, %v10132, 0.0
    %v10216 = vadd.f32 %v10214, %v10215
    %v10217 = vsel %vm229, %v10137, 0.0
    %v10218 = vadd.f32 %v10216, %v10217
    %v10219 = vsel %vm229, %v10142, 0.0
    %v10220 = vadd.f32 %v10218, %v10219
    %v10221 = vsel %vm229, %v10147, 0.0
    %v10222 = vadd.f32 %v10220, %v10221
    %v10223 = vrot.slane %v10222, 4
    %v10224 = vadd.f32 %v10222, %v10223
    %v10225 = vrot.slane %v10224, 2
    %v10226 = vadd.f32 %v10224, %v10225
    %v10227 = vrot.slane %v10226, 1
    %v10228 = vadd.f32 %v10226, %v10227
    %v10234 = vrot.slane %v10181, 7
    %v10235 = vrot.slane %v10194, 6
    %v10236 = vrot.slane %v10207, 5
    %v10237 = vrot.slane %v10228, 4
    %v10238 = vsel %vm6748, %v10168, %v10234
    %v10239 = vsel %vm6750, %v10238, %v10235
    %v10240 = vsel %vm6752, %v10236, %v10237
    %v10241 = vsel %vm6754, %v10239, %v10240
    %10242 = vrot.lane.b32.xlu0 %v10241, 111
    %v10243 = vpop.permute.xlu0 %10242
    %v10244 = vrot.slane %v10243, 1
    %v10245 = vsel %vm978, %v10243, %v10244
    %v10247 = vmul.f32 %v7348, %v10245
    %v10248 = vadd.f32 %v10058, %v10247
    %v10249 = vadd.f32 %v8504, %v10248
    %10250 = vst.msk [vmem:[%s20] sm:$0xf] %vm133, %v10249
    // Predicated region
    $region98: #{featnet_forward.1} parent=1 // pred_check
      _
    $region99: #{featnet_forward.1} parent=1 // pred_check_branch
      %10252 = sbr.rel (0) target = $region101
    $region100: #{featnet_forward.1} parent=1 // pred_region
      _
    $region101: #{featnet_forward.1} parent=1 // pred_fallthru
      _
    // Predicated region
    $region102: #{featnet_forward.1} parent=1 // pred_check
      _
    $region103: #{featnet_forward.1} parent=1 // pred_check_branch
      %10254 = sbr.rel (0) target = $region105
    $region104: #{featnet_forward.1} parent=1 // pred_region
      _
    $region105: #{featnet_forward.1} parent=1 // pred_fallthru
      _
    %10255 = vsyncpa [#allocation9], 1
    %10256 = vsyncpa [#allocation11], 1
    %10257 = vsyncpa [#allocation14], 1

</llo_original>
